<compile_context>
chip_gen: v7x
topology: tpu7x:2x2x1
jax: 0.10.0
libtpu: 0.0.40
codegen_flags: <defaults>
</compile_context>

<pallas_src>
import numpy as np
import jax
import jax.numpy as jnp
from jax.experimental import pallas as pl
from jax.experimental.pallas import tpu as pltpu

BN_EPS = 1e-5
LANE = 128
WEIGHT_DTYPE = jnp.bfloat16   # MXU-native; halves HBM->VMEM weight traffic


def conv_t_out_h(h_in, k, s, p, d):
    return (h_in - 1) * s - 2 * p + d * (k - 1) + 1


# -----------------------------------------------------------------------------
# Parameter packing (plain numpy, build/trace time only).
# -----------------------------------------------------------------------------
def pack_conv(w, h_in, stride, pad, dil):
    """ConvTranspose2d (kernel width 1) -> one (C_in*H_in, C_out*H_out) matmul matrix."""
    w = np.asarray(w, np.float32)
    c_in, c_out, k, _ = w.shape
    h_out = conv_t_out_h(h_in, k, stride, pad, dil)
    w4 = np.zeros((c_in, h_in, c_out, h_out), np.float32)
    for hi in range(h_in):
        for kh in range(k):
            ho = hi * stride - pad + dil * kh
            if 0 <= ho < h_out:
                w4[:, hi, :, ho] += w[:, :, kh, 0]
    return w4.reshape(c_in * h_in, c_out * h_out), h_out


# (c_in, c_out, kernel_h, stride_h, pad_h, dil_h, has_bn_relu)
PEPTIDE_CFG = [
    (64, 32, 4, 1, 0, 1, True),
    (32, 16, 4, 2, 1, 1, True),
    (16, 1, 3, 1, 0, 1, False),
]
MHC_CFG = [
    (256, 128, 4, 1, 0, 1, True),
    (128, 64, 4, 2, 1, 1, True),
    (64, 32, 4, 2, 1, 1, True),
    (32, 16, 4, 2, 1, 1, True),
    (16, 1, 8, 1, 0, 2, False),
]


def build_generator(key, configs, h_in=1):
    """Deterministic init + packing into 3 consolidated operands per net:
         w_slab : bf16 (sum_l C_in_l*H_in_l, C_out*H_out)  all BN-layer conv weights
         w_fin  : bf16 (C_in*H_in, 128)                    final conv weight, lane padded
         aff    : f32  (2*n_bn + 1, width)                 [g0; b0; g1; b1; ...; bias_fin]
       Weights are rounded through bf16 so the f64 reference sees exactly the values
       the MXU sees."""
    raw_layers = []
    slab_blocks, bn_meta, aff_rows = [], [], []
    width = None
    row_off = 0
    w_fin = b_fin = None
    out_dim = final_c = final_h = None
    h = h_in
    keys = jax.random.split(key, len(configs))
    for cfg, k in zip(configs, keys):
        c_in, c_out, ksz, s, p, d, has_bn = cfg
        kw, kb, kg, kbe = jax.random.split(k, 4)
        w = 0.05 * jax.random.normal(kw, (c_in, c_out, ksz, 1), jnp.float32)
        b = 0.05 * jax.random.normal(kb, (c_out,), jnp.float32)
        w = np.asarray(w.astype(jnp.bfloat16).astype(jnp.float32))
        b = np.asarray(b.astype(jnp.bfloat16).astype(jnp.float32))
        w_big, h_out = pack_conv(w, h, s, p, d)
        in_dim = c_in * h
        if has_bn:
            ch = c_out * h_out
            width = ch if width is None else width
            assert ch == width, "all BN layers of one net must share the slab width"
            g = np.asarray(1.0 + 0.1 * jax.random.normal(kg, (c_out,), jnp.float32),
                           np.float32)
            be = np.asarray(0.1 * jax.random.normal(kbe, (c_out,), jnp.float32),
                            np.float32)
            slab_blocks.append(w_big)
            bn_meta.append((row_off, in_dim, c_out, h_out))
            row_off += in_dim
            aff_rows.append(np.repeat(g, h_out).reshape(1, ch))
            aff_rows.append(np.repeat(be, h_out).reshape(1, ch))
            # conv bias is cancelled exactly by the BN mean subtraction -> not packed
            raw_layers.append((w, b, g, be))
        else:
            out_dim = c_out * h_out
            pad_cols = (-out_dim) % LANE
            w_fin = np.pad(w_big, ((0, 0), (0, pad_cols)))
            b_fin = np.pad(np.repeat(b, h_out).reshape(1, out_dim),
                           ((0, 0), (0, pad_cols)))
            final_c, final_h = c_out, h_out
            raw_layers.append((w, b, None, None))
        h = h_out
    fin_pad = int(w_fin.shape[1])
    b_row = np.zeros((1, width), np.float32)
    b_row[:, :fin_pad] = b_fin
    aff_rows.append(b_row)
    operands = (jnp.asarray(np.concatenate(slab_blocks, axis=0), WEIGHT_DTYPE),
                jnp.asarray(w_fin, WEIGHT_DTYPE),
                jnp.asarray(np.concatenate(aff_rows, axis=0), jnp.float32))
    meta = dict(bn_layers=tuple(bn_meta), width=int(width), out_dim=int(out_dim),
                final_c_out=int(final_c), final_h_out=int(final_h), fin_pad=fin_pad)
    return raw_layers, operands, meta


# -----------------------------------------------------------------------------
# Kernel body (trace-time helpers + fused kernel factory).
# -----------------------------------------------------------------------------
def _bn_relu(y, stats_ref, gamma, beta, inv, c, h, row_mask):
    """Training-mode BatchNorm2d + ReLU on a flattened (R_pad, C*H) activation.
       Padded batch rows are exactly zero on entry and are re-zeroed on exit, so
       the batch statistics (normalized by the true row count) stay exact."""
    ch = c * h
    # One elementwise pass produces both batch sums; stack them in a tiny VMEM
    # scratch so a single (2, C*H) LHS feeds ONE pool matmul + ONE broadcast-back
    # matmul (var = E[y^2] - mu^2).  The whole stats path stays f32.
    stats_ref[0:1, 0:ch] = jnp.sum(y, axis=0, keepdims=True)
    stats_ref[1:2, 0:ch] = jnp.sum(y * y, axis=0, keepdims=True)
    stats = stats_ref[0:2, 0:ch]                                    # (2, C*H) f32
    # 0/1 channel-pool matrices generated on-chip from 2-D iotas (no HBM weights).
    ri = jax.lax.broadcasted_iota(jnp.int32, (ch, c), 0)
    ci = jax.lax.broadcasted_iota(jnp.int32, (ch, c), 1)
    q = ri - ci * h
    pool = jnp.where((q >= 0) & (q < h), 1.0, 0.0)                  # (C*H, C)
    rj = jax.lax.broadcasted_iota(jnp.int32, (c, ch), 0)
    cj = jax.lax.broadcasted_iota(jnp.int32, (c, ch), 1)
    qt = cj - rj * h
    pool_t = jnp.where((qt >= 0) & (qt < h), 1.0, 0.0)              # (C, C*H)
    pooled = jnp.dot(stats, pool, preferred_element_type=jnp.float32)          # (2, C)
    full = jnp.dot(pooled, pool_t, preferred_element_type=jnp.float32) * inv   # (2, C*H)
    mu = full[0:1, :]
    var = jnp.maximum(full[1:2, :] - mu * mu, 0.0)
    # gamma folded into the normalization scale; ReLU fused; padded rows re-zeroed.
    scale = gamma * jax.lax.rsqrt(var + BN_EPS)
    return jnp.maximum((y - mu) * scale + beta, 0.0) * row_mask


def _net_forward(x_ref, w_ref, wfin_ref, aff_ref, stats_ref, meta, r_true, r_pad):
    """One generator on flattened (R_pad, C*H) activations."""
    bn_layers = meta['bn_layers']
    n_bn = len(bn_layers)
    # hoisted once per net: 0/1 mask of the real (un-padded) batch rows
    row_ids = jax.lax.broadcasted_iota(jnp.int32, (r_pad, 1), 0)
    row_mask = jnp.where(row_ids < r_true, 1.0, 0.0)                # (R_pad, 1) f32
    y = x_ref[...]
    for l, (row_off, in_dim, c_out, h_out) in enumerate(bn_layers):
        w = w_ref[row_off:row_off + in_dim, :]        # static, tile-aligned slab slice
        # width-1 ConvTranspose2d == one bf16 MXU matmul, f32 accumulate
        y = jnp.dot(y.astype(WEIGHT_DTYPE), w, preferred_element_type=jnp.float32)
        gamma = aff_ref[2 * l:2 * l + 1, :]
        beta = aff_ref[2 * l + 1:2 * l + 2, :]
        y = _bn_relu(y, stats_ref, gamma, beta, 1.0 / (r_true * h_out),
                     c_out, h_out, row_mask)
    b_fin = aff_ref[2 * n_bn:2 * n_bn + 1, 0:meta['fin_pad']]
    y = jnp.dot(y.astype(WEIGHT_DTYPE), wfin_ref[...],
                preferred_element_type=jnp.float32) + b_fin
    return jnp.tanh(y)


def make_fused_kernel(pep_meta, mhc_meta, r_true, r_pad):
    def kernel(x1_ref, x2_ref,
               w_pep_ref, wfin_pep_ref, aff_pep_ref,
               w_mhc_hbm_ref, wfin_mhc_ref, aff_mhc_ref,
               o1_ref, o2_ref,
               w_mhc_vmem, stats_ref, dma_sem):
        # Stream the large (~1.8 MB) MHC conv-weight slab HBM -> VMEM while the
        # small peptide net computes, instead of stalling in the prologue.
        cp = pltpu.make_async_copy(w_mhc_hbm_ref, w_mhc_vmem, dma_sem)
        cp.start()
        o1_ref[...] = _net_forward(x1_ref, w_pep_ref, wfin_pep_ref, aff_pep_ref,
                                   stats_ref, pep_meta, r_true, r_pad)
        cp.wait()
        o2_ref[...] = _net_forward(x2_ref, w_mhc_vmem, wfin_mhc_ref, aff_mhc_ref,
                                   stats_ref, mhc_meta, r_true, r_pad)
    return kernel


# -----------------------------------------------------------------------------
# Wrapper: flatten NCHW -> (R, C*H), pad R, run one fused pallas_call, reshape back.
# -----------------------------------------------------------------------------
def run_generators(x1_nchw, x2_nchw, pep_ops, pep_meta, mhc_ops, mhc_meta):
    def flatten(x):
        n, c, h, w = x.shape
        return jnp.transpose(x, (0, 3, 1, 2)).reshape(n * w, c * h)

    n, _, _, w_embed = x1_nchw.shape
    r_true = n * w_embed
    # Pad the batch-row dim to a multiple of 16 (>= 32) so bf16 MXU operands pack
    # into whole 16-row sublane vregs; padded rows are zero and are masked out of
    # the BN statistics inside the kernel (inv counts use the true R).
    r_pad = max(32, ((r_true + 15) // 16) * 16)
    x1f = jnp.pad(flatten(x1_nchw), ((0, r_pad - r_true), (0, 0)))
    x2f = jnp.pad(flatten(x2_nchw), ((0, r_pad - r_true), (0, 0)))

    w_pep, wfin_pep, aff_pep = pep_ops
    w_mhc, wfin_mhc, aff_mhc = mhc_ops
    kernel = make_fused_kernel(pep_meta, mhc_meta, r_true, r_pad)

    vspec = pl.BlockSpec(memory_space=pltpu.MemorySpace.VMEM)
    hbmspec = pl.BlockSpec(memory_space=pl.ANY)   # manual DMA inside the kernel
    stats_w = max(pep_meta['width'], mhc_meta['width'])

    o1, o2 = pl.pallas_call(
        kernel,
        out_shape=(jax.ShapeDtypeStruct((r_pad, pep_meta['fin_pad']), jnp.float32),
                   jax.ShapeDtypeStruct((r_pad, mhc_meta['fin_pad']), jnp.float32)),
        in_specs=[vspec, vspec,            # x1, x2
                  vspec, vspec, vspec,     # peptide: w_slab, w_fin, affine
                  hbmspec, vspec, vspec],  # MHC:     w_slab (HBM), w_fin, affine
        out_specs=(vspec, vspec),
        scratch_shapes=[
            pltpu.VMEM(w_mhc.shape, WEIGHT_DTYPE),   # VMEM home of the MHC slab
            pltpu.VMEM((2, stats_w), jnp.float32),   # stacked BN batch sums
            pltpu.SemaphoreType.DMA(()),
        ],
        compiler_params=pltpu.CompilerParams(vmem_limit_bytes=32 * 1024 * 1024),
    )(x1f, x2f, w_pep, wfin_pep, aff_pep, w_mhc, wfin_mhc, aff_mhc)

    def unflatten(o, meta):
        o = o[:r_true, :meta['out_dim']]  # drop row padding + lane padding
        return jnp.transpose(
            o.reshape(n, w_embed, meta['final_c_out'], meta['final_h_out']),
            (0, 2, 3, 1))

    return unflatten(o1, pep_meta), unflatten(o2, mhc_meta)


# -----------------------------------------------------------------------------
# Pure numpy reference (direct transposed-conv definition) for validation.
# -----------------------------------------------------------------------------
def convt_ref(x, w, b, stride, pad, dil):
    n, c_in, h, width = x.shape
    _, c_out, k, _ = w.shape
    h_out = conv_t_out_h(h, k, stride, pad, dil)
    y = np.zeros((n, c_out, h_out, width), np.float64)
    for hi in range(h):
        for kh in range(k):
            ho = hi * stride - pad + dil * kh
            if 0 <= ho < h_out:
                y[:, :, ho, :] += np.einsum('ncw,co->now', x[:, :, hi, :], w[:, :, kh, 0])
    return y + b[None, :, None, None]


def ref_forward(x, raw_layers, configs):
    y = np.asarray(x, np.float64)
    for raw, cfg in zip(raw_layers, configs):
        _, _, _, s, p, d, has_bn = cfg
        w, b, g, be = raw
        y = convt_ref(y, np.asarray(w, np.float64), np.asarray(b, np.float64), s, p, d)
        if has_bn:
            mu = y.mean(axis=(0, 2, 3), keepdims=True)
            var = y.var(axis=(0, 2, 3), keepdims=True)  # biased, as in torch training mode
            y = (y - mu) / np.sqrt(var + BN_EPS)
            y = y * np.asarray(g, np.float64)[None, :, None, None] \
                + np.asarray(be, np.float64)[None, :, None, None]
            y = np.maximum(y, 0.0)
    return np.tanh(y)


if __name__ == "__main__":
    key = jax.random.PRNGKey(0)
    k_pep, k_mhc, k_x1, k_x2 = jax.random.split(key, 4)

    N, W = 2, 12  # batch, embed width (width-1 conv kernels leave W untouched)
    x1 = jax.random.normal(k_x1, (N, 64, 1, W), jnp.float32)    # peptide noise
    x2 = jax.random.normal(k_x2, (N, 256, 1, W), jnp.float32)   # MHC noise

    pep_raw, pep_ops, pep_meta = build_generator(k_pep, PEPTIDE_CFG, h_in=1)
    mhc_raw, mhc_ops, mhc_meta = build_generator(k_mhc, MHC_CFG, h_in=1)

    fake_p, fake_m = run_generators(x1, x2, pep_ops, pep_meta, mhc_ops, mhc_meta)
    jax.block_until_ready((fake_p, fake_m))

    assert fake_p.shape == (N, 1, 10, W), fake_p.shape
    assert fake_m.shape == (N, 1, 46, W), fake_m.shape

    # Validate against the direct transposed-conv / batchnorm definition.
    ref_p = ref_forward(np.asarray(x1), pep_raw, PEPTIDE_CFG)
    ref_m = ref_forward(np.asarray(x2), mhc_raw, MHC_CFG)
    np.testing.assert_allclose(np.asarray(fake_p), ref_p, rtol=0, atol=5e-2)
    np.testing.assert_allclose(np.asarray(fake_m), ref_m, rtol=0, atol=5e-2)

    print("KERNEL_OK")
</pallas_src>

<mosaic_0001>
module attributes {stable_mosaic.version = 11 : i64} {
  func.func @kernel(%arg0: memref<32x64xf32, #tpu.memory_space<vmem>>, %arg1: memref<32x256xf32, #tpu.memory_space<vmem>>, %arg2: memref<192x128xbf16, #tpu.memory_space<vmem>>, %arg3: memref<128x128xbf16, #tpu.memory_space<vmem>>, %arg4: memref<5x128xf32, #tpu.memory_space<vmem>>, %arg5: memref<1792x512xbf16, #tpu.memory_space<any>>, %arg6: memref<512x128xbf16, #tpu.memory_space<vmem>>, %arg7: memref<9x512xf32, #tpu.memory_space<vmem>>, %arg8: memref<32x128xf32, #tpu.memory_space<vmem>>, %arg9: memref<32x128xf32, #tpu.memory_space<vmem>>, %arg10: memref<1792x512xbf16, #tpu.memory_space<vmem>>, %arg11: memref<2x512xf32, #tpu.memory_space<vmem>>, %arg12: memref<!tpu.dma_semaphore, #tpu.memory_space<semaphore_mem>>) attributes {dimension_semantics = [], scalar_prefetch = 0 : i64, scratch_operands = 3 : i64, tpu.core_type = #tpu.core_type<tc>} {
    tpu.enqueue_dma source(%arg5 : memref<1792x512xbf16, #tpu.memory_space<any>>) target(%arg10 : memref<1792x512xbf16, #tpu.memory_space<vmem>>) target_semaphore(%arg12 : memref<!tpu.dma_semaphore, #tpu.memory_space<semaphore_mem>>)
    %0 = tpu.iota {dimensions = array<i32: 0>} : vector<32x1xi32>
    %c24_i32 = arith.constant 24 : i32
    %1 = vector.broadcast %c24_i32 : i32 to vector<32x1xi32>
    %2 = arith.cmpi slt, %0, %1 : vector<32x1xi32>
    %cst = arith.constant 1.000000e+00 : f32
    %cst_0 = arith.constant 0.000000e+00 : f32
    %3 = vector.broadcast %cst : f32 to vector<32x1xf32>
    %4 = vector.broadcast %cst_0 : f32 to vector<32x1xf32>
    %5 = arith.select %2, %3, %4 : vector<32x1xi1>, vector<32x1xf32>
    %c0 = arith.constant 0 : index
    %c0_1 = arith.constant 0 : index
    %6 = vector.load %arg0[%c0, %c0_1] : memref<32x64xf32, #tpu.memory_space<vmem>>, vector<32x64xf32>
    %c0_2 = arith.constant 0 : index
    %c0_3 = arith.constant 0 : index
    %7 = vector.load %arg2[%c0_2, %c0_3] : memref<192x128xbf16, #tpu.memory_space<vmem>>, vector<64x128xbf16>
    %8 = arith.truncf %6 : vector<32x64xf32> to vector<32x64xbf16>
    %cst_4 = arith.constant dense<0.000000e+00> : vector<32x128xf32>
    %9 = tpu.matmul %8, %7, %cst_4 {dimension_numbers = #tpu.dot_dimension_numbers<[1], [0], [0], [1], [0, 0, 1, 1], [], []>} : vector<32x64xbf16>, vector<64x128xbf16>, vector<32x128xf32> -> vector<32x128xf32>
    %c0_5 = arith.constant 0 : index
    %c0_6 = arith.constant 0 : index
    %10 = vector.load %arg4[%c0_5, %c0_6] : memref<5x128xf32, #tpu.memory_space<vmem>>, vector<1x128xf32>
    %c1 = arith.constant 1 : index
    %c0_7 = arith.constant 0 : index
    %11 = vector.load %arg4[%c1, %c0_7] : memref<5x128xf32, #tpu.memory_space<vmem>>, vector<1x128xf32>
    %cst_8 = arith.constant dense<0.000000e+00> : vector<128xf32>
    %12 = vector.multi_reduction <add>, %9, %cst_8 [0] : vector<32x128xf32> to vector<128xf32>
    %13 = vector.shape_cast %12 : vector<128xf32> to vector<1x128xf32>
    %c0_9 = arith.constant 0 : index
    %c0_10 = arith.constant 0 : index
    %14 = vector.load %arg11[%c0_9, %c0_10] : memref<2x512xf32, #tpu.memory_space<vmem>>, vector<1x128xf32>
    tpu.vector_store %arg11[%c0_9, %c0_10], %13 {strides = array<i32>} : memref<2x512xf32, #tpu.memory_space<vmem>>, vector<1x128xf32>,
    %15 = arith.mulf %9, %9 : vector<32x128xf32>
    %cst_11 = arith.constant dense<0.000000e+00> : vector<128xf32>
    %16 = vector.multi_reduction <add>, %15, %cst_11 [0] : vector<32x128xf32> to vector<128xf32>
    %17 = vector.shape_cast %16 : vector<128xf32> to vector<1x128xf32>
    %c1_12 = arith.constant 1 : index
    %c0_13 = arith.constant 0 : index
    %18 = vector.load %arg11[%c1_12, %c0_13] : memref<2x512xf32, #tpu.memory_space<vmem>>, vector<1x128xf32>
    tpu.vector_store %arg11[%c1_12, %c0_13], %17 {strides = array<i32>} : memref<2x512xf32, #tpu.memory_space<vmem>>, vector<1x128xf32>,
    %c0_14 = arith.constant 0 : index
    %c0_15 = arith.constant 0 : index
    %19 = vector.load %arg11[%c0_14, %c0_15] : memref<2x512xf32, #tpu.memory_space<vmem>>, vector<2x128xf32>
    %20 = tpu.iota {dimensions = array<i32: 0>} : vector<128x32xi32>
    %21 = tpu.iota {dimensions = array<i32: 1>} : vector<128x32xi32>
    %c4_i32 = arith.constant 4 : i32
    %22 = vector.broadcast %c4_i32 : i32 to vector<128x32xi32>
    %23 = arith.muli %21, %22 : vector<128x32xi32>
    %24 = arith.subi %20, %23 : vector<128x32xi32>
    %c0_i32 = arith.constant 0 : i32
    %25 = vector.broadcast %c0_i32 : i32 to vector<128x32xi32>
    %26 = arith.cmpi sge, %24, %25 : vector<128x32xi32>
    %c4_i32_16 = arith.constant 4 : i32
    %27 = vector.broadcast %c4_i32_16 : i32 to vector<128x32xi32>
    %28 = arith.cmpi slt, %24, %27 : vector<128x32xi32>
    %29 = arith.andi %26, %28 : vector<128x32xi1>
    %cst_17 = arith.constant 1.000000e+00 : f32
    %cst_18 = arith.constant 0.000000e+00 : f32
    %30 = vector.broadcast %cst_17 : f32 to vector<128x32xf32>
    %31 = vector.broadcast %cst_18 : f32 to vector<128x32xf32>
    %32 = arith.select %29, %30, %31 : vector<128x32xi1>, vector<128x32xf32>
    %33 = tpu.iota {dimensions = array<i32: 0>} : vector<32x128xi32>
    %34 = tpu.iota {dimensions = array<i32: 1>} : vector<32x128xi32>
    %c4_i32_19 = arith.constant 4 : i32
    %35 = vector.broadcast %c4_i32_19 : i32 to vector<32x128xi32>
    %36 = arith.muli %33, %35 : vector<32x128xi32>
    %37 = arith.subi %34, %36 : vector<32x128xi32>
    %c0_i32_20 = arith.constant 0 : i32
    %38 = vector.broadcast %c0_i32_20 : i32 to vector<32x128xi32>
    %39 = arith.cmpi sge, %37, %38 : vector<32x128xi32>
    %c4_i32_21 = arith.constant 4 : i32
    %40 = vector.broadcast %c4_i32_21 : i32 to vector<32x128xi32>
    %41 = arith.cmpi slt, %37, %40 : vector<32x128xi32>
    %42 = arith.andi %39, %41 : vector<32x128xi1>
    %cst_22 = arith.constant 1.000000e+00 : f32
    %cst_23 = arith.constant 0.000000e+00 : f32
    %43 = vector.broadcast %cst_22 : f32 to vector<32x128xf32>
    %44 = vector.broadcast %cst_23 : f32 to vector<32x128xf32>
    %45 = arith.select %42, %43, %44 : vector<32x128xi1>, vector<32x128xf32>
    %cst_24 = arith.constant dense<0.000000e+00> : vector<2x32xf32>
    %46 = tpu.matmul %19, %32, %cst_24 {dimension_numbers = #tpu.dot_dimension_numbers<[1], [0], [0], [1], [0, 0, 1, 1], [], []>} : vector<2x128xf32>, vector<128x32xf32>, vector<2x32xf32> -> vector<2x32xf32>
    %cst_25 = arith.constant dense<0.000000e+00> : vector<2x128xf32>
    %47 = tpu.matmul %46, %45, %cst_25 {dimension_numbers = #tpu.dot_dimension_numbers<[1], [0], [0], [1], [0, 0, 1, 1], [], []>} : vector<2x32xf32>, vector<32x128xf32>, vector<2x128xf32> -> vector<2x128xf32>
    %cst_26 = arith.constant 0.010416667 : f32
    %48 = vector.broadcast %cst_26 : f32 to vector<2x128xf32>
    %49 = arith.mulf %47, %48 : vector<2x128xf32>
    %50 = vector.extract_strided_slice %49 {offsets = [0, 0], sizes = [1, 128], strides = [1, 1]} : vector<2x128xf32> to vector<1x128xf32>
    %51 = vector.extract_strided_slice %49 {offsets = [1, 0], sizes = [1, 128], strides = [1, 1]} : vector<2x128xf32> to vector<1x128xf32>
    %52 = arith.mulf %50, %50 : vector<1x128xf32>
    %53 = arith.subf %51, %52 : vector<1x128xf32>
    %cst_27 = arith.constant 0.000000e+00 : f32
    %54 = vector.broadcast %cst_27 : f32 to vector<1x128xf32>
    %55 = arith.maximumf %53, %54 : vector<1x128xf32>
    %cst_28 = arith.constant 9.99999974E-6 : f32
    %56 = vector.broadcast %cst_28 : f32 to vector<1x128xf32>
    %57 = arith.addf %55, %56 : vector<1x128xf32>
    %58 = math.rsqrt %57 : vector<1x128xf32>
    %59 = arith.mulf %10, %58 : vector<1x128xf32>
    %60 = vector.broadcast %50 : vector<1x128xf32> to vector<32x128xf32>
    %61 = arith.subf %9, %60 : vector<32x128xf32>
    %62 = vector.broadcast %59 : vector<1x128xf32> to vector<32x128xf32>
    %63 = arith.mulf %61, %62 : vector<32x128xf32>
    %64 = vector.broadcast %11 : vector<1x128xf32> to vector<32x128xf32>
    %65 = arith.addf %63, %64 : vector<32x128xf32>
    %cst_29 = arith.constant 0.000000e+00 : f32
    %66 = vector.broadcast %cst_29 : f32 to vector<32x128xf32>
    %67 = arith.maximumf %65, %66 : vector<32x128xf32>
    %68 = vector.broadcast %5 : vector<32x1xf32> to vector<32x128xf32>
    %69 = arith.mulf %67, %68 : vector<32x128xf32>
    %c64 = arith.constant 64 : index
    %c0_30 = arith.constant 0 : index
    %70 = vector.load %arg2[%c64, %c0_30] : memref<192x128xbf16, #tpu.memory_space<vmem>>, vector<128x128xbf16>
    %71 = arith.truncf %69 : vector<32x128xf32> to vector<32x128xbf16>
    %cst_31 = arith.constant dense<0.000000e+00> : vector<32x128xf32>
    %72 = tpu.matmul %71, %70, %cst_31 {dimension_numbers = #tpu.dot_dimension_numbers<[1], [0], [0], [1], [0, 0, 1, 1], [], []>} : vector<32x128xbf16>, vector<128x128xbf16>, vector<32x128xf32> -> vector<32x128xf32>
    %c2 = arith.constant 2 : index
    %c0_32 = arith.constant 0 : index
    %73 = vector.load %arg4[%c2, %c0_32] : memref<5x128xf32, #tpu.memory_space<vmem>>, vector<1x128xf32>
    %c3 = arith.constant 3 : index
    %c0_33 = arith.constant 0 : index
    %74 = vector.load %arg4[%c3, %c0_33] : memref<5x128xf32, #tpu.memory_space<vmem>>, vector<1x128xf32>
    %cst_34 = arith.constant dense<0.000000e+00> : vector<128xf32>
    %75 = vector.multi_reduction <add>, %72, %cst_34 [0] : vector<32x128xf32> to vector<128xf32>
    %76 = vector.shape_cast %75 : vector<128xf32> to vector<1x128xf32>
    %c0_35 = arith.constant 0 : index
    %c0_36 = arith.constant 0 : index
    %77 = vector.load %arg11[%c0_35, %c0_36] : memref<2x512xf32, #tpu.memory_space<vmem>>, vector<1x128xf32>
    tpu.vector_store %arg11[%c0_35, %c0_36], %76 {strides = array<i32>} : memref<2x512xf32, #tpu.memory_space<vmem>>, vector<1x128xf32>,
    %78 = arith.mulf %72, %72 : vector<32x128xf32>
    %cst_37 = arith.constant dense<0.000000e+00> : vector<128xf32>
    %79 = vector.multi_reduction <add>, %78, %cst_37 [0] : vector<32x128xf32> to vector<128xf32>
    %80 = vector.shape_cast %79 : vector<128xf32> to vector<1x128xf32>
    %c1_38 = arith.constant 1 : index
    %c0_39 = arith.constant 0 : index
    %81 = vector.load %arg11[%c1_38, %c0_39] : memref<2x512xf32, #tpu.memory_space<vmem>>, vector<1x128xf32>
    tpu.vector_store %arg11[%c1_38, %c0_39], %80 {strides = array<i32>} : memref<2x512xf32, #tpu.memory_space<vmem>>, vector<1x128xf32>,
    %c0_40 = arith.constant 0 : index
    %c0_41 = arith.constant 0 : index
    %82 = vector.load %arg11[%c0_40, %c0_41] : memref<2x512xf32, #tpu.memory_space<vmem>>, vector<2x128xf32>
    %83 = tpu.iota {dimensions = array<i32: 0>} : vector<128x16xi32>
    %84 = tpu.iota {dimensions = array<i32: 1>} : vector<128x16xi32>
    %c8_i32 = arith.constant 8 : i32
    %85 = vector.broadcast %c8_i32 : i32 to vector<128x16xi32>
    %86 = arith.muli %84, %85 : vector<128x16xi32>
    %87 = arith.subi %83, %86 : vector<128x16xi32>
    %c0_i32_42 = arith.constant 0 : i32
    %88 = vector.broadcast %c0_i32_42 : i32 to vector<128x16xi32>
    %89 = arith.cmpi sge, %87, %88 : vector<128x16xi32>
    %c8_i32_43 = arith.constant 8 : i32
    %90 = vector.broadcast %c8_i32_43 : i32 to vector<128x16xi32>
    %91 = arith.cmpi slt, %87, %90 : vector<128x16xi32>
    %92 = arith.andi %89, %91 : vector<128x16xi1>
    %cst_44 = arith.constant 1.000000e+00 : f32
    %cst_45 = arith.constant 0.000000e+00 : f32
    %93 = vector.broadcast %cst_44 : f32 to vector<128x16xf32>
    %94 = vector.broadcast %cst_45 : f32 to vector<128x16xf32>
    %95 = arith.select %92, %93, %94 : vector<128x16xi1>, vector<128x16xf32>
    %96 = tpu.iota {dimensions = array<i32: 0>} : vector<16x128xi32>
    %97 = tpu.iota {dimensions = array<i32: 1>} : vector<16x128xi32>
    %c8_i32_46 = arith.constant 8 : i32
    %98 = vector.broadcast %c8_i32_46 : i32 to vector<16x128xi32>
    %99 = arith.muli %96, %98 : vector<16x128xi32>
    %100 = arith.subi %97, %99 : vector<16x128xi32>
    %c0_i32_47 = arith.constant 0 : i32
    %101 = vector.broadcast %c0_i32_47 : i32 to vector<16x128xi32>
    %102 = arith.cmpi sge, %100, %101 : vector<16x128xi32>
    %c8_i32_48 = arith.constant 8 : i32
    %103 = vector.broadcast %c8_i32_48 : i32 to vector<16x128xi32>
    %104 = arith.cmpi slt, %100, %103 : vector<16x128xi32>
    %105 = arith.andi %102, %104 : vector<16x128xi1>
    %cst_49 = arith.constant 1.000000e+00 : f32
    %cst_50 = arith.constant 0.000000e+00 : f32
    %106 = vector.broadcast %cst_49 : f32 to vector<16x128xf32>
    %107 = vector.broadcast %cst_50 : f32 to vector<16x128xf32>
    %108 = arith.select %105, %106, %107 : vector<16x128xi1>, vector<16x128xf32>
    %cst_51 = arith.constant dense<0.000000e+00> : vector<2x16xf32>
    %109 = tpu.matmul %82, %95, %cst_51 {dimension_numbers = #tpu.dot_dimension_numbers<[1], [0], [0], [1], [0, 0, 1, 1], [], []>} : vector<2x128xf32>, vector<128x16xf32>, vector<2x16xf32> -> vector<2x16xf32>
    %cst_52 = arith.constant dense<0.000000e+00> : vector<2x128xf32>
    %110 = tpu.matmul %109, %108, %cst_52 {dimension_numbers = #tpu.dot_dimension_numbers<[1], [0], [0], [1], [0, 0, 1, 1], [], []>} : vector<2x16xf32>, vector<16x128xf32>, vector<2x128xf32> -> vector<2x128xf32>
    %cst_53 = arith.constant 0.00520833349 : f32
    %111 = vector.broadcast %cst_53 : f32 to vector<2x128xf32>
    %112 = arith.mulf %110, %111 : vector<2x128xf32>
    %113 = vector.extract_strided_slice %112 {offsets = [0, 0], sizes = [1, 128], strides = [1, 1]} : vector<2x128xf32> to vector<1x128xf32>
    %114 = vector.extract_strided_slice %112 {offsets = [1, 0], sizes = [1, 128], strides = [1, 1]} : vector<2x128xf32> to vector<1x128xf32>
    %115 = arith.mulf %113, %113 : vector<1x128xf32>
    %116 = arith.subf %114, %115 : vector<1x128xf32>
    %cst_54 = arith.constant 0.000000e+00 : f32
    %117 = vector.broadcast %cst_54 : f32 to vector<1x128xf32>
    %118 = arith.maximumf %116, %117 : vector<1x128xf32>
    %cst_55 = arith.constant 9.99999974E-6 : f32
    %119 = vector.broadcast %cst_55 : f32 to vector<1x128xf32>
    %120 = arith.addf %118, %119 : vector<1x128xf32>
    %121 = math.rsqrt %120 : vector<1x128xf32>
    %122 = arith.mulf %73, %121 : vector<1x128xf32>
    %123 = vector.broadcast %113 : vector<1x128xf32> to vector<32x128xf32>
    %124 = arith.subf %72, %123 : vector<32x128xf32>
    %125 = vector.broadcast %122 : vector<1x128xf32> to vector<32x128xf32>
    %126 = arith.mulf %124, %125 : vector<32x128xf32>
    %127 = vector.broadcast %74 : vector<1x128xf32> to vector<32x128xf32>
    %128 = arith.addf %126, %127 : vector<32x128xf32>
    %cst_56 = arith.constant 0.000000e+00 : f32
    %129 = vector.broadcast %cst_56 : f32 to vector<32x128xf32>
    %130 = arith.maximumf %128, %129 : vector<32x128xf32>
    %131 = vector.broadcast %5 : vector<32x1xf32> to vector<32x128xf32>
    %132 = arith.mulf %130, %131 : vector<32x128xf32>
    %c4 = arith.constant 4 : index
    %c0_57 = arith.constant 0 : index
    %133 = vector.load %arg4[%c4, %c0_57] : memref<5x128xf32, #tpu.memory_space<vmem>>, vector<1x128xf32>
    %134 = arith.truncf %132 : vector<32x128xf32> to vector<32x128xbf16>
    %c0_58 = arith.constant 0 : index
    %c0_59 = arith.constant 0 : index
    %135 = vector.load %arg3[%c0_58, %c0_59] : memref<128x128xbf16, #tpu.memory_space<vmem>>, vector<128x128xbf16>
    %cst_60 = arith.constant dense<0.000000e+00> : vector<32x128xf32>
    %136 = tpu.matmul %134, %135, %cst_60 {dimension_numbers = #tpu.dot_dimension_numbers<[1], [0], [0], [1], [0, 0, 1, 1], [], []>} : vector<32x128xbf16>, vector<128x128xbf16>, vector<32x128xf32> -> vector<32x128xf32>
    %137 = vector.broadcast %133 : vector<1x128xf32> to vector<32x128xf32>
    %138 = arith.addf %136, %137 : vector<32x128xf32>
    %139 = math.tanh %138 : vector<32x128xf32>
    %c0_61 = arith.constant 0 : index
    %c0_62 = arith.constant 0 : index
    %140 = vector.load %arg8[%c0_61, %c0_62] : memref<32x128xf32, #tpu.memory_space<vmem>>, vector<32x128xf32>
    tpu.vector_store %arg8[%c0_61, %c0_62], %139 {strides = array<i32>} : memref<32x128xf32, #tpu.memory_space<vmem>>, vector<32x128xf32>,
    tpu.wait_dma2 semaphore(%arg12 : memref<!tpu.dma_semaphore, #tpu.memory_space<semaphore_mem>>) src(%arg5 : memref<1792x512xbf16, #tpu.memory_space<any>>) dst(%arg10 : memref<1792x512xbf16, #tpu.memory_space<vmem>>)
    %141 = tpu.iota {dimensions = array<i32: 0>} : vector<32x1xi32>
    %c24_i32_63 = arith.constant 24 : i32
    %142 = vector.broadcast %c24_i32_63 : i32 to vector<32x1xi32>
    %143 = arith.cmpi slt, %141, %142 : vector<32x1xi32>
    %cst_64 = arith.constant 1.000000e+00 : f32
    %cst_65 = arith.constant 0.000000e+00 : f32
    %144 = vector.broadcast %cst_64 : f32 to vector<32x1xf32>
    %145 = vector.broadcast %cst_65 : f32 to vector<32x1xf32>
    %146 = arith.select %143, %144, %145 : vector<32x1xi1>, vector<32x1xf32>
    %c0_66 = arith.constant 0 : index
    %c0_67 = arith.constant 0 : index
    %147 = vector.load %arg1[%c0_66, %c0_67] : memref<32x256xf32, #tpu.memory_space<vmem>>, vector<32x256xf32>
    %c0_68 = arith.constant 0 : index
    %c0_69 = arith.constant 0 : index
    %148 = vector.load %arg10[%c0_68, %c0_69] : memref<1792x512xbf16, #tpu.memory_space<vmem>>, vector<256x512xbf16>
    %149 = arith.truncf %147 : vector<32x256xf32> to vector<32x256xbf16>
    %cst_70 = arith.constant dense<0.000000e+00> : vector<32x512xf32>
    %150 = tpu.matmul %149, %148, %cst_70 {dimension_numbers = #tpu.dot_dimension_numbers<[1], [0], [0], [1], [0, 0, 1, 1], [], []>} : vector<32x256xbf16>, vector<256x512xbf16>, vector<32x512xf32> -> vector<32x512xf32>
    %c0_71 = arith.constant 0 : index
    %c0_72 = arith.constant 0 : index
    %151 = vector.load %arg7[%c0_71, %c0_72] : memref<9x512xf32, #tpu.memory_space<vmem>>, vector<1x512xf32>
    %c1_73 = arith.constant 1 : index
    %c0_74 = arith.constant 0 : index
    %152 = vector.load %arg7[%c1_73, %c0_74] : memref<9x512xf32, #tpu.memory_space<vmem>>, vector<1x512xf32>
    %cst_75 = arith.constant dense<0.000000e+00> : vector<512xf32>
    %153 = vector.multi_reduction <add>, %150, %cst_75 [0] : vector<32x512xf32> to vector<512xf32>
    %154 = vector.shape_cast %153 : vector<512xf32> to vector<1x512xf32>
    %c0_76 = arith.constant 0 : index
    %c0_77 = arith.constant 0 : index
    %155 = vector.load %arg11[%c0_76, %c0_77] : memref<2x512xf32, #tpu.memory_space<vmem>>, vector<1x512xf32>
    tpu.vector_store %arg11[%c0_76, %c0_77], %154 {strides = array<i32>} : memref<2x512xf32, #tpu.memory_space<vmem>>, vector<1x512xf32>,
    %156 = arith.mulf %150, %150 : vector<32x512xf32>
    %cst_78 = arith.constant dense<0.000000e+00> : vector<512xf32>
    %157 = vector.multi_reduction <add>, %156, %cst_78 [0] : vector<32x512xf32> to vector<512xf32>
    %158 = vector.shape_cast %157 : vector<512xf32> to vector<1x512xf32>
    %c1_79 = arith.constant 1 : index
    %c0_80 = arith.constant 0 : index
    %159 = vector.load %arg11[%c1_79, %c0_80] : memref<2x512xf32, #tpu.memory_space<vmem>>, vector<1x512xf32>
    tpu.vector_store %arg11[%c1_79, %c0_80], %158 {strides = array<i32>} : memref<2x512xf32, #tpu.memory_space<vmem>>, vector<1x512xf32>,
    %c0_81 = arith.constant 0 : index
    %c0_82 = arith.constant 0 : index
    %160 = vector.load %arg11[%c0_81, %c0_82] : memref<2x512xf32, #tpu.memory_space<vmem>>, vector<2x512xf32>
    %161 = tpu.iota {dimensions = array<i32: 0>} : vector<512x128xi32>
    %162 = tpu.iota {dimensions = array<i32: 1>} : vector<512x128xi32>
    %c4_i32_83 = arith.constant 4 : i32
    %163 = vector.broadcast %c4_i32_83 : i32 to vector<512x128xi32>
    %164 = arith.muli %162, %163 : vector<512x128xi32>
    %165 = arith.subi %161, %164 : vector<512x128xi32>
    %c0_i32_84 = arith.constant 0 : i32
    %166 = vector.broadcast %c0_i32_84 : i32 to vector<512x128xi32>
    %167 = arith.cmpi sge, %165, %166 : vector<512x128xi32>
    %c4_i32_85 = arith.constant 4 : i32
    %168 = vector.broadcast %c4_i32_85 : i32 to vector<512x128xi32>
    %169 = arith.cmpi slt, %165, %168 : vector<512x128xi32>
    %170 = arith.andi %167, %169 : vector<512x128xi1>
    %cst_86 = arith.constant 1.000000e+00 : f32
    %cst_87 = arith.constant 0.000000e+00 : f32
    %171 = vector.broadcast %cst_86 : f32 to vector<512x128xf32>
    %172 = vector.broadcast %cst_87 : f32 to vector<512x128xf32>
    %173 = arith.select %170, %171, %172 : vector<512x128xi1>, vector<512x128xf32>
    %174 = tpu.iota {dimensions = array<i32: 0>} : vector<128x512xi32>
    %175 = tpu.iota {dimensions = array<i32: 1>} : vector<128x512xi32>
    %c4_i32_88 = arith.constant 4 : i32
    %176 = vector.broadcast %c4_i32_88 : i32 to vector<128x512xi32>
    %177 = arith.muli %174, %176 : vector<128x512xi32>
    %178 = arith.subi %175, %177 : vector<128x512xi32>
    %c0_i32_89 = arith.constant 0 : i32
    %179 = vector.broadcast %c0_i32_89 : i32 to vector<128x512xi32>
    %180 = arith.cmpi sge, %178, %179 : vector<128x512xi32>
    %c4_i32_90 = arith.constant 4 : i32
    %181 = vector.broadcast %c4_i32_90 : i32 to vector<128x512xi32>
    %182 = arith.cmpi slt, %178, %181 : vector<128x512xi32>
    %183 = arith.andi %180, %182 : vector<128x512xi1>
    %cst_91 = arith.constant 1.000000e+00 : f32
    %cst_92 = arith.constant 0.000000e+00 : f32
    %184 = vector.broadcast %cst_91 : f32 to vector<128x512xf32>
    %185 = vector.broadcast %cst_92 : f32 to vector<128x512xf32>
    %186 = arith.select %183, %184, %185 : vector<128x512xi1>, vector<128x512xf32>
    %cst_93 = arith.constant dense<0.000000e+00> : vector<2x128xf32>
    %187 = tpu.matmul %160, %173, %cst_93 {dimension_numbers = #tpu.dot_dimension_numbers<[1], [0], [0], [1], [0, 0, 1, 1], [], []>} : vector<2x512xf32>, vector<512x128xf32>, vector<2x128xf32> -> vector<2x128xf32>
    %cst_94 = arith.constant dense<0.000000e+00> : vector<2x512xf32>
    %188 = tpu.matmul %187, %186, %cst_94 {dimension_numbers = #tpu.dot_dimension_numbers<[1], [0], [0], [1], [0, 0, 1, 1], [], []>} : vector<2x128xf32>, vector<128x512xf32>, vector<2x512xf32> -> vector<2x512xf32>
    %cst_95 = arith.constant 0.010416667 : f32
    %189 = vector.broadcast %cst_95 : f32 to vector<2x512xf32>
    %190 = arith.mulf %188, %189 : vector<2x512xf32>
    %191 = vector.extract_strided_slice %190 {offsets = [0, 0], sizes = [1, 512], strides = [1, 1]} : vector<2x512xf32> to vector<1x512xf32>
    %192 = vector.extract_strided_slice %190 {offsets = [1, 0], sizes = [1, 512], strides = [1, 1]} : vector<2x512xf32> to vector<1x512xf32>
    %193 = arith.mulf %191, %191 : vector<1x512xf32>
    %194 = arith.subf %192, %193 : vector<1x512xf32>
    %cst_96 = arith.constant 0.000000e+00 : f32
    %195 = vector.broadcast %cst_96 : f32 to vector<1x512xf32>
    %196 = arith.maximumf %194, %195 : vector<1x512xf32>
    %cst_97 = arith.constant 9.99999974E-6 : f32
    %197 = vector.broadcast %cst_97 : f32 to vector<1x512xf32>
    %198 = arith.addf %196, %197 : vector<1x512xf32>
    %199 = math.rsqrt %198 : vector<1x512xf32>
    %200 = arith.mulf %151, %199 : vector<1x512xf32>
    %201 = vector.broadcast %191 : vector<1x512xf32> to vector<32x512xf32>
    %202 = arith.subf %150, %201 : vector<32x512xf32>
    %203 = vector.broadcast %200 : vector<1x512xf32> to vector<32x512xf32>
    %204 = arith.mulf %202, %203 : vector<32x512xf32>
    %205 = vector.broadcast %152 : vector<1x512xf32> to vector<32x512xf32>
    %206 = arith.addf %204, %205 : vector<32x512xf32>
    %cst_98 = arith.constant 0.000000e+00 : f32
    %207 = vector.broadcast %cst_98 : f32 to vector<32x512xf32>
    %208 = arith.maximumf %206, %207 : vector<32x512xf32>
    %209 = vector.broadcast %146 : vector<32x1xf32> to vector<32x512xf32>
    %210 = arith.mulf %208, %209 : vector<32x512xf32>
    %c256 = arith.constant 256 : index
    %c0_99 = arith.constant 0 : index
    %211 = vector.load %arg10[%c256, %c0_99] : memref<1792x512xbf16, #tpu.memory_space<vmem>>, vector<512x512xbf16>
    %212 = arith.truncf %210 : vector<32x512xf32> to vector<32x512xbf16>
    %cst_100 = arith.constant dense<0.000000e+00> : vector<32x512xf32>
    %213 = tpu.matmul %212, %211, %cst_100 {dimension_numbers = #tpu.dot_dimension_numbers<[1], [0], [0], [1], [0, 0, 1, 1], [], []>} : vector<32x512xbf16>, vector<512x512xbf16>, vector<32x512xf32> -> vector<32x512xf32>
    %c2_101 = arith.constant 2 : index
    %c0_102 = arith.constant 0 : index
    %214 = vector.load %arg7[%c2_101, %c0_102] : memref<9x512xf32, #tpu.memory_space<vmem>>, vector<1x512xf32>
    %c3_103 = arith.constant 3 : index
    %c0_104 = arith.constant 0 : index
    %215 = vector.load %arg7[%c3_103, %c0_104] : memref<9x512xf32, #tpu.memory_space<vmem>>, vector<1x512xf32>
    %cst_105 = arith.constant dense<0.000000e+00> : vector<512xf32>
    %216 = vector.multi_reduction <add>, %213, %cst_105 [0] : vector<32x512xf32> to vector<512xf32>
    %217 = vector.shape_cast %216 : vector<512xf32> to vector<1x512xf32>
    %c0_106 = arith.constant 0 : index
    %c0_107 = arith.constant 0 : index
    %218 = vector.load %arg11[%c0_106, %c0_107] : memref<2x512xf32, #tpu.memory_space<vmem>>, vector<1x512xf32>
    tpu.vector_store %arg11[%c0_106, %c0_107], %217 {strides = array<i32>} : memref<2x512xf32, #tpu.memory_space<vmem>>, vector<1x512xf32>,
    %219 = arith.mulf %213, %213 : vector<32x512xf32>
    %cst_108 = arith.constant dense<0.000000e+00> : vector<512xf32>
    %220 = vector.multi_reduction <add>, %219, %cst_108 [0] : vector<32x512xf32> to vector<512xf32>
    %221 = vector.shape_cast %220 : vector<512xf32> to vector<1x512xf32>
    %c1_109 = arith.constant 1 : index
    %c0_110 = arith.constant 0 : index
    %222 = vector.load %arg11[%c1_109, %c0_110] : memref<2x512xf32, #tpu.memory_space<vmem>>, vector<1x512xf32>
    tpu.vector_store %arg11[%c1_109, %c0_110], %221 {strides = array<i32>} : memref<2x512xf32, #tpu.memory_space<vmem>>, vector<1x512xf32>,
    %c0_111 = arith.constant 0 : index
    %c0_112 = arith.constant 0 : index
    %223 = vector.load %arg11[%c0_111, %c0_112] : memref<2x512xf32, #tpu.memory_space<vmem>>, vector<2x512xf32>
    %224 = tpu.iota {dimensions = array<i32: 0>} : vector<512x64xi32>
    %225 = tpu.iota {dimensions = array<i32: 1>} : vector<512x64xi32>
    %c8_i32_113 = arith.constant 8 : i32
    %226 = vector.broadcast %c8_i32_113 : i32 to vector<512x64xi32>
    %227 = arith.muli %225, %226 : vector<512x64xi32>
    %228 = arith.subi %224, %227 : vector<512x64xi32>
    %c0_i32_114 = arith.constant 0 : i32
    %229 = vector.broadcast %c0_i32_114 : i32 to vector<512x64xi32>
    %230 = arith.cmpi sge, %228, %229 : vector<512x64xi32>
    %c8_i32_115 = arith.constant 8 : i32
    %231 = vector.broadcast %c8_i32_115 : i32 to vector<512x64xi32>
    %232 = arith.cmpi slt, %228, %231 : vector<512x64xi32>
    %233 = arith.andi %230, %232 : vector<512x64xi1>
    %cst_116 = arith.constant 1.000000e+00 : f32
    %cst_117 = arith.constant 0.000000e+00 : f32
    %234 = vector.broadcast %cst_116 : f32 to vector<512x64xf32>
    %235 = vector.broadcast %cst_117 : f32 to vector<512x64xf32>
    %236 = arith.select %233, %234, %235 : vector<512x64xi1>, vector<512x64xf32>
    %237 = tpu.iota {dimensions = array<i32: 0>} : vector<64x512xi32>
    %238 = tpu.iota {dimensions = array<i32: 1>} : vector<64x512xi32>
    %c8_i32_118 = arith.constant 8 : i32
    %239 = vector.broadcast %c8_i32_118 : i32 to vector<64x512xi32>
    %240 = arith.muli %237, %239 : vector<64x512xi32>
    %241 = arith.subi %238, %240 : vector<64x512xi32>
    %c0_i32_119 = arith.constant 0 : i32
    %242 = vector.broadcast %c0_i32_119 : i32 to vector<64x512xi32>
    %243 = arith.cmpi sge, %241, %242 : vector<64x512xi32>
    %c8_i32_120 = arith.constant 8 : i32
    %244 = vector.broadcast %c8_i32_120 : i32 to vector<64x512xi32>
    %245 = arith.cmpi slt, %241, %244 : vector<64x512xi32>
    %246 = arith.andi %243, %245 : vector<64x512xi1>
    %cst_121 = arith.constant 1.000000e+00 : f32
    %cst_122 = arith.constant 0.000000e+00 : f32
    %247 = vector.broadcast %cst_121 : f32 to vector<64x512xf32>
    %248 = vector.broadcast %cst_122 : f32 to vector<64x512xf32>
    %249 = arith.select %246, %247, %248 : vector<64x512xi1>, vector<64x512xf32>
    %cst_123 = arith.constant dense<0.000000e+00> : vector<2x64xf32>
    %250 = tpu.matmul %223, %236, %cst_123 {dimension_numbers = #tpu.dot_dimension_numbers<[1], [0], [0], [1], [0, 0, 1, 1], [], []>} : vector<2x512xf32>, vector<512x64xf32>, vector<2x64xf32> -> vector<2x64xf32>
    %cst_124 = arith.constant dense<0.000000e+00> : vector<2x512xf32>
    %251 = tpu.matmul %250, %249, %cst_124 {dimension_numbers = #tpu.dot_dimension_numbers<[1], [0], [0], [1], [0, 0, 1, 1], [], []>} : vector<2x64xf32>, vector<64x512xf32>, vector<2x512xf32> -> vector<2x512xf32>
    %cst_125 = arith.constant 0.00520833349 : f32
    %252 = vector.broadcast %cst_125 : f32 to vector<2x512xf32>
    %253 = arith.mulf %251, %252 : vector<2x512xf32>
    %254 = vector.extract_strided_slice %253 {offsets = [0, 0], sizes = [1, 512], strides = [1, 1]} : vector<2x512xf32> to vector<1x512xf32>
    %255 = vector.extract_strided_slice %253 {offsets = [1, 0], sizes = [1, 512], strides = [1, 1]} : vector<2x512xf32> to vector<1x512xf32>
    %256 = arith.mulf %254, %254 : vector<1x512xf32>
    %257 = arith.subf %255, %256 : vector<1x512xf32>
    %cst_126 = arith.constant 0.000000e+00 : f32
    %258 = vector.broadcast %cst_126 : f32 to vector<1x512xf32>
    %259 = arith.maximumf %257, %258 : vector<1x512xf32>
    %cst_127 = arith.constant 9.99999974E-6 : f32
    %260 = vector.broadcast %cst_127 : f32 to vector<1x512xf32>
    %261 = arith.addf %259, %260 : vector<1x512xf32>
    %262 = math.rsqrt %261 : vector<1x512xf32>
    %263 = arith.mulf %214, %262 : vector<1x512xf32>
    %264 = vector.broadcast %254 : vector<1x512xf32> to vector<32x512xf32>
    %265 = arith.subf %213, %264 : vector<32x512xf32>
    %266 = vector.broadcast %263 : vector<1x512xf32> to vector<32x512xf32>
    %267 = arith.mulf %265, %266 : vector<32x512xf32>
    %268 = vector.broadcast %215 : vector<1x512xf32> to vector<32x512xf32>
    %269 = arith.addf %267, %268 : vector<32x512xf32>
    %cst_128 = arith.constant 0.000000e+00 : f32
    %270 = vector.broadcast %cst_128 : f32 to vector<32x512xf32>
    %271 = arith.maximumf %269, %270 : vector<32x512xf32>
    %272 = vector.broadcast %146 : vector<32x1xf32> to vector<32x512xf32>
    %273 = arith.mulf %271, %272 : vector<32x512xf32>
    %c768 = arith.constant 768 : index
    %c0_129 = arith.constant 0 : index
    %274 = vector.load %arg10[%c768, %c0_129] : memref<1792x512xbf16, #tpu.memory_space<vmem>>, vector<512x512xbf16>
    %275 = arith.truncf %273 : vector<32x512xf32> to vector<32x512xbf16>
    %cst_130 = arith.constant dense<0.000000e+00> : vector<32x512xf32>
    %276 = tpu.matmul %275, %274, %cst_130 {dimension_numbers = #tpu.dot_dimension_numbers<[1], [0], [0], [1], [0, 0, 1, 1], [], []>} : vector<32x512xbf16>, vector<512x512xbf16>, vector<32x512xf32> -> vector<32x512xf32>
    %c4_131 = arith.constant 4 : index
    %c0_132 = arith.constant 0 : index
    %277 = vector.load %arg7[%c4_131, %c0_132] : memref<9x512xf32, #tpu.memory_space<vmem>>, vector<1x512xf32>
    %c5 = arith.constant 5 : index
    %c0_133 = arith.constant 0 : index
    %278 = vector.load %arg7[%c5, %c0_133] : memref<9x512xf32, #tpu.memory_space<vmem>>, vector<1x512xf32>
    %cst_134 = arith.constant dense<0.000000e+00> : vector<512xf32>
    %279 = vector.multi_reduction <add>, %276, %cst_134 [0] : vector<32x512xf32> to vector<512xf32>
    %280 = vector.shape_cast %279 : vector<512xf32> to vector<1x512xf32>
    %c0_135 = arith.constant 0 : index
    %c0_136 = arith.constant 0 : index
    %281 = vector.load %arg11[%c0_135, %c0_136] : memref<2x512xf32, #tpu.memory_space<vmem>>, vector<1x512xf32>
    tpu.vector_store %arg11[%c0_135, %c0_136], %280 {strides = array<i32>} : memref<2x512xf32, #tpu.memory_space<vmem>>, vector<1x512xf32>,
    %282 = arith.mulf %276, %276 : vector<32x512xf32>
    %cst_137 = arith.constant dense<0.000000e+00> : vector<512xf32>
    %283 = vector.multi_reduction <add>, %282, %cst_137 [0] : vector<32x512xf32> to vector<512xf32>
    %284 = vector.shape_cast %283 : vector<512xf32> to vector<1x512xf32>
    %c1_138 = arith.constant 1 : index
    %c0_139 = arith.constant 0 : index
    %285 = vector.load %arg11[%c1_138, %c0_139] : memref<2x512xf32, #tpu.memory_space<vmem>>, vector<1x512xf32>
    tpu.vector_store %arg11[%c1_138, %c0_139], %284 {strides = array<i32>} : memref<2x512xf32, #tpu.memory_space<vmem>>, vector<1x512xf32>,
    %c0_140 = arith.constant 0 : index
    %c0_141 = arith.constant 0 : index
    %286 = vector.load %arg11[%c0_140, %c0_141] : memref<2x512xf32, #tpu.memory_space<vmem>>, vector<2x512xf32>
    %287 = tpu.iota {dimensions = array<i32: 0>} : vector<512x32xi32>
    %288 = tpu.iota {dimensions = array<i32: 1>} : vector<512x32xi32>
    %c16_i32 = arith.constant 16 : i32
    %289 = vector.broadcast %c16_i32 : i32 to vector<512x32xi32>
    %290 = arith.muli %288, %289 : vector<512x32xi32>
    %291 = arith.subi %287, %290 : vector<512x32xi32>
    %c0_i32_142 = arith.constant 0 : i32
    %292 = vector.broadcast %c0_i32_142 : i32 to vector<512x32xi32>
    %293 = arith.cmpi sge, %291, %292 : vector<512x32xi32>
    %c16_i32_143 = arith.constant 16 : i32
    %294 = vector.broadcast %c16_i32_143 : i32 to vector<512x32xi32>
    %295 = arith.cmpi slt, %291, %294 : vector<512x32xi32>
    %296 = arith.andi %293, %295 : vector<512x32xi1>
    %cst_144 = arith.constant 1.000000e+00 : f32
    %cst_145 = arith.constant 0.000000e+00 : f32
    %297 = vector.broadcast %cst_144 : f32 to vector<512x32xf32>
    %298 = vector.broadcast %cst_145 : f32 to vector<512x32xf32>
    %299 = arith.select %296, %297, %298 : vector<512x32xi1>, vector<512x32xf32>
    %300 = tpu.iota {dimensions = array<i32: 0>} : vector<32x512xi32>
    %301 = tpu.iota {dimensions = array<i32: 1>} : vector<32x512xi32>
    %c16_i32_146 = arith.constant 16 : i32
    %302 = vector.broadcast %c16_i32_146 : i32 to vector<32x512xi32>
    %303 = arith.muli %300, %302 : vector<32x512xi32>
    %304 = arith.subi %301, %303 : vector<32x512xi32>
    %c0_i32_147 = arith.constant 0 : i32
    %305 = vector.broadcast %c0_i32_147 : i32 to vector<32x512xi32>
    %306 = arith.cmpi sge, %304, %305 : vector<32x512xi32>
    %c16_i32_148 = arith.constant 16 : i32
    %307 = vector.broadcast %c16_i32_148 : i32 to vector<32x512xi32>
    %308 = arith.cmpi slt, %304, %307 : vector<32x512xi32>
    %309 = arith.andi %306, %308 : vector<32x512xi1>
    %cst_149 = arith.constant 1.000000e+00 : f32
    %cst_150 = arith.constant 0.000000e+00 : f32
    %310 = vector.broadcast %cst_149 : f32 to vector<32x512xf32>
    %311 = vector.broadcast %cst_150 : f32 to vector<32x512xf32>
    %312 = arith.select %309, %310, %311 : vector<32x512xi1>, vector<32x512xf32>
    %cst_151 = arith.constant dense<0.000000e+00> : vector<2x32xf32>
    %313 = tpu.matmul %286, %299, %cst_151 {dimension_numbers = #tpu.dot_dimension_numbers<[1], [0], [0], [1], [0, 0, 1, 1], [], []>} : vector<2x512xf32>, vector<512x32xf32>, vector<2x32xf32> -> vector<2x32xf32>
    %cst_152 = arith.constant dense<0.000000e+00> : vector<2x512xf32>
    %314 = tpu.matmul %313, %312, %cst_152 {dimension_numbers = #tpu.dot_dimension_numbers<[1], [0], [0], [1], [0, 0, 1, 1], [], []>} : vector<2x32xf32>, vector<32x512xf32>, vector<2x512xf32> -> vector<2x512xf32>
    %cst_153 = arith.constant 0.00260416674 : f32
    %315 = vector.broadcast %cst_153 : f32 to vector<2x512xf32>
    %316 = arith.mulf %314, %315 : vector<2x512xf32>
    %317 = vector.extract_strided_slice %316 {offsets = [0, 0], sizes = [1, 512], strides = [1, 1]} : vector<2x512xf32> to vector<1x512xf32>
    %318 = vector.extract_strided_slice %316 {offsets = [1, 0], sizes = [1, 512], strides = [1, 1]} : vector<2x512xf32> to vector<1x512xf32>
    %319 = arith.mulf %317, %317 : vector<1x512xf32>
    %320 = arith.subf %318, %319 : vector<1x512xf32>
    %cst_154 = arith.constant 0.000000e+00 : f32
    %321 = vector.broadcast %cst_154 : f32 to vector<1x512xf32>
    %322 = arith.maximumf %320, %321 : vector<1x512xf32>
    %cst_155 = arith.constant 9.99999974E-6 : f32
    %323 = vector.broadcast %cst_155 : f32 to vector<1x512xf32>
    %324 = arith.addf %322, %323 : vector<1x512xf32>
    %325 = math.rsqrt %324 : vector<1x512xf32>
    %326 = arith.mulf %277, %325 : vector<1x512xf32>
    %327 = vector.broadcast %317 : vector<1x512xf32> to vector<32x512xf32>
    %328 = arith.subf %276, %327 : vector<32x512xf32>
    %329 = vector.broadcast %326 : vector<1x512xf32> to vector<32x512xf32>
    %330 = arith.mulf %328, %329 : vector<32x512xf32>
    %331 = vector.broadcast %278 : vector<1x512xf32> to vector<32x512xf32>
    %332 = arith.addf %330, %331 : vector<32x512xf32>
    %cst_156 = arith.constant 0.000000e+00 : f32
    %333 = vector.broadcast %cst_156 : f32 to vector<32x512xf32>
    %334 = arith.maximumf %332, %333 : vector<32x512xf32>
    %335 = vector.broadcast %146 : vector<32x1xf32> to vector<32x512xf32>
    %336 = arith.mulf %334, %335 : vector<32x512xf32>
    %c1280 = arith.constant 1280 : index
    %c0_157 = arith.constant 0 : index
    %337 = vector.load %arg10[%c1280, %c0_157] : memref<1792x512xbf16, #tpu.memory_space<vmem>>, vector<512x512xbf16>
    %338 = arith.truncf %336 : vector<32x512xf32> to vector<32x512xbf16>
    %cst_158 = arith.constant dense<0.000000e+00> : vector<32x512xf32>
    %339 = tpu.matmul %338, %337, %cst_158 {dimension_numbers = #tpu.dot_dimension_numbers<[1], [0], [0], [1], [0, 0, 1, 1], [], []>} : vector<32x512xbf16>, vector<512x512xbf16>, vector<32x512xf32> -> vector<32x512xf32>
    %c6 = arith.constant 6 : index
    %c0_159 = arith.constant 0 : index
    %340 = vector.load %arg7[%c6, %c0_159] : memref<9x512xf32, #tpu.memory_space<vmem>>, vector<1x512xf32>
    %c7 = arith.constant 7 : index
    %c0_160 = arith.constant 0 : index
    %341 = vector.load %arg7[%c7, %c0_160] : memref<9x512xf32, #tpu.memory_space<vmem>>, vector<1x512xf32>
    %cst_161 = arith.constant dense<0.000000e+00> : vector<512xf32>
    %342 = vector.multi_reduction <add>, %339, %cst_161 [0] : vector<32x512xf32> to vector<512xf32>
    %343 = vector.shape_cast %342 : vector<512xf32> to vector<1x512xf32>
    %c0_162 = arith.constant 0 : index
    %c0_163 = arith.constant 0 : index
    %344 = vector.load %arg11[%c0_162, %c0_163] : memref<2x512xf32, #tpu.memory_space<vmem>>, vector<1x512xf32>
    tpu.vector_store %arg11[%c0_162, %c0_163], %343 {strides = array<i32>} : memref<2x512xf32, #tpu.memory_space<vmem>>, vector<1x512xf32>,
    %345 = arith.mulf %339, %339 : vector<32x512xf32>
    %cst_164 = arith.constant dense<0.000000e+00> : vector<512xf32>
    %346 = vector.multi_reduction <add>, %345, %cst_164 [0] : vector<32x512xf32> to vector<512xf32>
    %347 = vector.shape_cast %346 : vector<512xf32> to vector<1x512xf32>
    %c1_165 = arith.constant 1 : index
    %c0_166 = arith.constant 0 : index
    %348 = vector.load %arg11[%c1_165, %c0_166] : memref<2x512xf32, #tpu.memory_space<vmem>>, vector<1x512xf32>
    tpu.vector_store %arg11[%c1_165, %c0_166], %347 {strides = array<i32>} : memref<2x512xf32, #tpu.memory_space<vmem>>, vector<1x512xf32>,
    %c0_167 = arith.constant 0 : index
    %c0_168 = arith.constant 0 : index
    %349 = vector.load %arg11[%c0_167, %c0_168] : memref<2x512xf32, #tpu.memory_space<vmem>>, vector<2x512xf32>
    %350 = tpu.iota {dimensions = array<i32: 0>} : vector<512x16xi32>
    %351 = tpu.iota {dimensions = array<i32: 1>} : vector<512x16xi32>
    %c32_i32 = arith.constant 32 : i32
    %352 = vector.broadcast %c32_i32 : i32 to vector<512x16xi32>
    %353 = arith.muli %351, %352 : vector<512x16xi32>
    %354 = arith.subi %350, %353 : vector<512x16xi32>
    %c0_i32_169 = arith.constant 0 : i32
    %355 = vector.broadcast %c0_i32_169 : i32 to vector<512x16xi32>
    %356 = arith.cmpi sge, %354, %355 : vector<512x16xi32>
    %c32_i32_170 = arith.constant 32 : i32
    %357 = vector.broadcast %c32_i32_170 : i32 to vector<512x16xi32>
    %358 = arith.cmpi slt, %354, %357 : vector<512x16xi32>
    %359 = arith.andi %356, %358 : vector<512x16xi1>
    %cst_171 = arith.constant 1.000000e+00 : f32
    %cst_172 = arith.constant 0.000000e+00 : f32
    %360 = vector.broadcast %cst_171 : f32 to vector<512x16xf32>
    %361 = vector.broadcast %cst_172 : f32 to vector<512x16xf32>
    %362 = arith.select %359, %360, %361 : vector<512x16xi1>, vector<512x16xf32>
    %363 = tpu.iota {dimensions = array<i32: 0>} : vector<16x512xi32>
    %364 = tpu.iota {dimensions = array<i32: 1>} : vector<16x512xi32>
    %c32_i32_173 = arith.constant 32 : i32
    %365 = vector.broadcast %c32_i32_173 : i32 to vector<16x512xi32>
    %366 = arith.muli %363, %365 : vector<16x512xi32>
    %367 = arith.subi %364, %366 : vector<16x512xi32>
    %c0_i32_174 = arith.constant 0 : i32
    %368 = vector.broadcast %c0_i32_174 : i32 to vector<16x512xi32>
    %369 = arith.cmpi sge, %367, %368 : vector<16x512xi32>
    %c32_i32_175 = arith.constant 32 : i32
    %370 = vector.broadcast %c32_i32_175 : i32 to vector<16x512xi32>
    %371 = arith.cmpi slt, %367, %370 : vector<16x512xi32>
    %372 = arith.andi %369, %371 : vector<16x512xi1>
    %cst_176 = arith.constant 1.000000e+00 : f32
    %cst_177 = arith.constant 0.000000e+00 : f32
    %373 = vector.broadcast %cst_176 : f32 to vector<16x512xf32>
    %374 = vector.broadcast %cst_177 : f32 to vector<16x512xf32>
    %375 = arith.select %372, %373, %374 : vector<16x512xi1>, vector<16x512xf32>
    %cst_178 = arith.constant dense<0.000000e+00> : vector<2x16xf32>
    %376 = tpu.matmul %349, %362, %cst_178 {dimension_numbers = #tpu.dot_dimension_numbers<[1], [0], [0], [1], [0, 0, 1, 1], [], []>} : vector<2x512xf32>, vector<512x16xf32>, vector<2x16xf32> -> vector<2x16xf32>
    %cst_179 = arith.constant dense<0.000000e+00> : vector<2x512xf32>
    %377 = tpu.matmul %376, %375, %cst_179 {dimension_numbers = #tpu.dot_dimension_numbers<[1], [0], [0], [1], [0, 0, 1, 1], [], []>} : vector<2x16xf32>, vector<16x512xf32>, vector<2x512xf32> -> vector<2x512xf32>
    %cst_180 = arith.constant 0.00130208337 : f32
    %378 = vector.broadcast %cst_180 : f32 to vector<2x512xf32>
    %379 = arith.mulf %377, %378 : vector<2x512xf32>
    %380 = vector.extract_strided_slice %379 {offsets = [0, 0], sizes = [1, 512], strides = [1, 1]} : vector<2x512xf32> to vector<1x512xf32>
    %381 = vector.extract_strided_slice %379 {offsets = [1, 0], sizes = [1, 512], strides = [1, 1]} : vector<2x512xf32> to vector<1x512xf32>
    %382 = arith.mulf %380, %380 : vector<1x512xf32>
    %383 = arith.subf %381, %382 : vector<1x512xf32>
    %cst_181 = arith.constant 0.000000e+00 : f32
    %384 = vector.broadcast %cst_181 : f32 to vector<1x512xf32>
    %385 = arith.maximumf %383, %384 : vector<1x512xf32>
    %cst_182 = arith.constant 9.99999974E-6 : f32
    %386 = vector.broadcast %cst_182 : f32 to vector<1x512xf32>
    %387 = arith.addf %385, %386 : vector<1x512xf32>
    %388 = math.rsqrt %387 : vector<1x512xf32>
    %389 = arith.mulf %340, %388 : vector<1x512xf32>
    %390 = vector.broadcast %380 : vector<1x512xf32> to vector<32x512xf32>
    %391 = arith.subf %339, %390 : vector<32x512xf32>
    %392 = vector.broadcast %389 : vector<1x512xf32> to vector<32x512xf32>
    %393 = arith.mulf %391, %392 : vector<32x512xf32>
    %394 = vector.broadcast %341 : vector<1x512xf32> to vector<32x512xf32>
    %395 = arith.addf %393, %394 : vector<32x512xf32>
    %cst_183 = arith.constant 0.000000e+00 : f32
    %396 = vector.broadcast %cst_183 : f32 to vector<32x512xf32>
    %397 = arith.maximumf %395, %396 : vector<32x512xf32>
    %398 = vector.broadcast %146 : vector<32x1xf32> to vector<32x512xf32>
    %399 = arith.mulf %397, %398 : vector<32x512xf32>
    %c8 = arith.constant 8 : index
    %c0_184 = arith.constant 0 : index
    %400 = vector.load %arg7[%c8, %c0_184] : memref<9x512xf32, #tpu.memory_space<vmem>>, vector<1x128xf32>
    %401 = arith.truncf %399 : vector<32x512xf32> to vector<32x512xbf16>
    %c0_185 = arith.constant 0 : index
    %c0_186 = arith.constant 0 : index
    %402 = vector.load %arg6[%c0_185, %c0_186] : memref<512x128xbf16, #tpu.memory_space<vmem>>, vector<512x128xbf16>
    %cst_187 = arith.constant dense<0.000000e+00> : vector<32x128xf32>
    %403 = tpu.matmul %401, %402, %cst_187 {dimension_numbers = #tpu.dot_dimension_numbers<[1], [0], [0], [1], [0, 0, 1, 1], [], []>} : vector<32x512xbf16>, vector<512x128xbf16>, vector<32x128xf32> -> vector<32x128xf32>
    %404 = vector.broadcast %400 : vector<1x128xf32> to vector<32x128xf32>
    %405 = arith.addf %403, %404 : vector<32x128xf32>
    %406 = math.tanh %405 : vector<32x128xf32>
    %c0_188 = arith.constant 0 : index
    %c0_189 = arith.constant 0 : index
    %407 = vector.load %arg9[%c0_188, %c0_189] : memref<32x128xf32, #tpu.memory_space<vmem>>, vector<32x128xf32>
    tpu.vector_store %arg9[%c0_188, %c0_189], %406 {strides = array<i32>} : memref<32x128xf32, #tpu.memory_space<vmem>>, vector<32x128xf32>,
    return
  }
}

</mosaic_0001>

<llo_original>
// kernel: tpu_custom_call.1
$region0: #{tpu_custom_call.1}
  #allocation0 [shape = 'u32[]', space=smem, size = 0x4, offset = 0x4, fixed_abs, tag = 'smem constant byte address 0x4 - core index']
  #allocation1 [shape = 'u32[144,128]{1,0:T(1,128)}', space=vmem, size = 0x12000, scoped, tag = 'internal scratch']
  #allocation2 [shape = 'bf16[1792,512]{1,0:T(16,128)(2,1)}', space=vmem, size = 0x1c0000, scoped, tag = 'scratch operand']
  #allocation3 [shape = 'f32[2,512]{1,0:T(2,128)}', space=vmem, size = 0x1000, scoped, tag = 'scratch operand']
  #allocation4 [shape = 's32[1]{0}', space=sflag, size = 0x4, scoped, tag = 'scratch operand']
  #allocation20 [shape = 's32[]', space=sflag, size = 0x4, offset = 0, fixed_abs, tag = 'sflag constant byte address 0x0 - dummy sync flag']
  %s0 = inlined_call_operand.hbm [shape: f32[32,64], index: 0, kind: input, shape index: {}]
  %s1 = inlined_call_operand.hbm [shape: f32[32,256], index: 1, kind: input, shape index: {}]
  %s2 = inlined_call_operand.hbm [shape: bf16[192,128], index: 2, kind: input, shape index: {}]
  %s3 = inlined_call_operand.hbm [shape: bf16[128,128], index: 3, kind: input, shape index: {}]
  %s4 = inlined_call_operand.hbm [shape: f32[5,128], index: 4, kind: input, shape index: {}]
  %s5 = inlined_call_operand.hbm [shape: bf16[1792,512], index: 5, kind: input, shape index: {}]
  %s6 = inlined_call_operand.hbm [shape: bf16[512,128], index: 6, kind: input, shape index: {}]
  %s7 = inlined_call_operand.hbm [shape: f32[9,512], index: 7, kind: input, shape index: {}]
  %s8 = inlined_call_operand.hbm [shape: f32[32,128], index: 8, kind: output, shape index: {0}]
  %s9 = inlined_call_operand.hbm [shape: f32[32,128], index: 9, kind: output, shape index: {1}]
  %10 = xla_tuple %s8, %s9
  %s11 = sld [smem:[#allocation0]]
  $region74: #{tpu_custom_call.1} parent=0
    _
  %s13 = ssub.s32 1, %s11
  %s14 = scalar_select 0, %s13, %s11
  $region1: #{tpu_custom_call.1} parent=0
    #allocation5 [shape = 'u8[16384]{0}', space=vmem, size = 0x4000, scoped, tag = 'input window, operand 0, single buffered']
    #allocation6 [shape = 's32[1]{0}', space=sflag, size = 0x4, scoped, tag = 'scoped memory for tpu_custom_call.1']
    #allocation7 [shape = 's32[1]{0}', space=sflag, size = 0x4, scoped, tag = 'scoped memory for tpu_custom_call.1']
    #allocation8 [shape = 'u8[32768]{0}', space=vmem, size = 0x8000, scoped, tag = 'input window, operand 1, single buffered']
    #allocation9 [shape = 's32[1]{0}', space=sflag, size = 0x4, scoped, tag = 'scoped memory for tpu_custom_call.1']
    #allocation10 [shape = 'u8[49152]{0}', space=vmem, size = 0xc000, scoped, tag = 'input window, operand 2, single buffered']
    #allocation11 [shape = 'u8[32768]{0}', space=vmem, size = 0x8000, scoped, tag = 'input window, operand 3, single buffered']
    #allocation12 [shape = 's32[1]{0}', space=sflag, size = 0x4, scoped, tag = 'scoped memory for tpu_custom_call.1']
    #allocation13 [shape = 'u8[4096]{0}', space=vmem, size = 0x1000, scoped, tag = 'input window, operand 4, single buffered']
    #allocation14 [shape = 'u8[131072]{0}', space=vmem, size = 0x20000, scoped, tag = 'input window, operand 6, single buffered']
    #allocation15 [shape = 's32[1]{0}', space=sflag, size = 0x4, scoped, tag = 'scoped memory for tpu_custom_call.1']
    #allocation16 [shape = 'u8[32768]{0}', space=vmem, size = 0x8000, scoped, tag = 'input window, operand 7, single buffered']
    #allocation17 [shape = 'u8[16384]{0}', space=vmem, size = 0x4000, scoped, tag = 'output window, operand 0, single buffered']
    #allocation18 [shape = 'u8[16384]{0}', space=vmem, size = 0x4000, scoped, tag = 'output window, operand 1, single buffered']
    #allocation19 [shape = 's32[1]{0}', space=sflag, size = 0x4, scoped, tag = 'scoped memory for tpu_custom_call.1']
    #allocation21 [shape = 'u32[9]{0}', space=smem, size = 0x24, scoped, tag = 'DMA stride descriptor']
    %15 = vsyncpa [#allocation6], 0
    %16 = vsyncpa [#allocation9], 0
    %17 = vsyncpa [#allocation12], 0
    %18 = vsyncpa [#allocation15], 0
    %19 = vsyncpa [#allocation7], 0
    %20 = vsyncpa [#allocation19], 0
    // Predicated region
    $region2: #{tpu_custom_call.1} parent=1 // pred_check
      _
    $region3: #{tpu_custom_call.1} parent=1 // pred_check_branch
      %22 = sbr.rel (0) target = $region5
    $region4: #{tpu_custom_call.1} parent=1 // pred_region
      %s24 = ssub.s32 512, 512
      %25 = vsyncadd [#allocation6], %s24
      %s26 = sshll.u32 [#allocation5], 4
      %s27 = int_to_ptr.vmem [resolvable:$true] %s26
      %32 = dma.hbm_to_vmem [thread:$0]  %s0, 512, %s27, [#allocation6], 128, 128, 8
    $region5: #{tpu_custom_call.1} parent=1 // pred_fallthru
      _
    // Predicated region
    $region6: #{tpu_custom_call.1} parent=1 // pred_check
      _
    $region7: #{tpu_custom_call.1} parent=1 // pred_check_branch
      %34 = sbr.rel (0) target = $region9
    $region8: #{tpu_custom_call.1} parent=1 // pred_region
      %s36 = ssub.s32 1024, 1024
      %37 = vsyncadd [#allocation9], %s36
      %s38 = sshll.u32 [#allocation8], 4
      %s39 = int_to_ptr.vmem [resolvable:$true] %s38
      %44 = dma.hbm_to_vmem [thread:$0]  %s1, 1024, %s39, [#allocation9], 256, 256, 16
    $region9: #{tpu_custom_call.1} parent=1 // pred_fallthru
      _
    // Predicated region
    $region10: #{tpu_custom_call.1} parent=1 // pred_check
      _
    $region11: #{tpu_custom_call.1} parent=1 // pred_check_branch
      %46 = sbr.rel (0) target = $region13
    $region12: #{tpu_custom_call.1} parent=1 // pred_region
      %s48 = ssub.s32 1536, 1536
      %49 = vsyncadd [#allocation9], %s48
      %s50 = sshll.u32 [#allocation10], 4
      %s51 = int_to_ptr.vmem [resolvable:$true] %s50
      %56 = dma.hbm_to_vmem [thread:$0]  %s2, 1536, %s51, [#allocation9], 64, 64, 4
    $region13: #{tpu_custom_call.1} parent=1 // pred_fallthru
      _
    // Predicated region
    $region14: #{tpu_custom_call.1} parent=1 // pred_check
      _
    $region15: #{tpu_custom_call.1} parent=1 // pred_check_branch
      %58 = sbr.rel (0) target = $region17
    $region16: #{tpu_custom_call.1} parent=1 // pred_region
      %s60 = ssub.s32 1024, 1024
      %61 = vsyncadd [#allocation12], %s60
      %s62 = sshll.u32 [#allocation11], 4
      %s63 = int_to_ptr.vmem [resolvable:$true] %s62
      %68 = dma.hbm_to_vmem [thread:$0]  %s3, 1024, %s63, [#allocation12], 64, 64, 4
    $region17: #{tpu_custom_call.1} parent=1 // pred_fallthru
      _
    // Predicated region
    $region18: #{tpu_custom_call.1} parent=1 // pred_check
      _
    $region19: #{tpu_custom_call.1} parent=1 // pred_check_branch
      %70 = sbr.rel (0) target = $region21
    $region20: #{tpu_custom_call.1} parent=1 // pred_region
      %s72 = ssub.s32 128, 128
      %73 = vsyncadd [#allocation12], %s72
      %s75 = sshll.u32 [#allocation13], 4
      %s76 = int_to_ptr.vmem [resolvable:$true] %s75
      %78 = dma.hbm_to_vmem [thread:$0]  %s4, 128, %s76, [#allocation12]
    $region21: #{tpu_custom_call.1} parent=1 // pred_fallthru
      _
    // Predicated region
    $region22: #{tpu_custom_call.1} parent=1 // pred_check
      _
    $region23: #{tpu_custom_call.1} parent=1 // pred_check_branch
      %80 = sbr.rel (0) target = $region25
    $region24: #{tpu_custom_call.1} parent=1 // pred_region
      %s82 = ssub.s32 4096, 4096
      %83 = vsyncadd [#allocation15], %s82
      %s84 = sshll.u32 [#allocation14], 4
      %s85 = int_to_ptr.vmem [resolvable:$true] %s84
      %90 = dma.hbm_to_vmem [thread:$0]  %s6, 4096, %s85, [#allocation15], 64, 64, 4
    $region25: #{tpu_custom_call.1} parent=1 // pred_fallthru
      _
    // Predicated region
    $region26: #{tpu_custom_call.1} parent=1 // pred_check
      _
    $region27: #{tpu_custom_call.1} parent=1 // pred_check_branch
      %92 = sbr.rel (0) target = $region29
    $region28: #{tpu_custom_call.1} parent=1 // pred_region
      %s94 = ssub.s32 1024, 1024
      %95 = vsyncadd [#allocation15], %s94
      %s96 = sshll.u32 [#allocation16], 4
      %s97 = int_to_ptr.vmem [resolvable:$true] %s96
      %102 = dma.hbm_to_vmem [thread:$0]  %s7, 1024, %s97, [#allocation15], 512, 512, 32
    $region29: #{tpu_custom_call.1} parent=1 // pred_fallthru
      _
    // Predicated region
    $region30: #{tpu_custom_call.1} parent=1 // pred_check
      _
    $region31: #{tpu_custom_call.1} parent=1 // pred_check_branch
      %104 = sbr.rel (0) target = $region33
    $region32: #{tpu_custom_call.1} parent=1 // pred_region
      %105 = dma.done [#allocation6], 512
    $region33: #{tpu_custom_call.1} parent=1 // pred_fallthru
      _
    // Predicated region
    $region34: #{tpu_custom_call.1} parent=1 // pred_check
      _
    $region35: #{tpu_custom_call.1} parent=1 // pred_check_branch
      %107 = sbr.rel (0) target = $region37
    $region36: #{tpu_custom_call.1} parent=1 // pred_region
      %108 = dma.done [#allocation9], 1024
    $region37: #{tpu_custom_call.1} parent=1 // pred_fallthru
      _
    // Predicated region
    $region38: #{tpu_custom_call.1} parent=1 // pred_check
      _
    $region39: #{tpu_custom_call.1} parent=1 // pred_check_branch
      %110 = sbr.rel (0) target = $region41
    $region40: #{tpu_custom_call.1} parent=1 // pred_region
      %111 = dma.done [#allocation9], 1536
    $region41: #{tpu_custom_call.1} parent=1 // pred_fallthru
      _
    // Predicated region
    $region42: #{tpu_custom_call.1} parent=1 // pred_check
      _
    $region43: #{tpu_custom_call.1} parent=1 // pred_check_branch
      %113 = sbr.rel (0) target = $region45
    $region44: #{tpu_custom_call.1} parent=1 // pred_region
      %114 = dma.done [#allocation12], 1024
    $region45: #{tpu_custom_call.1} parent=1 // pred_fallthru
      _
    // Predicated region
    $region46: #{tpu_custom_call.1} parent=1 // pred_check
      _
    $region47: #{tpu_custom_call.1} parent=1 // pred_check_branch
      %116 = sbr.rel (0) target = $region49
    $region48: #{tpu_custom_call.1} parent=1 // pred_region
      %117 = dma.done [#allocation12], 128
    $region49: #{tpu_custom_call.1} parent=1 // pred_fallthru
      _
    // Predicated region
    $region50: #{tpu_custom_call.1} parent=1 // pred_check
      _
    $region51: #{tpu_custom_call.1} parent=1 // pred_check_branch
      %119 = sbr.rel (0) target = $region53
    $region52: #{tpu_custom_call.1} parent=1 // pred_region
      %120 = dma.done [#allocation15], 4096
    $region53: #{tpu_custom_call.1} parent=1 // pred_fallthru
      _
    // Predicated region
    $region54: #{tpu_custom_call.1} parent=1 // pred_check
      _
    $region55: #{tpu_custom_call.1} parent=1 // pred_check_branch
      %122 = sbr.rel (0) target = $region57
    $region56: #{tpu_custom_call.1} parent=1 // pred_region
      %123 = dma.done [#allocation15], 1024
    $region57: #{tpu_custom_call.1} parent=1 // pred_fallthru
      _
    %s126 = sshll.u32 1, 14
    %s127 = sxor.u32 4294967295, %s126
    %s129 = sld [smem:[#allocation0]]
    %s130 = sadd.s32 2, %s129
    %s132 = sshll.u32 7, 26
    %s133 = sxor.u32 4294967295, %s132
    %s134 = sand.u32 0, %s133
    %s135 = sshll.u32 %s130, 26
    %s136 = sor.u32 %s134, %s135
    %s137 = sshll.u32 [#allocation2], 4
    %s138 = int_to_ptr.vmem [resolvable:$true] %s137
    %141 = sst [smem:[#allocation21]] 512
    %s142 = scalar_lea.smem [#allocation21], 1
    %143 = sst [smem:[%s142]] 512
    %s144 = scalar_lea.smem [#allocation21], 2
    %145 = sst [smem:[%s144]] 4
    %s146 = scalar_lea.smem [#allocation21], 3
    %147 = sst [smem:[%s146]] 64
    %s148 = scalar_lea.smem [#allocation21], 4
    %149 = sst [smem:[%s148]] 128
    %s150 = scalar_lea.smem [#allocation21], 5
    %151 = sst [smem:[%s150]] 2
    %s152 = scalar_lea.smem [#allocation21], 6
    %153 = sst [smem:[%s152]] 256
    %s154 = scalar_lea.smem [#allocation21], 7
    %155 = sst [smem:[%s154]] 64
    %s156 = scalar_lea.smem [#allocation21], 8
    %157 = sst [smem:[%s156]] 4
    %159 = dma.general %s5, 57344, %s138, [#allocation4], [#allocation20], [#allocation21], %s136, 0
    %v160 = vlaneseq
    %v161 = vshrl.u32 %v160, 7
    %v162 = vadd.s32 %v161, 8
    %v163 = vadd.s32 %v161, 16
    %v164 = vadd.s32 %v161, 24
    %vm165 = vcmp.lt.s32.totalorder %v161, 24
    %vm166 = vcmp.lt.s32.totalorder %v162, 24
    %vm167 = vcmp.lt.s32.totalorder %v163, 24
    %vm168 = vcmp.lt.s32.totalorder %v164, 24
    %v169 = vsel %vm165, 1.0, 0.0
    %v170 = vsel %vm166, 1.0, 0.0
    %v171 = vsel %vm167, 1.0, 0.0
    %v172 = vsel %vm168, 1.0, 0.0
    %v173 = vld [vmem:[#allocation5] sm:$0xff]
    %v174 = vld [vmem:[#allocation5 + $0x8] sm:$0xff]
    %v175 = vld [vmem:[#allocation5 + $0x10] sm:$0xff]
    %v176 = vld [vmem:[#allocation5 + $0x18] sm:$0xff]
    %v177 = vld [vmem:[#allocation10] sm:$0xf]
    %v178 = vld [vmem:[#allocation10 + $0x4] sm:$0xf]
    %v179 = vld [vmem:[#allocation10 + $0x8] sm:$0xf]
    %v180 = vld [vmem:[#allocation10 + $0xc] sm:$0xf]
    %v181 = vld [vmem:[#allocation10 + $0x10] sm:$0xf]
    %v182 = vld [vmem:[#allocation10 + $0x14] sm:$0xf]
    %v183 = vld [vmem:[#allocation10 + $0x18] sm:$0xf]
    %v184 = vld [vmem:[#allocation10 + $0x1c] sm:$0xf]
    %v185 = vpack.c.bf16 %v174, %v173
    %v186 = vpack.c.bf16 %v176, %v175
    %v195 = vunpack.c.l.b16 %v177
    %v196 = vunpack.c.l.b16 %v178
    %v197 = vunpack.c.l.b16 %v179
    %v198 = vunpack.c.l.b16 %v180
    %v199 = vunpack.c.l.b16 %v181
    %v200 = vunpack.c.l.b16 %v182
    %v201 = vunpack.c.l.b16 %v183
    %v202 = vunpack.c.l.b16 %v184
    %v203 = vpack.c.b16 %v196, %v195
    %v204 = vpack.c.b16 %v198, %v197
    %v205 = vpack.c.b16 %v200, %v199
    %v206 = vpack.c.b16 %v202, %v201
    %vm211 = vcmask 523264
    %v213 = vsel %vm211, %v185, 0
    %v216 = vsel %vm211, %v186, 0
    %218 = vmatprep.subr.bf16.mxu0 0
    %219 = vmatpush1.bf16.msra.mxu0 %v203
    %220 = vmatprep.subr.bf16.mxu0 0
    %221 = vmatpush1.bf16.msra.mxu0 %v204
    %222 = vmatprep.subr.bf16.mxu0 0
    %223 = vmatpush1.bf16.msra.mxu0 %v205
    %224 = vmatprep.subr.bf16.mxu0 0
    %225 = vmatpush1.bf16.msra.mxu0 %v206
    %226 = vmatprep.subr.bf16.mxu0 0
    %227 = vmatpush1.bf16.msra.mxu0 0
    %228 = vmatprep.subr.bf16.mxu0 0
    %229 = vmatpush1.bf16.msra.mxu0 0
    %230 = vmatprep.subr.bf16.mxu0 0
    %231 = vmatpush1.bf16.msra.mxu0 0
    %232 = vmatprep.subr.bf16.mxu0 0
    %233 = vmatpush1.bf16.msra.mxu0 0
    %234 = vmatprep.subr.bf16.mxu0 0
    %235 = vmatpush1.bf16.msra.mxu0 0
    %236 = vmatprep.subr.bf16.mxu0 0
    %237 = vmatpush1.bf16.msra.mxu0 0
    %238 = vmatprep.subr.bf16.mxu0 0
    %239 = vmatpush1.bf16.msra.mxu0 0
    %240 = vmatprep.subr.bf16.mxu0 0
    %241 = vmatpush1.bf16.msra.mxu0 0
    %242 = vmatprep.subr.bf16.mxu0 0
    %243 = vmatpush1.bf16.msra.mxu0 0
    %244 = vmatprep.subr.bf16.mxu0 0
    %245 = vmatpush1.bf16.msra.mxu0 0
    %246 = vmatprep.subr.bf16.mxu0 0
    %247 = vmatpush1.bf16.msra.mxu0 0
    %248 = vmatprep.subr.bf16.mxu0 0
    %249 = vmatpush1.bf16.msra.mxu0 0
    %250 = vmatprep.mubr.bf16.mxu0 0
    %251 = vmatmul.mubr.bf16.gmra.mrb[0].mxu0 %v213
    %v252 = vpop.f32.mrb[0].mxu0
    %v253 = vadd.f32 0.0, %v252
    %v254 = vpop.f32.mrb[0].mxu0
    %v255 = vpop.f32.mrb[0].mxu0
    %v256 = vadd.f32 0.0, %v255
    %v257 = vpop.f32.mrb[0].mxu0
    %258 = vmatprep.mubr.bf16.mxu0 0
    %259 = vmatmul.mubr.bf16.gmra.mrb[0].mxu0 %v216
    %v260 = vpop.f32.mrb[0].mxu0
    %v261 = vadd.f32 0.0, %v260
    %v262 = vpop.f32.mrb[0].mxu0
    %v263 = vpop.f32.mrb[0].mxu0
    %v264 = vadd.f32 0.0, %v263
    %v265 = vpop.f32.mrb[0].mxu0
    %266 = vdwg.mxu0
    %v267 = vld [vmem:[#allocation13] sm:$0x1]
    %v268 = vld [vmem:[#allocation13 + $0x1] sm:$0x1]
    %v269 = vadd.f32 %v253, %v256
    %v270 = vadd.f32 %v269, %v261
    %v271 = vadd.f32 %v270, %v264
    %v272 = vrot.slane %v271, 4
    %v273 = vadd.f32 %v271, %v272
    %v274 = vrot.slane %v273, 2
    %v275 = vadd.f32 %v273, %v274
    %v276 = vrot.slane %v275, 1
    %v277 = vadd.f32 %v275, %v276
    %278 = vst [vmem:[#allocation3] sm:$0x1] %v277
    %v279 = vmul.f32 %v253, %v253
    %v280 = vmul.f32 %v256, %v256
    %v281 = vmul.f32 %v261, %v261
    %v282 = vmul.f32 %v264, %v264
    %v283 = vadd.f32 %v279, %v280
    %v284 = vadd.f32 %v283, %v281
    %v285 = vadd.f32 %v284, %v282
    %v286 = vrot.slane %v285, 4
    %v287 = vadd.f32 %v285, %v286
    %v288 = vrot.slane %v287, 2
    %v289 = vadd.f32 %v287, %v288
    %v290 = vrot.slane %v289, 1
    %v291 = vadd.f32 %v289, %v290
    %292 = vst [vmem:[#allocation3 + $0x1] sm:$0x1] %v291
    %v293 = vld [vmem:[#allocation3] sm:$0x3]
    %v294 = vadd.s32 %v161, 32
    %v295 = vadd.s32 %v161, 40
    %v296 = vadd.s32 %v161, 48
    %v297 = vadd.s32 %v161, 56
    %v298 = vadd.s32 %v161, 64
    %v299 = vadd.s32 %v161, 72
    %v300 = vadd.s32 %v161, 80
    %v301 = vadd.s32 %v161, 88
    %v302 = vadd.s32 %v161, 96
    %v303 = vadd.s32 %v161, 104
    %v304 = vadd.s32 %v161, 112
    %v305 = vadd.s32 %v161, 120
    %v306 = vlaneseq
    %v307 = vand.u32 %v306, 127
    %v308 = vmul.u32 %v307, 4
    %v309 = vsub.s32 %v161, %v308
    %v310 = vsub.s32 %v162, %v308
    %v311 = vsub.s32 %v163, %v308
    %v312 = vsub.s32 %v164, %v308
    %v313 = vsub.s32 %v294, %v308
    %v314 = vsub.s32 %v295, %v308
    %v315 = vsub.s32 %v296, %v308
    %v316 = vsub.s32 %v297, %v308
    %v317 = vsub.s32 %v298, %v308
    %v318 = vsub.s32 %v299, %v308
    %v319 = vsub.s32 %v300, %v308
    %v320 = vsub.s32 %v301, %v308
    %v321 = vsub.s32 %v302, %v308
    %v322 = vsub.s32 %v303, %v308
    %v323 = vsub.s32 %v304, %v308
    %v324 = vsub.s32 %v305, %v308
    %vm325 = vcmp.ge.s32.totalorder %v309, 0
    %vm326 = vcmp.ge.s32.totalorder %v310, 0
    %vm327 = vcmp.ge.s32.totalorder %v311, 0
    %vm328 = vcmp.ge.s32.totalorder %v312, 0
    %vm329 = vcmp.ge.s32.totalorder %v313, 0
    %vm330 = vcmp.ge.s32.totalorder %v314, 0
    %vm331 = vcmp.ge.s32.totalorder %v315, 0
    %vm332 = vcmp.ge.s32.totalorder %v316, 0
    %vm333 = vcmp.ge.s32.totalorder %v317, 0
    %vm334 = vcmp.ge.s32.totalorder %v318, 0
    %vm335 = vcmp.ge.s32.totalorder %v319, 0
    %vm336 = vcmp.ge.s32.totalorder %v320, 0
    %vm337 = vcmp.ge.s32.totalorder %v321, 0
    %vm338 = vcmp.ge.s32.totalorder %v322, 0
    %vm339 = vcmp.ge.s32.totalorder %v323, 0
    %vm340 = vcmp.ge.s32.totalorder %v324, 0
    %vm341 = vcmp.lt.s32.totalorder %v309, 4
    %vm342 = vcmp.lt.s32.totalorder %v310, 4
    %vm343 = vcmp.lt.s32.totalorder %v311, 4
    %vm344 = vcmp.lt.s32.totalorder %v312, 4
    %vm345 = vcmp.lt.s32.totalorder %v313, 4
    %vm346 = vcmp.lt.s32.totalorder %v314, 4
    %vm347 = vcmp.lt.s32.totalorder %v315, 4
    %vm348 = vcmp.lt.s32.totalorder %v316, 4
    %vm349 = vcmp.lt.s32.totalorder %v317, 4
    %vm350 = vcmp.lt.s32.totalorder %v318, 4
    %vm351 = vcmp.lt.s32.totalorder %v319, 4
    %vm352 = vcmp.lt.s32.totalorder %v320, 4
    %vm353 = vcmp.lt.s32.totalorder %v321, 4
    %vm354 = vcmp.lt.s32.totalorder %v322, 4
    %vm355 = vcmp.lt.s32.totalorder %v323, 4
    %vm356 = vcmp.lt.s32.totalorder %v324, 4
    %vm357 = vmand %vm325, %vm341
    %vm358 = vmand %vm326, %vm342
    %vm359 = vmand %vm327, %vm343
    %vm360 = vmand %vm328, %vm344
    %vm361 = vmand %vm329, %vm345
    %vm362 = vmand %vm330, %vm346
    %vm363 = vmand %vm331, %vm347
    %vm364 = vmand %vm332, %vm348
    %vm365 = vmand %vm333, %vm349
    %vm366 = vmand %vm334, %vm350
    %vm367 = vmand %vm335, %vm351
    %vm368 = vmand %vm336, %vm352
    %vm369 = vmand %vm337, %vm353
    %vm370 = vmand %vm338, %vm354
    %vm371 = vmand %vm339, %vm355
    %vm372 = vmand %vm340, %vm356
    %v373 = vsel %vm357, 1.0, 0.0
    %v374 = vsel %vm358, 1.0, 0.0
    %v375 = vsel %vm359, 1.0, 0.0
    %v376 = vsel %vm360, 1.0, 0.0
    %v377 = vsel %vm361, 1.0, 0.0
    %v378 = vsel %vm362, 1.0, 0.0
    %v379 = vsel %vm363, 1.0, 0.0
    %v380 = vsel %vm364, 1.0, 0.0
    %v381 = vsel %vm365, 1.0, 0.0
    %v382 = vsel %vm366, 1.0, 0.0
    %v383 = vsel %vm367, 1.0, 0.0
    %v384 = vsel %vm368, 1.0, 0.0
    %v385 = vsel %vm369, 1.0, 0.0
    %v386 = vsel %vm370, 1.0, 0.0
    %v387 = vsel %vm371, 1.0, 0.0
    %v388 = vsel %vm372, 1.0, 0.0
    %v389 = vmul.u32 %v161, 4
    %v390 = vmul.u32 %v162, 4
    %v391 = vmul.u32 %v163, 4
    %v392 = vmul.u32 %v164, 4
    %v393 = vsub.s32 %v307, %v389
    %v394 = vsub.s32 %v307, %v390
    %v395 = vsub.s32 %v307, %v391
    %v396 = vsub.s32 %v307, %v392
    %vm397 = vcmp.ge.s32.totalorder %v393, 0
    %vm398 = vcmp.ge.s32.totalorder %v394, 0
    %vm399 = vcmp.ge.s32.totalorder %v395, 0
    %vm400 = vcmp.ge.s32.totalorder %v396, 0
    %vm401 = vcmp.lt.s32.totalorder %v393, 4
    %vm402 = vcmp.lt.s32.totalorder %v394, 4
    %vm403 = vcmp.lt.s32.totalorder %v395, 4
    %vm404 = vcmp.lt.s32.totalorder %v396, 4
    %vm405 = vmand %vm397, %vm401
    %vm406 = vmand %vm398, %vm402
    %vm407 = vmand %vm399, %vm403
    %vm408 = vmand %vm400, %vm404
    %v409 = vsel %vm405, 1.0, 0.0
    %v410 = vsel %vm406, 1.0, 0.0
    %v411 = vsel %vm407, 1.0, 0.0
    %v412 = vsel %vm408, 1.0, 0.0
    %413 = vmatprep.subr.mxu0 0.0
    %414 = vmatpush1.msra.mxu0 %v373
    %415 = vmatprep.subr.mxu0 0.0
    %416 = vmatpush1.msra.mxu0 %v374
    %417 = vmatprep.subr.mxu0 0.0
    %418 = vmatpush1.msra.mxu0 %v375
    %419 = vmatprep.subr.mxu0 0.0
    %420 = vmatpush1.msra.mxu0 %v376
    %421 = vmatprep.subr.mxu0 0.0
    %422 = vmatpush1.msra.mxu0 %v377
    %423 = vmatprep.subr.mxu0 0.0
    %424 = vmatpush1.msra.mxu0 %v378
    %425 = vmatprep.subr.mxu0 0.0
    %426 = vmatpush1.msra.mxu0 %v379
    %427 = vmatprep.subr.mxu0 0.0
    %428 = vmatpush1.msra.mxu0 %v380
    %429 = vmatprep.subr.mxu0 0.0
    %430 = vmatpush1.msra.mxu0 %v381
    %431 = vmatprep.subr.mxu0 0.0
    %432 = vmatpush1.msra.mxu0 %v382
    %433 = vmatprep.subr.mxu0 0.0
    %434 = vmatpush1.msra.mxu0 %v383
    %435 = vmatprep.subr.mxu0 0.0
    %436 = vmatpush1.msra.mxu0 %v384
    %437 = vmatprep.subr.mxu0 0.0
    %438 = vmatpush1.msra.mxu0 %v385
    %439 = vmatprep.subr.mxu0 0.0
    %440 = vmatpush1.msra.mxu0 %v386
    %441 = vmatprep.subr.mxu0 0.0
    %442 = vmatpush1.msra.mxu0 %v387
    %443 = vmatprep.subr.mxu0 0.0
    %444 = vmatpush1.msra.mxu0 %v388
    %445 = vmatprep.subr.mxu0 0.0
    %446 = vmatpush1.msra.mxu0 0.0
    %447 = vmatprep.subr.mxu0 0.0
    %448 = vmatpush1.msra.mxu0 0.0
    %449 = vmatprep.subr.mxu0 0.0
    %450 = vmatpush1.msra.mxu0 0.0
    %451 = vmatprep.subr.mxu0 0.0
    %452 = vmatpush1.msra.mxu0 0.0
    %453 = vmatprep.subr.mxu0 0.0
    %454 = vmatpush1.msra.mxu0 0.0
    %455 = vmatprep.subr.mxu0 0.0
    %456 = vmatpush1.msra.mxu0 0.0
    %457 = vmatprep.subr.mxu0 0.0
    %458 = vmatpush1.msra.mxu0 0.0
    %459 = vmatprep.subr.mxu0 0.0
    %460 = vmatpush1.msra.mxu0 0.0
    %461 = vmatprep.subr.mxu0 0.0
    %462 = vmatpush1.msra.mxu0 0.0
    %463 = vmatprep.subr.mxu0 0.0
    %464 = vmatpush1.msra.mxu0 0.0
    %465 = vmatprep.subr.mxu0 0.0
    %466 = vmatpush1.msra.mxu0 0.0
    %467 = vmatprep.subr.mxu0 0.0
    %468 = vmatpush1.msra.mxu0 0.0
    %469 = vmatprep.subr.mxu0 0.0
    %470 = vmatpush1.msra.mxu0 0.0
    %471 = vmatprep.subr.mxu0 0.0
    %472 = vmatpush1.msra.mxu0 0.0
    %473 = vmatprep.subr.mxu0 0.0
    %474 = vmatpush1.msra.mxu0 0.0
    %475 = vmatprep.subr.mxu0 0.0
    %476 = vmatpush1.msra.mxu0 0.0
    %477 = vmatprep.mubr.f32.mxu0 0.0
    %478 = vmatmul.mubr.f32.gmra.mrb[0].mxu0 %v293
    %v479 = vpop.f32.mrb[0].mxu0
    %v480 = vadd.f32 0.0, %v479
    %v481 = vpop.f32.mrb[0].mxu0
    %482 = vdwg.mxu0
    %vm483 = vcmask 261120
    %v485 = vsel %vm483, %v480, 0
    %487 = vmatprep.subr.mxu0 0.0
    %488 = vmatpush1.msra.mxu0 %v409
    %489 = vmatprep.subr.mxu0 0.0
    %490 = vmatpush1.msra.mxu0 %v410
    %491 = vmatprep.subr.mxu0 0.0
    %492 = vmatpush1.msra.mxu0 %v411
    %493 = vmatprep.subr.mxu0 0.0
    %494 = vmatpush1.msra.mxu0 %v412
    %495 = vmatprep.subr.mxu0 0.0
    %496 = vmatpush1.msra.mxu0 0.0
    %497 = vmatprep.subr.mxu0 0.0
    %498 = vmatpush1.msra.mxu0 0.0
    %499 = vmatprep.subr.mxu0 0.0
    %500 = vmatpush1.msra.mxu0 0.0
    %501 = vmatprep.subr.mxu0 0.0
    %502 = vmatpush1.msra.mxu0 0.0
    %503 = vmatprep.subr.mxu0 0.0
    %504 = vmatpush1.msra.mxu0 0.0
    %505 = vmatprep.subr.mxu0 0.0
    %506 = vmatpush1.msra.mxu0 0.0
    %507 = vmatprep.subr.mxu0 0.0
    %508 = vmatpush1.msra.mxu0 0.0
    %509 = vmatprep.subr.mxu0 0.0
    %510 = vmatpush1.msra.mxu0 0.0
    %511 = vmatprep.subr.mxu0 0.0
    %512 = vmatpush1.msra.mxu0 0.0
    %513 = vmatprep.subr.mxu0 0.0
    %514 = vmatpush1.msra.mxu0 0.0
    %515 = vmatprep.subr.mxu0 0.0
    %516 = vmatpush1.msra.mxu0 0.0
    %517 = vmatprep.subr.mxu0 0.0
    %518 = vmatpush1.msra.mxu0 0.0
    %519 = vmatprep.subr.mxu0 0.0
    %520 = vmatpush1.msra.mxu0 0.0
    %521 = vmatprep.subr.mxu0 0.0
    %522 = vmatpush1.msra.mxu0 0.0
    %523 = vmatprep.subr.mxu0 0.0
    %524 = vmatpush1.msra.mxu0 0.0
    %525 = vmatprep.subr.mxu0 0.0
    %526 = vmatpush1.msra.mxu0 0.0
    %527 = vmatprep.subr.mxu0 0.0
    %528 = vmatpush1.msra.mxu0 0.0
    %529 = vmatprep.subr.mxu0 0.0
    %530 = vmatpush1.msra.mxu0 0.0
    %531 = vmatprep.subr.mxu0 0.0
    %532 = vmatpush1.msra.mxu0 0.0
    %533 = vmatprep.subr.mxu0 0.0
    %534 = vmatpush1.msra.mxu0 0.0
    %535 = vmatprep.subr.mxu0 0.0
    %536 = vmatpush1.msra.mxu0 0.0
    %537 = vmatprep.subr.mxu0 0.0
    %538 = vmatpush1.msra.mxu0 0.0
    %539 = vmatprep.subr.mxu0 0.0
    %540 = vmatpush1.msra.mxu0 0.0
    %541 = vmatprep.subr.mxu0 0.0
    %542 = vmatpush1.msra.mxu0 0.0
    %543 = vmatprep.subr.mxu0 0.0
    %544 = vmatpush1.msra.mxu0 0.0
    %545 = vmatprep.subr.mxu0 0.0
    %546 = vmatpush1.msra.mxu0 0.0
    %547 = vmatprep.subr.mxu0 0.0
    %548 = vmatpush1.msra.mxu0 0.0
    %549 = vmatprep.subr.mxu0 0.0
    %550 = vmatpush1.msra.mxu0 0.0
    %551 = vmatprep.mubr.f32.mxu0 0.0
    %552 = vmatmul.mubr.f32.gmra.mrb[0].mxu0 %v485
    %v553 = vpop.f32.mrb[0].mxu0
    %v554 = vadd.f32 0.0, %v553
    %v555 = vpop.f32.mrb[0].mxu0
    %556 = vdwg.mxu0
    %v557 = vmul.f32 %v554, 0.010416667
    %v558 = vmul.f32 %v557, %v557
    %v560 = vrot.slane %v558, 7
    %v562 = vsub.f32 %v557, %v560
    %v563 = vmax.f32 %v562, 0.0
    %v564 = vadd.f32 %v563, 1e-05
    %v565 = vrsqrt.pop %v564
    %v567 = vrot.slane %v565, 1
    %v569 = vmul.f32 %v267, %v567
    %v570 = vlaneseq
    %v571 = vshrl.u32 %v570, 7
    %v572 = vsub.s32 0, %v571
    %v573 = vrot.slane %v557, %v572
    %v574 = vsub.f32 %v253, %v573
    %v575 = vsub.f32 %v256, %v573
    %v576 = vsub.f32 %v261, %v573
    %v577 = vsub.f32 %v264, %v573
    %v578 = vlaneseq
    %v579 = vshrl.u32 %v578, 7
    %v580 = vsub.s32 0, %v579
    %v581 = vrot.slane %v569, %v580
    %v582 = vmul.f32 %v574, %v581
    %v583 = vmul.f32 %v575, %v581
    %v584 = vmul.f32 %v576, %v581
    %v585 = vmul.f32 %v577, %v581
    %v586 = vlaneseq
    %v587 = vshrl.u32 %v586, 7
    %v588 = vsub.s32 0, %v587
    %v589 = vrot.slane %v268, %v588
    %v590 = vadd.f32 %v582, %v589
    %v591 = vadd.f32 %v583, %v589
    %v592 = vadd.f32 %v584, %v589
    %v593 = vadd.f32 %v585, %v589
    %v594 = vmax.f32 %v590, 0.0
    %v595 = vmax.f32 %v591, 0.0
    %v596 = vmax.f32 %v592, 0.0
    %v597 = vmax.f32 %v593, 0.0
    %v598 = vmul.f32 %v594, %v169
    %v599 = vmul.f32 %v595, %v170
    %v600 = vmul.f32 %v596, %v171
    %v601 = vmul.f32 %v597, %v172
    %v602 = vld [vmem:[#allocation10 + $0x20] sm:$0xf]
    %v603 = vld [vmem:[#allocation10 + $0x24] sm:$0xf]
    %v604 = vld [vmem:[#allocation10 + $0x28] sm:$0xf]
    %v605 = vld [vmem:[#allocation10 + $0x2c] sm:$0xf]
    %v606 = vld [vmem:[#allocation10 + $0x30] sm:$0xf]
    %v607 = vld [vmem:[#allocation10 + $0x34] sm:$0xf]
    %v608 = vld [vmem:[#allocation10 + $0x38] sm:$0xf]
    %v609 = vld [vmem:[#allocation10 + $0x3c] sm:$0xf]
    %v610 = vld [vmem:[#allocation10 + $0x40] sm:$0xf]
    %v611 = vld [vmem:[#allocation10 + $0x44] sm:$0xf]
    %v612 = vld [vmem:[#allocation10 + $0x48] sm:$0xf]
    %v613 = vld [vmem:[#allocation10 + $0x4c] sm:$0xf]
    %v614 = vld [vmem:[#allocation10 + $0x50] sm:$0xf]
    %v615 = vld [vmem:[#allocation10 + $0x54] sm:$0xf]
    %v616 = vld [vmem:[#allocation10 + $0x58] sm:$0xf]
    %v617 = vld [vmem:[#allocation10 + $0x5c] sm:$0xf]
    %v618 = vpack.c.bf16 %v599, %v598
    %v619 = vpack.c.bf16 %v601, %v600
    %v636 = vunpack.c.l.b16 %v602
    %v637 = vunpack.c.l.b16 %v603
    %v638 = vunpack.c.l.b16 %v604
    %v639 = vunpack.c.l.b16 %v605
    %v640 = vunpack.c.l.b16 %v606
    %v641 = vunpack.c.l.b16 %v607
    %v642 = vunpack.c.l.b16 %v608
    %v643 = vunpack.c.l.b16 %v609
    %v644 = vunpack.c.l.b16 %v610
    %v645 = vunpack.c.l.b16 %v611
    %v646 = vunpack.c.l.b16 %v612
    %v647 = vunpack.c.l.b16 %v613
    %v648 = vunpack.c.l.b16 %v614
    %v649 = vunpack.c.l.b16 %v615
    %v650 = vunpack.c.l.b16 %v616
    %v651 = vunpack.c.l.b16 %v617
    %v652 = vpack.c.b16 %v637, %v636
    %v653 = vpack.c.b16 %v639, %v638
    %v654 = vpack.c.b16 %v641, %v640
    %v655 = vpack.c.b16 %v643, %v642
    %v656 = vpack.c.b16 %v645, %v644
    %v657 = vpack.c.b16 %v647, %v646
    %v658 = vpack.c.b16 %v649, %v648
    %v659 = vpack.c.b16 %v651, %v650
    %668 = vmatprep.subr.bf16.mxu0 0
    %669 = vmatpush1.bf16.msra.mxu0 %v652
    %670 = vmatprep.subr.bf16.mxu0 0
    %671 = vmatpush1.bf16.msra.mxu0 %v653
    %672 = vmatprep.subr.bf16.mxu0 0
    %673 = vmatpush1.bf16.msra.mxu0 %v654
    %674 = vmatprep.subr.bf16.mxu0 0
    %675 = vmatpush1.bf16.msra.mxu0 %v655
    %676 = vmatprep.subr.bf16.mxu0 0
    %677 = vmatpush1.bf16.msra.mxu0 %v656
    %678 = vmatprep.subr.bf16.mxu0 0
    %679 = vmatpush1.bf16.msra.mxu0 %v657
    %680 = vmatprep.subr.bf16.mxu0 0
    %681 = vmatpush1.bf16.msra.mxu0 %v658
    %682 = vmatprep.subr.bf16.mxu0 0
    %683 = vmatpush1.bf16.msra.mxu0 %v659
    %684 = vmatprep.subr.bf16.mxu0 0
    %685 = vmatpush1.bf16.msra.mxu0 0
    %686 = vmatprep.subr.bf16.mxu0 0
    %687 = vmatpush1.bf16.msra.mxu0 0
    %688 = vmatprep.subr.bf16.mxu0 0
    %689 = vmatpush1.bf16.msra.mxu0 0
    %690 = vmatprep.subr.bf16.mxu0 0
    %691 = vmatpush1.bf16.msra.mxu0 0
    %692 = vmatprep.subr.bf16.mxu0 0
    %693 = vmatpush1.bf16.msra.mxu0 0
    %694 = vmatprep.subr.bf16.mxu0 0
    %695 = vmatpush1.bf16.msra.mxu0 0
    %696 = vmatprep.subr.bf16.mxu0 0
    %697 = vmatpush1.bf16.msra.mxu0 0
    %698 = vmatprep.subr.bf16.mxu0 0
    %699 = vmatpush1.bf16.msra.mxu0 0
    %700 = vmatprep.mubr.bf16.mxu0 0
    %701 = vmatmul.mubr.bf16.gmra.mrb[0].mxu0 %v618
    %v702 = vpop.f32.mrb[0].mxu0
    %v703 = vadd.f32 0.0, %v702
    %v704 = vpop.f32.mrb[0].mxu0
    %v705 = vpop.f32.mrb[0].mxu0
    %v706 = vadd.f32 0.0, %v705
    %v707 = vpop.f32.mrb[0].mxu0
    %708 = vmatprep.mubr.bf16.mxu0 0
    %709 = vmatmul.mubr.bf16.gmra.mrb[0].mxu0 %v619
    %v710 = vpop.f32.mrb[0].mxu0
    %v711 = vadd.f32 0.0, %v710
    %v712 = vpop.f32.mrb[0].mxu0
    %v713 = vpop.f32.mrb[0].mxu0
    %v714 = vadd.f32 0.0, %v713
    %v715 = vpop.f32.mrb[0].mxu0
    %716 = vdwg.mxu0
    %v717 = vld [vmem:[#allocation13 + $0x2] sm:$0x1]
    %v718 = vld [vmem:[#allocation13 + $0x3] sm:$0x1]
    %v719 = vadd.f32 %v703, %v706
    %v720 = vadd.f32 %v719, %v711
    %v721 = vadd.f32 %v720, %v714
    %v722 = vrot.slane %v721, 4
    %v723 = vadd.f32 %v721, %v722
    %v724 = vrot.slane %v723, 2
    %v725 = vadd.f32 %v723, %v724
    %v726 = vrot.slane %v725, 1
    %v727 = vadd.f32 %v725, %v726
    %728 = vst [vmem:[#allocation3] sm:$0x1] %v727
    %v729 = vmul.f32 %v703, %v703
    %v730 = vmul.f32 %v706, %v706
    %v731 = vmul.f32 %v711, %v711
    %v732 = vmul.f32 %v714, %v714
    %v733 = vadd.f32 %v729, %v730
    %v734 = vadd.f32 %v733, %v731
    %v735 = vadd.f32 %v734, %v732
    %v736 = vrot.slane %v735, 4
    %v737 = vadd.f32 %v735, %v736
    %v738 = vrot.slane %v737, 2
    %v739 = vadd.f32 %v737, %v738
    %v740 = vrot.slane %v739, 1
    %v741 = vadd.f32 %v739, %v740
    %742 = vst [vmem:[#allocation3 + $0x1] sm:$0x1] %v741
    %v743 = vld [vmem:[#allocation3] sm:$0x3]
    %v744 = vmul.u32 %v307, 8
    %v745 = vsub.s32 %v161, %v744
    %v746 = vsub.s32 %v162, %v744
    %v747 = vsub.s32 %v163, %v744
    %v748 = vsub.s32 %v164, %v744
    %v749 = vsub.s32 %v294, %v744
    %v750 = vsub.s32 %v295, %v744
    %v751 = vsub.s32 %v296, %v744
    %v752 = vsub.s32 %v297, %v744
    %v753 = vsub.s32 %v298, %v744
    %v754 = vsub.s32 %v299, %v744
    %v755 = vsub.s32 %v300, %v744
    %v756 = vsub.s32 %v301, %v744
    %v757 = vsub.s32 %v302, %v744
    %v758 = vsub.s32 %v303, %v744
    %v759 = vsub.s32 %v304, %v744
    %v760 = vsub.s32 %v305, %v744
    %vm761 = vcmp.ge.s32.totalorder %v745, 0
    %vm762 = vcmp.ge.s32.totalorder %v746, 0
    %vm763 = vcmp.ge.s32.totalorder %v747, 0
    %vm764 = vcmp.ge.s32.totalorder %v748, 0
    %vm765 = vcmp.ge.s32.totalorder %v749, 0
    %vm766 = vcmp.ge.s32.totalorder %v750, 0
    %vm767 = vcmp.ge.s32.totalorder %v751, 0
    %vm768 = vcmp.ge.s32.totalorder %v752, 0
    %vm769 = vcmp.ge.s32.totalorder %v753, 0
    %vm770 = vcmp.ge.s32.totalorder %v754, 0
    %vm771 = vcmp.ge.s32.totalorder %v755, 0
    %vm772 = vcmp.ge.s32.totalorder %v756, 0
    %vm773 = vcmp.ge.s32.totalorder %v757, 0
    %vm774 = vcmp.ge.s32.totalorder %v758, 0
    %vm775 = vcmp.ge.s32.totalorder %v759, 0
    %vm776 = vcmp.ge.s32.totalorder %v760, 0
    %vm777 = vcmp.lt.s32.totalorder %v745, 8
    %vm778 = vcmp.lt.s32.totalorder %v746, 8
    %vm779 = vcmp.lt.s32.totalorder %v747, 8
    %vm780 = vcmp.lt.s32.totalorder %v748, 8
    %vm781 = vcmp.lt.s32.totalorder %v749, 8
    %vm782 = vcmp.lt.s32.totalorder %v750, 8
    %vm783 = vcmp.lt.s32.totalorder %v751, 8
    %vm784 = vcmp.lt.s32.totalorder %v752, 8
    %vm785 = vcmp.lt.s32.totalorder %v753, 8
    %vm786 = vcmp.lt.s32.totalorder %v754, 8
    %vm787 = vcmp.lt.s32.totalorder %v755, 8
    %vm788 = vcmp.lt.s32.totalorder %v756, 8
    %vm789 = vcmp.lt.s32.totalorder %v757, 8
    %vm790 = vcmp.lt.s32.totalorder %v758, 8
    %vm791 = vcmp.lt.s32.totalorder %v759, 8
    %vm792 = vcmp.lt.s32.totalorder %v760, 8
    %vm793 = vmand %vm761, %vm777
    %vm794 = vmand %vm762, %vm778
    %vm795 = vmand %vm763, %vm779
    %vm796 = vmand %vm764, %vm780
    %vm797 = vmand %vm765, %vm781
    %vm798 = vmand %vm766, %vm782
    %vm799 = vmand %vm767, %vm783
    %vm800 = vmand %vm768, %vm784
    %vm801 = vmand %vm769, %vm785
    %vm802 = vmand %vm770, %vm786
    %vm803 = vmand %vm771, %vm787
    %vm804 = vmand %vm772, %vm788
    %vm805 = vmand %vm773, %vm789
    %vm806 = vmand %vm774, %vm790
    %vm807 = vmand %vm775, %vm791
    %vm808 = vmand %vm776, %vm792
    %v809 = vsel %vm793, 1.0, 0.0
    %v810 = vsel %vm794, 1.0, 0.0
    %v811 = vsel %vm795, 1.0, 0.0
    %v812 = vsel %vm796, 1.0, 0.0
    %v813 = vsel %vm797, 1.0, 0.0
    %v814 = vsel %vm798, 1.0, 0.0
    %v815 = vsel %vm799, 1.0, 0.0
    %v816 = vsel %vm800, 1.0, 0.0
    %v817 = vsel %vm801, 1.0, 0.0
    %v818 = vsel %vm802, 1.0, 0.0
    %v819 = vsel %vm803, 1.0, 0.0
    %v820 = vsel %vm804, 1.0, 0.0
    %v821 = vsel %vm805, 1.0, 0.0
    %v822 = vsel %vm806, 1.0, 0.0
    %v823 = vsel %vm807, 1.0, 0.0
    %v824 = vsel %vm808, 1.0, 0.0
    %v825 = vmul.u32 %v161, 8
    %v826 = vmul.u32 %v162, 8
    %v827 = vsub.s32 %v307, %v825
    %v828 = vsub.s32 %v307, %v826
    %vm829 = vcmp.ge.s32.totalorder %v827, 0
    %vm830 = vcmp.ge.s32.totalorder %v828, 0
    %vm831 = vcmp.lt.s32.totalorder %v827, 8
    %vm832 = vcmp.lt.s32.totalorder %v828, 8
    %vm833 = vmand %vm829, %vm831
    %vm834 = vmand %vm830, %vm832
    %v835 = vsel %vm833, 1.0, 0.0
    %v836 = vsel %vm834, 1.0, 0.0
    %837 = vmatprep.subr.mxu0 0.0
    %838 = vmatpush1.msra.mxu0 %v809
    %839 = vmatprep.subr.mxu0 0.0
    %840 = vmatpush1.msra.mxu0 %v810
    %841 = vmatprep.subr.mxu0 0.0
    %842 = vmatpush1.msra.mxu0 %v811
    %843 = vmatprep.subr.mxu0 0.0
    %844 = vmatpush1.msra.mxu0 %v812
    %845 = vmatprep.subr.mxu0 0.0
    %846 = vmatpush1.msra.mxu0 %v813
    %847 = vmatprep.subr.mxu0 0.0
    %848 = vmatpush1.msra.mxu0 %v814
    %849 = vmatprep.subr.mxu0 0.0
    %850 = vmatpush1.msra.mxu0 %v815
    %851 = vmatprep.subr.mxu0 0.0
    %852 = vmatpush1.msra.mxu0 %v816
    %853 = vmatprep.subr.mxu0 0.0
    %854 = vmatpush1.msra.mxu0 %v817
    %855 = vmatprep.subr.mxu0 0.0
    %856 = vmatpush1.msra.mxu0 %v818
    %857 = vmatprep.subr.mxu0 0.0
    %858 = vmatpush1.msra.mxu0 %v819
    %859 = vmatprep.subr.mxu0 0.0
    %860 = vmatpush1.msra.mxu0 %v820
    %861 = vmatprep.subr.mxu0 0.0
    %862 = vmatpush1.msra.mxu0 %v821
    %863 = vmatprep.subr.mxu0 0.0
    %864 = vmatpush1.msra.mxu0 %v822
    %865 = vmatprep.subr.mxu0 0.0
    %866 = vmatpush1.msra.mxu0 %v823
    %867 = vmatprep.subr.mxu0 0.0
    %868 = vmatpush1.msra.mxu0 %v824
    %869 = vmatprep.subr.mxu0 0.0
    %870 = vmatpush1.msra.mxu0 0.0
    %871 = vmatprep.subr.mxu0 0.0
    %872 = vmatpush1.msra.mxu0 0.0
    %873 = vmatprep.subr.mxu0 0.0
    %874 = vmatpush1.msra.mxu0 0.0
    %875 = vmatprep.subr.mxu0 0.0
    %876 = vmatpush1.msra.mxu0 0.0
    %877 = vmatprep.subr.mxu0 0.0
    %878 = vmatpush1.msra.mxu0 0.0
    %879 = vmatprep.subr.mxu0 0.0
    %880 = vmatpush1.msra.mxu0 0.0
    %881 = vmatprep.subr.mxu0 0.0
    %882 = vmatpush1.msra.mxu0 0.0
    %883 = vmatprep.subr.mxu0 0.0
    %884 = vmatpush1.msra.mxu0 0.0
    %885 = vmatprep.subr.mxu0 0.0
    %886 = vmatpush1.msra.mxu0 0.0
    %887 = vmatprep.subr.mxu0 0.0
    %888 = vmatpush1.msra.mxu0 0.0
    %889 = vmatprep.subr.mxu0 0.0
    %890 = vmatpush1.msra.mxu0 0.0
    %891 = vmatprep.subr.mxu0 0.0
    %892 = vmatpush1.msra.mxu0 0.0
    %893 = vmatprep.subr.mxu0 0.0
    %894 = vmatpush1.msra.mxu0 0.0
    %895 = vmatprep.subr.mxu0 0.0
    %896 = vmatpush1.msra.mxu0 0.0
    %897 = vmatprep.subr.mxu0 0.0
    %898 = vmatpush1.msra.mxu0 0.0
    %899 = vmatprep.subr.mxu0 0.0
    %900 = vmatpush1.msra.mxu0 0.0
    %901 = vmatprep.mubr.f32.mxu0 0.0
    %902 = vmatmul.mubr.f32.gmra.mrb[0].mxu0 %v743
    %v903 = vpop.f32.mrb[0].mxu0
    %v904 = vadd.f32 0.0, %v903
    %v905 = vpop.f32.mrb[0].mxu0
    %906 = vdwg.mxu0
    %vm907 = vcmask 130048
    %v909 = vsel %vm907, %v904, 0
    %911 = vmatprep.subr.mxu0 0.0
    %912 = vmatpush1.msra.mxu0 %v835
    %913 = vmatprep.subr.mxu0 0.0
    %914 = vmatpush1.msra.mxu0 %v836
    %915 = vmatprep.subr.mxu0 0.0
    %916 = vmatpush1.msra.mxu0 0.0
    %917 = vmatprep.subr.mxu0 0.0
    %918 = vmatpush1.msra.mxu0 0.0
    %919 = vmatprep.subr.mxu0 0.0
    %920 = vmatpush1.msra.mxu0 0.0
    %921 = vmatprep.subr.mxu0 0.0
    %922 = vmatpush1.msra.mxu0 0.0
    %923 = vmatprep.subr.mxu0 0.0
    %924 = vmatpush1.msra.mxu0 0.0
    %925 = vmatprep.subr.mxu0 0.0
    %926 = vmatpush1.msra.mxu0 0.0
    %927 = vmatprep.subr.mxu0 0.0
    %928 = vmatpush1.msra.mxu0 0.0
    %929 = vmatprep.subr.mxu0 0.0
    %930 = vmatpush1.msra.mxu0 0.0
    %931 = vmatprep.subr.mxu0 0.0
    %932 = vmatpush1.msra.mxu0 0.0
    %933 = vmatprep.subr.mxu0 0.0
    %934 = vmatpush1.msra.mxu0 0.0
    %935 = vmatprep.subr.mxu0 0.0
    %936 = vmatpush1.msra.mxu0 0.0
    %937 = vmatprep.subr.mxu0 0.0
    %938 = vmatpush1.msra.mxu0 0.0
    %939 = vmatprep.subr.mxu0 0.0
    %940 = vmatpush1.msra.mxu0 0.0
    %941 = vmatprep.subr.mxu0 0.0
    %942 = vmatpush1.msra.mxu0 0.0
    %943 = vmatprep.subr.mxu0 0.0
    %944 = vmatpush1.msra.mxu0 0.0
    %945 = vmatprep.subr.mxu0 0.0
    %946 = vmatpush1.msra.mxu0 0.0
    %947 = vmatprep.subr.mxu0 0.0
    %948 = vmatpush1.msra.mxu0 0.0
    %949 = vmatprep.subr.mxu0 0.0
    %950 = vmatpush1.msra.mxu0 0.0
    %951 = vmatprep.subr.mxu0 0.0
    %952 = vmatpush1.msra.mxu0 0.0
    %953 = vmatprep.subr.mxu0 0.0
    %954 = vmatpush1.msra.mxu0 0.0
    %955 = vmatprep.subr.mxu0 0.0
    %956 = vmatpush1.msra.mxu0 0.0
    %957 = vmatprep.subr.mxu0 0.0
    %958 = vmatpush1.msra.mxu0 0.0
    %959 = vmatprep.subr.mxu0 0.0
    %960 = vmatpush1.msra.mxu0 0.0
    %961 = vmatprep.subr.mxu0 0.0
    %962 = vmatpush1.msra.mxu0 0.0
    %963 = vmatprep.subr.mxu0 0.0
    %964 = vmatpush1.msra.mxu0 0.0
    %965 = vmatprep.subr.mxu0 0.0
    %966 = vmatpush1.msra.mxu0 0.0
    %967 = vmatprep.subr.mxu0 0.0
    %968 = vmatpush1.msra.mxu0 0.0
    %969 = vmatprep.subr.mxu0 0.0
    %970 = vmatpush1.msra.mxu0 0.0
    %971 = vmatprep.subr.mxu0 0.0
    %972 = vmatpush1.msra.mxu0 0.0
    %973 = vmatprep.subr.mxu0 0.0
    %974 = vmatpush1.msra.mxu0 0.0
    %975 = vmatprep.mubr.f32.mxu0 0.0
    %976 = vmatmul.mubr.f32.gmra.mrb[0].mxu0 %v909
    %v977 = vpop.f32.mrb[0].mxu0
    %v978 = vadd.f32 0.0, %v977
    %v979 = vpop.f32.mrb[0].mxu0
    %980 = vdwg.mxu0
    %v981 = vmul.f32 %v978, 0.0052083335
    %v982 = vmul.f32 %v981, %v981
    %v984 = vrot.slane %v982, 7
    %v986 = vsub.f32 %v981, %v984
    %v987 = vmax.f32 %v986, 0.0
    %v988 = vadd.f32 %v987, 1e-05
    %v989 = vrsqrt.pop %v988
    %v991 = vrot.slane %v989, 1
    %v993 = vmul.f32 %v717, %v991
    %v994 = vlaneseq
    %v995 = vshrl.u32 %v994, 7
    %v996 = vsub.s32 0, %v995
    %v997 = vrot.slane %v981, %v996
    %v998 = vsub.f32 %v703, %v997
    %v999 = vsub.f32 %v706, %v997
    %v1000 = vsub.f32 %v711, %v997
    %v1001 = vsub.f32 %v714, %v997
    %v1002 = vlaneseq
    %v1003 = vshrl.u32 %v1002, 7
    %v1004 = vsub.s32 0, %v1003
    %v1005 = vrot.slane %v993, %v1004
    %v1006 = vmul.f32 %v998, %v1005
    %v1007 = vmul.f32 %v999, %v1005
    %v1008 = vmul.f32 %v1000, %v1005
    %v1009 = vmul.f32 %v1001, %v1005
    %v1010 = vlaneseq
    %v1011 = vshrl.u32 %v1010, 7
    %v1012 = vsub.s32 0, %v1011
    %v1013 = vrot.slane %v718, %v1012
    %v1014 = vadd.f32 %v1006, %v1013
    %v1015 = vadd.f32 %v1007, %v1013
    %v1016 = vadd.f32 %v1008, %v1013
    %v1017 = vadd.f32 %v1009, %v1013
    %v1018 = vmax.f32 %v1014, 0.0
    %v1019 = vmax.f32 %v1015, 0.0
    %v1020 = vmax.f32 %v1016, 0.0
    %v1021 = vmax.f32 %v1017, 0.0
    %v1022 = vmul.f32 %v1018, %v169
    %v1023 = vmul.f32 %v1019, %v170
    %v1024 = vmul.f32 %v1020, %v171
    %v1025 = vmul.f32 %v1021, %v172
    %v1026 = vld [vmem:[#allocation13 + $0x4] sm:$0x1]
    %v1027 = vpack.c.bf16 %v1023, %v1022
    %v1028 = vpack.c.bf16 %v1025, %v1024
    %v1029 = vld [vmem:[#allocation11] sm:$0xf]
    %v1030 = vld [vmem:[#allocation11 + $0x4] sm:$0xf]
    %v1031 = vld [vmem:[#allocation11 + $0x8] sm:$0xf]
    %v1032 = vld [vmem:[#allocation11 + $0xc] sm:$0xf]
    %v1033 = vld [vmem:[#allocation11 + $0x10] sm:$0xf]
    %v1034 = vld [vmem:[#allocation11 + $0x14] sm:$0xf]
    %v1035 = vld [vmem:[#allocation11 + $0x18] sm:$0xf]
    %v1036 = vld [vmem:[#allocation11 + $0x1c] sm:$0xf]
    %v1037 = vld [vmem:[#allocation11 + $0x20] sm:$0xf]
    %v1038 = vld [vmem:[#allocation11 + $0x24] sm:$0xf]
    %v1039 = vld [vmem:[#allocation11 + $0x28] sm:$0xf]
    %v1040 = vld [vmem:[#allocation11 + $0x2c] sm:$0xf]
    %v1041 = vld [vmem:[#allocation11 + $0x30] sm:$0xf]
    %v1042 = vld [vmem:[#allocation11 + $0x34] sm:$0xf]
    %v1043 = vld [vmem:[#allocation11 + $0x38] sm:$0xf]
    %v1044 = vld [vmem:[#allocation11 + $0x3c] sm:$0xf]
    %v1045 = vlaneseq
    %v1046 = vshrl.u32 %v1045, 7
    %v1047 = vsub.s32 0, %v1046
    %v1048 = vrot.slane %v1026, %v1047
    %v1065 = vunpack.c.l.b16 %v1029
    %v1066 = vunpack.c.l.b16 %v1030
    %v1067 = vunpack.c.l.b16 %v1031
    %v1068 = vunpack.c.l.b16 %v1032
    %v1069 = vunpack.c.l.b16 %v1033
    %v1070 = vunpack.c.l.b16 %v1034
    %v1071 = vunpack.c.l.b16 %v1035
    %v1072 = vunpack.c.l.b16 %v1036
    %v1073 = vunpack.c.l.b16 %v1037
    %v1074 = vunpack.c.l.b16 %v1038
    %v1075 = vunpack.c.l.b16 %v1039
    %v1076 = vunpack.c.l.b16 %v1040
    %v1077 = vunpack.c.l.b16 %v1041
    %v1078 = vunpack.c.l.b16 %v1042
    %v1079 = vunpack.c.l.b16 %v1043
    %v1080 = vunpack.c.l.b16 %v1044
    %v1081 = vpack.c.b16 %v1066, %v1065
    %v1082 = vpack.c.b16 %v1068, %v1067
    %v1083 = vpack.c.b16 %v1070, %v1069
    %v1084 = vpack.c.b16 %v1072, %v1071
    %v1085 = vpack.c.b16 %v1074, %v1073
    %v1086 = vpack.c.b16 %v1076, %v1075
    %v1087 = vpack.c.b16 %v1078, %v1077
    %v1088 = vpack.c.b16 %v1080, %v1079
    %1097 = vmatprep.subr.bf16.mxu0 0
    %1098 = vmatpush1.bf16.msra.mxu0 %v1081
    %1099 = vmatprep.subr.bf16.mxu0 0
    %1100 = vmatpush1.bf16.msra.mxu0 %v1082
    %1101 = vmatprep.subr.bf16.mxu0 0
    %1102 = vmatpush1.bf16.msra.mxu0 %v1083
    %1103 = vmatprep.subr.bf16.mxu0 0
    %1104 = vmatpush1.bf16.msra.mxu0 %v1084
    %1105 = vmatprep.subr.bf16.mxu0 0
    %1106 = vmatpush1.bf16.msra.mxu0 %v1085
    %1107 = vmatprep.subr.bf16.mxu0 0
    %1108 = vmatpush1.bf16.msra.mxu0 %v1086
    %1109 = vmatprep.subr.bf16.mxu0 0
    %1110 = vmatpush1.bf16.msra.mxu0 %v1087
    %1111 = vmatprep.subr.bf16.mxu0 0
    %1112 = vmatpush1.bf16.msra.mxu0 %v1088
    %1113 = vmatprep.subr.bf16.mxu0 0
    %1114 = vmatpush1.bf16.msra.mxu0 0
    %1115 = vmatprep.subr.bf16.mxu0 0
    %1116 = vmatpush1.bf16.msra.mxu0 0
    %1117 = vmatprep.subr.bf16.mxu0 0
    %1118 = vmatpush1.bf16.msra.mxu0 0
    %1119 = vmatprep.subr.bf16.mxu0 0
    %1120 = vmatpush1.bf16.msra.mxu0 0
    %1121 = vmatprep.subr.bf16.mxu0 0
    %1122 = vmatpush1.bf16.msra.mxu0 0
    %1123 = vmatprep.subr.bf16.mxu0 0
    %1124 = vmatpush1.bf16.msra.mxu0 0
    %1125 = vmatprep.subr.bf16.mxu0 0
    %1126 = vmatpush1.bf16.msra.mxu0 0
    %1127 = vmatprep.subr.bf16.mxu0 0
    %1128 = vmatpush1.bf16.msra.mxu0 0
    %1129 = vmatprep.mubr.bf16.mxu0 0
    %1130 = vmatmul.mubr.bf16.gmra.mrb[0].mxu0 %v1027
    %v1131 = vpop.f32.mrb[0].mxu0
    %v1132 = vadd.f32 %v1048, %v1131
    %v1133 = vpop.f32.mrb[0].mxu0
    %v1134 = vpop.f32.mrb[0].mxu0
    %v1135 = vadd.f32 %v1048, %v1134
    %v1136 = vpop.f32.mrb[0].mxu0
    %1137 = vmatprep.mubr.bf16.mxu0 0
    %1138 = vmatmul.mubr.bf16.gmra.mrb[0].mxu0 %v1028
    %v1139 = vpop.f32.mrb[0].mxu0
    %v1140 = vadd.f32 %v1048, %v1139
    %v1141 = vpop.f32.mrb[0].mxu0
    %v1142 = vpop.f32.mrb[0].mxu0
    %v1143 = vadd.f32 %v1048, %v1142
    %v1144 = vpop.f32.mrb[0].mxu0
    %1145 = vdwg.mxu0
    %v1146 = vtanh.pop %v1132
    %v1147 = vtanh.pop %v1135
    %v1148 = vtanh.pop %v1140
    %v1149 = vtanh.pop %v1143
    %1150 = vst [vmem:[#allocation17] sm:$0xff] %v1146
    %1151 = vst [vmem:[#allocation17 + $0x8] sm:$0xff] %v1147
    %1152 = vst [vmem:[#allocation17 + $0x10] sm:$0xff] %v1148
    %1153 = vst [vmem:[#allocation17 + $0x18] sm:$0xff] %v1149
    %s1154 = smul.u32 4, 224
    %s1155 = smul.u32 %s1154, 4
    %s1156 = sshll.u32 %s1155, 4
    %1157 = dma.done [#allocation4], %s1156
    %v1158 = vld [vmem:[#allocation8] sm:$0xff]
    %v1159 = vld [vmem:[#allocation8 + $0x8] sm:$0xff]
    %v1160 = vld [vmem:[#allocation8 + $0x10] sm:$0xff]
    %v1161 = vld [vmem:[#allocation8 + $0x18] sm:$0xff]
    %v1162 = vld [vmem:[#allocation8 + $0x20] sm:$0xff]
    %v1163 = vld [vmem:[#allocation8 + $0x28] sm:$0xff]
    %v1164 = vld [vmem:[#allocation8 + $0x30] sm:$0xff]
    %v1165 = vld [vmem:[#allocation8 + $0x38] sm:$0xff]
    %v1166 = vld [vmem:[#allocation2] sm:$0xff]
    %v1167 = vld [vmem:[#allocation2 + $0x8] sm:$0xff]
    %v1168 = vld [vmem:[#allocation2 + $0x10] sm:$0xff]
    %v1169 = vld [vmem:[#allocation2 + $0x18] sm:$0xff]
    %v1170 = vld [vmem:[#allocation2 + $0x20] sm:$0xff]
    %v1171 = vld [vmem:[#allocation2 + $0x28] sm:$0xff]
    %v1172 = vld [vmem:[#allocation2 + $0x30] sm:$0xff]
    %v1173 = vld [vmem:[#allocation2 + $0x38] sm:$0xff]
    %v1174 = vld [vmem:[#allocation2 + $0x40] sm:$0xff]
    %v1175 = vld [vmem:[#allocation2 + $0x48] sm:$0xff]
    %v1176 = vld [vmem:[#allocation2 + $0x50] sm:$0xff]
    %v1177 = vld [vmem:[#allocation2 + $0x58] sm:$0xff]
    %v1178 = vld [vmem:[#allocation2 + $0x60] sm:$0xff]
    %v1179 = vld [vmem:[#allocation2 + $0x68] sm:$0xff]
    %v1180 = vld [vmem:[#allocation2 + $0x70] sm:$0xff]
    %v1181 = vld [vmem:[#allocation2 + $0x78] sm:$0xff]
    %v1182 = vld [vmem:[#allocation2 + $0x80] sm:$0xff]
    %v1183 = vld [vmem:[#allocation2 + $0x88] sm:$0xff]
    %v1184 = vld [vmem:[#allocation2 + $0x90] sm:$0xff]
    %v1185 = vld [vmem:[#allocation2 + $0x98] sm:$0xff]
    %v1186 = vld [vmem:[#allocation2 + $0xa0] sm:$0xff]
    %v1187 = vld [vmem:[#allocation2 + $0xa8] sm:$0xff]
    %v1188 = vld [vmem:[#allocation2 + $0xb0] sm:$0xff]
    %v1189 = vld [vmem:[#allocation2 + $0xb8] sm:$0xff]
    %v1190 = vld [vmem:[#allocation2 + $0xc0] sm:$0xff]
    %v1191 = vld [vmem:[#allocation2 + $0xc8] sm:$0xff]
    %v1192 = vld [vmem:[#allocation2 + $0xd0] sm:$0xff]
    %v1193 = vld [vmem:[#allocation2 + $0xd8] sm:$0xff]
    %v1194 = vld [vmem:[#allocation2 + $0xe0] sm:$0xff]
    %v1195 = vld [vmem:[#allocation2 + $0xe8] sm:$0xff]
    %v1196 = vld [vmem:[#allocation2 + $0xf0] sm:$0xff]
    %v1197 = vld [vmem:[#allocation2 + $0xf8] sm:$0xff]
    %v1198 = vld [vmem:[#allocation2 + $0x100] sm:$0xff]
    %v1199 = vld [vmem:[#allocation2 + $0x108] sm:$0xff]
    %v1200 = vld [vmem:[#allocation2 + $0x110] sm:$0xff]
    %v1201 = vld [vmem:[#allocation2 + $0x118] sm:$0xff]
    %v1202 = vld [vmem:[#allocation2 + $0x120] sm:$0xff]
    %v1203 = vld [vmem:[#allocation2 + $0x128] sm:$0xff]
    %v1204 = vld [vmem:[#allocation2 + $0x130] sm:$0xff]
    %v1205 = vld [vmem:[#allocation2 + $0x138] sm:$0xff]
    %v1206 = vld [vmem:[#allocation2 + $0x140] sm:$0xff]
    %v1207 = vld [vmem:[#allocation2 + $0x148] sm:$0xff]
    %v1208 = vld [vmem:[#allocation2 + $0x150] sm:$0xff]
    %v1209 = vld [vmem:[#allocation2 + $0x158] sm:$0xff]
    %v1210 = vld [vmem:[#allocation2 + $0x160] sm:$0xff]
    %v1211 = vld [vmem:[#allocation2 + $0x168] sm:$0xff]
    %v1212 = vld [vmem:[#allocation2 + $0x170] sm:$0xff]
    %v1213 = vld [vmem:[#allocation2 + $0x178] sm:$0xff]
    %v1214 = vld [vmem:[#allocation2 + $0x180] sm:$0xff]
    %v1215 = vld [vmem:[#allocation2 + $0x188] sm:$0xff]
    %v1216 = vld [vmem:[#allocation2 + $0x190] sm:$0xff]
    %v1217 = vld [vmem:[#allocation2 + $0x198] sm:$0xff]
    %v1218 = vld [vmem:[#allocation2 + $0x1a0] sm:$0xff]
    %v1219 = vld [vmem:[#allocation2 + $0x1a8] sm:$0xff]
    %v1220 = vld [vmem:[#allocation2 + $0x1b0] sm:$0xff]
    %v1221 = vld [vmem:[#allocation2 + $0x1b8] sm:$0xff]
    %v1222 = vld [vmem:[#allocation2 + $0x1c0] sm:$0xff]
    %v1223 = vld [vmem:[#allocation2 + $0x1c8] sm:$0xff]
    %v1224 = vld [vmem:[#allocation2 + $0x1d0] sm:$0xff]
    %v1225 = vld [vmem:[#allocation2 + $0x1d8] sm:$0xff]
    %v1226 = vld [vmem:[#allocation2 + $0x1e0] sm:$0xff]
    %v1227 = vld [vmem:[#allocation2 + $0x1e8] sm:$0xff]
    %v1228 = vld [vmem:[#allocation2 + $0x1f0] sm:$0xff]
    %v1229 = vld [vmem:[#allocation2 + $0x1f8] sm:$0xff]
    %v1230 = vpack.c.bf16 %v1160, %v1158
    %v1231 = vpack.c.bf16 %v1161, %v1159
    %v1232 = vpack.c.bf16 %v1164, %v1162
    %v1233 = vpack.c.bf16 %v1165, %v1163
    %1234 = vmatprep.subr.bf16.mxu0 %v1167
    %1235 = vmatpush1.bf16.msra.mxu0 %v1166
    %1236 = vmatprep.subr.bf16.mxu0 %v1171
    %1237 = vmatpush1.bf16.msra.mxu0 %v1170
    %1238 = vmatprep.subr.bf16.mxu0 %v1175
    %1239 = vmatpush1.bf16.msra.mxu0 %v1174
    %1240 = vmatprep.subr.bf16.mxu0 %v1179
    %1241 = vmatpush1.bf16.msra.mxu0 %v1178
    %1242 = vmatprep.subr.bf16.mxu0 %v1183
    %1243 = vmatpush1.bf16.msra.mxu0 %v1182
    %1244 = vmatprep.subr.bf16.mxu0 %v1187
    %1245 = vmatpush1.bf16.msra.mxu0 %v1186
    %1246 = vmatprep.subr.bf16.mxu0 %v1191
    %1247 = vmatpush1.bf16.msra.mxu0 %v1190
    %1248 = vmatprep.subr.bf16.mxu0 %v1195
    %1249 = vmatpush1.bf16.msra.mxu0 %v1194
    %1250 = vmatprep.subr.bf16.mxu0 %v1199
    %1251 = vmatpush1.bf16.msra.mxu0 %v1198
    %1252 = vmatprep.subr.bf16.mxu0 %v1203
    %1253 = vmatpush1.bf16.msra.mxu0 %v1202
    %1254 = vmatprep.subr.bf16.mxu0 %v1207
    %1255 = vmatpush1.bf16.msra.mxu0 %v1206
    %1256 = vmatprep.subr.bf16.mxu0 %v1211
    %1257 = vmatpush1.bf16.msra.mxu0 %v1210
    %1258 = vmatprep.subr.bf16.mxu0 %v1215
    %1259 = vmatpush1.bf16.msra.mxu0 %v1214
    %1260 = vmatprep.subr.bf16.mxu0 %v1219
    %1261 = vmatpush1.bf16.msra.mxu0 %v1218
    %1262 = vmatprep.subr.bf16.mxu0 %v1223
    %1263 = vmatpush1.bf16.msra.mxu0 %v1222
    %1264 = vmatprep.subr.bf16.mxu0 %v1227
    %1265 = vmatpush1.bf16.msra.mxu0 %v1226
    %1266 = vmatprep.mubr.bf16.mxu0 %v1231
    %1267 = vmatmul.mubr.bf16.gmra.mrb[0].mxu0 %v1230
    %v1268 = vpop.f32.mrb[0].mxu0
    %v1269 = vadd.f32 0.0, %v1268
    %v1270 = vpop.f32.mrb[0].mxu0
    %v1271 = vadd.f32 0.0, %v1270
    %v1272 = vpop.f32.mrb[0].mxu0
    %v1273 = vadd.f32 0.0, %v1272
    %v1274 = vpop.f32.mrb[0].mxu0
    %v1275 = vadd.f32 0.0, %v1274
    %1276 = vmatprep.mubr.bf16.mxu0 %v1233
    %1277 = vmatmul.mubr.bf16.gmra.mrb[0].mxu0 %v1232
    %v1278 = vpop.f32.mrb[0].mxu0
    %v1279 = vadd.f32 0.0, %v1278
    %v1280 = vpop.f32.mrb[0].mxu0
    %v1281 = vadd.f32 0.0, %v1280
    %v1282 = vpop.f32.mrb[0].mxu0
    %v1283 = vadd.f32 0.0, %v1282
    %v1284 = vpop.f32.mrb[0].mxu0
    %v1285 = vadd.f32 0.0, %v1284
    %1286 = vdwg.mxu0
    %1287 = vmatprep.subr.bf16.mxu0 %v1169
    %1288 = vmatpush1.bf16.msra.mxu0 %v1168
    %1289 = vmatprep.subr.bf16.mxu0 %v1173
    %1290 = vmatpush1.bf16.msra.mxu0 %v1172
    %1291 = vmatprep.subr.bf16.mxu0 %v1177
    %1292 = vmatpush1.bf16.msra.mxu0 %v1176
    %1293 = vmatprep.subr.bf16.mxu0 %v1181
    %1294 = vmatpush1.bf16.msra.mxu0 %v1180
    %1295 = vmatprep.subr.bf16.mxu0 %v1185
    %1296 = vmatpush1.bf16.msra.mxu0 %v1184
    %1297 = vmatprep.subr.bf16.mxu0 %v1189
    %1298 = vmatpush1.bf16.msra.mxu0 %v1188
    %1299 = vmatprep.subr.bf16.mxu0 %v1193
    %1300 = vmatpush1.bf16.msra.mxu0 %v1192
    %1301 = vmatprep.subr.bf16.mxu0 %v1197
    %1302 = vmatpush1.bf16.msra.mxu0 %v1196
    %1303 = vmatprep.subr.bf16.mxu0 %v1201
    %1304 = vmatpush1.bf16.msra.mxu0 %v1200
    %1305 = vmatprep.subr.bf16.mxu0 %v1205
    %1306 = vmatpush1.bf16.msra.mxu0 %v1204
    %1307 = vmatprep.subr.bf16.mxu0 %v1209
    %1308 = vmatpush1.bf16.msra.mxu0 %v1208
    %1309 = vmatprep.subr.bf16.mxu0 %v1213
    %1310 = vmatpush1.bf16.msra.mxu0 %v1212
    %1311 = vmatprep.subr.bf16.mxu0 %v1217
    %1312 = vmatpush1.bf16.msra.mxu0 %v1216
    %1313 = vmatprep.subr.bf16.mxu0 %v1221
    %1314 = vmatpush1.bf16.msra.mxu0 %v1220
    %1315 = vmatprep.subr.bf16.mxu0 %v1225
    %1316 = vmatpush1.bf16.msra.mxu0 %v1224
    %1317 = vmatprep.subr.bf16.mxu0 %v1229
    %1318 = vmatpush1.bf16.msra.mxu0 %v1228
    %1319 = vmatprep.mubr.bf16.mxu0 %v1231
    %1320 = vmatmul.mubr.bf16.gmra.mrb[0].mxu0 %v1230
    %v1321 = vpop.f32.mrb[0].mxu0
    %v1322 = vadd.f32 0.0, %v1321
    %v1323 = vpop.f32.mrb[0].mxu0
    %v1324 = vadd.f32 0.0, %v1323
    %v1325 = vpop.f32.mrb[0].mxu0
    %v1326 = vadd.f32 0.0, %v1325
    %v1327 = vpop.f32.mrb[0].mxu0
    %v1328 = vadd.f32 0.0, %v1327
    %1329 = vmatprep.mubr.bf16.mxu0 %v1233
    %1330 = vmatmul.mubr.bf16.gmra.mrb[0].mxu0 %v1232
    %v1331 = vpop.f32.mrb[0].mxu0
    %v1332 = vadd.f32 0.0, %v1331
    %v1333 = vpop.f32.mrb[0].mxu0
    %v1334 = vadd.f32 0.0, %v1333
    %v1335 = vpop.f32.mrb[0].mxu0
    %v1336 = vadd.f32 0.0, %v1335
    %v1337 = vpop.f32.mrb[0].mxu0
    %v1338 = vadd.f32 0.0, %v1337
    %1339 = vdwg.mxu0
    %v1340 = vld [vmem:[#allocation16] ss:$8 sm:$0xf]
    %s1341 = scalar_lea.vmem [#allocation16], 1
    %v1342 = vld [vmem:[%s1341] ss:$8 sm:$0xf]
    %v1343 = vadd.f32 %v1269, %v1273
    %v1344 = vadd.f32 %v1343, %v1279
    %v1345 = vadd.f32 %v1344, %v1283
    %v1346 = vrot.slane %v1345, 4
    %v1347 = vadd.f32 %v1345, %v1346
    %v1348 = vrot.slane %v1347, 2
    %v1349 = vadd.f32 %v1347, %v1348
    %v1350 = vrot.slane %v1349, 1
    %v1351 = vadd.f32 %v1349, %v1350
    %v1352 = vadd.f32 %v1271, %v1275
    %v1353 = vadd.f32 %v1352, %v1281
    %v1354 = vadd.f32 %v1353, %v1285
    %v1355 = vrot.slane %v1354, 4
    %v1356 = vadd.f32 %v1354, %v1355
    %v1357 = vrot.slane %v1356, 2
    %v1358 = vadd.f32 %v1356, %v1357
    %v1359 = vrot.slane %v1358, 1
    %v1360 = vadd.f32 %v1358, %v1359
    %v1361 = vadd.f32 %v1322, %v1326
    %v1362 = vadd.f32 %v1361, %v1332
    %v1363 = vadd.f32 %v1362, %v1336
    %v1364 = vrot.slane %v1363, 4
    %v1365 = vadd.f32 %v1363, %v1364
    %v1366 = vrot.slane %v1365, 2
    %v1367 = vadd.f32 %v1365, %v1366
    %v1368 = vrot.slane %v1367, 1
    %v1369 = vadd.f32 %v1367, %v1368
    %v1370 = vadd.f32 %v1324, %v1328
    %v1371 = vadd.f32 %v1370, %v1334
    %v1372 = vadd.f32 %v1371, %v1338
    %v1373 = vrot.slane %v1372, 4
    %v1374 = vadd.f32 %v1372, %v1373
    %v1375 = vrot.slane %v1374, 2
    %v1376 = vadd.f32 %v1374, %v1375
    %v1377 = vrot.slane %v1376, 1
    %v1378 = vadd.f32 %v1376, %v1377
    %v1383 = vcombine.low %v1351, %v1360
    %v1384 = vcombine.low %v1369, %v1378
    %v1386 = vunpack.c.l.s4 1966171168
    %v1387 = vunpack.c.0.s8 %v1386
    %v1388 = vlaneseq
    %v1389 = vshrl.u32 %v1388, 7
    %v1390 = vsub.s32 %v1387, %v1389
    %v1391 = vrot.slane %v1383, %v1390
    %v1393 = vunpack.c.l.s4 1966171168
    %v1394 = vunpack.c.0.s8 %v1393
    %v1395 = vlaneseq
    %v1396 = vshrl.u32 %v1395, 7
    %v1397 = vsub.s32 %v1394, %v1396
    %v1398 = vrot.slane %v1384, %v1397
    %v1399 = vcombine.low %v1391, %v1398
    %v1401 = vunpack.c.l.s4 1966171168
    %v1402 = vunpack.c.0.s8 %v1401
    %v1403 = vlaneseq
    %v1404 = vshrl.u32 %v1403, 7
    %v1405 = vsub.s32 %v1402, %v1404
    %v1406 = vrot.slane %v1399, %v1405
    %v1408 = vlaneseq
    %vm1409 = vcmp.ge.s32.totalorder %v1408, 0
    %vm1410 = vcmp.lt.s32.totalorder %v1408, 512
    %vm1411 = vmand %vm1409, %vm1410
    %1412 = vst.msk [vmem:[#allocation3] ss:$2 sm:$0xf] %vm1411, %v1406
    %v1413 = vmul.f32 %v1269, %v1269
    %v1414 = vmul.f32 %v1271, %v1271
    %v1415 = vmul.f32 %v1322, %v1322
    %v1416 = vmul.f32 %v1324, %v1324
    %v1417 = vmul.f32 %v1273, %v1273
    %v1418 = vmul.f32 %v1275, %v1275
    %v1419 = vmul.f32 %v1326, %v1326
    %v1420 = vmul.f32 %v1328, %v1328
    %v1421 = vmul.f32 %v1279, %v1279
    %v1422 = vmul.f32 %v1281, %v1281
    %v1423 = vmul.f32 %v1332, %v1332
    %v1424 = vmul.f32 %v1334, %v1334
    %v1425 = vmul.f32 %v1283, %v1283
    %v1426 = vmul.f32 %v1285, %v1285
    %v1427 = vmul.f32 %v1336, %v1336
    %v1428 = vmul.f32 %v1338, %v1338
    %v1429 = vadd.f32 %v1413, %v1417
    %v1430 = vadd.f32 %v1429, %v1421
    %v1431 = vadd.f32 %v1430, %v1425
    %v1432 = vrot.slane %v1431, 4
    %v1433 = vadd.f32 %v1431, %v1432
    %v1434 = vrot.slane %v1433, 2
    %v1435 = vadd.f32 %v1433, %v1434
    %v1436 = vrot.slane %v1435, 1
    %v1437 = vadd.f32 %v1435, %v1436
    %v1438 = vadd.f32 %v1414, %v1418
    %v1439 = vadd.f32 %v1438, %v1422
    %v1440 = vadd.f32 %v1439, %v1426
    %v1441 = vrot.slane %v1440, 4
    %v1442 = vadd.f32 %v1440, %v1441
    %v1443 = vrot.slane %v1442, 2
    %v1444 = vadd.f32 %v1442, %v1443
    %v1445 = vrot.slane %v1444, 1
    %v1446 = vadd.f32 %v1444, %v1445
    %v1447 = vadd.f32 %v1415, %v1419
    %v1448 = vadd.f32 %v1447, %v1423
    %v1449 = vadd.f32 %v1448, %v1427
    %v1450 = vrot.slane %v1449, 4
    %v1451 = vadd.f32 %v1449, %v1450
    %v1452 = vrot.slane %v1451, 2
    %v1453 = vadd.f32 %v1451, %v1452
    %v1454 = vrot.slane %v1453, 1
    %v1455 = vadd.f32 %v1453, %v1454
    %v1456 = vadd.f32 %v1416, %v1420
    %v1457 = vadd.f32 %v1456, %v1424
    %v1458 = vadd.f32 %v1457, %v1428
    %v1459 = vrot.slane %v1458, 4
    %v1460 = vadd.f32 %v1458, %v1459
    %v1461 = vrot.slane %v1460, 2
    %v1462 = vadd.f32 %v1460, %v1461
    %v1463 = vrot.slane %v1462, 1
    %v1464 = vadd.f32 %v1462, %v1463
    %v1469 = vcombine.low %v1437, %v1446
    %v1470 = vcombine.low %v1455, %v1464
    %v1472 = vunpack.c.l.s4 1966171168
    %v1473 = vunpack.c.0.s8 %v1472
    %v1474 = vlaneseq
    %v1475 = vshrl.u32 %v1474, 7
    %v1476 = vsub.s32 %v1473, %v1475
    %v1477 = vrot.slane %v1469, %v1476
    %v1479 = vunpack.c.l.s4 1966171168
    %v1480 = vunpack.c.0.s8 %v1479
    %v1481 = vlaneseq
    %v1482 = vshrl.u32 %v1481, 7
    %v1483 = vsub.s32 %v1480, %v1482
    %v1484 = vrot.slane %v1470, %v1483
    %v1485 = vcombine.low %v1477, %v1484
    %v1487 = vunpack.c.l.s4 1966171168
    %v1488 = vunpack.c.0.s8 %v1487
    %v1489 = vlaneseq
    %v1490 = vshrl.u32 %v1489, 7
    %v1491 = vsub.s32 %v1488, %v1490
    %v1492 = vrot.slane %v1485, %v1491
    %s1494 = scalar_lea.vmem [#allocation3], 1
    %1495 = vst.msk [vmem:[%s1494] ss:$2 sm:$0xf] %vm1411, %v1492
    %v1496 = vld [vmem:[#allocation3] sm:$0xff]
    %v1497 = vadd.s32 %v161, 128
    %v1498 = vadd.s32 %v161, 136
    %v1499 = vadd.s32 %v161, 144
    %v1500 = vadd.s32 %v161, 152
    %v1501 = vadd.s32 %v161, 160
    %v1502 = vadd.s32 %v161, 168
    %v1503 = vadd.s32 %v161, 176
    %v1504 = vadd.s32 %v161, 184
    %v1505 = vadd.s32 %v161, 192
    %v1506 = vadd.s32 %v161, 200
    %v1507 = vadd.s32 %v161, 208
    %v1508 = vadd.s32 %v161, 216
    %v1509 = vadd.s32 %v161, 224
    %v1510 = vadd.s32 %v161, 232
    %v1511 = vadd.s32 %v161, 240
    %v1512 = vadd.s32 %v161, 248
    %v1513 = vadd.s32 %v161, 256
    %v1514 = vadd.s32 %v161, 264
    %v1515 = vadd.s32 %v161, 272
    %v1516 = vadd.s32 %v161, 280
    %v1517 = vadd.s32 %v161, 288
    %v1518 = vadd.s32 %v161, 296
    %v1519 = vadd.s32 %v161, 304
    %v1520 = vadd.s32 %v161, 312
    %v1521 = vadd.s32 %v161, 320
    %v1522 = vadd.s32 %v161, 328
    %v1523 = vadd.s32 %v161, 336
    %v1524 = vadd.s32 %v161, 344
    %v1525 = vadd.s32 %v161, 352
    %v1526 = vadd.s32 %v161, 360
    %v1527 = vadd.s32 %v161, 368
    %v1528 = vadd.s32 %v161, 376
    %v1529 = vadd.s32 %v161, 384
    %v1530 = vadd.s32 %v161, 392
    %v1531 = vadd.s32 %v161, 400
    %v1532 = vadd.s32 %v161, 408
    %v1533 = vadd.s32 %v161, 416
    %v1534 = vadd.s32 %v161, 424
    %v1535 = vadd.s32 %v161, 432
    %v1536 = vadd.s32 %v161, 440
    %v1537 = vadd.s32 %v161, 448
    %v1538 = vadd.s32 %v161, 456
    %v1539 = vadd.s32 %v161, 464
    %v1540 = vadd.s32 %v161, 472
    %v1541 = vadd.s32 %v161, 480
    %v1542 = vadd.s32 %v161, 488
    %v1543 = vadd.s32 %v161, 496
    %v1544 = vadd.s32 %v161, 504
    %v1545 = vsub.s32 %v1497, %v308
    %v1546 = vsub.s32 %v1498, %v308
    %v1547 = vsub.s32 %v1499, %v308
    %v1548 = vsub.s32 %v1500, %v308
    %v1549 = vsub.s32 %v1501, %v308
    %v1550 = vsub.s32 %v1502, %v308
    %v1551 = vsub.s32 %v1503, %v308
    %v1552 = vsub.s32 %v1504, %v308
    %v1553 = vsub.s32 %v1505, %v308
    %v1554 = vsub.s32 %v1506, %v308
    %v1555 = vsub.s32 %v1507, %v308
    %v1556 = vsub.s32 %v1508, %v308
    %v1557 = vsub.s32 %v1509, %v308
    %v1558 = vsub.s32 %v1510, %v308
    %v1559 = vsub.s32 %v1511, %v308
    %v1560 = vsub.s32 %v1512, %v308
    %v1561 = vsub.s32 %v1513, %v308
    %v1562 = vsub.s32 %v1514, %v308
    %v1563 = vsub.s32 %v1515, %v308
    %v1564 = vsub.s32 %v1516, %v308
    %v1565 = vsub.s32 %v1517, %v308
    %v1566 = vsub.s32 %v1518, %v308
    %v1567 = vsub.s32 %v1519, %v308
    %v1568 = vsub.s32 %v1520, %v308
    %v1569 = vsub.s32 %v1521, %v308
    %v1570 = vsub.s32 %v1522, %v308
    %v1571 = vsub.s32 %v1523, %v308
    %v1572 = vsub.s32 %v1524, %v308
    %v1573 = vsub.s32 %v1525, %v308
    %v1574 = vsub.s32 %v1526, %v308
    %v1575 = vsub.s32 %v1527, %v308
    %v1576 = vsub.s32 %v1528, %v308
    %v1577 = vsub.s32 %v1529, %v308
    %v1578 = vsub.s32 %v1530, %v308
    %v1579 = vsub.s32 %v1531, %v308
    %v1580 = vsub.s32 %v1532, %v308
    %v1581 = vsub.s32 %v1533, %v308
    %v1582 = vsub.s32 %v1534, %v308
    %v1583 = vsub.s32 %v1535, %v308
    %v1584 = vsub.s32 %v1536, %v308
    %v1585 = vsub.s32 %v1537, %v308
    %v1586 = vsub.s32 %v1538, %v308
    %v1587 = vsub.s32 %v1539, %v308
    %v1588 = vsub.s32 %v1540, %v308
    %v1589 = vsub.s32 %v1541, %v308
    %v1590 = vsub.s32 %v1542, %v308
    %v1591 = vsub.s32 %v1543, %v308
    %v1592 = vsub.s32 %v1544, %v308
    %vm1593 = vcmp.ge.s32.totalorder %v1545, 0
    %vm1594 = vcmp.ge.s32.totalorder %v1546, 0
    %vm1595 = vcmp.ge.s32.totalorder %v1547, 0
    %vm1596 = vcmp.ge.s32.totalorder %v1548, 0
    %vm1597 = vcmp.ge.s32.totalorder %v1549, 0
    %vm1598 = vcmp.ge.s32.totalorder %v1550, 0
    %vm1599 = vcmp.ge.s32.totalorder %v1551, 0
    %vm1600 = vcmp.ge.s32.totalorder %v1552, 0
    %vm1601 = vcmp.ge.s32.totalorder %v1553, 0
    %vm1602 = vcmp.ge.s32.totalorder %v1554, 0
    %vm1603 = vcmp.ge.s32.totalorder %v1555, 0
    %vm1604 = vcmp.ge.s32.totalorder %v1556, 0
    %vm1605 = vcmp.ge.s32.totalorder %v1557, 0
    %vm1606 = vcmp.ge.s32.totalorder %v1558, 0
    %vm1607 = vcmp.ge.s32.totalorder %v1559, 0
    %vm1608 = vcmp.ge.s32.totalorder %v1560, 0
    %vm1609 = vcmp.ge.s32.totalorder %v1561, 0
    %vm1610 = vcmp.ge.s32.totalorder %v1562, 0
    %vm1611 = vcmp.ge.s32.totalorder %v1563, 0
    %vm1612 = vcmp.ge.s32.totalorder %v1564, 0
    %vm1613 = vcmp.ge.s32.totalorder %v1565, 0
    %vm1614 = vcmp.ge.s32.totalorder %v1566, 0
    %vm1615 = vcmp.ge.s32.totalorder %v1567, 0
    %vm1616 = vcmp.ge.s32.totalorder %v1568, 0
    %vm1617 = vcmp.ge.s32.totalorder %v1569, 0
    %vm1618 = vcmp.ge.s32.totalorder %v1570, 0
    %vm1619 = vcmp.ge.s32.totalorder %v1571, 0
    %vm1620 = vcmp.ge.s32.totalorder %v1572, 0
    %vm1621 = vcmp.ge.s32.totalorder %v1573, 0
    %vm1622 = vcmp.ge.s32.totalorder %v1574, 0
    %vm1623 = vcmp.ge.s32.totalorder %v1575, 0
    %vm1624 = vcmp.ge.s32.totalorder %v1576, 0
    %vm1625 = vcmp.ge.s32.totalorder %v1577, 0
    %vm1626 = vcmp.ge.s32.totalorder %v1578, 0
    %vm1627 = vcmp.ge.s32.totalorder %v1579, 0
    %vm1628 = vcmp.ge.s32.totalorder %v1580, 0
    %vm1629 = vcmp.ge.s32.totalorder %v1581, 0
    %vm1630 = vcmp.ge.s32.totalorder %v1582, 0
    %vm1631 = vcmp.ge.s32.totalorder %v1583, 0
    %vm1632 = vcmp.ge.s32.totalorder %v1584, 0
    %vm1633 = vcmp.ge.s32.totalorder %v1585, 0
    %vm1634 = vcmp.ge.s32.totalorder %v1586, 0
    %vm1635 = vcmp.ge.s32.totalorder %v1587, 0
    %vm1636 = vcmp.ge.s32.totalorder %v1588, 0
    %vm1637 = vcmp.ge.s32.totalorder %v1589, 0
    %vm1638 = vcmp.ge.s32.totalorder %v1590, 0
    %vm1639 = vcmp.ge.s32.totalorder %v1591, 0
    %vm1640 = vcmp.ge.s32.totalorder %v1592, 0
    %vm1641 = vcmp.lt.s32.totalorder %v1545, 4
    %vm1642 = vcmp.lt.s32.totalorder %v1546, 4
    %vm1643 = vcmp.lt.s32.totalorder %v1547, 4
    %vm1644 = vcmp.lt.s32.totalorder %v1548, 4
    %vm1645 = vcmp.lt.s32.totalorder %v1549, 4
    %vm1646 = vcmp.lt.s32.totalorder %v1550, 4
    %vm1647 = vcmp.lt.s32.totalorder %v1551, 4
    %vm1648 = vcmp.lt.s32.totalorder %v1552, 4
    %vm1649 = vcmp.lt.s32.totalorder %v1553, 4
    %vm1650 = vcmp.lt.s32.totalorder %v1554, 4
    %vm1651 = vcmp.lt.s32.totalorder %v1555, 4
    %vm1652 = vcmp.lt.s32.totalorder %v1556, 4
    %vm1653 = vcmp.lt.s32.totalorder %v1557, 4
    %vm1654 = vcmp.lt.s32.totalorder %v1558, 4
    %vm1655 = vcmp.lt.s32.totalorder %v1559, 4
    %vm1656 = vcmp.lt.s32.totalorder %v1560, 4
    %vm1657 = vcmp.lt.s32.totalorder %v1561, 4
    %vm1658 = vcmp.lt.s32.totalorder %v1562, 4
    %vm1659 = vcmp.lt.s32.totalorder %v1563, 4
    %vm1660 = vcmp.lt.s32.totalorder %v1564, 4
    %vm1661 = vcmp.lt.s32.totalorder %v1565, 4
    %vm1662 = vcmp.lt.s32.totalorder %v1566, 4
    %vm1663 = vcmp.lt.s32.totalorder %v1567, 4
    %vm1664 = vcmp.lt.s32.totalorder %v1568, 4
    %vm1665 = vcmp.lt.s32.totalorder %v1569, 4
    %vm1666 = vcmp.lt.s32.totalorder %v1570, 4
    %vm1667 = vcmp.lt.s32.totalorder %v1571, 4
    %vm1668 = vcmp.lt.s32.totalorder %v1572, 4
    %vm1669 = vcmp.lt.s32.totalorder %v1573, 4
    %vm1670 = vcmp.lt.s32.totalorder %v1574, 4
    %vm1671 = vcmp.lt.s32.totalorder %v1575, 4
    %vm1672 = vcmp.lt.s32.totalorder %v1576, 4
    %vm1673 = vcmp.lt.s32.totalorder %v1577, 4
    %vm1674 = vcmp.lt.s32.totalorder %v1578, 4
    %vm1675 = vcmp.lt.s32.totalorder %v1579, 4
    %vm1676 = vcmp.lt.s32.totalorder %v1580, 4
    %vm1677 = vcmp.lt.s32.totalorder %v1581, 4
    %vm1678 = vcmp.lt.s32.totalorder %v1582, 4
    %vm1679 = vcmp.lt.s32.totalorder %v1583, 4
    %vm1680 = vcmp.lt.s32.totalorder %v1584, 4
    %vm1681 = vcmp.lt.s32.totalorder %v1585, 4
    %vm1682 = vcmp.lt.s32.totalorder %v1586, 4
    %vm1683 = vcmp.lt.s32.totalorder %v1587, 4
    %vm1684 = vcmp.lt.s32.totalorder %v1588, 4
    %vm1685 = vcmp.lt.s32.totalorder %v1589, 4
    %vm1686 = vcmp.lt.s32.totalorder %v1590, 4
    %vm1687 = vcmp.lt.s32.totalorder %v1591, 4
    %vm1688 = vcmp.lt.s32.totalorder %v1592, 4
    %vm1689 = vmand %vm1593, %vm1641
    %vm1690 = vmand %vm1594, %vm1642
    %vm1691 = vmand %vm1595, %vm1643
    %vm1692 = vmand %vm1596, %vm1644
    %vm1693 = vmand %vm1597, %vm1645
    %vm1694 = vmand %vm1598, %vm1646
    %vm1695 = vmand %vm1599, %vm1647
    %vm1696 = vmand %vm1600, %vm1648
    %vm1697 = vmand %vm1601, %vm1649
    %vm1698 = vmand %vm1602, %vm1650
    %vm1699 = vmand %vm1603, %vm1651
    %vm1700 = vmand %vm1604, %vm1652
    %vm1701 = vmand %vm1605, %vm1653
    %vm1702 = vmand %vm1606, %vm1654
    %vm1703 = vmand %vm1607, %vm1655
    %vm1704 = vmand %vm1608, %vm1656
    %vm1705 = vmand %vm1609, %vm1657
    %vm1706 = vmand %vm1610, %vm1658
    %vm1707 = vmand %vm1611, %vm1659
    %vm1708 = vmand %vm1612, %vm1660
    %vm1709 = vmand %vm1613, %vm1661
    %vm1710 = vmand %vm1614, %vm1662
    %vm1711 = vmand %vm1615, %vm1663
    %vm1712 = vmand %vm1616, %vm1664
    %vm1713 = vmand %vm1617, %vm1665
    %vm1714 = vmand %vm1618, %vm1666
    %vm1715 = vmand %vm1619, %vm1667
    %vm1716 = vmand %vm1620, %vm1668
    %vm1717 = vmand %vm1621, %vm1669
    %vm1718 = vmand %vm1622, %vm1670
    %vm1719 = vmand %vm1623, %vm1671
    %vm1720 = vmand %vm1624, %vm1672
    %vm1721 = vmand %vm1625, %vm1673
    %vm1722 = vmand %vm1626, %vm1674
    %vm1723 = vmand %vm1627, %vm1675
    %vm1724 = vmand %vm1628, %vm1676
    %vm1725 = vmand %vm1629, %vm1677
    %vm1726 = vmand %vm1630, %vm1678
    %vm1727 = vmand %vm1631, %vm1679
    %vm1728 = vmand %vm1632, %vm1680
    %vm1729 = vmand %vm1633, %vm1681
    %vm1730 = vmand %vm1634, %vm1682
    %vm1731 = vmand %vm1635, %vm1683
    %vm1732 = vmand %vm1636, %vm1684
    %vm1733 = vmand %vm1637, %vm1685
    %vm1734 = vmand %vm1638, %vm1686
    %vm1735 = vmand %vm1639, %vm1687
    %vm1736 = vmand %vm1640, %vm1688
    %v1737 = vsel %vm1689, 1.0, 0.0
    %v1738 = vsel %vm1690, 1.0, 0.0
    %v1739 = vsel %vm1691, 1.0, 0.0
    %v1740 = vsel %vm1692, 1.0, 0.0
    %v1741 = vsel %vm1693, 1.0, 0.0
    %v1742 = vsel %vm1694, 1.0, 0.0
    %v1743 = vsel %vm1695, 1.0, 0.0
    %v1744 = vsel %vm1696, 1.0, 0.0
    %v1745 = vsel %vm1697, 1.0, 0.0
    %v1746 = vsel %vm1698, 1.0, 0.0
    %v1747 = vsel %vm1699, 1.0, 0.0
    %v1748 = vsel %vm1700, 1.0, 0.0
    %v1749 = vsel %vm1701, 1.0, 0.0
    %v1750 = vsel %vm1702, 1.0, 0.0
    %v1751 = vsel %vm1703, 1.0, 0.0
    %v1752 = vsel %vm1704, 1.0, 0.0
    %v1753 = vsel %vm1705, 1.0, 0.0
    %v1754 = vsel %vm1706, 1.0, 0.0
    %v1755 = vsel %vm1707, 1.0, 0.0
    %v1756 = vsel %vm1708, 1.0, 0.0
    %v1757 = vsel %vm1709, 1.0, 0.0
    %v1758 = vsel %vm1710, 1.0, 0.0
    %v1759 = vsel %vm1711, 1.0, 0.0
    %v1760 = vsel %vm1712, 1.0, 0.0
    %v1761 = vsel %vm1713, 1.0, 0.0
    %v1762 = vsel %vm1714, 1.0, 0.0
    %v1763 = vsel %vm1715, 1.0, 0.0
    %v1764 = vsel %vm1716, 1.0, 0.0
    %v1765 = vsel %vm1717, 1.0, 0.0
    %v1766 = vsel %vm1718, 1.0, 0.0
    %v1767 = vsel %vm1719, 1.0, 0.0
    %v1768 = vsel %vm1720, 1.0, 0.0
    %v1769 = vsel %vm1721, 1.0, 0.0
    %v1770 = vsel %vm1722, 1.0, 0.0
    %v1771 = vsel %vm1723, 1.0, 0.0
    %v1772 = vsel %vm1724, 1.0, 0.0
    %v1773 = vsel %vm1725, 1.0, 0.0
    %v1774 = vsel %vm1726, 1.0, 0.0
    %v1775 = vsel %vm1727, 1.0, 0.0
    %v1776 = vsel %vm1728, 1.0, 0.0
    %v1777 = vsel %vm1729, 1.0, 0.0
    %v1778 = vsel %vm1730, 1.0, 0.0
    %v1779 = vsel %vm1731, 1.0, 0.0
    %v1780 = vsel %vm1732, 1.0, 0.0
    %v1781 = vsel %vm1733, 1.0, 0.0
    %v1782 = vsel %vm1734, 1.0, 0.0
    %v1783 = vsel %vm1735, 1.0, 0.0
    %v1784 = vsel %vm1736, 1.0, 0.0
    %v1785 = vadd.s32 %v307, 128
    %v1786 = vadd.s32 %v307, 256
    %v1787 = vadd.s32 %v307, 384
    %v1788 = vmul.u32 %v294, 4
    %v1789 = vmul.u32 %v295, 4
    %v1790 = vmul.u32 %v296, 4
    %v1791 = vmul.u32 %v297, 4
    %v1792 = vmul.u32 %v298, 4
    %v1793 = vmul.u32 %v299, 4
    %v1794 = vmul.u32 %v300, 4
    %v1795 = vmul.u32 %v301, 4
    %v1796 = vmul.u32 %v302, 4
    %v1797 = vmul.u32 %v303, 4
    %v1798 = vmul.u32 %v304, 4
    %v1799 = vmul.u32 %v305, 4
    %v1800 = vsub.s32 %v1785, %v389
    %v1801 = vsub.s32 %v1786, %v389
    %v1802 = vsub.s32 %v1787, %v389
    %v1803 = vsub.s32 %v1785, %v390
    %v1804 = vsub.s32 %v1786, %v390
    %v1805 = vsub.s32 %v1787, %v390
    %v1806 = vsub.s32 %v1785, %v391
    %v1807 = vsub.s32 %v1786, %v391
    %v1808 = vsub.s32 %v1787, %v391
    %v1809 = vsub.s32 %v1785, %v392
    %v1810 = vsub.s32 %v1786, %v392
    %v1811 = vsub.s32 %v1787, %v392
    %v1812 = vsub.s32 %v307, %v1788
    %v1813 = vsub.s32 %v1785, %v1788
    %v1814 = vsub.s32 %v1786, %v1788
    %v1815 = vsub.s32 %v1787, %v1788
    %v1816 = vsub.s32 %v307, %v1789
    %v1817 = vsub.s32 %v1785, %v1789
    %v1818 = vsub.s32 %v1786, %v1789
    %v1819 = vsub.s32 %v1787, %v1789
    %v1820 = vsub.s32 %v307, %v1790
    %v1821 = vsub.s32 %v1785, %v1790
    %v1822 = vsub.s32 %v1786, %v1790
    %v1823 = vsub.s32 %v1787, %v1790
    %v1824 = vsub.s32 %v307, %v1791
    %v1825 = vsub.s32 %v1785, %v1791
    %v1826 = vsub.s32 %v1786, %v1791
    %v1827 = vsub.s32 %v1787, %v1791
    %v1828 = vsub.s32 %v307, %v1792
    %v1829 = vsub.s32 %v1785, %v1792
    %v1830 = vsub.s32 %v1786, %v1792
    %v1831 = vsub.s32 %v1787, %v1792
    %v1832 = vsub.s32 %v307, %v1793
    %v1833 = vsub.s32 %v1785, %v1793
    %v1834 = vsub.s32 %v1786, %v1793
    %v1835 = vsub.s32 %v1787, %v1793
    %v1836 = vsub.s32 %v307, %v1794
    %v1837 = vsub.s32 %v1785, %v1794
    %v1838 = vsub.s32 %v1786, %v1794
    %v1839 = vsub.s32 %v1787, %v1794
    %v1840 = vsub.s32 %v307, %v1795
    %v1841 = vsub.s32 %v1785, %v1795
    %v1842 = vsub.s32 %v1786, %v1795
    %v1843 = vsub.s32 %v1787, %v1795
    %v1844 = vsub.s32 %v307, %v1796
    %v1845 = vsub.s32 %v1785, %v1796
    %v1846 = vsub.s32 %v1786, %v1796
    %v1847 = vsub.s32 %v1787, %v1796
    %v1848 = vsub.s32 %v307, %v1797
    %v1849 = vsub.s32 %v1785, %v1797
    %v1850 = vsub.s32 %v1786, %v1797
    %v1851 = vsub.s32 %v1787, %v1797
    %v1852 = vsub.s32 %v307, %v1798
    %v1853 = vsub.s32 %v1785, %v1798
    %v1854 = vsub.s32 %v1786, %v1798
    %v1855 = vsub.s32 %v1787, %v1798
    %v1856 = vsub.s32 %v307, %v1799
    %v1857 = vsub.s32 %v1785, %v1799
    %v1858 = vsub.s32 %v1786, %v1799
    %v1859 = vsub.s32 %v1787, %v1799
    %vm1860 = vcmp.ge.s32.totalorder %v1800, 0
    %vm1861 = vcmp.ge.s32.totalorder %v1801, 0
    %vm1862 = vcmp.ge.s32.totalorder %v1802, 0
    %vm1863 = vcmp.ge.s32.totalorder %v1803, 0
    %vm1864 = vcmp.ge.s32.totalorder %v1804, 0
    %vm1865 = vcmp.ge.s32.totalorder %v1805, 0
    %vm1866 = vcmp.ge.s32.totalorder %v1806, 0
    %vm1867 = vcmp.ge.s32.totalorder %v1807, 0
    %vm1868 = vcmp.ge.s32.totalorder %v1808, 0
    %vm1869 = vcmp.ge.s32.totalorder %v1809, 0
    %vm1870 = vcmp.ge.s32.totalorder %v1810, 0
    %vm1871 = vcmp.ge.s32.totalorder %v1811, 0
    %vm1872 = vcmp.ge.s32.totalorder %v1812, 0
    %vm1873 = vcmp.ge.s32.totalorder %v1813, 0
    %vm1874 = vcmp.ge.s32.totalorder %v1814, 0
    %vm1875 = vcmp.ge.s32.totalorder %v1815, 0
    %vm1876 = vcmp.ge.s32.totalorder %v1816, 0
    %vm1877 = vcmp.ge.s32.totalorder %v1817, 0
    %vm1878 = vcmp.ge.s32.totalorder %v1818, 0
    %vm1879 = vcmp.ge.s32.totalorder %v1819, 0
    %vm1880 = vcmp.ge.s32.totalorder %v1820, 0
    %vm1881 = vcmp.ge.s32.totalorder %v1821, 0
    %vm1882 = vcmp.ge.s32.totalorder %v1822, 0
    %vm1883 = vcmp.ge.s32.totalorder %v1823, 0
    %vm1884 = vcmp.ge.s32.totalorder %v1824, 0
    %vm1885 = vcmp.ge.s32.totalorder %v1825, 0
    %vm1886 = vcmp.ge.s32.totalorder %v1826, 0
    %vm1887 = vcmp.ge.s32.totalorder %v1827, 0
    %vm1888 = vcmp.ge.s32.totalorder %v1828, 0
    %vm1889 = vcmp.ge.s32.totalorder %v1829, 0
    %vm1890 = vcmp.ge.s32.totalorder %v1830, 0
    %vm1891 = vcmp.ge.s32.totalorder %v1831, 0
    %vm1892 = vcmp.ge.s32.totalorder %v1832, 0
    %vm1893 = vcmp.ge.s32.totalorder %v1833, 0
    %vm1894 = vcmp.ge.s32.totalorder %v1834, 0
    %vm1895 = vcmp.ge.s32.totalorder %v1835, 0
    %vm1896 = vcmp.ge.s32.totalorder %v1836, 0
    %vm1897 = vcmp.ge.s32.totalorder %v1837, 0
    %vm1898 = vcmp.ge.s32.totalorder %v1838, 0
    %vm1899 = vcmp.ge.s32.totalorder %v1839, 0
    %vm1900 = vcmp.ge.s32.totalorder %v1840, 0
    %vm1901 = vcmp.ge.s32.totalorder %v1841, 0
    %vm1902 = vcmp.ge.s32.totalorder %v1842, 0
    %vm1903 = vcmp.ge.s32.totalorder %v1843, 0
    %vm1904 = vcmp.ge.s32.totalorder %v1844, 0
    %vm1905 = vcmp.ge.s32.totalorder %v1845, 0
    %vm1906 = vcmp.ge.s32.totalorder %v1846, 0
    %vm1907 = vcmp.ge.s32.totalorder %v1847, 0
    %vm1908 = vcmp.ge.s32.totalorder %v1848, 0
    %vm1909 = vcmp.ge.s32.totalorder %v1849, 0
    %vm1910 = vcmp.ge.s32.totalorder %v1850, 0
    %vm1911 = vcmp.ge.s32.totalorder %v1851, 0
    %vm1912 = vcmp.ge.s32.totalorder %v1852, 0
    %vm1913 = vcmp.ge.s32.totalorder %v1853, 0
    %vm1914 = vcmp.ge.s32.totalorder %v1854, 0
    %vm1915 = vcmp.ge.s32.totalorder %v1855, 0
    %vm1916 = vcmp.ge.s32.totalorder %v1856, 0
    %vm1917 = vcmp.ge.s32.totalorder %v1857, 0
    %vm1918 = vcmp.ge.s32.totalorder %v1858, 0
    %vm1919 = vcmp.ge.s32.totalorder %v1859, 0
    %vm1920 = vcmp.lt.s32.totalorder %v1800, 4
    %vm1921 = vcmp.lt.s32.totalorder %v1801, 4
    %vm1922 = vcmp.lt.s32.totalorder %v1802, 4
    %vm1923 = vcmp.lt.s32.totalorder %v1803, 4
    %vm1924 = vcmp.lt.s32.totalorder %v1804, 4
    %vm1925 = vcmp.lt.s32.totalorder %v1805, 4
    %vm1926 = vcmp.lt.s32.totalorder %v1806, 4
    %vm1927 = vcmp.lt.s32.totalorder %v1807, 4
    %vm1928 = vcmp.lt.s32.totalorder %v1808, 4
    %vm1929 = vcmp.lt.s32.totalorder %v1809, 4
    %vm1930 = vcmp.lt.s32.totalorder %v1810, 4
    %vm1931 = vcmp.lt.s32.totalorder %v1811, 4
    %vm1932 = vcmp.lt.s32.totalorder %v1812, 4
    %vm1933 = vcmp.lt.s32.totalorder %v1813, 4
    %vm1934 = vcmp.lt.s32.totalorder %v1814, 4
    %vm1935 = vcmp.lt.s32.totalorder %v1815, 4
    %vm1936 = vcmp.lt.s32.totalorder %v1816, 4
    %vm1937 = vcmp.lt.s32.totalorder %v1817, 4
    %vm1938 = vcmp.lt.s32.totalorder %v1818, 4
    %vm1939 = vcmp.lt.s32.totalorder %v1819, 4
    %vm1940 = vcmp.lt.s32.totalorder %v1820, 4
    %vm1941 = vcmp.lt.s32.totalorder %v1821, 4
    %vm1942 = vcmp.lt.s32.totalorder %v1822, 4
    %vm1943 = vcmp.lt.s32.totalorder %v1823, 4
    %vm1944 = vcmp.lt.s32.totalorder %v1824, 4
    %vm1945 = vcmp.lt.s32.totalorder %v1825, 4
    %vm1946 = vcmp.lt.s32.totalorder %v1826, 4
    %vm1947 = vcmp.lt.s32.totalorder %v1827, 4
    %vm1948 = vcmp.lt.s32.totalorder %v1828, 4
    %vm1949 = vcmp.lt.s32.totalorder %v1829, 4
    %vm1950 = vcmp.lt.s32.totalorder %v1830, 4
    %vm1951 = vcmp.lt.s32.totalorder %v1831, 4
    %vm1952 = vcmp.lt.s32.totalorder %v1832, 4
    %vm1953 = vcmp.lt.s32.totalorder %v1833, 4
    %vm1954 = vcmp.lt.s32.totalorder %v1834, 4
    %vm1955 = vcmp.lt.s32.totalorder %v1835, 4
    %vm1956 = vcmp.lt.s32.totalorder %v1836, 4
    %vm1957 = vcmp.lt.s32.totalorder %v1837, 4
    %vm1958 = vcmp.lt.s32.totalorder %v1838, 4
    %vm1959 = vcmp.lt.s32.totalorder %v1839, 4
    %vm1960 = vcmp.lt.s32.totalorder %v1840, 4
    %vm1961 = vcmp.lt.s32.totalorder %v1841, 4
    %vm1962 = vcmp.lt.s32.totalorder %v1842, 4
    %vm1963 = vcmp.lt.s32.totalorder %v1843, 4
    %vm1964 = vcmp.lt.s32.totalorder %v1844, 4
    %vm1965 = vcmp.lt.s32.totalorder %v1845, 4
    %vm1966 = vcmp.lt.s32.totalorder %v1846, 4
    %vm1967 = vcmp.lt.s32.totalorder %v1847, 4
    %vm1968 = vcmp.lt.s32.totalorder %v1848, 4
    %vm1969 = vcmp.lt.s32.totalorder %v1849, 4
    %vm1970 = vcmp.lt.s32.totalorder %v1850, 4
    %vm1971 = vcmp.lt.s32.totalorder %v1851, 4
    %vm1972 = vcmp.lt.s32.totalorder %v1852, 4
    %vm1973 = vcmp.lt.s32.totalorder %v1853, 4
    %vm1974 = vcmp.lt.s32.totalorder %v1854, 4
    %vm1975 = vcmp.lt.s32.totalorder %v1855, 4
    %vm1976 = vcmp.lt.s32.totalorder %v1856, 4
    %vm1977 = vcmp.lt.s32.totalorder %v1857, 4
    %vm1978 = vcmp.lt.s32.totalorder %v1858, 4
    %vm1979 = vcmp.lt.s32.totalorder %v1859, 4
    %vm1980 = vmand %vm1860, %vm1920
    %vm1981 = vmand %vm1861, %vm1921
    %vm1982 = vmand %vm1862, %vm1922
    %vm1983 = vmand %vm1863, %vm1923
    %vm1984 = vmand %vm1864, %vm1924
    %vm1985 = vmand %vm1865, %vm1925
    %vm1986 = vmand %vm1866, %vm1926
    %vm1987 = vmand %vm1867, %vm1927
    %vm1988 = vmand %vm1868, %vm1928
    %vm1989 = vmand %vm1869, %vm1929
    %vm1990 = vmand %vm1870, %vm1930
    %vm1991 = vmand %vm1871, %vm1931
    %vm1992 = vmand %vm1872, %vm1932
    %vm1993 = vmand %vm1873, %vm1933
    %vm1994 = vmand %vm1874, %vm1934
    %vm1995 = vmand %vm1875, %vm1935
    %vm1996 = vmand %vm1876, %vm1936
    %vm1997 = vmand %vm1877, %vm1937
    %vm1998 = vmand %vm1878, %vm1938
    %vm1999 = vmand %vm1879, %vm1939
    %vm2000 = vmand %vm1880, %vm1940
    %vm2001 = vmand %vm1881, %vm1941
    %vm2002 = vmand %vm1882, %vm1942
    %vm2003 = vmand %vm1883, %vm1943
    %vm2004 = vmand %vm1884, %vm1944
    %vm2005 = vmand %vm1885, %vm1945
    %vm2006 = vmand %vm1886, %vm1946
    %vm2007 = vmand %vm1887, %vm1947
    %vm2008 = vmand %vm1888, %vm1948
    %vm2009 = vmand %vm1889, %vm1949
    %vm2010 = vmand %vm1890, %vm1950
    %vm2011 = vmand %vm1891, %vm1951
    %vm2012 = vmand %vm1892, %vm1952
    %vm2013 = vmand %vm1893, %vm1953
    %vm2014 = vmand %vm1894, %vm1954
    %vm2015 = vmand %vm1895, %vm1955
    %vm2016 = vmand %vm1896, %vm1956
    %vm2017 = vmand %vm1897, %vm1957
    %vm2018 = vmand %vm1898, %vm1958
    %vm2019 = vmand %vm1899, %vm1959
    %vm2020 = vmand %vm1900, %vm1960
    %vm2021 = vmand %vm1901, %vm1961
    %vm2022 = vmand %vm1902, %vm1962
    %vm2023 = vmand %vm1903, %vm1963
    %vm2024 = vmand %vm1904, %vm1964
    %vm2025 = vmand %vm1905, %vm1965
    %vm2026 = vmand %vm1906, %vm1966
    %vm2027 = vmand %vm1907, %vm1967
    %vm2028 = vmand %vm1908, %vm1968
    %vm2029 = vmand %vm1909, %vm1969
    %vm2030 = vmand %vm1910, %vm1970
    %vm2031 = vmand %vm1911, %vm1971
    %vm2032 = vmand %vm1912, %vm1972
    %vm2033 = vmand %vm1913, %vm1973
    %vm2034 = vmand %vm1914, %vm1974
    %vm2035 = vmand %vm1915, %vm1975
    %vm2036 = vmand %vm1916, %vm1976
    %vm2037 = vmand %vm1917, %vm1977
    %vm2038 = vmand %vm1918, %vm1978
    %vm2039 = vmand %vm1919, %vm1979
    %v2040 = vsel %vm1980, 1.0, 0.0
    %v2041 = vsel %vm1981, 1.0, 0.0
    %v2042 = vsel %vm1982, 1.0, 0.0
    %v2043 = vsel %vm1983, 1.0, 0.0
    %v2044 = vsel %vm1984, 1.0, 0.0
    %v2045 = vsel %vm1985, 1.0, 0.0
    %v2046 = vsel %vm1986, 1.0, 0.0
    %v2047 = vsel %vm1987, 1.0, 0.0
    %v2048 = vsel %vm1988, 1.0, 0.0
    %v2049 = vsel %vm1989, 1.0, 0.0
    %v2050 = vsel %vm1990, 1.0, 0.0
    %v2051 = vsel %vm1991, 1.0, 0.0
    %v2052 = vsel %vm1992, 1.0, 0.0
    %v2053 = vsel %vm1993, 1.0, 0.0
    %v2054 = vsel %vm1994, 1.0, 0.0
    %v2055 = vsel %vm1995, 1.0, 0.0
    %v2056 = vsel %vm1996, 1.0, 0.0
    %v2057 = vsel %vm1997, 1.0, 0.0
    %v2058 = vsel %vm1998, 1.0, 0.0
    %v2059 = vsel %vm1999, 1.0, 0.0
    %v2060 = vsel %vm2000, 1.0, 0.0
    %v2061 = vsel %vm2001, 1.0, 0.0
    %v2062 = vsel %vm2002, 1.0, 0.0
    %v2063 = vsel %vm2003, 1.0, 0.0
    %v2064 = vsel %vm2004, 1.0, 0.0
    %v2065 = vsel %vm2005, 1.0, 0.0
    %v2066 = vsel %vm2006, 1.0, 0.0
    %v2067 = vsel %vm2007, 1.0, 0.0
    %v2068 = vsel %vm2008, 1.0, 0.0
    %v2069 = vsel %vm2009, 1.0, 0.0
    %v2070 = vsel %vm2010, 1.0, 0.0
    %v2071 = vsel %vm2011, 1.0, 0.0
    %v2072 = vsel %vm2012, 1.0, 0.0
    %v2073 = vsel %vm2013, 1.0, 0.0
    %v2074 = vsel %vm2014, 1.0, 0.0
    %v2075 = vsel %vm2015, 1.0, 0.0
    %v2076 = vsel %vm2016, 1.0, 0.0
    %v2077 = vsel %vm2017, 1.0, 0.0
    %v2078 = vsel %vm2018, 1.0, 0.0
    %v2079 = vsel %vm2019, 1.0, 0.0
    %v2080 = vsel %vm2020, 1.0, 0.0
    %v2081 = vsel %vm2021, 1.0, 0.0
    %v2082 = vsel %vm2022, 1.0, 0.0
    %v2083 = vsel %vm2023, 1.0, 0.0
    %v2084 = vsel %vm2024, 1.0, 0.0
    %v2085 = vsel %vm2025, 1.0, 0.0
    %v2086 = vsel %vm2026, 1.0, 0.0
    %v2087 = vsel %vm2027, 1.0, 0.0
    %v2088 = vsel %vm2028, 1.0, 0.0
    %v2089 = vsel %vm2029, 1.0, 0.0
    %v2090 = vsel %vm2030, 1.0, 0.0
    %v2091 = vsel %vm2031, 1.0, 0.0
    %v2092 = vsel %vm2032, 1.0, 0.0
    %v2093 = vsel %vm2033, 1.0, 0.0
    %v2094 = vsel %vm2034, 1.0, 0.0
    %v2095 = vsel %vm2035, 1.0, 0.0
    %v2096 = vsel %vm2036, 1.0, 0.0
    %v2097 = vsel %vm2037, 1.0, 0.0
    %v2098 = vsel %vm2038, 1.0, 0.0
    %v2099 = vsel %vm2039, 1.0, 0.0
    %v2101 = vcombine.high %v1496, %v1496
    %v2103 = vunpack.c.l.s4 1983009808
    %v2104 = vunpack.c.0.s8 %v2103
    %v2105 = vlaneseq
    %v2106 = vshrl.u32 %v2105, 7
    %v2107 = vsub.s32 %v2104, %v2106
    %v2108 = vrot.slane %v1496, %v2107
    %v2110 = vunpack.c.l.s4 1983009808
    %v2111 = vunpack.c.0.s8 %v2110
    %v2112 = vlaneseq
    %v2113 = vshrl.u32 %v2112, 7
    %v2114 = vsub.s32 %v2111, %v2113
    %v2115 = vrot.slane %v2101, %v2114
    %v2116 = vcombine.high %v2108, %v2108
    %v2117 = vcombine.high %v2115, %v2115
    %2122 = vmatprep.subr.mxu0 0.0
    %2123 = vmatpush1.msra.mxu0 %v373
    %2124 = vmatprep.subr.mxu0 0.0
    %2125 = vmatpush1.msra.mxu0 %v374
    %2126 = vmatprep.subr.mxu0 0.0
    %2127 = vmatpush1.msra.mxu0 %v375
    %2128 = vmatprep.subr.mxu0 0.0
    %2129 = vmatpush1.msra.mxu0 %v376
    %2130 = vmatprep.subr.mxu0 0.0
    %2131 = vmatpush1.msra.mxu0 %v377
    %2132 = vmatprep.subr.mxu0 0.0
    %2133 = vmatpush1.msra.mxu0 %v378
    %2134 = vmatprep.subr.mxu0 0.0
    %2135 = vmatpush1.msra.mxu0 %v379
    %2136 = vmatprep.subr.mxu0 0.0
    %2137 = vmatpush1.msra.mxu0 %v380
    %2138 = vmatprep.subr.mxu0 0.0
    %2139 = vmatpush1.msra.mxu0 %v381
    %2140 = vmatprep.subr.mxu0 0.0
    %2141 = vmatpush1.msra.mxu0 %v382
    %2142 = vmatprep.subr.mxu0 0.0
    %2143 = vmatpush1.msra.mxu0 %v383
    %2144 = vmatprep.subr.mxu0 0.0
    %2145 = vmatpush1.msra.mxu0 %v384
    %2146 = vmatprep.subr.mxu0 0.0
    %2147 = vmatpush1.msra.mxu0 %v385
    %2148 = vmatprep.subr.mxu0 0.0
    %2149 = vmatpush1.msra.mxu0 %v386
    %2150 = vmatprep.subr.mxu0 0.0
    %2151 = vmatpush1.msra.mxu0 %v387
    %2152 = vmatprep.subr.mxu0 0.0
    %2153 = vmatpush1.msra.mxu0 %v388
    %2154 = vmatprep.subr.mxu0 0.0
    %2155 = vmatpush1.msra.mxu0 %v1737
    %2156 = vmatprep.subr.mxu0 0.0
    %2157 = vmatpush1.msra.mxu0 %v1738
    %2158 = vmatprep.subr.mxu0 0.0
    %2159 = vmatpush1.msra.mxu0 %v1739
    %2160 = vmatprep.subr.mxu0 0.0
    %2161 = vmatpush1.msra.mxu0 %v1740
    %2162 = vmatprep.subr.mxu0 0.0
    %2163 = vmatpush1.msra.mxu0 %v1741
    %2164 = vmatprep.subr.mxu0 0.0
    %2165 = vmatpush1.msra.mxu0 %v1742
    %2166 = vmatprep.subr.mxu0 0.0
    %2167 = vmatpush1.msra.mxu0 %v1743
    %2168 = vmatprep.subr.mxu0 0.0
    %2169 = vmatpush1.msra.mxu0 %v1744
    %2170 = vmatprep.subr.mxu0 0.0
    %2171 = vmatpush1.msra.mxu0 %v1745
    %2172 = vmatprep.subr.mxu0 0.0
    %2173 = vmatpush1.msra.mxu0 %v1746
    %2174 = vmatprep.subr.mxu0 0.0
    %2175 = vmatpush1.msra.mxu0 %v1747
    %2176 = vmatprep.subr.mxu0 0.0
    %2177 = vmatpush1.msra.mxu0 %v1748
    %2178 = vmatprep.subr.mxu0 0.0
    %2179 = vmatpush1.msra.mxu0 %v1749
    %2180 = vmatprep.subr.mxu0 0.0
    %2181 = vmatpush1.msra.mxu0 %v1750
    %2182 = vmatprep.subr.mxu0 0.0
    %2183 = vmatpush1.msra.mxu0 %v1751
    %2184 = vmatprep.subr.mxu0 0.0
    %2185 = vmatpush1.msra.mxu0 %v1752
    %2186 = vmatprep.mubr.f32.mxu0 %v2116
    %2187 = vmatmul.mubr.f32.gmra.mrb[0].mxu0 %v2108
    %v2188 = vpop.f32.mrb[0].mxu0
    %v2189 = vadd.f32 0.0, %v2188
    %v2190 = vpop.f32.mrb[0].mxu0
    %2191 = vdwg.mxu0
    %2192 = vmatprep.subr.mxu0 0.0
    %2193 = vmatpush1.msra.mxu0 %v1753
    %2194 = vmatprep.subr.mxu0 0.0
    %2195 = vmatpush1.msra.mxu0 %v1754
    %2196 = vmatprep.subr.mxu0 0.0
    %2197 = vmatpush1.msra.mxu0 %v1755
    %2198 = vmatprep.subr.mxu0 0.0
    %2199 = vmatpush1.msra.mxu0 %v1756
    %2200 = vmatprep.subr.mxu0 0.0
    %2201 = vmatpush1.msra.mxu0 %v1757
    %2202 = vmatprep.subr.mxu0 0.0
    %2203 = vmatpush1.msra.mxu0 %v1758
    %2204 = vmatprep.subr.mxu0 0.0
    %2205 = vmatpush1.msra.mxu0 %v1759
    %2206 = vmatprep.subr.mxu0 0.0
    %2207 = vmatpush1.msra.mxu0 %v1760
    %2208 = vmatprep.subr.mxu0 0.0
    %2209 = vmatpush1.msra.mxu0 %v1761
    %2210 = vmatprep.subr.mxu0 0.0
    %2211 = vmatpush1.msra.mxu0 %v1762
    %2212 = vmatprep.subr.mxu0 0.0
    %2213 = vmatpush1.msra.mxu0 %v1763
    %2214 = vmatprep.subr.mxu0 0.0
    %2215 = vmatpush1.msra.mxu0 %v1764
    %2216 = vmatprep.subr.mxu0 0.0
    %2217 = vmatpush1.msra.mxu0 %v1765
    %2218 = vmatprep.subr.mxu0 0.0
    %2219 = vmatpush1.msra.mxu0 %v1766
    %2220 = vmatprep.subr.mxu0 0.0
    %2221 = vmatpush1.msra.mxu0 %v1767
    %2222 = vmatprep.subr.mxu0 0.0
    %2223 = vmatpush1.msra.mxu0 %v1768
    %2224 = vmatprep.subr.mxu0 0.0
    %2225 = vmatpush1.msra.mxu0 %v1769
    %2226 = vmatprep.subr.mxu0 0.0
    %2227 = vmatpush1.msra.mxu0 %v1770
    %2228 = vmatprep.subr.mxu0 0.0
    %2229 = vmatpush1.msra.mxu0 %v1771
    %2230 = vmatprep.subr.mxu0 0.0
    %2231 = vmatpush1.msra.mxu0 %v1772
    %2232 = vmatprep.subr.mxu0 0.0
    %2233 = vmatpush1.msra.mxu0 %v1773
    %2234 = vmatprep.subr.mxu0 0.0
    %2235 = vmatpush1.msra.mxu0 %v1774
    %2236 = vmatprep.subr.mxu0 0.0
    %2237 = vmatpush1.msra.mxu0 %v1775
    %2238 = vmatprep.subr.mxu0 0.0
    %2239 = vmatpush1.msra.mxu0 %v1776
    %2240 = vmatprep.subr.mxu0 0.0
    %2241 = vmatpush1.msra.mxu0 %v1777
    %2242 = vmatprep.subr.mxu0 0.0
    %2243 = vmatpush1.msra.mxu0 %v1778
    %2244 = vmatprep.subr.mxu0 0.0
    %2245 = vmatpush1.msra.mxu0 %v1779
    %2246 = vmatprep.subr.mxu0 0.0
    %2247 = vmatpush1.msra.mxu0 %v1780
    %2248 = vmatprep.subr.mxu0 0.0
    %2249 = vmatpush1.msra.mxu0 %v1781
    %2250 = vmatprep.subr.mxu0 0.0
    %2251 = vmatpush1.msra.mxu0 %v1782
    %2252 = vmatprep.subr.mxu0 0.0
    %2253 = vmatpush1.msra.mxu0 %v1783
    %2254 = vmatprep.subr.mxu0 0.0
    %2255 = vmatpush1.msra.mxu0 %v1784
    %2256 = vmatprep.mubr.f32.mxu0 %v2117
    %2257 = vmatmul.mubr.f32.gmra.mrb[0].mxu0 %v2115
    %v2258 = vpop.f32.mrb[0].mxu0
    %v2259 = vadd.f32 %v2189, %v2258
    %v2260 = vpop.f32.mrb[0].mxu0
    %2261 = vdwg.mxu0
    %2262 = vmatprep.subr.mxu0 %v2040
    %2263 = vmatpush1.msra.mxu0 %v409
    %2264 = vmatprep.subr.mxu0 %v2043
    %2265 = vmatpush1.msra.mxu0 %v410
    %2266 = vmatprep.subr.mxu0 %v2046
    %2267 = vmatpush1.msra.mxu0 %v411
    %2268 = vmatprep.subr.mxu0 %v2049
    %2269 = vmatpush1.msra.mxu0 %v412
    %2270 = vmatprep.subr.mxu0 %v2053
    %2271 = vmatpush1.msra.mxu0 %v2052
    %2272 = vmatprep.subr.mxu0 %v2057
    %2273 = vmatpush1.msra.mxu0 %v2056
    %2274 = vmatprep.subr.mxu0 %v2061
    %2275 = vmatpush1.msra.mxu0 %v2060
    %2276 = vmatprep.subr.mxu0 %v2065
    %2277 = vmatpush1.msra.mxu0 %v2064
    %2278 = vmatprep.subr.mxu0 %v2069
    %2279 = vmatpush1.msra.mxu0 %v2068
    %2280 = vmatprep.subr.mxu0 %v2073
    %2281 = vmatpush1.msra.mxu0 %v2072
    %2282 = vmatprep.subr.mxu0 %v2077
    %2283 = vmatpush1.msra.mxu0 %v2076
    %2284 = vmatprep.subr.mxu0 %v2081
    %2285 = vmatpush1.msra.mxu0 %v2080
    %2286 = vmatprep.subr.mxu0 %v2085
    %2287 = vmatpush1.msra.mxu0 %v2084
    %2288 = vmatprep.subr.mxu0 %v2089
    %2289 = vmatpush1.msra.mxu0 %v2088
    %2290 = vmatprep.subr.mxu0 %v2093
    %2291 = vmatpush1.msra.mxu0 %v2092
    %2292 = vmatprep.subr.mxu0 %v2097
    %2293 = vmatpush1.msra.mxu0 %v2096
    %2294 = vmatprep.subr.mxu0 0.0
    %2295 = vmatpush1.msra.mxu0 0.0
    %2296 = vmatprep.subr.mxu0 0.0
    %2297 = vmatpush1.msra.mxu0 0.0
    %2298 = vmatprep.subr.mxu0 0.0
    %2299 = vmatpush1.msra.mxu0 0.0
    %2300 = vmatprep.subr.mxu0 0.0
    %2301 = vmatpush1.msra.mxu0 0.0
    %2302 = vmatprep.subr.mxu0 0.0
    %2303 = vmatpush1.msra.mxu0 0.0
    %2304 = vmatprep.subr.mxu0 0.0
    %2305 = vmatpush1.msra.mxu0 0.0
    %2306 = vmatprep.subr.mxu0 0.0
    %2307 = vmatpush1.msra.mxu0 0.0
    %2308 = vmatprep.subr.mxu0 0.0
    %2309 = vmatpush1.msra.mxu0 0.0
    %2310 = vmatprep.subr.mxu0 0.0
    %2311 = vmatpush1.msra.mxu0 0.0
    %2312 = vmatprep.subr.mxu0 0.0
    %2313 = vmatpush1.msra.mxu0 0.0
    %2314 = vmatprep.subr.mxu0 0.0
    %2315 = vmatpush1.msra.mxu0 0.0
    %2316 = vmatprep.subr.mxu0 0.0
    %2317 = vmatpush1.msra.mxu0 0.0
    %2318 = vmatprep.subr.mxu0 0.0
    %2319 = vmatpush1.msra.mxu0 0.0
    %2320 = vmatprep.subr.mxu0 0.0
    %2321 = vmatpush1.msra.mxu0 0.0
    %2322 = vmatprep.subr.mxu0 0.0
    %2323 = vmatpush1.msra.mxu0 0.0
    %2324 = vmatprep.subr.mxu0 0.0
    %2325 = vmatpush1.msra.mxu0 0.0
    %2326 = vmatprep.mubr.f32.mxu0 0.0
    %2327 = vmatmul.mubr.f32.gmra.mrb[0].mxu0 %v2259
    %v2328 = vpop.f32.mrb[0].mxu0
    %v2329 = vadd.f32 0.0, %v2328
    %v2330 = vpop.f32.mrb[0].mxu0
    %v2331 = vadd.f32 0.0, %v2330
    %2332 = vdwg.mxu0
    %2333 = vmatprep.subr.mxu0 %v2042
    %2334 = vmatpush1.msra.mxu0 %v2041
    %2335 = vmatprep.subr.mxu0 %v2045
    %2336 = vmatpush1.msra.mxu0 %v2044
    %2337 = vmatprep.subr.mxu0 %v2048
    %2338 = vmatpush1.msra.mxu0 %v2047
    %2339 = vmatprep.subr.mxu0 %v2051
    %2340 = vmatpush1.msra.mxu0 %v2050
    %2341 = vmatprep.subr.mxu0 %v2055
    %2342 = vmatpush1.msra.mxu0 %v2054
    %2343 = vmatprep.subr.mxu0 %v2059
    %2344 = vmatpush1.msra.mxu0 %v2058
    %2345 = vmatprep.subr.mxu0 %v2063
    %2346 = vmatpush1.msra.mxu0 %v2062
    %2347 = vmatprep.subr.mxu0 %v2067
    %2348 = vmatpush1.msra.mxu0 %v2066
    %2349 = vmatprep.subr.mxu0 %v2071
    %2350 = vmatpush1.msra.mxu0 %v2070
    %2351 = vmatprep.subr.mxu0 %v2075
    %2352 = vmatpush1.msra.mxu0 %v2074
    %2353 = vmatprep.subr.mxu0 %v2079
    %2354 = vmatpush1.msra.mxu0 %v2078
    %2355 = vmatprep.subr.mxu0 %v2083
    %2356 = vmatpush1.msra.mxu0 %v2082
    %2357 = vmatprep.subr.mxu0 %v2087
    %2358 = vmatpush1.msra.mxu0 %v2086
    %2359 = vmatprep.subr.mxu0 %v2091
    %2360 = vmatpush1.msra.mxu0 %v2090
    %2361 = vmatprep.subr.mxu0 %v2095
    %2362 = vmatpush1.msra.mxu0 %v2094
    %2363 = vmatprep.subr.mxu0 %v2099
    %2364 = vmatpush1.msra.mxu0 %v2098
    %2365 = vmatprep.subr.mxu0 0.0
    %2366 = vmatpush1.msra.mxu0 0.0
    %2367 = vmatprep.subr.mxu0 0.0
    %2368 = vmatpush1.msra.mxu0 0.0
    %2369 = vmatprep.subr.mxu0 0.0
    %2370 = vmatpush1.msra.mxu0 0.0
    %2371 = vmatprep.subr.mxu0 0.0
    %2372 = vmatpush1.msra.mxu0 0.0
    %2373 = vmatprep.subr.mxu0 0.0
    %2374 = vmatpush1.msra.mxu0 0.0
    %2375 = vmatprep.subr.mxu0 0.0
    %2376 = vmatpush1.msra.mxu0 0.0
    %2377 = vmatprep.subr.mxu0 0.0
    %2378 = vmatpush1.msra.mxu0 0.0
    %2379 = vmatprep.subr.mxu0 0.0
    %2380 = vmatpush1.msra.mxu0 0.0
    %2381 = vmatprep.subr.mxu0 0.0
    %2382 = vmatpush1.msra.mxu0 0.0
    %2383 = vmatprep.subr.mxu0 0.0
    %2384 = vmatpush1.msra.mxu0 0.0
    %2385 = vmatprep.subr.mxu0 0.0
    %2386 = vmatpush1.msra.mxu0 0.0
    %2387 = vmatprep.subr.mxu0 0.0
    %2388 = vmatpush1.msra.mxu0 0.0
    %2389 = vmatprep.subr.mxu0 0.0
    %2390 = vmatpush1.msra.mxu0 0.0
    %2391 = vmatprep.subr.mxu0 0.0
    %2392 = vmatpush1.msra.mxu0 0.0
    %2393 = vmatprep.subr.mxu0 0.0
    %2394 = vmatpush1.msra.mxu0 0.0
    %2395 = vmatprep.subr.mxu0 0.0
    %2396 = vmatpush1.msra.mxu0 0.0
    %2397 = vmatprep.mubr.f32.mxu0 0.0
    %2398 = vmatmul.mubr.f32.gmra.mrb[0].mxu0 %v2259
    %v2399 = vpop.f32.mrb[0].mxu0
    %v2400 = vadd.f32 0.0, %v2399
    %v2401 = vpop.f32.mrb[0].mxu0
    %v2402 = vadd.f32 0.0, %v2401
    %2403 = vdwg.mxu0
    %v2404 = vmul.f32 %v2329, 0.010416667
    %v2405 = vmul.f32 %v2331, 0.010416667
    %v2406 = vmul.f32 %v2400, 0.010416667
    %v2407 = vmul.f32 %v2402, 0.010416667
    %v2408 = vmul.f32 %v2404, %v2404
    %v2409 = vmul.f32 %v2405, %v2405
    %v2410 = vmul.f32 %v2406, %v2406
    %v2411 = vmul.f32 %v2407, %v2407
    %v2416 = vrot.slane %v2408, 7
    %v2417 = vrot.slane %v2409, 7
    %v2418 = vrot.slane %v2410, 7
    %v2419 = vrot.slane %v2411, 7
    %v2424 = vsub.f32 %v2404, %v2416
    %v2425 = vsub.f32 %v2405, %v2417
    %v2426 = vsub.f32 %v2406, %v2418
    %v2427 = vsub.f32 %v2407, %v2419
    %v2428 = vmax.f32 %v2424, 0.0
    %v2429 = vmax.f32 %v2425, 0.0
    %v2430 = vmax.f32 %v2426, 0.0
    %v2431 = vmax.f32 %v2427, 0.0
    %v2432 = vadd.f32 %v2428, 1e-05
    %v2433 = vadd.f32 %v2429, 1e-05
    %v2434 = vadd.f32 %v2430, 1e-05
    %v2435 = vadd.f32 %v2431, 1e-05
    %v2436 = vrsqrt.pop %v2432
    %v2437 = vrsqrt.pop %v2433
    %v2438 = vrsqrt.pop %v2434
    %v2439 = vrsqrt.pop %v2435
    %v2444 = vcombine.low %v2436, %v2437
    %v2445 = vcombine.low %v2438, %v2439
    %v2447 = vunpack.c.l.s4 1966171168
    %v2448 = vunpack.c.0.s8 %v2447
    %v2449 = vlaneseq
    %v2450 = vshrl.u32 %v2449, 7
    %v2451 = vsub.s32 %v2448, %v2450
    %v2452 = vrot.slane %v2444, %v2451
    %v2454 = vunpack.c.l.s4 1966171168
    %v2455 = vunpack.c.0.s8 %v2454
    %v2456 = vlaneseq
    %v2457 = vshrl.u32 %v2456, 7
    %v2458 = vsub.s32 %v2455, %v2457
    %v2459 = vrot.slane %v2445, %v2458
    %v2460 = vcombine.high %v2452, %v2459
    %v2462 = vunpack.c.l.s4 1966171168
    %v2463 = vunpack.c.0.s8 %v2462
    %v2464 = vlaneseq
    %v2465 = vshrl.u32 %v2464, 7
    %v2466 = vsub.s32 %v2463, %v2465
    %v2467 = vrot.slane %v2460, %v2466
    %v2469 = vmul.f32 %v1340, %v2467
    %v2470 = vlaneseq
    %v2471 = vshrl.u32 %v2470, 7
    %v2472 = vsub.s32 0, %v2471
    %v2473 = vrot.slane %v2404, %v2472
    %v2474 = vlaneseq
    %v2475 = vshrl.u32 %v2474, 7
    %v2476 = vsub.s32 0, %v2475
    %v2477 = vrot.slane %v2405, %v2476
    %v2478 = vlaneseq
    %v2479 = vshrl.u32 %v2478, 7
    %v2480 = vsub.s32 0, %v2479
    %v2481 = vrot.slane %v2406, %v2480
    %v2482 = vlaneseq
    %v2483 = vshrl.u32 %v2482, 7
    %v2484 = vsub.s32 0, %v2483
    %v2485 = vrot.slane %v2407, %v2484
    %v2486 = vsub.f32 %v1269, %v2473
    %v2487 = vsub.f32 %v1271, %v2477
    %v2488 = vsub.f32 %v1322, %v2481
    %v2489 = vsub.f32 %v1324, %v2485
    %v2490 = vsub.f32 %v1273, %v2473
    %v2491 = vsub.f32 %v1275, %v2477
    %v2492 = vsub.f32 %v1326, %v2481
    %v2493 = vsub.f32 %v1328, %v2485
    %v2494 = vsub.f32 %v1279, %v2473
    %v2495 = vsub.f32 %v1281, %v2477
    %v2496 = vsub.f32 %v1332, %v2481
    %v2497 = vsub.f32 %v1334, %v2485
    %v2498 = vsub.f32 %v1283, %v2473
    %v2499 = vsub.f32 %v1285, %v2477
    %v2500 = vsub.f32 %v1336, %v2481
    %v2501 = vsub.f32 %v1338, %v2485
    %v2503 = vlaneseq
    %v2504 = vshrl.u32 %v2503, 7
    %v2505 = vsub.s32 0, %v2504
    %v2506 = vrot.slane %v2469, %v2505
    %v2507 = vlaneseq
    %v2508 = vshrl.u32 %v2507, 7
    %v2509 = vsub.s32 1, %v2508
    %v2510 = vrot.slane %v2469, %v2509
    %v2511 = vlaneseq
    %v2512 = vshrl.u32 %v2511, 7
    %v2513 = vsub.s32 2, %v2512
    %v2514 = vrot.slane %v2469, %v2513
    %v2515 = vlaneseq
    %v2516 = vshrl.u32 %v2515, 7
    %v2517 = vsub.s32 3, %v2516
    %v2518 = vrot.slane %v2469, %v2517
    %v2523 = vmul.f32 %v2486, %v2506
    %v2524 = vmul.f32 %v2487, %v2510
    %v2525 = vmul.f32 %v2488, %v2514
    %v2526 = vmul.f32 %v2489, %v2518
    %v2527 = vmul.f32 %v2490, %v2506
    %v2528 = vmul.f32 %v2491, %v2510
    %v2529 = vmul.f32 %v2492, %v2514
    %v2530 = vmul.f32 %v2493, %v2518
    %v2531 = vmul.f32 %v2494, %v2506
    %v2532 = vmul.f32 %v2495, %v2510
    %v2533 = vmul.f32 %v2496, %v2514
    %v2534 = vmul.f32 %v2497, %v2518
    %v2535 = vmul.f32 %v2498, %v2506
    %v2536 = vmul.f32 %v2499, %v2510
    %v2537 = vmul.f32 %v2500, %v2514
    %v2538 = vmul.f32 %v2501, %v2518
    %v2540 = vlaneseq
    %v2541 = vshrl.u32 %v2540, 7
    %v2542 = vsub.s32 0, %v2541
    %v2543 = vrot.slane %v1342, %v2542
    %v2544 = vlaneseq
    %v2545 = vshrl.u32 %v2544, 7
    %v2546 = vsub.s32 1, %v2545
    %v2547 = vrot.slane %v1342, %v2546
    %v2548 = vlaneseq
    %v2549 = vshrl.u32 %v2548, 7
    %v2550 = vsub.s32 2, %v2549
    %v2551 = vrot.slane %v1342, %v2550
    %v2552 = vlaneseq
    %v2553 = vshrl.u32 %v2552, 7
    %v2554 = vsub.s32 3, %v2553
    %v2555 = vrot.slane %v1342, %v2554
    %v2560 = vadd.f32 %v2523, %v2543
    %v2561 = vadd.f32 %v2524, %v2547
    %v2562 = vadd.f32 %v2525, %v2551
    %v2563 = vadd.f32 %v2526, %v2555
    %v2564 = vadd.f32 %v2527, %v2543
    %v2565 = vadd.f32 %v2528, %v2547
    %v2566 = vadd.f32 %v2529, %v2551
    %v2567 = vadd.f32 %v2530, %v2555
    %v2568 = vadd.f32 %v2531, %v2543
    %v2569 = vadd.f32 %v2532, %v2547
    %v2570 = vadd.f32 %v2533, %v2551
    %v2571 = vadd.f32 %v2534, %v2555
    %v2572 = vadd.f32 %v2535, %v2543
    %v2573 = vadd.f32 %v2536, %v2547
    %v2574 = vadd.f32 %v2537, %v2551
    %v2575 = vadd.f32 %v2538, %v2555
    %v2576 = vmax.f32 %v2560, 0.0
    %v2577 = vmax.f32 %v2561, 0.0
    %v2578 = vmax.f32 %v2562, 0.0
    %v2579 = vmax.f32 %v2563, 0.0
    %v2580 = vmax.f32 %v2564, 0.0
    %v2581 = vmax.f32 %v2565, 0.0
    %v2582 = vmax.f32 %v2566, 0.0
    %v2583 = vmax.f32 %v2567, 0.0
    %v2584 = vmax.f32 %v2568, 0.0
    %v2585 = vmax.f32 %v2569, 0.0
    %v2586 = vmax.f32 %v2570, 0.0
    %v2587 = vmax.f32 %v2571, 0.0
    %v2588 = vmax.f32 %v2572, 0.0
    %v2589 = vmax.f32 %v2573, 0.0
    %v2590 = vmax.f32 %v2574, 0.0
    %v2591 = vmax.f32 %v2575, 0.0
    %v2592 = vmul.f32 %v2576, %v169
    %v2593 = vmul.f32 %v2577, %v169
    %v2594 = vmul.f32 %v2578, %v169
    %v2595 = vmul.f32 %v2579, %v169
    %v2596 = vmul.f32 %v2580, %v170
    %v2597 = vmul.f32 %v2581, %v170
    %v2598 = vmul.f32 %v2582, %v170
    %v2599 = vmul.f32 %v2583, %v170
    %v2600 = vmul.f32 %v2584, %v171
    %v2601 = vmul.f32 %v2585, %v171
    %v2602 = vmul.f32 %v2586, %v171
    %v2603 = vmul.f32 %v2587, %v171
    %v2604 = vmul.f32 %v2588, %v172
    %v2605 = vmul.f32 %v2589, %v172
    %v2606 = vmul.f32 %v2590, %v172
    %v2607 = vmul.f32 %v2591, %v172
    %v2608 = vld [vmem:[#allocation2 + $0x200] sm:$0xff]
    %v2609 = vld [vmem:[#allocation2 + $0x208] sm:$0xff]
    %v2610 = vld [vmem:[#allocation2 + $0x210] sm:$0xff]
    %v2611 = vld [vmem:[#allocation2 + $0x218] sm:$0xff]
    %v2612 = vld [vmem:[#allocation2 + $0x220] sm:$0xff]
    %v2613 = vld [vmem:[#allocation2 + $0x228] sm:$0xff]
    %v2614 = vld [vmem:[#allocation2 + $0x230] sm:$0xff]
    %v2615 = vld [vmem:[#allocation2 + $0x238] sm:$0xff]
    %v2616 = vld [vmem:[#allocation2 + $0x240] sm:$0xff]
    %v2617 = vld [vmem:[#allocation2 + $0x248] sm:$0xff]
    %v2618 = vld [vmem:[#allocation2 + $0x250] sm:$0xff]
    %v2619 = vld [vmem:[#allocation2 + $0x258] sm:$0xff]
    %v2620 = vld [vmem:[#allocation2 + $0x260] sm:$0xff]
    %v2621 = vld [vmem:[#allocation2 + $0x268] sm:$0xff]
    %v2622 = vld [vmem:[#allocation2 + $0x270] sm:$0xff]
    %v2623 = vld [vmem:[#allocation2 + $0x278] sm:$0xff]
    %v2624 = vld [vmem:[#allocation2 + $0x280] sm:$0xff]
    %v2625 = vld [vmem:[#allocation2 + $0x288] sm:$0xff]
    %v2626 = vld [vmem:[#allocation2 + $0x290] sm:$0xff]
    %v2627 = vld [vmem:[#allocation2 + $0x298] sm:$0xff]
    %v2628 = vld [vmem:[#allocation2 + $0x2a0] sm:$0xff]
    %v2629 = vld [vmem:[#allocation2 + $0x2a8] sm:$0xff]
    %v2630 = vld [vmem:[#allocation2 + $0x2b0] sm:$0xff]
    %v2631 = vld [vmem:[#allocation2 + $0x2b8] sm:$0xff]
    %v2632 = vld [vmem:[#allocation2 + $0x2c0] sm:$0xff]
    %v2633 = vld [vmem:[#allocation2 + $0x2c8] sm:$0xff]
    %v2634 = vld [vmem:[#allocation2 + $0x2d0] sm:$0xff]
    %v2635 = vld [vmem:[#allocation2 + $0x2d8] sm:$0xff]
    %v2636 = vld [vmem:[#allocation2 + $0x2e0] sm:$0xff]
    %v2637 = vld [vmem:[#allocation2 + $0x2e8] sm:$0xff]
    %v2638 = vld [vmem:[#allocation2 + $0x2f0] sm:$0xff]
    %v2639 = vld [vmem:[#allocation2 + $0x2f8] sm:$0xff]
    %v2640 = vld [vmem:[#allocation2 + $0x300] sm:$0xff]
    %v2641 = vld [vmem:[#allocation2 + $0x308] sm:$0xff]
    %v2642 = vld [vmem:[#allocation2 + $0x310] sm:$0xff]
    %v2643 = vld [vmem:[#allocation2 + $0x318] sm:$0xff]
    %v2644 = vld [vmem:[#allocation2 + $0x320] sm:$0xff]
    %v2645 = vld [vmem:[#allocation2 + $0x328] sm:$0xff]
    %v2646 = vld [vmem:[#allocation2 + $0x330] sm:$0xff]
    %v2647 = vld [vmem:[#allocation2 + $0x338] sm:$0xff]
    %v2648 = vld [vmem:[#allocation2 + $0x340] sm:$0xff]
    %v2649 = vld [vmem:[#allocation2 + $0x348] sm:$0xff]
    %v2650 = vld [vmem:[#allocation2 + $0x350] sm:$0xff]
    %v2651 = vld [vmem:[#allocation2 + $0x358] sm:$0xff]
    %v2652 = vld [vmem:[#allocation2 + $0x360] sm:$0xff]
    %v2653 = vld [vmem:[#allocation2 + $0x368] sm:$0xff]
    %v2654 = vld [vmem:[#allocation2 + $0x370] sm:$0xff]
    %v2655 = vld [vmem:[#allocation2 + $0x378] sm:$0xff]
    %v2656 = vld [vmem:[#allocation2 + $0x380] sm:$0xff]
    %v2657 = vld [vmem:[#allocation2 + $0x388] sm:$0xff]
    %v2658 = vld [vmem:[#allocation2 + $0x390] sm:$0xff]
    %v2659 = vld [vmem:[#allocation2 + $0x398] sm:$0xff]
    %v2660 = vld [vmem:[#allocation2 + $0x3a0] sm:$0xff]
    %v2661 = vld [vmem:[#allocation2 + $0x3a8] sm:$0xff]
    %v2662 = vld [vmem:[#allocation2 + $0x3b0] sm:$0xff]
    %v2663 = vld [vmem:[#allocation2 + $0x3b8] sm:$0xff]
    %v2664 = vld [vmem:[#allocation2 + $0x3c0] sm:$0xff]
    %v2665 = vld [vmem:[#allocation2 + $0x3c8] sm:$0xff]
    %v2666 = vld [vmem:[#allocation2 + $0x3d0] sm:$0xff]
    %v2667 = vld [vmem:[#allocation2 + $0x3d8] sm:$0xff]
    %v2668 = vld [vmem:[#allocation2 + $0x3e0] sm:$0xff]
    %v2669 = vld [vmem:[#allocation2 + $0x3e8] sm:$0xff]
    %v2670 = vld [vmem:[#allocation2 + $0x3f0] sm:$0xff]
    %v2671 = vld [vmem:[#allocation2 + $0x3f8] sm:$0xff]
    %v2672 = vld [vmem:[#allocation2 + $0x400] sm:$0xff]
    %v2673 = vld [vmem:[#allocation2 + $0x408] sm:$0xff]
    %v2674 = vld [vmem:[#allocation2 + $0x410] sm:$0xff]
    %v2675 = vld [vmem:[#allocation2 + $0x418] sm:$0xff]
    %v2676 = vld [vmem:[#allocation2 + $0x420] sm:$0xff]
    %v2677 = vld [vmem:[#allocation2 + $0x428] sm:$0xff]
    %v2678 = vld [vmem:[#allocation2 + $0x430] sm:$0xff]
    %v2679 = vld [vmem:[#allocation2 + $0x438] sm:$0xff]
    %v2680 = vld [vmem:[#allocation2 + $0x440] sm:$0xff]
    %v2681 = vld [vmem:[#allocation2 + $0x448] sm:$0xff]
    %v2682 = vld [vmem:[#allocation2 + $0x450] sm:$0xff]
    %v2683 = vld [vmem:[#allocation2 + $0x458] sm:$0xff]
    %v2684 = vld [vmem:[#allocation2 + $0x460] sm:$0xff]
    %v2685 = vld [vmem:[#allocation2 + $0x468] sm:$0xff]
    %v2686 = vld [vmem:[#allocation2 + $0x470] sm:$0xff]
    %v2687 = vld [vmem:[#allocation2 + $0x478] sm:$0xff]
    %v2688 = vld [vmem:[#allocation2 + $0x480] sm:$0xff]
    %v2689 = vld [vmem:[#allocation2 + $0x488] sm:$0xff]
    %v2690 = vld [vmem:[#allocation2 + $0x490] sm:$0xff]
    %v2691 = vld [vmem:[#allocation2 + $0x498] sm:$0xff]
    %v2692 = vld [vmem:[#allocation2 + $0x4a0] sm:$0xff]
    %v2693 = vld [vmem:[#allocation2 + $0x4a8] sm:$0xff]
    %v2694 = vld [vmem:[#allocation2 + $0x4b0] sm:$0xff]
    %v2695 = vld [vmem:[#allocation2 + $0x4b8] sm:$0xff]
    %v2696 = vld [vmem:[#allocation2 + $0x4c0] sm:$0xff]
    %v2697 = vld [vmem:[#allocation2 + $0x4c8] sm:$0xff]
    %v2698 = vld [vmem:[#allocation2 + $0x4d0] sm:$0xff]
    %v2699 = vld [vmem:[#allocation2 + $0x4d8] sm:$0xff]
    %v2700 = vld [vmem:[#allocation2 + $0x4e0] sm:$0xff]
    %v2701 = vld [vmem:[#allocation2 + $0x4e8] sm:$0xff]
    %v2702 = vld [vmem:[#allocation2 + $0x4f0] sm:$0xff]
    %v2703 = vld [vmem:[#allocation2 + $0x4f8] sm:$0xff]
    %v2704 = vld [vmem:[#allocation2 + $0x500] sm:$0xff]
    %v2705 = vld [vmem:[#allocation2 + $0x508] sm:$0xff]
    %v2706 = vld [vmem:[#allocation2 + $0x510] sm:$0xff]
    %v2707 = vld [vmem:[#allocation2 + $0x518] sm:$0xff]
    %v2708 = vld [vmem:[#allocation2 + $0x520] sm:$0xff]
    %v2709 = vld [vmem:[#allocation2 + $0x528] sm:$0xff]
    %v2710 = vld [vmem:[#allocation2 + $0x530] sm:$0xff]
    %v2711 = vld [vmem:[#allocation2 + $0x538] sm:$0xff]
    %v2712 = vld [vmem:[#allocation2 + $0x540] sm:$0xff]
    %v2713 = vld [vmem:[#allocation2 + $0x548] sm:$0xff]
    %v2714 = vld [vmem:[#allocation2 + $0x550] sm:$0xff]
    %v2715 = vld [vmem:[#allocation2 + $0x558] sm:$0xff]
    %v2716 = vld [vmem:[#allocation2 + $0x560] sm:$0xff]
    %v2717 = vld [vmem:[#allocation2 + $0x568] sm:$0xff]
    %v2718 = vld [vmem:[#allocation2 + $0x570] sm:$0xff]
    %v2719 = vld [vmem:[#allocation2 + $0x578] sm:$0xff]
    %v2720 = vld [vmem:[#allocation2 + $0x580] sm:$0xff]
    %v2721 = vld [vmem:[#allocation2 + $0x588] sm:$0xff]
    %v2722 = vld [vmem:[#allocation2 + $0x590] sm:$0xff]
    %v2723 = vld [vmem:[#allocation2 + $0x598] sm:$0xff]
    %v2724 = vld [vmem:[#allocation2 + $0x5a0] sm:$0xff]
    %v2725 = vld [vmem:[#allocation2 + $0x5a8] sm:$0xff]
    %v2726 = vld [vmem:[#allocation2 + $0x5b0] sm:$0xff]
    %v2727 = vld [vmem:[#allocation2 + $0x5b8] sm:$0xff]
    %v2728 = vld [vmem:[#allocation2 + $0x5c0] sm:$0xff]
    %v2729 = vld [vmem:[#allocation2 + $0x5c8] sm:$0xff]
    %v2730 = vld [vmem:[#allocation2 + $0x5d0] sm:$0xff]
    %v2731 = vld [vmem:[#allocation2 + $0x5d8] sm:$0xff]
    %v2732 = vld [vmem:[#allocation2 + $0x5e0] sm:$0xff]
    %v2733 = vld [vmem:[#allocation2 + $0x5e8] sm:$0xff]
    %v2734 = vld [vmem:[#allocation2 + $0x5f0] sm:$0xff]
    %v2735 = vld [vmem:[#allocation2 + $0x5f8] sm:$0xff]
    %v2736 = vpack.c.bf16 %v2596, %v2592
    %v2737 = vpack.c.bf16 %v2597, %v2593
    %v2738 = vpack.c.bf16 %v2598, %v2594
    %v2739 = vpack.c.bf16 %v2599, %v2595
    %v2740 = vpack.c.bf16 %v2604, %v2600
    %v2741 = vpack.c.bf16 %v2605, %v2601
    %v2742 = vpack.c.bf16 %v2606, %v2602
    %v2743 = vpack.c.bf16 %v2607, %v2603
    %2744 = vmatprep.subr.bf16.mxu0 %v2609
    %2745 = vmatpush1.bf16.msra.mxu0 %v2608
    %2746 = vmatprep.subr.bf16.mxu0 %v2613
    %2747 = vmatpush1.bf16.msra.mxu0 %v2612
    %2748 = vmatprep.subr.bf16.mxu0 %v2617
    %2749 = vmatpush1.bf16.msra.mxu0 %v2616
    %2750 = vmatprep.subr.bf16.mxu0 %v2621
    %2751 = vmatpush1.bf16.msra.mxu0 %v2620
    %2752 = vmatprep.subr.bf16.mxu0 %v2625
    %2753 = vmatpush1.bf16.msra.mxu0 %v2624
    %2754 = vmatprep.subr.bf16.mxu0 %v2629
    %2755 = vmatpush1.bf16.msra.mxu0 %v2628
    %2756 = vmatprep.subr.bf16.mxu0 %v2633
    %2757 = vmatpush1.bf16.msra.mxu0 %v2632
    %2758 = vmatprep.subr.bf16.mxu0 %v2637
    %2759 = vmatpush1.bf16.msra.mxu0 %v2636
    %2760 = vmatprep.subr.bf16.mxu0 %v2641
    %2761 = vmatpush1.bf16.msra.mxu0 %v2640
    %2762 = vmatprep.subr.bf16.mxu0 %v2645
    %2763 = vmatpush1.bf16.msra.mxu0 %v2644
    %2764 = vmatprep.subr.bf16.mxu0 %v2649
    %2765 = vmatpush1.bf16.msra.mxu0 %v2648
    %2766 = vmatprep.subr.bf16.mxu0 %v2653
    %2767 = vmatpush1.bf16.msra.mxu0 %v2652
    %2768 = vmatprep.subr.bf16.mxu0 %v2657
    %2769 = vmatpush1.bf16.msra.mxu0 %v2656
    %2770 = vmatprep.subr.bf16.mxu0 %v2661
    %2771 = vmatpush1.bf16.msra.mxu0 %v2660
    %2772 = vmatprep.subr.bf16.mxu0 %v2665
    %2773 = vmatpush1.bf16.msra.mxu0 %v2664
    %2774 = vmatprep.subr.bf16.mxu0 %v2669
    %2775 = vmatpush1.bf16.msra.mxu0 %v2668
    %2776 = vmatprep.mubr.bf16.mxu0 %v2737
    %2777 = vmatmul.mubr.bf16.gmra.mrb[0].mxu0 %v2736
    %v2778 = vpop.f32.mrb[0].mxu0
    %v2779 = vadd.f32 0.0, %v2778
    %v2780 = vpop.f32.mrb[0].mxu0
    %v2781 = vadd.f32 0.0, %v2780
    %v2782 = vpop.f32.mrb[0].mxu0
    %v2783 = vadd.f32 0.0, %v2782
    %v2784 = vpop.f32.mrb[0].mxu0
    %v2785 = vadd.f32 0.0, %v2784
    %2786 = vmatprep.mubr.bf16.mxu0 %v2741
    %2787 = vmatmul.mubr.bf16.gmra.mrb[0].mxu0 %v2740
    %v2788 = vpop.f32.mrb[0].mxu0
    %v2789 = vadd.f32 0.0, %v2788
    %v2790 = vpop.f32.mrb[0].mxu0
    %v2791 = vadd.f32 0.0, %v2790
    %v2792 = vpop.f32.mrb[0].mxu0
    %v2793 = vadd.f32 0.0, %v2792
    %v2794 = vpop.f32.mrb[0].mxu0
    %v2795 = vadd.f32 0.0, %v2794
    %2796 = vdwg.mxu0
    %2797 = vmatprep.subr.bf16.mxu0 %v2673
    %2798 = vmatpush1.bf16.msra.mxu0 %v2672
    %2799 = vmatprep.subr.bf16.mxu0 %v2677
    %2800 = vmatpush1.bf16.msra.mxu0 %v2676
    %2801 = vmatprep.subr.bf16.mxu0 %v2681
    %2802 = vmatpush1.bf16.msra.mxu0 %v2680
    %2803 = vmatprep.subr.bf16.mxu0 %v2685
    %2804 = vmatpush1.bf16.msra.mxu0 %v2684
    %2805 = vmatprep.subr.bf16.mxu0 %v2689
    %2806 = vmatpush1.bf16.msra.mxu0 %v2688
    %2807 = vmatprep.subr.bf16.mxu0 %v2693
    %2808 = vmatpush1.bf16.msra.mxu0 %v2692
    %2809 = vmatprep.subr.bf16.mxu0 %v2697
    %2810 = vmatpush1.bf16.msra.mxu0 %v2696
    %2811 = vmatprep.subr.bf16.mxu0 %v2701
    %2812 = vmatpush1.bf16.msra.mxu0 %v2700
    %2813 = vmatprep.subr.bf16.mxu0 %v2705
    %2814 = vmatpush1.bf16.msra.mxu0 %v2704
    %2815 = vmatprep.subr.bf16.mxu0 %v2709
    %2816 = vmatpush1.bf16.msra.mxu0 %v2708
    %2817 = vmatprep.subr.bf16.mxu0 %v2713
    %2818 = vmatpush1.bf16.msra.mxu0 %v2712
    %2819 = vmatprep.subr.bf16.mxu0 %v2717
    %2820 = vmatpush1.bf16.msra.mxu0 %v2716
    %2821 = vmatprep.subr.bf16.mxu0 %v2721
    %2822 = vmatpush1.bf16.msra.mxu0 %v2720
    %2823 = vmatprep.subr.bf16.mxu0 %v2725
    %2824 = vmatpush1.bf16.msra.mxu0 %v2724
    %2825 = vmatprep.subr.bf16.mxu0 %v2729
    %2826 = vmatpush1.bf16.msra.mxu0 %v2728
    %2827 = vmatprep.subr.bf16.mxu0 %v2733
    %2828 = vmatpush1.bf16.msra.mxu0 %v2732
    %2829 = vmatprep.mubr.bf16.mxu0 %v2739
    %2830 = vmatmul.mubr.bf16.gmra.mrb[0].mxu0 %v2738
    %v2831 = vpop.f32.mrb[0].mxu0
    %v2832 = vadd.f32 %v2779, %v2831
    %v2833 = vpop.f32.mrb[0].mxu0
    %v2834 = vadd.f32 %v2781, %v2833
    %v2835 = vpop.f32.mrb[0].mxu0
    %v2836 = vadd.f32 %v2783, %v2835
    %v2837 = vpop.f32.mrb[0].mxu0
    %v2838 = vadd.f32 %v2785, %v2837
    %2839 = vmatprep.mubr.bf16.mxu0 %v2743
    %2840 = vmatmul.mubr.bf16.gmra.mrb[0].mxu0 %v2742
    %v2841 = vpop.f32.mrb[0].mxu0
    %v2842 = vadd.f32 %v2789, %v2841
    %v2843 = vpop.f32.mrb[0].mxu0
    %v2844 = vadd.f32 %v2791, %v2843
    %v2845 = vpop.f32.mrb[0].mxu0
    %v2846 = vadd.f32 %v2793, %v2845
    %v2847 = vpop.f32.mrb[0].mxu0
    %v2848 = vadd.f32 %v2795, %v2847
    %2849 = vdwg.mxu0
    %2850 = vmatprep.subr.bf16.mxu0 %v2611
    %2851 = vmatpush1.bf16.msra.mxu0 %v2610
    %2852 = vmatprep.subr.bf16.mxu0 %v2615
    %2853 = vmatpush1.bf16.msra.mxu0 %v2614
    %2854 = vmatprep.subr.bf16.mxu0 %v2619
    %2855 = vmatpush1.bf16.msra.mxu0 %v2618
    %2856 = vmatprep.subr.bf16.mxu0 %v2623
    %2857 = vmatpush1.bf16.msra.mxu0 %v2622
    %2858 = vmatprep.subr.bf16.mxu0 %v2627
    %2859 = vmatpush1.bf16.msra.mxu0 %v2626
    %2860 = vmatprep.subr.bf16.mxu0 %v2631
    %2861 = vmatpush1.bf16.msra.mxu0 %v2630
    %2862 = vmatprep.subr.bf16.mxu0 %v2635
    %2863 = vmatpush1.bf16.msra.mxu0 %v2634
    %2864 = vmatprep.subr.bf16.mxu0 %v2639
    %2865 = vmatpush1.bf16.msra.mxu0 %v2638
    %2866 = vmatprep.subr.bf16.mxu0 %v2643
    %2867 = vmatpush1.bf16.msra.mxu0 %v2642
    %2868 = vmatprep.subr.bf16.mxu0 %v2647
    %2869 = vmatpush1.bf16.msra.mxu0 %v2646
    %2870 = vmatprep.subr.bf16.mxu0 %v2651
    %2871 = vmatpush1.bf16.msra.mxu0 %v2650
    %2872 = vmatprep.subr.bf16.mxu0 %v2655
    %2873 = vmatpush1.bf16.msra.mxu0 %v2654
    %2874 = vmatprep.subr.bf16.mxu0 %v2659
    %2875 = vmatpush1.bf16.msra.mxu0 %v2658
    %2876 = vmatprep.subr.bf16.mxu0 %v2663
    %2877 = vmatpush1.bf16.msra.mxu0 %v2662
    %2878 = vmatprep.subr.bf16.mxu0 %v2667
    %2879 = vmatpush1.bf16.msra.mxu0 %v2666
    %2880 = vmatprep.subr.bf16.mxu0 %v2671
    %2881 = vmatpush1.bf16.msra.mxu0 %v2670
    %2882 = vmatprep.mubr.bf16.mxu0 %v2737
    %2883 = vmatmul.mubr.bf16.gmra.mrb[0].mxu0 %v2736
    %v2884 = vpop.f32.mrb[0].mxu0
    %v2885 = vadd.f32 0.0, %v2884
    %v2886 = vpop.f32.mrb[0].mxu0
    %v2887 = vadd.f32 0.0, %v2886
    %v2888 = vpop.f32.mrb[0].mxu0
    %v2889 = vadd.f32 0.0, %v2888
    %v2890 = vpop.f32.mrb[0].mxu0
    %v2891 = vadd.f32 0.0, %v2890
    %2892 = vmatprep.mubr.bf16.mxu0 %v2741
    %2893 = vmatmul.mubr.bf16.gmra.mrb[0].mxu0 %v2740
    %v2894 = vpop.f32.mrb[0].mxu0
    %v2895 = vadd.f32 0.0, %v2894
    %v2896 = vpop.f32.mrb[0].mxu0
    %v2897 = vadd.f32 0.0, %v2896
    %v2898 = vpop.f32.mrb[0].mxu0
    %v2899 = vadd.f32 0.0, %v2898
    %v2900 = vpop.f32.mrb[0].mxu0
    %v2901 = vadd.f32 0.0, %v2900
    %2902 = vdwg.mxu0
    %2903 = vmatprep.subr.bf16.mxu0 %v2675
    %2904 = vmatpush1.bf16.msra.mxu0 %v2674
    %2905 = vmatprep.subr.bf16.mxu0 %v2679
    %2906 = vmatpush1.bf16.msra.mxu0 %v2678
    %2907 = vmatprep.subr.bf16.mxu0 %v2683
    %2908 = vmatpush1.bf16.msra.mxu0 %v2682
    %2909 = vmatprep.subr.bf16.mxu0 %v2687
    %2910 = vmatpush1.bf16.msra.mxu0 %v2686
    %2911 = vmatprep.subr.bf16.mxu0 %v2691
    %2912 = vmatpush1.bf16.msra.mxu0 %v2690
    %2913 = vmatprep.subr.bf16.mxu0 %v2695
    %2914 = vmatpush1.bf16.msra.mxu0 %v2694
    %2915 = vmatprep.subr.bf16.mxu0 %v2699
    %2916 = vmatpush1.bf16.msra.mxu0 %v2698
    %2917 = vmatprep.subr.bf16.mxu0 %v2703
    %2918 = vmatpush1.bf16.msra.mxu0 %v2702
    %2919 = vmatprep.subr.bf16.mxu0 %v2707
    %2920 = vmatpush1.bf16.msra.mxu0 %v2706
    %2921 = vmatprep.subr.bf16.mxu0 %v2711
    %2922 = vmatpush1.bf16.msra.mxu0 %v2710
    %2923 = vmatprep.subr.bf16.mxu0 %v2715
    %2924 = vmatpush1.bf16.msra.mxu0 %v2714
    %2925 = vmatprep.subr.bf16.mxu0 %v2719
    %2926 = vmatpush1.bf16.msra.mxu0 %v2718
    %2927 = vmatprep.subr.bf16.mxu0 %v2723
    %2928 = vmatpush1.bf16.msra.mxu0 %v2722
    %2929 = vmatprep.subr.bf16.mxu0 %v2727
    %2930 = vmatpush1.bf16.msra.mxu0 %v2726
    %2931 = vmatprep.subr.bf16.mxu0 %v2731
    %2932 = vmatpush1.bf16.msra.mxu0 %v2730
    %2933 = vmatprep.subr.bf16.mxu0 %v2735
    %2934 = vmatpush1.bf16.msra.mxu0 %v2734
    %2935 = vmatprep.mubr.bf16.mxu0 %v2739
    %2936 = vmatmul.mubr.bf16.gmra.mrb[0].mxu0 %v2738
    %v2937 = vpop.f32.mrb[0].mxu0
    %v2938 = vadd.f32 %v2885, %v2937
    %v2939 = vpop.f32.mrb[0].mxu0
    %v2940 = vadd.f32 %v2887, %v2939
    %v2941 = vpop.f32.mrb[0].mxu0
    %v2942 = vadd.f32 %v2889, %v2941
    %v2943 = vpop.f32.mrb[0].mxu0
    %v2944 = vadd.f32 %v2891, %v2943
    %2945 = vmatprep.mubr.bf16.mxu0 %v2743
    %2946 = vmatmul.mubr.bf16.gmra.mrb[0].mxu0 %v2742
    %v2947 = vpop.f32.mrb[0].mxu0
    %v2948 = vadd.f32 %v2895, %v2947
    %v2949 = vpop.f32.mrb[0].mxu0
    %v2950 = vadd.f32 %v2897, %v2949
    %v2951 = vpop.f32.mrb[0].mxu0
    %v2952 = vadd.f32 %v2899, %v2951
    %v2953 = vpop.f32.mrb[0].mxu0
    %v2954 = vadd.f32 %v2901, %v2953
    %2955 = vdwg.mxu0
    %s2956 = scalar_lea.vmem [#allocation16], 2
    %v2957 = vld [vmem:[%s2956] ss:$8 sm:$0xf]
    %s2958 = scalar_lea.vmem [#allocation16], 3
    %v2959 = vld [vmem:[%s2958] ss:$8 sm:$0xf]
    %v2960 = vadd.f32 %v2832, %v2836
    %v2961 = vadd.f32 %v2960, %v2842
    %v2962 = vadd.f32 %v2961, %v2846
    %v2963 = vrot.slane %v2962, 4
    %v2964 = vadd.f32 %v2962, %v2963
    %v2965 = vrot.slane %v2964, 2
    %v2966 = vadd.f32 %v2964, %v2965
    %v2967 = vrot.slane %v2966, 1
    %v2968 = vadd.f32 %v2966, %v2967
    %v2969 = vadd.f32 %v2834, %v2838
    %v2970 = vadd.f32 %v2969, %v2844
    %v2971 = vadd.f32 %v2970, %v2848
    %v2972 = vrot.slane %v2971, 4
    %v2973 = vadd.f32 %v2971, %v2972
    %v2974 = vrot.slane %v2973, 2
    %v2975 = vadd.f32 %v2973, %v2974
    %v2976 = vrot.slane %v2975, 1
    %v2977 = vadd.f32 %v2975, %v2976
    %v2978 = vadd.f32 %v2938, %v2942
    %v2979 = vadd.f32 %v2978, %v2948
    %v2980 = vadd.f32 %v2979, %v2952
    %v2981 = vrot.slane %v2980, 4
    %v2982 = vadd.f32 %v2980, %v2981
    %v2983 = vrot.slane %v2982, 2
    %v2984 = vadd.f32 %v2982, %v2983
    %v2985 = vrot.slane %v2984, 1
    %v2986 = vadd.f32 %v2984, %v2985
    %v2987 = vadd.f32 %v2940, %v2944
    %v2988 = vadd.f32 %v2987, %v2950
    %v2989 = vadd.f32 %v2988, %v2954
    %v2990 = vrot.slane %v2989, 4
    %v2991 = vadd.f32 %v2989, %v2990
    %v2992 = vrot.slane %v2991, 2
    %v2993 = vadd.f32 %v2991, %v2992
    %v2994 = vrot.slane %v2993, 1
    %v2995 = vadd.f32 %v2993, %v2994
    %v3000 = vcombine.low %v2968, %v2977
    %v3001 = vcombine.low %v2986, %v2995
    %v3003 = vunpack.c.l.s4 1966171168
    %v3004 = vunpack.c.0.s8 %v3003
    %v3005 = vlaneseq
    %v3006 = vshrl.u32 %v3005, 7
    %v3007 = vsub.s32 %v3004, %v3006
    %v3008 = vrot.slane %v3000, %v3007
    %v3010 = vunpack.c.l.s4 1966171168
    %v3011 = vunpack.c.0.s8 %v3010
    %v3012 = vlaneseq
    %v3013 = vshrl.u32 %v3012, 7
    %v3014 = vsub.s32 %v3011, %v3013
    %v3015 = vrot.slane %v3001, %v3014
    %v3016 = vcombine.low %v3008, %v3015
    %v3018 = vunpack.c.l.s4 1966171168
    %v3019 = vunpack.c.0.s8 %v3018
    %v3020 = vlaneseq
    %v3021 = vshrl.u32 %v3020, 7
    %v3022 = vsub.s32 %v3019, %v3021
    %v3023 = vrot.slane %v3016, %v3022
    %3025 = vst.msk [vmem:[#allocation3] ss:$2 sm:$0xf] %vm1411, %v3023
    %v3026 = vmul.f32 %v2832, %v2832
    %v3027 = vmul.f32 %v2834, %v2834
    %v3028 = vmul.f32 %v2938, %v2938
    %v3029 = vmul.f32 %v2940, %v2940
    %v3030 = vmul.f32 %v2836, %v2836
    %v3031 = vmul.f32 %v2838, %v2838
    %v3032 = vmul.f32 %v2942, %v2942
    %v3033 = vmul.f32 %v2944, %v2944
    %v3034 = vmul.f32 %v2842, %v2842
    %v3035 = vmul.f32 %v2844, %v2844
    %v3036 = vmul.f32 %v2948, %v2948
    %v3037 = vmul.f32 %v2950, %v2950
    %v3038 = vmul.f32 %v2846, %v2846
    %v3039 = vmul.f32 %v2848, %v2848
    %v3040 = vmul.f32 %v2952, %v2952
    %v3041 = vmul.f32 %v2954, %v2954
    %v3042 = vadd.f32 %v3026, %v3030
    %v3043 = vadd.f32 %v3042, %v3034
    %v3044 = vadd.f32 %v3043, %v3038
    %v3045 = vrot.slane %v3044, 4
    %v3046 = vadd.f32 %v3044, %v3045
    %v3047 = vrot.slane %v3046, 2
    %v3048 = vadd.f32 %v3046, %v3047
    %v3049 = vrot.slane %v3048, 1
    %v3050 = vadd.f32 %v3048, %v3049
    %v3051 = vadd.f32 %v3027, %v3031
    %v3052 = vadd.f32 %v3051, %v3035
    %v3053 = vadd.f32 %v3052, %v3039
    %v3054 = vrot.slane %v3053, 4
    %v3055 = vadd.f32 %v3053, %v3054
    %v3056 = vrot.slane %v3055, 2
    %v3057 = vadd.f32 %v3055, %v3056
    %v3058 = vrot.slane %v3057, 1
    %v3059 = vadd.f32 %v3057, %v3058
    %v3060 = vadd.f32 %v3028, %v3032
    %v3061 = vadd.f32 %v3060, %v3036
    %v3062 = vadd.f32 %v3061, %v3040
    %v3063 = vrot.slane %v3062, 4
    %v3064 = vadd.f32 %v3062, %v3063
    %v3065 = vrot.slane %v3064, 2
    %v3066 = vadd.f32 %v3064, %v3065
    %v3067 = vrot.slane %v3066, 1
    %v3068 = vadd.f32 %v3066, %v3067
    %v3069 = vadd.f32 %v3029, %v3033
    %v3070 = vadd.f32 %v3069, %v3037
    %v3071 = vadd.f32 %v3070, %v3041
    %v3072 = vrot.slane %v3071, 4
    %v3073 = vadd.f32 %v3071, %v3072
    %v3074 = vrot.slane %v3073, 2
    %v3075 = vadd.f32 %v3073, %v3074
    %v3076 = vrot.slane %v3075, 1
    %v3077 = vadd.f32 %v3075, %v3076
    %v3082 = vcombine.low %v3050, %v3059
    %v3083 = vcombine.low %v3068, %v3077
    %v3085 = vunpack.c.l.s4 1966171168
    %v3086 = vunpack.c.0.s8 %v3085
    %v3087 = vlaneseq
    %v3088 = vshrl.u32 %v3087, 7
    %v3089 = vsub.s32 %v3086, %v3088
    %v3090 = vrot.slane %v3082, %v3089
    %v3092 = vunpack.c.l.s4 1966171168
    %v3093 = vunpack.c.0.s8 %v3092
    %v3094 = vlaneseq
    %v3095 = vshrl.u32 %v3094, 7
    %v3096 = vsub.s32 %v3093, %v3095
    %v3097 = vrot.slane %v3083, %v3096
    %v3098 = vcombine.low %v3090, %v3097
    %v3100 = vunpack.c.l.s4 1966171168
    %v3101 = vunpack.c.0.s8 %v3100
    %v3102 = vlaneseq
    %v3103 = vshrl.u32 %v3102, 7
    %v3104 = vsub.s32 %v3101, %v3103
    %v3105 = vrot.slane %v3098, %v3104
    %3107 = vst.msk [vmem:[%s1494] ss:$2 sm:$0xf] %vm1411, %v3105
    %v3108 = vld [vmem:[#allocation3] sm:$0xff]
    %v3109 = vsub.s32 %v1497, %v744
    %v3110 = vsub.s32 %v1498, %v744
    %v3111 = vsub.s32 %v1499, %v744
    %v3112 = vsub.s32 %v1500, %v744
    %v3113 = vsub.s32 %v1501, %v744
    %v3114 = vsub.s32 %v1502, %v744
    %v3115 = vsub.s32 %v1503, %v744
    %v3116 = vsub.s32 %v1504, %v744
    %v3117 = vsub.s32 %v1505, %v744
    %v3118 = vsub.s32 %v1506, %v744
    %v3119 = vsub.s32 %v1507, %v744
    %v3120 = vsub.s32 %v1508, %v744
    %v3121 = vsub.s32 %v1509, %v744
    %v3122 = vsub.s32 %v1510, %v744
    %v3123 = vsub.s32 %v1511, %v744
    %v3124 = vsub.s32 %v1512, %v744
    %v3125 = vsub.s32 %v1513, %v744
    %v3126 = vsub.s32 %v1514, %v744
    %v3127 = vsub.s32 %v1515, %v744
    %v3128 = vsub.s32 %v1516, %v744
    %v3129 = vsub.s32 %v1517, %v744
    %v3130 = vsub.s32 %v1518, %v744
    %v3131 = vsub.s32 %v1519, %v744
    %v3132 = vsub.s32 %v1520, %v744
    %v3133 = vsub.s32 %v1521, %v744
    %v3134 = vsub.s32 %v1522, %v744
    %v3135 = vsub.s32 %v1523, %v744
    %v3136 = vsub.s32 %v1524, %v744
    %v3137 = vsub.s32 %v1525, %v744
    %v3138 = vsub.s32 %v1526, %v744
    %v3139 = vsub.s32 %v1527, %v744
    %v3140 = vsub.s32 %v1528, %v744
    %v3141 = vsub.s32 %v1529, %v744
    %v3142 = vsub.s32 %v1530, %v744
    %v3143 = vsub.s32 %v1531, %v744
    %v3144 = vsub.s32 %v1532, %v744
    %v3145 = vsub.s32 %v1533, %v744
    %v3146 = vsub.s32 %v1534, %v744
    %v3147 = vsub.s32 %v1535, %v744
    %v3148 = vsub.s32 %v1536, %v744
    %v3149 = vsub.s32 %v1537, %v744
    %v3150 = vsub.s32 %v1538, %v744
    %v3151 = vsub.s32 %v1539, %v744
    %v3152 = vsub.s32 %v1540, %v744
    %v3153 = vsub.s32 %v1541, %v744
    %v3154 = vsub.s32 %v1542, %v744
    %v3155 = vsub.s32 %v1543, %v744
    %v3156 = vsub.s32 %v1544, %v744
    %vm3157 = vcmp.ge.s32.totalorder %v3109, 0
    %vm3158 = vcmp.ge.s32.totalorder %v3110, 0
    %vm3159 = vcmp.ge.s32.totalorder %v3111, 0
    %vm3160 = vcmp.ge.s32.totalorder %v3112, 0
    %vm3161 = vcmp.ge.s32.totalorder %v3113, 0
    %vm3162 = vcmp.ge.s32.totalorder %v3114, 0
    %vm3163 = vcmp.ge.s32.totalorder %v3115, 0
    %vm3164 = vcmp.ge.s32.totalorder %v3116, 0
    %vm3165 = vcmp.ge.s32.totalorder %v3117, 0
    %vm3166 = vcmp.ge.s32.totalorder %v3118, 0
    %vm3167 = vcmp.ge.s32.totalorder %v3119, 0
    %vm3168 = vcmp.ge.s32.totalorder %v3120, 0
    %vm3169 = vcmp.ge.s32.totalorder %v3121, 0
    %vm3170 = vcmp.ge.s32.totalorder %v3122, 0
    %vm3171 = vcmp.ge.s32.totalorder %v3123, 0
    %vm3172 = vcmp.ge.s32.totalorder %v3124, 0
    %vm3173 = vcmp.ge.s32.totalorder %v3125, 0
    %vm3174 = vcmp.ge.s32.totalorder %v3126, 0
    %vm3175 = vcmp.ge.s32.totalorder %v3127, 0
    %vm3176 = vcmp.ge.s32.totalorder %v3128, 0
    %vm3177 = vcmp.ge.s32.totalorder %v3129, 0
    %vm3178 = vcmp.ge.s32.totalorder %v3130, 0
    %vm3179 = vcmp.ge.s32.totalorder %v3131, 0
    %vm3180 = vcmp.ge.s32.totalorder %v3132, 0
    %vm3181 = vcmp.ge.s32.totalorder %v3133, 0
    %vm3182 = vcmp.ge.s32.totalorder %v3134, 0
    %vm3183 = vcmp.ge.s32.totalorder %v3135, 0
    %vm3184 = vcmp.ge.s32.totalorder %v3136, 0
    %vm3185 = vcmp.ge.s32.totalorder %v3137, 0
    %vm3186 = vcmp.ge.s32.totalorder %v3138, 0
    %vm3187 = vcmp.ge.s32.totalorder %v3139, 0
    %vm3188 = vcmp.ge.s32.totalorder %v3140, 0
    %vm3189 = vcmp.ge.s32.totalorder %v3141, 0
    %vm3190 = vcmp.ge.s32.totalorder %v3142, 0
    %vm3191 = vcmp.ge.s32.totalorder %v3143, 0
    %vm3192 = vcmp.ge.s32.totalorder %v3144, 0
    %vm3193 = vcmp.ge.s32.totalorder %v3145, 0
    %vm3194 = vcmp.ge.s32.totalorder %v3146, 0
    %vm3195 = vcmp.ge.s32.totalorder %v3147, 0
    %vm3196 = vcmp.ge.s32.totalorder %v3148, 0
    %vm3197 = vcmp.ge.s32.totalorder %v3149, 0
    %vm3198 = vcmp.ge.s32.totalorder %v3150, 0
    %vm3199 = vcmp.ge.s32.totalorder %v3151, 0
    %vm3200 = vcmp.ge.s32.totalorder %v3152, 0
    %vm3201 = vcmp.ge.s32.totalorder %v3153, 0
    %vm3202 = vcmp.ge.s32.totalorder %v3154, 0
    %vm3203 = vcmp.ge.s32.totalorder %v3155, 0
    %vm3204 = vcmp.ge.s32.totalorder %v3156, 0
    %vm3205 = vcmp.lt.s32.totalorder %v3109, 8
    %vm3206 = vcmp.lt.s32.totalorder %v3110, 8
    %vm3207 = vcmp.lt.s32.totalorder %v3111, 8
    %vm3208 = vcmp.lt.s32.totalorder %v3112, 8
    %vm3209 = vcmp.lt.s32.totalorder %v3113, 8
    %vm3210 = vcmp.lt.s32.totalorder %v3114, 8
    %vm3211 = vcmp.lt.s32.totalorder %v3115, 8
    %vm3212 = vcmp.lt.s32.totalorder %v3116, 8
    %vm3213 = vcmp.lt.s32.totalorder %v3117, 8
    %vm3214 = vcmp.lt.s32.totalorder %v3118, 8
    %vm3215 = vcmp.lt.s32.totalorder %v3119, 8
    %vm3216 = vcmp.lt.s32.totalorder %v3120, 8
    %vm3217 = vcmp.lt.s32.totalorder %v3121, 8
    %vm3218 = vcmp.lt.s32.totalorder %v3122, 8
    %vm3219 = vcmp.lt.s32.totalorder %v3123, 8
    %vm3220 = vcmp.lt.s32.totalorder %v3124, 8
    %vm3221 = vcmp.lt.s32.totalorder %v3125, 8
    %vm3222 = vcmp.lt.s32.totalorder %v3126, 8
    %vm3223 = vcmp.lt.s32.totalorder %v3127, 8
    %vm3224 = vcmp.lt.s32.totalorder %v3128, 8
    %vm3225 = vcmp.lt.s32.totalorder %v3129, 8
    %vm3226 = vcmp.lt.s32.totalorder %v3130, 8
    %vm3227 = vcmp.lt.s32.totalorder %v3131, 8
    %vm3228 = vcmp.lt.s32.totalorder %v3132, 8
    %vm3229 = vcmp.lt.s32.totalorder %v3133, 8
    %vm3230 = vcmp.lt.s32.totalorder %v3134, 8
    %vm3231 = vcmp.lt.s32.totalorder %v3135, 8
    %vm3232 = vcmp.lt.s32.totalorder %v3136, 8
    %vm3233 = vcmp.lt.s32.totalorder %v3137, 8
    %vm3234 = vcmp.lt.s32.totalorder %v3138, 8
    %vm3235 = vcmp.lt.s32.totalorder %v3139, 8
    %vm3236 = vcmp.lt.s32.totalorder %v3140, 8
    %vm3237 = vcmp.lt.s32.totalorder %v3141, 8
    %vm3238 = vcmp.lt.s32.totalorder %v3142, 8
    %vm3239 = vcmp.lt.s32.totalorder %v3143, 8
    %vm3240 = vcmp.lt.s32.totalorder %v3144, 8
    %vm3241 = vcmp.lt.s32.totalorder %v3145, 8
    %vm3242 = vcmp.lt.s32.totalorder %v3146, 8
    %vm3243 = vcmp.lt.s32.totalorder %v3147, 8
    %vm3244 = vcmp.lt.s32.totalorder %v3148, 8
    %vm3245 = vcmp.lt.s32.totalorder %v3149, 8
    %vm3246 = vcmp.lt.s32.totalorder %v3150, 8
    %vm3247 = vcmp.lt.s32.totalorder %v3151, 8
    %vm3248 = vcmp.lt.s32.totalorder %v3152, 8
    %vm3249 = vcmp.lt.s32.totalorder %v3153, 8
    %vm3250 = vcmp.lt.s32.totalorder %v3154, 8
    %vm3251 = vcmp.lt.s32.totalorder %v3155, 8
    %vm3252 = vcmp.lt.s32.totalorder %v3156, 8
    %vm3253 = vmand %vm3157, %vm3205
    %vm3254 = vmand %vm3158, %vm3206
    %vm3255 = vmand %vm3159, %vm3207
    %vm3256 = vmand %vm3160, %vm3208
    %vm3257 = vmand %vm3161, %vm3209
    %vm3258 = vmand %vm3162, %vm3210
    %vm3259 = vmand %vm3163, %vm3211
    %vm3260 = vmand %vm3164, %vm3212
    %vm3261 = vmand %vm3165, %vm3213
    %vm3262 = vmand %vm3166, %vm3214
    %vm3263 = vmand %vm3167, %vm3215
    %vm3264 = vmand %vm3168, %vm3216
    %vm3265 = vmand %vm3169, %vm3217
    %vm3266 = vmand %vm3170, %vm3218
    %vm3267 = vmand %vm3171, %vm3219
    %vm3268 = vmand %vm3172, %vm3220
    %vm3269 = vmand %vm3173, %vm3221
    %vm3270 = vmand %vm3174, %vm3222
    %vm3271 = vmand %vm3175, %vm3223
    %vm3272 = vmand %vm3176, %vm3224
    %vm3273 = vmand %vm3177, %vm3225
    %vm3274 = vmand %vm3178, %vm3226
    %vm3275 = vmand %vm3179, %vm3227
    %vm3276 = vmand %vm3180, %vm3228
    %vm3277 = vmand %vm3181, %vm3229
    %vm3278 = vmand %vm3182, %vm3230
    %vm3279 = vmand %vm3183, %vm3231
    %vm3280 = vmand %vm3184, %vm3232
    %vm3281 = vmand %vm3185, %vm3233
    %vm3282 = vmand %vm3186, %vm3234
    %vm3283 = vmand %vm3187, %vm3235
    %vm3284 = vmand %vm3188, %vm3236
    %vm3285 = vmand %vm3189, %vm3237
    %vm3286 = vmand %vm3190, %vm3238
    %vm3287 = vmand %vm3191, %vm3239
    %vm3288 = vmand %vm3192, %vm3240
    %vm3289 = vmand %vm3193, %vm3241
    %vm3290 = vmand %vm3194, %vm3242
    %vm3291 = vmand %vm3195, %vm3243
    %vm3292 = vmand %vm3196, %vm3244
    %vm3293 = vmand %vm3197, %vm3245
    %vm3294 = vmand %vm3198, %vm3246
    %vm3295 = vmand %vm3199, %vm3247
    %vm3296 = vmand %vm3200, %vm3248
    %vm3297 = vmand %vm3201, %vm3249
    %vm3298 = vmand %vm3202, %vm3250
    %vm3299 = vmand %vm3203, %vm3251
    %vm3300 = vmand %vm3204, %vm3252
    %v3301 = vsel %vm3253, 1.0, 0.0
    %v3302 = vsel %vm3254, 1.0, 0.0
    %v3303 = vsel %vm3255, 1.0, 0.0
    %v3304 = vsel %vm3256, 1.0, 0.0
    %v3305 = vsel %vm3257, 1.0, 0.0
    %v3306 = vsel %vm3258, 1.0, 0.0
    %v3307 = vsel %vm3259, 1.0, 0.0
    %v3308 = vsel %vm3260, 1.0, 0.0
    %v3309 = vsel %vm3261, 1.0, 0.0
    %v3310 = vsel %vm3262, 1.0, 0.0
    %v3311 = vsel %vm3263, 1.0, 0.0
    %v3312 = vsel %vm3264, 1.0, 0.0
    %v3313 = vsel %vm3265, 1.0, 0.0
    %v3314 = vsel %vm3266, 1.0, 0.0
    %v3315 = vsel %vm3267, 1.0, 0.0
    %v3316 = vsel %vm3268, 1.0, 0.0
    %v3317 = vsel %vm3269, 1.0, 0.0
    %v3318 = vsel %vm3270, 1.0, 0.0
    %v3319 = vsel %vm3271, 1.0, 0.0
    %v3320 = vsel %vm3272, 1.0, 0.0
    %v3321 = vsel %vm3273, 1.0, 0.0
    %v3322 = vsel %vm3274, 1.0, 0.0
    %v3323 = vsel %vm3275, 1.0, 0.0
    %v3324 = vsel %vm3276, 1.0, 0.0
    %v3325 = vsel %vm3277, 1.0, 0.0
    %v3326 = vsel %vm3278, 1.0, 0.0
    %v3327 = vsel %vm3279, 1.0, 0.0
    %v3328 = vsel %vm3280, 1.0, 0.0
    %v3329 = vsel %vm3281, 1.0, 0.0
    %v3330 = vsel %vm3282, 1.0, 0.0
    %v3331 = vsel %vm3283, 1.0, 0.0
    %v3332 = vsel %vm3284, 1.0, 0.0
    %v3333 = vsel %vm3285, 1.0, 0.0
    %v3334 = vsel %vm3286, 1.0, 0.0
    %v3335 = vsel %vm3287, 1.0, 0.0
    %v3336 = vsel %vm3288, 1.0, 0.0
    %v3337 = vsel %vm3289, 1.0, 0.0
    %v3338 = vsel %vm3290, 1.0, 0.0
    %v3339 = vsel %vm3291, 1.0, 0.0
    %v3340 = vsel %vm3292, 1.0, 0.0
    %v3341 = vsel %vm3293, 1.0, 0.0
    %v3342 = vsel %vm3294, 1.0, 0.0
    %v3343 = vsel %vm3295, 1.0, 0.0
    %v3344 = vsel %vm3296, 1.0, 0.0
    %v3345 = vsel %vm3297, 1.0, 0.0
    %v3346 = vsel %vm3298, 1.0, 0.0
    %v3347 = vsel %vm3299, 1.0, 0.0
    %v3348 = vsel %vm3300, 1.0, 0.0
    %v3349 = vmul.u32 %v163, 8
    %v3350 = vmul.u32 %v164, 8
    %v3351 = vmul.u32 %v294, 8
    %v3352 = vmul.u32 %v295, 8
    %v3353 = vmul.u32 %v296, 8
    %v3354 = vmul.u32 %v297, 8
    %v3355 = vsub.s32 %v1785, %v825
    %v3356 = vsub.s32 %v1786, %v825
    %v3357 = vsub.s32 %v1787, %v825
    %v3358 = vsub.s32 %v1785, %v826
    %v3359 = vsub.s32 %v1786, %v826
    %v3360 = vsub.s32 %v1787, %v826
    %v3361 = vsub.s32 %v307, %v3349
    %v3362 = vsub.s32 %v1785, %v3349
    %v3363 = vsub.s32 %v1786, %v3349
    %v3364 = vsub.s32 %v1787, %v3349
    %v3365 = vsub.s32 %v307, %v3350
    %v3366 = vsub.s32 %v1785, %v3350
    %v3367 = vsub.s32 %v1786, %v3350
    %v3368 = vsub.s32 %v1787, %v3350
    %v3369 = vsub.s32 %v307, %v3351
    %v3370 = vsub.s32 %v1785, %v3351
    %v3371 = vsub.s32 %v1786, %v3351
    %v3372 = vsub.s32 %v1787, %v3351
    %v3373 = vsub.s32 %v307, %v3352
    %v3374 = vsub.s32 %v1785, %v3352
    %v3375 = vsub.s32 %v1786, %v3352
    %v3376 = vsub.s32 %v1787, %v3352
    %v3377 = vsub.s32 %v307, %v3353
    %v3378 = vsub.s32 %v1785, %v3353
    %v3379 = vsub.s32 %v1786, %v3353
    %v3380 = vsub.s32 %v1787, %v3353
    %v3381 = vsub.s32 %v307, %v3354
    %v3382 = vsub.s32 %v1785, %v3354
    %v3383 = vsub.s32 %v1786, %v3354
    %v3384 = vsub.s32 %v1787, %v3354
    %vm3385 = vcmp.ge.s32.totalorder %v3355, 0
    %vm3386 = vcmp.ge.s32.totalorder %v3356, 0
    %vm3387 = vcmp.ge.s32.totalorder %v3357, 0
    %vm3388 = vcmp.ge.s32.totalorder %v3358, 0
    %vm3389 = vcmp.ge.s32.totalorder %v3359, 0
    %vm3390 = vcmp.ge.s32.totalorder %v3360, 0
    %vm3391 = vcmp.ge.s32.totalorder %v3361, 0
    %vm3392 = vcmp.ge.s32.totalorder %v3362, 0
    %vm3393 = vcmp.ge.s32.totalorder %v3363, 0
    %vm3394 = vcmp.ge.s32.totalorder %v3364, 0
    %vm3395 = vcmp.ge.s32.totalorder %v3365, 0
    %vm3396 = vcmp.ge.s32.totalorder %v3366, 0
    %vm3397 = vcmp.ge.s32.totalorder %v3367, 0
    %vm3398 = vcmp.ge.s32.totalorder %v3368, 0
    %vm3399 = vcmp.ge.s32.totalorder %v3369, 0
    %vm3400 = vcmp.ge.s32.totalorder %v3370, 0
    %vm3401 = vcmp.ge.s32.totalorder %v3371, 0
    %vm3402 = vcmp.ge.s32.totalorder %v3372, 0
    %vm3403 = vcmp.ge.s32.totalorder %v3373, 0
    %vm3404 = vcmp.ge.s32.totalorder %v3374, 0
    %vm3405 = vcmp.ge.s32.totalorder %v3375, 0
    %vm3406 = vcmp.ge.s32.totalorder %v3376, 0
    %vm3407 = vcmp.ge.s32.totalorder %v3377, 0
    %vm3408 = vcmp.ge.s32.totalorder %v3378, 0
    %vm3409 = vcmp.ge.s32.totalorder %v3379, 0
    %vm3410 = vcmp.ge.s32.totalorder %v3380, 0
    %vm3411 = vcmp.ge.s32.totalorder %v3381, 0
    %vm3412 = vcmp.ge.s32.totalorder %v3382, 0
    %vm3413 = vcmp.ge.s32.totalorder %v3383, 0
    %vm3414 = vcmp.ge.s32.totalorder %v3384, 0
    %vm3415 = vcmp.lt.s32.totalorder %v3355, 8
    %vm3416 = vcmp.lt.s32.totalorder %v3356, 8
    %vm3417 = vcmp.lt.s32.totalorder %v3357, 8
    %vm3418 = vcmp.lt.s32.totalorder %v3358, 8
    %vm3419 = vcmp.lt.s32.totalorder %v3359, 8
    %vm3420 = vcmp.lt.s32.totalorder %v3360, 8
    %vm3421 = vcmp.lt.s32.totalorder %v3361, 8
    %vm3422 = vcmp.lt.s32.totalorder %v3362, 8
    %vm3423 = vcmp.lt.s32.totalorder %v3363, 8
    %vm3424 = vcmp.lt.s32.totalorder %v3364, 8
    %vm3425 = vcmp.lt.s32.totalorder %v3365, 8
    %vm3426 = vcmp.lt.s32.totalorder %v3366, 8
    %vm3427 = vcmp.lt.s32.totalorder %v3367, 8
    %vm3428 = vcmp.lt.s32.totalorder %v3368, 8
    %vm3429 = vcmp.lt.s32.totalorder %v3369, 8
    %vm3430 = vcmp.lt.s32.totalorder %v3370, 8
    %vm3431 = vcmp.lt.s32.totalorder %v3371, 8
    %vm3432 = vcmp.lt.s32.totalorder %v3372, 8
    %vm3433 = vcmp.lt.s32.totalorder %v3373, 8
    %vm3434 = vcmp.lt.s32.totalorder %v3374, 8
    %vm3435 = vcmp.lt.s32.totalorder %v3375, 8
    %vm3436 = vcmp.lt.s32.totalorder %v3376, 8
    %vm3437 = vcmp.lt.s32.totalorder %v3377, 8
    %vm3438 = vcmp.lt.s32.totalorder %v3378, 8
    %vm3439 = vcmp.lt.s32.totalorder %v3379, 8
    %vm3440 = vcmp.lt.s32.totalorder %v3380, 8
    %vm3441 = vcmp.lt.s32.totalorder %v3381, 8
    %vm3442 = vcmp.lt.s32.totalorder %v3382, 8
    %vm3443 = vcmp.lt.s32.totalorder %v3383, 8
    %vm3444 = vcmp.lt.s32.totalorder %v3384, 8
    %vm3445 = vmand %vm3385, %vm3415
    %vm3446 = vmand %vm3386, %vm3416
    %vm3447 = vmand %vm3387, %vm3417
    %vm3448 = vmand %vm3388, %vm3418
    %vm3449 = vmand %vm3389, %vm3419
    %vm3450 = vmand %vm3390, %vm3420
    %vm3451 = vmand %vm3391, %vm3421
    %vm3452 = vmand %vm3392, %vm3422
    %vm3453 = vmand %vm3393, %vm3423
    %vm3454 = vmand %vm3394, %vm3424
    %vm3455 = vmand %vm3395, %vm3425
    %vm3456 = vmand %vm3396, %vm3426
    %vm3457 = vmand %vm3397, %vm3427
    %vm3458 = vmand %vm3398, %vm3428
    %vm3459 = vmand %vm3399, %vm3429
    %vm3460 = vmand %vm3400, %vm3430
    %vm3461 = vmand %vm3401, %vm3431
    %vm3462 = vmand %vm3402, %vm3432
    %vm3463 = vmand %vm3403, %vm3433
    %vm3464 = vmand %vm3404, %vm3434
    %vm3465 = vmand %vm3405, %vm3435
    %vm3466 = vmand %vm3406, %vm3436
    %vm3467 = vmand %vm3407, %vm3437
    %vm3468 = vmand %vm3408, %vm3438
    %vm3469 = vmand %vm3409, %vm3439
    %vm3470 = vmand %vm3410, %vm3440
    %vm3471 = vmand %vm3411, %vm3441
    %vm3472 = vmand %vm3412, %vm3442
    %vm3473 = vmand %vm3413, %vm3443
    %vm3474 = vmand %vm3414, %vm3444
    %v3475 = vsel %vm3445, 1.0, 0.0
    %v3476 = vsel %vm3446, 1.0, 0.0
    %v3477 = vsel %vm3447, 1.0, 0.0
    %v3478 = vsel %vm3448, 1.0, 0.0
    %v3479 = vsel %vm3449, 1.0, 0.0
    %v3480 = vsel %vm3450, 1.0, 0.0
    %v3481 = vsel %vm3451, 1.0, 0.0
    %v3482 = vsel %vm3452, 1.0, 0.0
    %v3483 = vsel %vm3453, 1.0, 0.0
    %v3484 = vsel %vm3454, 1.0, 0.0
    %v3485 = vsel %vm3455, 1.0, 0.0
    %v3486 = vsel %vm3456, 1.0, 0.0
    %v3487 = vsel %vm3457, 1.0, 0.0
    %v3488 = vsel %vm3458, 1.0, 0.0
    %v3489 = vsel %vm3459, 1.0, 0.0
    %v3490 = vsel %vm3460, 1.0, 0.0
    %v3491 = vsel %vm3461, 1.0, 0.0
    %v3492 = vsel %vm3462, 1.0, 0.0
    %v3493 = vsel %vm3463, 1.0, 0.0
    %v3494 = vsel %vm3464, 1.0, 0.0
    %v3495 = vsel %vm3465, 1.0, 0.0
    %v3496 = vsel %vm3466, 1.0, 0.0
    %v3497 = vsel %vm3467, 1.0, 0.0
    %v3498 = vsel %vm3468, 1.0, 0.0
    %v3499 = vsel %vm3469, 1.0, 0.0
    %v3500 = vsel %vm3470, 1.0, 0.0
    %v3501 = vsel %vm3471, 1.0, 0.0
    %v3502 = vsel %vm3472, 1.0, 0.0
    %v3503 = vsel %vm3473, 1.0, 0.0
    %v3504 = vsel %vm3474, 1.0, 0.0
    %v3506 = vcombine.high %v3108, %v3108
    %v3508 = vunpack.c.l.s4 1983009808
    %v3509 = vunpack.c.0.s8 %v3508
    %v3510 = vlaneseq
    %v3511 = vshrl.u32 %v3510, 7
    %v3512 = vsub.s32 %v3509, %v3511
    %v3513 = vrot.slane %v3108, %v3512
    %v3515 = vunpack.c.l.s4 1983009808
    %v3516 = vunpack.c.0.s8 %v3515
    %v3517 = vlaneseq
    %v3518 = vshrl.u32 %v3517, 7
    %v3519 = vsub.s32 %v3516, %v3518
    %v3520 = vrot.slane %v3506, %v3519
    %v3521 = vcombine.high %v3513, %v3513
    %v3522 = vcombine.high %v3520, %v3520
    %3527 = vmatprep.subr.mxu0 0.0
    %3528 = vmatpush1.msra.mxu0 %v809
    %3529 = vmatprep.subr.mxu0 0.0
    %3530 = vmatpush1.msra.mxu0 %v810
    %3531 = vmatprep.subr.mxu0 0.0
    %3532 = vmatpush1.msra.mxu0 %v811
    %3533 = vmatprep.subr.mxu0 0.0
    %3534 = vmatpush1.msra.mxu0 %v812
    %3535 = vmatprep.subr.mxu0 0.0
    %3536 = vmatpush1.msra.mxu0 %v813
    %3537 = vmatprep.subr.mxu0 0.0
    %3538 = vmatpush1.msra.mxu0 %v814
    %3539 = vmatprep.subr.mxu0 0.0
    %3540 = vmatpush1.msra.mxu0 %v815
    %3541 = vmatprep.subr.mxu0 0.0
    %3542 = vmatpush1.msra.mxu0 %v816
    %3543 = vmatprep.subr.mxu0 0.0
    %3544 = vmatpush1.msra.mxu0 %v817
    %3545 = vmatprep.subr.mxu0 0.0
    %3546 = vmatpush1.msra.mxu0 %v818
    %3547 = vmatprep.subr.mxu0 0.0
    %3548 = vmatpush1.msra.mxu0 %v819
    %3549 = vmatprep.subr.mxu0 0.0
    %3550 = vmatpush1.msra.mxu0 %v820
    %3551 = vmatprep.subr.mxu0 0.0
    %3552 = vmatpush1.msra.mxu0 %v821
    %3553 = vmatprep.subr.mxu0 0.0
    %3554 = vmatpush1.msra.mxu0 %v822
    %3555 = vmatprep.subr.mxu0 0.0
    %3556 = vmatpush1.msra.mxu0 %v823
    %3557 = vmatprep.subr.mxu0 0.0
    %3558 = vmatpush1.msra.mxu0 %v824
    %3559 = vmatprep.subr.mxu0 0.0
    %3560 = vmatpush1.msra.mxu0 %v3301
    %3561 = vmatprep.subr.mxu0 0.0
    %3562 = vmatpush1.msra.mxu0 %v3302
    %3563 = vmatprep.subr.mxu0 0.0
    %3564 = vmatpush1.msra.mxu0 %v3303
    %3565 = vmatprep.subr.mxu0 0.0
    %3566 = vmatpush1.msra.mxu0 %v3304
    %3567 = vmatprep.subr.mxu0 0.0
    %3568 = vmatpush1.msra.mxu0 %v3305
    %3569 = vmatprep.subr.mxu0 0.0
    %3570 = vmatpush1.msra.mxu0 %v3306
    %3571 = vmatprep.subr.mxu0 0.0
    %3572 = vmatpush1.msra.mxu0 %v3307
    %3573 = vmatprep.subr.mxu0 0.0
    %3574 = vmatpush1.msra.mxu0 %v3308
    %3575 = vmatprep.subr.mxu0 0.0
    %3576 = vmatpush1.msra.mxu0 %v3309
    %3577 = vmatprep.subr.mxu0 0.0
    %3578 = vmatpush1.msra.mxu0 %v3310
    %3579 = vmatprep.subr.mxu0 0.0
    %3580 = vmatpush1.msra.mxu0 %v3311
    %3581 = vmatprep.subr.mxu0 0.0
    %3582 = vmatpush1.msra.mxu0 %v3312
    %3583 = vmatprep.subr.mxu0 0.0
    %3584 = vmatpush1.msra.mxu0 %v3313
    %3585 = vmatprep.subr.mxu0 0.0
    %3586 = vmatpush1.msra.mxu0 %v3314
    %3587 = vmatprep.subr.mxu0 0.0
    %3588 = vmatpush1.msra.mxu0 %v3315
    %3589 = vmatprep.subr.mxu0 0.0
    %3590 = vmatpush1.msra.mxu0 %v3316
    %3591 = vmatprep.mubr.f32.mxu0 %v3521
    %3592 = vmatmul.mubr.f32.gmra.mrb[0].mxu0 %v3513
    %v3593 = vpop.f32.mrb[0].mxu0
    %v3594 = vadd.f32 0.0, %v3593
    %v3595 = vpop.f32.mrb[0].mxu0
    %3596 = vdwg.mxu0
    %3597 = vmatprep.subr.mxu0 0.0
    %3598 = vmatpush1.msra.mxu0 %v3317
    %3599 = vmatprep.subr.mxu0 0.0
    %3600 = vmatpush1.msra.mxu0 %v3318
    %3601 = vmatprep.subr.mxu0 0.0
    %3602 = vmatpush1.msra.mxu0 %v3319
    %3603 = vmatprep.subr.mxu0 0.0
    %3604 = vmatpush1.msra.mxu0 %v3320
    %3605 = vmatprep.subr.mxu0 0.0
    %3606 = vmatpush1.msra.mxu0 %v3321
    %3607 = vmatprep.subr.mxu0 0.0
    %3608 = vmatpush1.msra.mxu0 %v3322
    %3609 = vmatprep.subr.mxu0 0.0
    %3610 = vmatpush1.msra.mxu0 %v3323
    %3611 = vmatprep.subr.mxu0 0.0
    %3612 = vmatpush1.msra.mxu0 %v3324
    %3613 = vmatprep.subr.mxu0 0.0
    %3614 = vmatpush1.msra.mxu0 %v3325
    %3615 = vmatprep.subr.mxu0 0.0
    %3616 = vmatpush1.msra.mxu0 %v3326
    %3617 = vmatprep.subr.mxu0 0.0
    %3618 = vmatpush1.msra.mxu0 %v3327
    %3619 = vmatprep.subr.mxu0 0.0
    %3620 = vmatpush1.msra.mxu0 %v3328
    %3621 = vmatprep.subr.mxu0 0.0
    %3622 = vmatpush1.msra.mxu0 %v3329
    %3623 = vmatprep.subr.mxu0 0.0
    %3624 = vmatpush1.msra.mxu0 %v3330
    %3625 = vmatprep.subr.mxu0 0.0
    %3626 = vmatpush1.msra.mxu0 %v3331
    %3627 = vmatprep.subr.mxu0 0.0
    %3628 = vmatpush1.msra.mxu0 %v3332
    %3629 = vmatprep.subr.mxu0 0.0
    %3630 = vmatpush1.msra.mxu0 %v3333
    %3631 = vmatprep.subr.mxu0 0.0
    %3632 = vmatpush1.msra.mxu0 %v3334
    %3633 = vmatprep.subr.mxu0 0.0
    %3634 = vmatpush1.msra.mxu0 %v3335
    %3635 = vmatprep.subr.mxu0 0.0
    %3636 = vmatpush1.msra.mxu0 %v3336
    %3637 = vmatprep.subr.mxu0 0.0
    %3638 = vmatpush1.msra.mxu0 %v3337
    %3639 = vmatprep.subr.mxu0 0.0
    %3640 = vmatpush1.msra.mxu0 %v3338
    %3641 = vmatprep.subr.mxu0 0.0
    %3642 = vmatpush1.msra.mxu0 %v3339
    %3643 = vmatprep.subr.mxu0 0.0
    %3644 = vmatpush1.msra.mxu0 %v3340
    %3645 = vmatprep.subr.mxu0 0.0
    %3646 = vmatpush1.msra.mxu0 %v3341
    %3647 = vmatprep.subr.mxu0 0.0
    %3648 = vmatpush1.msra.mxu0 %v3342
    %3649 = vmatprep.subr.mxu0 0.0
    %3650 = vmatpush1.msra.mxu0 %v3343
    %3651 = vmatprep.subr.mxu0 0.0
    %3652 = vmatpush1.msra.mxu0 %v3344
    %3653 = vmatprep.subr.mxu0 0.0
    %3654 = vmatpush1.msra.mxu0 %v3345
    %3655 = vmatprep.subr.mxu0 0.0
    %3656 = vmatpush1.msra.mxu0 %v3346
    %3657 = vmatprep.subr.mxu0 0.0
    %3658 = vmatpush1.msra.mxu0 %v3347
    %3659 = vmatprep.subr.mxu0 0.0
    %3660 = vmatpush1.msra.mxu0 %v3348
    %3661 = vmatprep.mubr.f32.mxu0 %v3522
    %3662 = vmatmul.mubr.f32.gmra.mrb[0].mxu0 %v3520
    %v3663 = vpop.f32.mrb[0].mxu0
    %v3664 = vadd.f32 %v3594, %v3663
    %v3665 = vpop.f32.mrb[0].mxu0
    %3666 = vdwg.mxu0
    %v3668 = vsel %vm211, %v3664, 0
    %3670 = vmatprep.subr.mxu0 %v3475
    %3671 = vmatpush1.msra.mxu0 %v835
    %3672 = vmatprep.subr.mxu0 %v3478
    %3673 = vmatpush1.msra.mxu0 %v836
    %3674 = vmatprep.subr.mxu0 %v3482
    %3675 = vmatpush1.msra.mxu0 %v3481
    %3676 = vmatprep.subr.mxu0 %v3486
    %3677 = vmatpush1.msra.mxu0 %v3485
    %3678 = vmatprep.subr.mxu0 %v3490
    %3679 = vmatpush1.msra.mxu0 %v3489
    %3680 = vmatprep.subr.mxu0 %v3494
    %3681 = vmatpush1.msra.mxu0 %v3493
    %3682 = vmatprep.subr.mxu0 %v3498
    %3683 = vmatpush1.msra.mxu0 %v3497
    %3684 = vmatprep.subr.mxu0 %v3502
    %3685 = vmatpush1.msra.mxu0 %v3501
    %3686 = vmatprep.subr.mxu0 0.0
    %3687 = vmatpush1.msra.mxu0 0.0
    %3688 = vmatprep.subr.mxu0 0.0
    %3689 = vmatpush1.msra.mxu0 0.0
    %3690 = vmatprep.subr.mxu0 0.0
    %3691 = vmatpush1.msra.mxu0 0.0
    %3692 = vmatprep.subr.mxu0 0.0
    %3693 = vmatpush1.msra.mxu0 0.0
    %3694 = vmatprep.subr.mxu0 0.0
    %3695 = vmatpush1.msra.mxu0 0.0
    %3696 = vmatprep.subr.mxu0 0.0
    %3697 = vmatpush1.msra.mxu0 0.0
    %3698 = vmatprep.subr.mxu0 0.0
    %3699 = vmatpush1.msra.mxu0 0.0
    %3700 = vmatprep.subr.mxu0 0.0
    %3701 = vmatpush1.msra.mxu0 0.0
    %3702 = vmatprep.subr.mxu0 0.0
    %3703 = vmatpush1.msra.mxu0 0.0
    %3704 = vmatprep.subr.mxu0 0.0
    %3705 = vmatpush1.msra.mxu0 0.0
    %3706 = vmatprep.subr.mxu0 0.0
    %3707 = vmatpush1.msra.mxu0 0.0
    %3708 = vmatprep.subr.mxu0 0.0
    %3709 = vmatpush1.msra.mxu0 0.0
    %3710 = vmatprep.subr.mxu0 0.0
    %3711 = vmatpush1.msra.mxu0 0.0
    %3712 = vmatprep.subr.mxu0 0.0
    %3713 = vmatpush1.msra.mxu0 0.0
    %3714 = vmatprep.subr.mxu0 0.0
    %3715 = vmatpush1.msra.mxu0 0.0
    %3716 = vmatprep.subr.mxu0 0.0
    %3717 = vmatpush1.msra.mxu0 0.0
    %3718 = vmatprep.subr.mxu0 0.0
    %3719 = vmatpush1.msra.mxu0 0.0
    %3720 = vmatprep.subr.mxu0 0.0
    %3721 = vmatpush1.msra.mxu0 0.0
    %3722 = vmatprep.subr.mxu0 0.0
    %3723 = vmatpush1.msra.mxu0 0.0
    %3724 = vmatprep.subr.mxu0 0.0
    %3725 = vmatpush1.msra.mxu0 0.0
    %3726 = vmatprep.subr.mxu0 0.0
    %3727 = vmatpush1.msra.mxu0 0.0
    %3728 = vmatprep.subr.mxu0 0.0
    %3729 = vmatpush1.msra.mxu0 0.0
    %3730 = vmatprep.subr.mxu0 0.0
    %3731 = vmatpush1.msra.mxu0 0.0
    %3732 = vmatprep.subr.mxu0 0.0
    %3733 = vmatpush1.msra.mxu0 0.0
    %3734 = vmatprep.mubr.f32.mxu0 0.0
    %3735 = vmatmul.mubr.f32.gmra.mrb[0].mxu0 %v3668
    %v3736 = vpop.f32.mrb[0].mxu0
    %v3737 = vadd.f32 0.0, %v3736
    %v3738 = vpop.f32.mrb[0].mxu0
    %v3739 = vadd.f32 0.0, %v3738
    %3740 = vdwg.mxu0
    %3741 = vmatprep.subr.mxu0 %v3477
    %3742 = vmatpush1.msra.mxu0 %v3476
    %3743 = vmatprep.subr.mxu0 %v3480
    %3744 = vmatpush1.msra.mxu0 %v3479
    %3745 = vmatprep.subr.mxu0 %v3484
    %3746 = vmatpush1.msra.mxu0 %v3483
    %3747 = vmatprep.subr.mxu0 %v3488
    %3748 = vmatpush1.msra.mxu0 %v3487
    %3749 = vmatprep.subr.mxu0 %v3492
    %3750 = vmatpush1.msra.mxu0 %v3491
    %3751 = vmatprep.subr.mxu0 %v3496
    %3752 = vmatpush1.msra.mxu0 %v3495
    %3753 = vmatprep.subr.mxu0 %v3500
    %3754 = vmatpush1.msra.mxu0 %v3499
    %3755 = vmatprep.subr.mxu0 %v3504
    %3756 = vmatpush1.msra.mxu0 %v3503
    %3757 = vmatprep.subr.mxu0 0.0
    %3758 = vmatpush1.msra.mxu0 0.0
    %3759 = vmatprep.subr.mxu0 0.0
    %3760 = vmatpush1.msra.mxu0 0.0
    %3761 = vmatprep.subr.mxu0 0.0
    %3762 = vmatpush1.msra.mxu0 0.0
    %3763 = vmatprep.subr.mxu0 0.0
    %3764 = vmatpush1.msra.mxu0 0.0
    %3765 = vmatprep.subr.mxu0 0.0
    %3766 = vmatpush1.msra.mxu0 0.0
    %3767 = vmatprep.subr.mxu0 0.0
    %3768 = vmatpush1.msra.mxu0 0.0
    %3769 = vmatprep.subr.mxu0 0.0
    %3770 = vmatpush1.msra.mxu0 0.0
    %3771 = vmatprep.subr.mxu0 0.0
    %3772 = vmatpush1.msra.mxu0 0.0
    %3773 = vmatprep.subr.mxu0 0.0
    %3774 = vmatpush1.msra.mxu0 0.0
    %3775 = vmatprep.subr.mxu0 0.0
    %3776 = vmatpush1.msra.mxu0 0.0
    %3777 = vmatprep.subr.mxu0 0.0
    %3778 = vmatpush1.msra.mxu0 0.0
    %3779 = vmatprep.subr.mxu0 0.0
    %3780 = vmatpush1.msra.mxu0 0.0
    %3781 = vmatprep.subr.mxu0 0.0
    %3782 = vmatpush1.msra.mxu0 0.0
    %3783 = vmatprep.subr.mxu0 0.0
    %3784 = vmatpush1.msra.mxu0 0.0
    %3785 = vmatprep.subr.mxu0 0.0
    %3786 = vmatpush1.msra.mxu0 0.0
    %3787 = vmatprep.subr.mxu0 0.0
    %3788 = vmatpush1.msra.mxu0 0.0
    %3789 = vmatprep.subr.mxu0 0.0
    %3790 = vmatpush1.msra.mxu0 0.0
    %3791 = vmatprep.subr.mxu0 0.0
    %3792 = vmatpush1.msra.mxu0 0.0
    %3793 = vmatprep.subr.mxu0 0.0
    %3794 = vmatpush1.msra.mxu0 0.0
    %3795 = vmatprep.subr.mxu0 0.0
    %3796 = vmatpush1.msra.mxu0 0.0
    %3797 = vmatprep.subr.mxu0 0.0
    %3798 = vmatpush1.msra.mxu0 0.0
    %3799 = vmatprep.subr.mxu0 0.0
    %3800 = vmatpush1.msra.mxu0 0.0
    %3801 = vmatprep.subr.mxu0 0.0
    %3802 = vmatpush1.msra.mxu0 0.0
    %3803 = vmatprep.subr.mxu0 0.0
    %3804 = vmatpush1.msra.mxu0 0.0
    %3805 = vmatprep.mubr.f32.mxu0 0.0
    %3806 = vmatmul.mubr.f32.gmra.mrb[0].mxu0 %v3668
    %v3807 = vpop.f32.mrb[0].mxu0
    %v3808 = vadd.f32 0.0, %v3807
    %v3809 = vpop.f32.mrb[0].mxu0
    %v3810 = vadd.f32 0.0, %v3809
    %3811 = vdwg.mxu0
    %v3812 = vmul.f32 %v3737, 0.0052083335
    %v3813 = vmul.f32 %v3739, 0.0052083335
    %v3814 = vmul.f32 %v3808, 0.0052083335
    %v3815 = vmul.f32 %v3810, 0.0052083335
    %v3816 = vmul.f32 %v3812, %v3812
    %v3817 = vmul.f32 %v3813, %v3813
    %v3818 = vmul.f32 %v3814, %v3814
    %v3819 = vmul.f32 %v3815, %v3815
    %v3824 = vrot.slane %v3816, 7
    %v3825 = vrot.slane %v3817, 7
    %v3826 = vrot.slane %v3818, 7
    %v3827 = vrot.slane %v3819, 7
    %v3832 = vsub.f32 %v3812, %v3824
    %v3833 = vsub.f32 %v3813, %v3825
    %v3834 = vsub.f32 %v3814, %v3826
    %v3835 = vsub.f32 %v3815, %v3827
    %v3836 = vmax.f32 %v3832, 0.0
    %v3837 = vmax.f32 %v3833, 0.0
    %v3838 = vmax.f32 %v3834, 0.0
    %v3839 = vmax.f32 %v3835, 0.0
    %v3840 = vadd.f32 %v3836, 1e-05
    %v3841 = vadd.f32 %v3837, 1e-05
    %v3842 = vadd.f32 %v3838, 1e-05
    %v3843 = vadd.f32 %v3839, 1e-05
    %v3844 = vrsqrt.pop %v3840
    %v3845 = vrsqrt.pop %v3841
    %v3846 = vrsqrt.pop %v3842
    %v3847 = vrsqrt.pop %v3843
    %v3852 = vcombine.low %v3844, %v3845
    %v3853 = vcombine.low %v3846, %v3847
    %v3855 = vunpack.c.l.s4 1966171168
    %v3856 = vunpack.c.0.s8 %v3855
    %v3857 = vlaneseq
    %v3858 = vshrl.u32 %v3857, 7
    %v3859 = vsub.s32 %v3856, %v3858
    %v3860 = vrot.slane %v3852, %v3859
    %v3862 = vunpack.c.l.s4 1966171168
    %v3863 = vunpack.c.0.s8 %v3862
    %v3864 = vlaneseq
    %v3865 = vshrl.u32 %v3864, 7
    %v3866 = vsub.s32 %v3863, %v3865
    %v3867 = vrot.slane %v3853, %v3866
    %v3868 = vcombine.high %v3860, %v3867
    %v3870 = vunpack.c.l.s4 1966171168
    %v3871 = vunpack.c.0.s8 %v3870
    %v3872 = vlaneseq
    %v3873 = vshrl.u32 %v3872, 7
    %v3874 = vsub.s32 %v3871, %v3873
    %v3875 = vrot.slane %v3868, %v3874
    %v3877 = vmul.f32 %v2957, %v3875
    %v3878 = vlaneseq
    %v3879 = vshrl.u32 %v3878, 7
    %v3880 = vsub.s32 0, %v3879
    %v3881 = vrot.slane %v3812, %v3880
    %v3882 = vlaneseq
    %v3883 = vshrl.u32 %v3882, 7
    %v3884 = vsub.s32 0, %v3883
    %v3885 = vrot.slane %v3813, %v3884
    %v3886 = vlaneseq
    %v3887 = vshrl.u32 %v3886, 7
    %v3888 = vsub.s32 0, %v3887
    %v3889 = vrot.slane %v3814, %v3888
    %v3890 = vlaneseq
    %v3891 = vshrl.u32 %v3890, 7
    %v3892 = vsub.s32 0, %v3891
    %v3893 = vrot.slane %v3815, %v3892
    %v3894 = vsub.f32 %v2832, %v3881
    %v3895 = vsub.f32 %v2834, %v3885
    %v3896 = vsub.f32 %v2938, %v3889
    %v3897 = vsub.f32 %v2940, %v3893
    %v3898 = vsub.f32 %v2836, %v3881
    %v3899 = vsub.f32 %v2838, %v3885
    %v3900 = vsub.f32 %v2942, %v3889
    %v3901 = vsub.f32 %v2944, %v3893
    %v3902 = vsub.f32 %v2842, %v3881
    %v3903 = vsub.f32 %v2844, %v3885
    %v3904 = vsub.f32 %v2948, %v3889
    %v3905 = vsub.f32 %v2950, %v3893
    %v3906 = vsub.f32 %v2846, %v3881
    %v3907 = vsub.f32 %v2848, %v3885
    %v3908 = vsub.f32 %v2952, %v3889
    %v3909 = vsub.f32 %v2954, %v3893
    %v3911 = vlaneseq
    %v3912 = vshrl.u32 %v3911, 7
    %v3913 = vsub.s32 0, %v3912
    %v3914 = vrot.slane %v3877, %v3913
    %v3915 = vlaneseq
    %v3916 = vshrl.u32 %v3915, 7
    %v3917 = vsub.s32 1, %v3916
    %v3918 = vrot.slane %v3877, %v3917
    %v3919 = vlaneseq
    %v3920 = vshrl.u32 %v3919, 7
    %v3921 = vsub.s32 2, %v3920
    %v3922 = vrot.slane %v3877, %v3921
    %v3923 = vlaneseq
    %v3924 = vshrl.u32 %v3923, 7
    %v3925 = vsub.s32 3, %v3924
    %v3926 = vrot.slane %v3877, %v3925
    %v3931 = vmul.f32 %v3894, %v3914
    %v3932 = vmul.f32 %v3895, %v3918
    %v3933 = vmul.f32 %v3896, %v3922
    %v3934 = vmul.f32 %v3897, %v3926
    %v3935 = vmul.f32 %v3898, %v3914
    %v3936 = vmul.f32 %v3899, %v3918
    %v3937 = vmul.f32 %v3900, %v3922
    %v3938 = vmul.f32 %v3901, %v3926
    %v3939 = vmul.f32 %v3902, %v3914
    %v3940 = vmul.f32 %v3903, %v3918
    %v3941 = vmul.f32 %v3904, %v3922
    %v3942 = vmul.f32 %v3905, %v3926
    %v3943 = vmul.f32 %v3906, %v3914
    %v3944 = vmul.f32 %v3907, %v3918
    %v3945 = vmul.f32 %v3908, %v3922
    %v3946 = vmul.f32 %v3909, %v3926
    %v3948 = vlaneseq
    %v3949 = vshrl.u32 %v3948, 7
    %v3950 = vsub.s32 0, %v3949
    %v3951 = vrot.slane %v2959, %v3950
    %v3952 = vlaneseq
    %v3953 = vshrl.u32 %v3952, 7
    %v3954 = vsub.s32 1, %v3953
    %v3955 = vrot.slane %v2959, %v3954
    %v3956 = vlaneseq
    %v3957 = vshrl.u32 %v3956, 7
    %v3958 = vsub.s32 2, %v3957
    %v3959 = vrot.slane %v2959, %v3958
    %v3960 = vlaneseq
    %v3961 = vshrl.u32 %v3960, 7
    %v3962 = vsub.s32 3, %v3961
    %v3963 = vrot.slane %v2959, %v3962
    %v3968 = vadd.f32 %v3931, %v3951
    %v3969 = vadd.f32 %v3932, %v3955
    %v3970 = vadd.f32 %v3933, %v3959
    %v3971 = vadd.f32 %v3934, %v3963
    %v3972 = vadd.f32 %v3935, %v3951
    %v3973 = vadd.f32 %v3936, %v3955
    %v3974 = vadd.f32 %v3937, %v3959
    %v3975 = vadd.f32 %v3938, %v3963
    %v3976 = vadd.f32 %v3939, %v3951
    %v3977 = vadd.f32 %v3940, %v3955
    %v3978 = vadd.f32 %v3941, %v3959
    %v3979 = vadd.f32 %v3942, %v3963
    %v3980 = vadd.f32 %v3943, %v3951
    %v3981 = vadd.f32 %v3944, %v3955
    %v3982 = vadd.f32 %v3945, %v3959
    %v3983 = vadd.f32 %v3946, %v3963
    %v3984 = vmax.f32 %v3968, 0.0
    %v3985 = vmax.f32 %v3969, 0.0
    %v3986 = vmax.f32 %v3970, 0.0
    %v3987 = vmax.f32 %v3971, 0.0
    %v3988 = vmax.f32 %v3972, 0.0
    %v3989 = vmax.f32 %v3973, 0.0
    %v3990 = vmax.f32 %v3974, 0.0
    %v3991 = vmax.f32 %v3975, 0.0
    %v3992 = vmax.f32 %v3976, 0.0
    %v3993 = vmax.f32 %v3977, 0.0
    %v3994 = vmax.f32 %v3978, 0.0
    %v3995 = vmax.f32 %v3979, 0.0
    %v3996 = vmax.f32 %v3980, 0.0
    %v3997 = vmax.f32 %v3981, 0.0
    %v3998 = vmax.f32 %v3982, 0.0
    %v3999 = vmax.f32 %v3983, 0.0
    %v4000 = vmul.f32 %v3984, %v169
    %v4001 = vmul.f32 %v3985, %v169
    %v4002 = vmul.f32 %v3986, %v169
    %v4003 = vmul.f32 %v3987, %v169
    %v4004 = vmul.f32 %v3988, %v170
    %v4005 = vmul.f32 %v3989, %v170
    %v4006 = vmul.f32 %v3990, %v170
    %v4007 = vmul.f32 %v3991, %v170
    %v4008 = vmul.f32 %v3992, %v171
    %v4009 = vmul.f32 %v3993, %v171
    %v4010 = vmul.f32 %v3994, %v171
    %v4011 = vmul.f32 %v3995, %v171
    %v4012 = vmul.f32 %v3996, %v172
    %v4013 = vmul.f32 %v3997, %v172
    %v4014 = vmul.f32 %v3998, %v172
    %v4015 = vmul.f32 %v3999, %v172
    %v4016 = vld [vmem:[#allocation2 + $0x600] sm:$0xff]
    %v4017 = vld [vmem:[#allocation2 + $0x608] sm:$0xff]
    %v4018 = vld [vmem:[#allocation2 + $0x610] sm:$0xff]
    %v4019 = vld [vmem:[#allocation2 + $0x618] sm:$0xff]
    %v4020 = vld [vmem:[#allocation2 + $0x620] sm:$0xff]
    %v4021 = vld [vmem:[#allocation2 + $0x628] sm:$0xff]
    %v4022 = vld [vmem:[#allocation2 + $0x630] sm:$0xff]
    %v4023 = vld [vmem:[#allocation2 + $0x638] sm:$0xff]
    %v4024 = vld [vmem:[#allocation2 + $0x640] sm:$0xff]
    %v4025 = vld [vmem:[#allocation2 + $0x648] sm:$0xff]
    %v4026 = vld [vmem:[#allocation2 + $0x650] sm:$0xff]
    %v4027 = vld [vmem:[#allocation2 + $0x658] sm:$0xff]
    %v4028 = vld [vmem:[#allocation2 + $0x660] sm:$0xff]
    %v4029 = vld [vmem:[#allocation2 + $0x668] sm:$0xff]
    %v4030 = vld [vmem:[#allocation2 + $0x670] sm:$0xff]
    %v4031 = vld [vmem:[#allocation2 + $0x678] sm:$0xff]
    %v4032 = vld [vmem:[#allocation2 + $0x680] sm:$0xff]
    %v4033 = vld [vmem:[#allocation2 + $0x688] sm:$0xff]
    %v4034 = vld [vmem:[#allocation2 + $0x690] sm:$0xff]
    %v4035 = vld [vmem:[#allocation2 + $0x698] sm:$0xff]
    %v4036 = vld [vmem:[#allocation2 + $0x6a0] sm:$0xff]
    %v4037 = vld [vmem:[#allocation2 + $0x6a8] sm:$0xff]
    %v4038 = vld [vmem:[#allocation2 + $0x6b0] sm:$0xff]
    %v4039 = vld [vmem:[#allocation2 + $0x6b8] sm:$0xff]
    %v4040 = vld [vmem:[#allocation2 + $0x6c0] sm:$0xff]
    %v4041 = vld [vmem:[#allocation2 + $0x6c8] sm:$0xff]
    %v4042 = vld [vmem:[#allocation2 + $0x6d0] sm:$0xff]
    %v4043 = vld [vmem:[#allocation2 + $0x6d8] sm:$0xff]
    %v4044 = vld [vmem:[#allocation2 + $0x6e0] sm:$0xff]
    %v4045 = vld [vmem:[#allocation2 + $0x6e8] sm:$0xff]
    %v4046 = vld [vmem:[#allocation2 + $0x6f0] sm:$0xff]
    %v4047 = vld [vmem:[#allocation2 + $0x6f8] sm:$0xff]
    %v4048 = vld [vmem:[#allocation2 + $0x700] sm:$0xff]
    %v4049 = vld [vmem:[#allocation2 + $0x708] sm:$0xff]
    %v4050 = vld [vmem:[#allocation2 + $0x710] sm:$0xff]
    %v4051 = vld [vmem:[#allocation2 + $0x718] sm:$0xff]
    %v4052 = vld [vmem:[#allocation2 + $0x720] sm:$0xff]
    %v4053 = vld [vmem:[#allocation2 + $0x728] sm:$0xff]
    %v4054 = vld [vmem:[#allocation2 + $0x730] sm:$0xff]
    %v4055 = vld [vmem:[#allocation2 + $0x738] sm:$0xff]
    %v4056 = vld [vmem:[#allocation2 + $0x740] sm:$0xff]
    %v4057 = vld [vmem:[#allocation2 + $0x748] sm:$0xff]
    %v4058 = vld [vmem:[#allocation2 + $0x750] sm:$0xff]
    %v4059 = vld [vmem:[#allocation2 + $0x758] sm:$0xff]
    %v4060 = vld [vmem:[#allocation2 + $0x760] sm:$0xff]
    %v4061 = vld [vmem:[#allocation2 + $0x768] sm:$0xff]
    %v4062 = vld [vmem:[#allocation2 + $0x770] sm:$0xff]
    %v4063 = vld [vmem:[#allocation2 + $0x778] sm:$0xff]
    %v4064 = vld [vmem:[#allocation2 + $0x780] sm:$0xff]
    %v4065 = vld [vmem:[#allocation2 + $0x788] sm:$0xff]
    %v4066 = vld [vmem:[#allocation2 + $0x790] sm:$0xff]
    %v4067 = vld [vmem:[#allocation2 + $0x798] sm:$0xff]
    %v4068 = vld [vmem:[#allocation2 + $0x7a0] sm:$0xff]
    %v4069 = vld [vmem:[#allocation2 + $0x7a8] sm:$0xff]
    %v4070 = vld [vmem:[#allocation2 + $0x7b0] sm:$0xff]
    %v4071 = vld [vmem:[#allocation2 + $0x7b8] sm:$0xff]
    %v4072 = vld [vmem:[#allocation2 + $0x7c0] sm:$0xff]
    %v4073 = vld [vmem:[#allocation2 + $0x7c8] sm:$0xff]
    %v4074 = vld [vmem:[#allocation2 + $0x7d0] sm:$0xff]
    %v4075 = vld [vmem:[#allocation2 + $0x7d8] sm:$0xff]
    %v4076 = vld [vmem:[#allocation2 + $0x7e0] sm:$0xff]
    %v4077 = vld [vmem:[#allocation2 + $0x7e8] sm:$0xff]
    %v4078 = vld [vmem:[#allocation2 + $0x7f0] sm:$0xff]
    %v4079 = vld [vmem:[#allocation2 + $0x7f8] sm:$0xff]
    %v4080 = vld [vmem:[#allocation2 + $0x800] sm:$0xff]
    %v4081 = vld [vmem:[#allocation2 + $0x808] sm:$0xff]
    %v4082 = vld [vmem:[#allocation2 + $0x810] sm:$0xff]
    %v4083 = vld [vmem:[#allocation2 + $0x818] sm:$0xff]
    %v4084 = vld [vmem:[#allocation2 + $0x820] sm:$0xff]
    %v4085 = vld [vmem:[#allocation2 + $0x828] sm:$0xff]
    %v4086 = vld [vmem:[#allocation2 + $0x830] sm:$0xff]
    %v4087 = vld [vmem:[#allocation2 + $0x838] sm:$0xff]
    %v4088 = vld [vmem:[#allocation2 + $0x840] sm:$0xff]
    %v4089 = vld [vmem:[#allocation2 + $0x848] sm:$0xff]
    %v4090 = vld [vmem:[#allocation2 + $0x850] sm:$0xff]
    %v4091 = vld [vmem:[#allocation2 + $0x858] sm:$0xff]
    %v4092 = vld [vmem:[#allocation2 + $0x860] sm:$0xff]
    %v4093 = vld [vmem:[#allocation2 + $0x868] sm:$0xff]
    %v4094 = vld [vmem:[#allocation2 + $0x870] sm:$0xff]
    %v4095 = vld [vmem:[#allocation2 + $0x878] sm:$0xff]
    %v4096 = vld [vmem:[#allocation2 + $0x880] sm:$0xff]
    %v4097 = vld [vmem:[#allocation2 + $0x888] sm:$0xff]
    %v4098 = vld [vmem:[#allocation2 + $0x890] sm:$0xff]
    %v4099 = vld [vmem:[#allocation2 + $0x898] sm:$0xff]
    %v4100 = vld [vmem:[#allocation2 + $0x8a0] sm:$0xff]
    %v4101 = vld [vmem:[#allocation2 + $0x8a8] sm:$0xff]
    %v4102 = vld [vmem:[#allocation2 + $0x8b0] sm:$0xff]
    %v4103 = vld [vmem:[#allocation2 + $0x8b8] sm:$0xff]
    %v4104 = vld [vmem:[#allocation2 + $0x8c0] sm:$0xff]
    %v4105 = vld [vmem:[#allocation2 + $0x8c8] sm:$0xff]
    %v4106 = vld [vmem:[#allocation2 + $0x8d0] sm:$0xff]
    %v4107 = vld [vmem:[#allocation2 + $0x8d8] sm:$0xff]
    %v4108 = vld [vmem:[#allocation2 + $0x8e0] sm:$0xff]
    %v4109 = vld [vmem:[#allocation2 + $0x8e8] sm:$0xff]
    %v4110 = vld [vmem:[#allocation2 + $0x8f0] sm:$0xff]
    %v4111 = vld [vmem:[#allocation2 + $0x8f8] sm:$0xff]
    %v4112 = vld [vmem:[#allocation2 + $0x900] sm:$0xff]
    %v4113 = vld [vmem:[#allocation2 + $0x908] sm:$0xff]
    %v4114 = vld [vmem:[#allocation2 + $0x910] sm:$0xff]
    %v4115 = vld [vmem:[#allocation2 + $0x918] sm:$0xff]
    %v4116 = vld [vmem:[#allocation2 + $0x920] sm:$0xff]
    %v4117 = vld [vmem:[#allocation2 + $0x928] sm:$0xff]
    %v4118 = vld [vmem:[#allocation2 + $0x930] sm:$0xff]
    %v4119 = vld [vmem:[#allocation2 + $0x938] sm:$0xff]
    %v4120 = vld [vmem:[#allocation2 + $0x940] sm:$0xff]
    %v4121 = vld [vmem:[#allocation2 + $0x948] sm:$0xff]
    %v4122 = vld [vmem:[#allocation2 + $0x950] sm:$0xff]
    %v4123 = vld [vmem:[#allocation2 + $0x958] sm:$0xff]
    %v4124 = vld [vmem:[#allocation2 + $0x960] sm:$0xff]
    %v4125 = vld [vmem:[#allocation2 + $0x968] sm:$0xff]
    %v4126 = vld [vmem:[#allocation2 + $0x970] sm:$0xff]
    %v4127 = vld [vmem:[#allocation2 + $0x978] sm:$0xff]
    %v4128 = vld [vmem:[#allocation2 + $0x980] sm:$0xff]
    %v4129 = vld [vmem:[#allocation2 + $0x988] sm:$0xff]
    %v4130 = vld [vmem:[#allocation2 + $0x990] sm:$0xff]
    %v4131 = vld [vmem:[#allocation2 + $0x998] sm:$0xff]
    %v4132 = vld [vmem:[#allocation2 + $0x9a0] sm:$0xff]
    %v4133 = vld [vmem:[#allocation2 + $0x9a8] sm:$0xff]
    %v4134 = vld [vmem:[#allocation2 + $0x9b0] sm:$0xff]
    %v4135 = vld [vmem:[#allocation2 + $0x9b8] sm:$0xff]
    %v4136 = vld [vmem:[#allocation2 + $0x9c0] sm:$0xff]
    %v4137 = vld [vmem:[#allocation2 + $0x9c8] sm:$0xff]
    %v4138 = vld [vmem:[#allocation2 + $0x9d0] sm:$0xff]
    %v4139 = vld [vmem:[#allocation2 + $0x9d8] sm:$0xff]
    %v4140 = vld [vmem:[#allocation2 + $0x9e0] sm:$0xff]
    %v4141 = vld [vmem:[#allocation2 + $0x9e8] sm:$0xff]
    %v4142 = vld [vmem:[#allocation2 + $0x9f0] sm:$0xff]
    %v4143 = vld [vmem:[#allocation2 + $0x9f8] sm:$0xff]
    %v4144 = vpack.c.bf16 %v4004, %v4000
    %v4145 = vpack.c.bf16 %v4005, %v4001
    %v4146 = vpack.c.bf16 %v4006, %v4002
    %v4147 = vpack.c.bf16 %v4007, %v4003
    %v4148 = vpack.c.bf16 %v4012, %v4008
    %v4149 = vpack.c.bf16 %v4013, %v4009
    %v4150 = vpack.c.bf16 %v4014, %v4010
    %v4151 = vpack.c.bf16 %v4015, %v4011
    %4152 = vmatprep.subr.bf16.mxu0 %v4017
    %4153 = vmatpush1.bf16.msra.mxu0 %v4016
    %4154 = vmatprep.subr.bf16.mxu0 %v4021
    %4155 = vmatpush1.bf16.msra.mxu0 %v4020
    %4156 = vmatprep.subr.bf16.mxu0 %v4025
    %4157 = vmatpush1.bf16.msra.mxu0 %v4024
    %4158 = vmatprep.subr.bf16.mxu0 %v4029
    %4159 = vmatpush1.bf16.msra.mxu0 %v4028
    %4160 = vmatprep.subr.bf16.mxu0 %v4033
    %4161 = vmatpush1.bf16.msra.mxu0 %v4032
    %4162 = vmatprep.subr.bf16.mxu0 %v4037
    %4163 = vmatpush1.bf16.msra.mxu0 %v4036
    %4164 = vmatprep.subr.bf16.mxu0 %v4041
    %4165 = vmatpush1.bf16.msra.mxu0 %v4040
    %4166 = vmatprep.subr.bf16.mxu0 %v4045
    %4167 = vmatpush1.bf16.msra.mxu0 %v4044
    %4168 = vmatprep.subr.bf16.mxu0 %v4049
    %4169 = vmatpush1.bf16.msra.mxu0 %v4048
    %4170 = vmatprep.subr.bf16.mxu0 %v4053
    %4171 = vmatpush1.bf16.msra.mxu0 %v4052
    %4172 = vmatprep.subr.bf16.mxu0 %v4057
    %4173 = vmatpush1.bf16.msra.mxu0 %v4056
    %4174 = vmatprep.subr.bf16.mxu0 %v4061
    %4175 = vmatpush1.bf16.msra.mxu0 %v4060
    %4176 = vmatprep.subr.bf16.mxu0 %v4065
    %4177 = vmatpush1.bf16.msra.mxu0 %v4064
    %4178 = vmatprep.subr.bf16.mxu0 %v4069
    %4179 = vmatpush1.bf16.msra.mxu0 %v4068
    %4180 = vmatprep.subr.bf16.mxu0 %v4073
    %4181 = vmatpush1.bf16.msra.mxu0 %v4072
    %4182 = vmatprep.subr.bf16.mxu0 %v4077
    %4183 = vmatpush1.bf16.msra.mxu0 %v4076
    %4184 = vmatprep.mubr.bf16.mxu0 %v4145
    %4185 = vmatmul.mubr.bf16.gmra.mrb[0].mxu0 %v4144
    %v4186 = vpop.f32.mrb[0].mxu0
    %v4187 = vadd.f32 0.0, %v4186
    %v4188 = vpop.f32.mrb[0].mxu0
    %v4189 = vadd.f32 0.0, %v4188
    %v4190 = vpop.f32.mrb[0].mxu0
    %v4191 = vadd.f32 0.0, %v4190
    %v4192 = vpop.f32.mrb[0].mxu0
    %v4193 = vadd.f32 0.0, %v4192
    %4194 = vmatprep.mubr.bf16.mxu0 %v4149
    %4195 = vmatmul.mubr.bf16.gmra.mrb[0].mxu0 %v4148
    %v4196 = vpop.f32.mrb[0].mxu0
    %v4197 = vadd.f32 0.0, %v4196
    %v4198 = vpop.f32.mrb[0].mxu0
    %v4199 = vadd.f32 0.0, %v4198
    %v4200 = vpop.f32.mrb[0].mxu0
    %v4201 = vadd.f32 0.0, %v4200
    %v4202 = vpop.f32.mrb[0].mxu0
    %v4203 = vadd.f32 0.0, %v4202
    %4204 = vdwg.mxu0
    %4205 = vmatprep.subr.bf16.mxu0 %v4081
    %4206 = vmatpush1.bf16.msra.mxu0 %v4080
    %4207 = vmatprep.subr.bf16.mxu0 %v4085
    %4208 = vmatpush1.bf16.msra.mxu0 %v4084
    %4209 = vmatprep.subr.bf16.mxu0 %v4089
    %4210 = vmatpush1.bf16.msra.mxu0 %v4088
    %4211 = vmatprep.subr.bf16.mxu0 %v4093
    %4212 = vmatpush1.bf16.msra.mxu0 %v4092
    %4213 = vmatprep.subr.bf16.mxu0 %v4097
    %4214 = vmatpush1.bf16.msra.mxu0 %v4096
    %4215 = vmatprep.subr.bf16.mxu0 %v4101
    %4216 = vmatpush1.bf16.msra.mxu0 %v4100
    %4217 = vmatprep.subr.bf16.mxu0 %v4105
    %4218 = vmatpush1.bf16.msra.mxu0 %v4104
    %4219 = vmatprep.subr.bf16.mxu0 %v4109
    %4220 = vmatpush1.bf16.msra.mxu0 %v4108
    %4221 = vmatprep.subr.bf16.mxu0 %v4113
    %4222 = vmatpush1.bf16.msra.mxu0 %v4112
    %4223 = vmatprep.subr.bf16.mxu0 %v4117
    %4224 = vmatpush1.bf16.msra.mxu0 %v4116
    %4225 = vmatprep.subr.bf16.mxu0 %v4121
    %4226 = vmatpush1.bf16.msra.mxu0 %v4120
    %4227 = vmatprep.subr.bf16.mxu0 %v4125
    %4228 = vmatpush1.bf16.msra.mxu0 %v4124
    %4229 = vmatprep.subr.bf16.mxu0 %v4129
    %4230 = vmatpush1.bf16.msra.mxu0 %v4128
    %4231 = vmatprep.subr.bf16.mxu0 %v4133
    %4232 = vmatpush1.bf16.msra.mxu0 %v4132
    %4233 = vmatprep.subr.bf16.mxu0 %v4137
    %4234 = vmatpush1.bf16.msra.mxu0 %v4136
    %4235 = vmatprep.subr.bf16.mxu0 %v4141
    %4236 = vmatpush1.bf16.msra.mxu0 %v4140
    %4237 = vmatprep.mubr.bf16.mxu0 %v4147
    %4238 = vmatmul.mubr.bf16.gmra.mrb[0].mxu0 %v4146
    %v4239 = vpop.f32.mrb[0].mxu0
    %v4240 = vadd.f32 %v4187, %v4239
    %v4241 = vpop.f32.mrb[0].mxu0
    %v4242 = vadd.f32 %v4189, %v4241
    %v4243 = vpop.f32.mrb[0].mxu0
    %v4244 = vadd.f32 %v4191, %v4243
    %v4245 = vpop.f32.mrb[0].mxu0
    %v4246 = vadd.f32 %v4193, %v4245
    %4247 = vmatprep.mubr.bf16.mxu0 %v4151
    %4248 = vmatmul.mubr.bf16.gmra.mrb[0].mxu0 %v4150
    %v4249 = vpop.f32.mrb[0].mxu0
    %v4250 = vadd.f32 %v4197, %v4249
    %v4251 = vpop.f32.mrb[0].mxu0
    %v4252 = vadd.f32 %v4199, %v4251
    %v4253 = vpop.f32.mrb[0].mxu0
    %v4254 = vadd.f32 %v4201, %v4253
    %v4255 = vpop.f32.mrb[0].mxu0
    %v4256 = vadd.f32 %v4203, %v4255
    %4257 = vdwg.mxu0
    %4258 = vmatprep.subr.bf16.mxu0 %v4019
    %4259 = vmatpush1.bf16.msra.mxu0 %v4018
    %4260 = vmatprep.subr.bf16.mxu0 %v4023
    %4261 = vmatpush1.bf16.msra.mxu0 %v4022
    %4262 = vmatprep.subr.bf16.mxu0 %v4027
    %4263 = vmatpush1.bf16.msra.mxu0 %v4026
    %4264 = vmatprep.subr.bf16.mxu0 %v4031
    %4265 = vmatpush1.bf16.msra.mxu0 %v4030
    %4266 = vmatprep.subr.bf16.mxu0 %v4035
    %4267 = vmatpush1.bf16.msra.mxu0 %v4034
    %4268 = vmatprep.subr.bf16.mxu0 %v4039
    %4269 = vmatpush1.bf16.msra.mxu0 %v4038
    %4270 = vmatprep.subr.bf16.mxu0 %v4043
    %4271 = vmatpush1.bf16.msra.mxu0 %v4042
    %4272 = vmatprep.subr.bf16.mxu0 %v4047
    %4273 = vmatpush1.bf16.msra.mxu0 %v4046
    %4274 = vmatprep.subr.bf16.mxu0 %v4051
    %4275 = vmatpush1.bf16.msra.mxu0 %v4050
    %4276 = vmatprep.subr.bf16.mxu0 %v4055
    %4277 = vmatpush1.bf16.msra.mxu0 %v4054
    %4278 = vmatprep.subr.bf16.mxu0 %v4059
    %4279 = vmatpush1.bf16.msra.mxu0 %v4058
    %4280 = vmatprep.subr.bf16.mxu0 %v4063
    %4281 = vmatpush1.bf16.msra.mxu0 %v4062
    %4282 = vmatprep.subr.bf16.mxu0 %v4067
    %4283 = vmatpush1.bf16.msra.mxu0 %v4066
    %4284 = vmatprep.subr.bf16.mxu0 %v4071
    %4285 = vmatpush1.bf16.msra.mxu0 %v4070
    %4286 = vmatprep.subr.bf16.mxu0 %v4075
    %4287 = vmatpush1.bf16.msra.mxu0 %v4074
    %4288 = vmatprep.subr.bf16.mxu0 %v4079
    %4289 = vmatpush1.bf16.msra.mxu0 %v4078
    %4290 = vmatprep.mubr.bf16.mxu0 %v4145
    %4291 = vmatmul.mubr.bf16.gmra.mrb[0].mxu0 %v4144
    %v4292 = vpop.f32.mrb[0].mxu0
    %v4293 = vadd.f32 0.0, %v4292
    %v4294 = vpop.f32.mrb[0].mxu0
    %v4295 = vadd.f32 0.0, %v4294
    %v4296 = vpop.f32.mrb[0].mxu0
    %v4297 = vadd.f32 0.0, %v4296
    %v4298 = vpop.f32.mrb[0].mxu0
    %v4299 = vadd.f32 0.0, %v4298
    %4300 = vmatprep.mubr.bf16.mxu0 %v4149
    %4301 = vmatmul.mubr.bf16.gmra.mrb[0].mxu0 %v4148
    %v4302 = vpop.f32.mrb[0].mxu0
    %v4303 = vadd.f32 0.0, %v4302
    %v4304 = vpop.f32.mrb[0].mxu0
    %v4305 = vadd.f32 0.0, %v4304
    %v4306 = vpop.f32.mrb[0].mxu0
    %v4307 = vadd.f32 0.0, %v4306
    %v4308 = vpop.f32.mrb[0].mxu0
    %v4309 = vadd.f32 0.0, %v4308
    %4310 = vdwg.mxu0
    %4311 = vmatprep.subr.bf16.mxu0 %v4083
    %4312 = vmatpush1.bf16.msra.mxu0 %v4082
    %4313 = vmatprep.subr.bf16.mxu0 %v4087
    %4314 = vmatpush1.bf16.msra.mxu0 %v4086
    %4315 = vmatprep.subr.bf16.mxu0 %v4091
    %4316 = vmatpush1.bf16.msra.mxu0 %v4090
    %4317 = vmatprep.subr.bf16.mxu0 %v4095
    %4318 = vmatpush1.bf16.msra.mxu0 %v4094
    %4319 = vmatprep.subr.bf16.mxu0 %v4099
    %4320 = vmatpush1.bf16.msra.mxu0 %v4098
    %4321 = vmatprep.subr.bf16.mxu0 %v4103
    %4322 = vmatpush1.bf16.msra.mxu0 %v4102
    %4323 = vmatprep.subr.bf16.mxu0 %v4107
    %4324 = vmatpush1.bf16.msra.mxu0 %v4106
    %4325 = vmatprep.subr.bf16.mxu0 %v4111
    %4326 = vmatpush1.bf16.msra.mxu0 %v4110
    %4327 = vmatprep.subr.bf16.mxu0 %v4115
    %4328 = vmatpush1.bf16.msra.mxu0 %v4114
    %4329 = vmatprep.subr.bf16.mxu0 %v4119
    %4330 = vmatpush1.bf16.msra.mxu0 %v4118
    %4331 = vmatprep.subr.bf16.mxu0 %v4123
    %4332 = vmatpush1.bf16.msra.mxu0 %v4122
    %4333 = vmatprep.subr.bf16.mxu0 %v4127
    %4334 = vmatpush1.bf16.msra.mxu0 %v4126
    %4335 = vmatprep.subr.bf16.mxu0 %v4131
    %4336 = vmatpush1.bf16.msra.mxu0 %v4130
    %4337 = vmatprep.subr.bf16.mxu0 %v4135
    %4338 = vmatpush1.bf16.msra.mxu0 %v4134
    %4339 = vmatprep.subr.bf16.mxu0 %v4139
    %4340 = vmatpush1.bf16.msra.mxu0 %v4138
    %4341 = vmatprep.subr.bf16.mxu0 %v4143
    %4342 = vmatpush1.bf16.msra.mxu0 %v4142
    %4343 = vmatprep.mubr.bf16.mxu0 %v4147
    %4344 = vmatmul.mubr.bf16.gmra.mrb[0].mxu0 %v4146
    %v4345 = vpop.f32.mrb[0].mxu0
    %v4346 = vadd.f32 %v4293, %v4345
    %v4347 = vpop.f32.mrb[0].mxu0
    %v4348 = vadd.f32 %v4295, %v4347
    %v4349 = vpop.f32.mrb[0].mxu0
    %v4350 = vadd.f32 %v4297, %v4349
    %v4351 = vpop.f32.mrb[0].mxu0
    %v4352 = vadd.f32 %v4299, %v4351
    %4353 = vmatprep.mubr.bf16.mxu0 %v4151
    %4354 = vmatmul.mubr.bf16.gmra.mrb[0].mxu0 %v4150
    %v4355 = vpop.f32.mrb[0].mxu0
    %v4356 = vadd.f32 %v4303, %v4355
    %v4357 = vpop.f32.mrb[0].mxu0
    %v4358 = vadd.f32 %v4305, %v4357
    %v4359 = vpop.f32.mrb[0].mxu0
    %v4360 = vadd.f32 %v4307, %v4359
    %v4361 = vpop.f32.mrb[0].mxu0
    %v4362 = vadd.f32 %v4309, %v4361
    %4363 = vdwg.mxu0
    %s4364 = scalar_lea.vmem [#allocation16], 4
    %v4365 = vld [vmem:[%s4364] ss:$8 sm:$0xf]
    %s4366 = scalar_lea.vmem [#allocation16], 5
    %v4367 = vld [vmem:[%s4366] ss:$8 sm:$0xf]
    %v4368 = vadd.f32 %v4240, %v4244
    %v4369 = vadd.f32 %v4368, %v4250
    %v4370 = vadd.f32 %v4369, %v4254
    %v4371 = vrot.slane %v4370, 4
    %v4372 = vadd.f32 %v4370, %v4371
    %v4373 = vrot.slane %v4372, 2
    %v4374 = vadd.f32 %v4372, %v4373
    %v4375 = vrot.slane %v4374, 1
    %v4376 = vadd.f32 %v4374, %v4375
    %v4377 = vadd.f32 %v4242, %v4246
    %v4378 = vadd.f32 %v4377, %v4252
    %v4379 = vadd.f32 %v4378, %v4256
    %v4380 = vrot.slane %v4379, 4
    %v4381 = vadd.f32 %v4379, %v4380
    %v4382 = vrot.slane %v4381, 2
    %v4383 = vadd.f32 %v4381, %v4382
    %v4384 = vrot.slane %v4383, 1
    %v4385 = vadd.f32 %v4383, %v4384
    %v4386 = vadd.f32 %v4346, %v4350
    %v4387 = vadd.f32 %v4386, %v4356
    %v4388 = vadd.f32 %v4387, %v4360
    %v4389 = vrot.slane %v4388, 4
    %v4390 = vadd.f32 %v4388, %v4389
    %v4391 = vrot.slane %v4390, 2
    %v4392 = vadd.f32 %v4390, %v4391
    %v4393 = vrot.slane %v4392, 1
    %v4394 = vadd.f32 %v4392, %v4393
    %v4395 = vadd.f32 %v4348, %v4352
    %v4396 = vadd.f32 %v4395, %v4358
    %v4397 = vadd.f32 %v4396, %v4362
    %v4398 = vrot.slane %v4397, 4
    %v4399 = vadd.f32 %v4397, %v4398
    %v4400 = vrot.slane %v4399, 2
    %v4401 = vadd.f32 %v4399, %v4400
    %v4402 = vrot.slane %v4401, 1
    %v4403 = vadd.f32 %v4401, %v4402
    %v4408 = vcombine.low %v4376, %v4385
    %v4409 = vcombine.low %v4394, %v4403
    %v4411 = vunpack.c.l.s4 1966171168
    %v4412 = vunpack.c.0.s8 %v4411
    %v4413 = vlaneseq
    %v4414 = vshrl.u32 %v4413, 7
    %v4415 = vsub.s32 %v4412, %v4414
    %v4416 = vrot.slane %v4408, %v4415
    %v4418 = vunpack.c.l.s4 1966171168
    %v4419 = vunpack.c.0.s8 %v4418
    %v4420 = vlaneseq
    %v4421 = vshrl.u32 %v4420, 7
    %v4422 = vsub.s32 %v4419, %v4421
    %v4423 = vrot.slane %v4409, %v4422
    %v4424 = vcombine.low %v4416, %v4423
    %v4426 = vunpack.c.l.s4 1966171168
    %v4427 = vunpack.c.0.s8 %v4426
    %v4428 = vlaneseq
    %v4429 = vshrl.u32 %v4428, 7
    %v4430 = vsub.s32 %v4427, %v4429
    %v4431 = vrot.slane %v4424, %v4430
    %4433 = vst.msk [vmem:[#allocation3] ss:$2 sm:$0xf] %vm1411, %v4431
    %v4434 = vmul.f32 %v4240, %v4240
    %v4435 = vmul.f32 %v4242, %v4242
    %v4436 = vmul.f32 %v4346, %v4346
    %v4437 = vmul.f32 %v4348, %v4348
    %v4438 = vmul.f32 %v4244, %v4244
    %v4439 = vmul.f32 %v4246, %v4246
    %v4440 = vmul.f32 %v4350, %v4350
    %v4441 = vmul.f32 %v4352, %v4352
    %v4442 = vmul.f32 %v4250, %v4250
    %v4443 = vmul.f32 %v4252, %v4252
    %v4444 = vmul.f32 %v4356, %v4356
    %v4445 = vmul.f32 %v4358, %v4358
    %v4446 = vmul.f32 %v4254, %v4254
    %v4447 = vmul.f32 %v4256, %v4256
    %v4448 = vmul.f32 %v4360, %v4360
    %v4449 = vmul.f32 %v4362, %v4362
    %v4450 = vadd.f32 %v4434, %v4438
    %v4451 = vadd.f32 %v4450, %v4442
    %v4452 = vadd.f32 %v4451, %v4446
    %v4453 = vrot.slane %v4452, 4
    %v4454 = vadd.f32 %v4452, %v4453
    %v4455 = vrot.slane %v4454, 2
    %v4456 = vadd.f32 %v4454, %v4455
    %v4457 = vrot.slane %v4456, 1
    %v4458 = vadd.f32 %v4456, %v4457
    %v4459 = vadd.f32 %v4435, %v4439
    %v4460 = vadd.f32 %v4459, %v4443
    %v4461 = vadd.f32 %v4460, %v4447
    %v4462 = vrot.slane %v4461, 4
    %v4463 = vadd.f32 %v4461, %v4462
    %v4464 = vrot.slane %v4463, 2
    %v4465 = vadd.f32 %v4463, %v4464
    %v4466 = vrot.slane %v4465, 1
    %v4467 = vadd.f32 %v4465, %v4466
    %v4468 = vadd.f32 %v4436, %v4440
    %v4469 = vadd.f32 %v4468, %v4444
    %v4470 = vadd.f32 %v4469, %v4448
    %v4471 = vrot.slane %v4470, 4
    %v4472 = vadd.f32 %v4470, %v4471
    %v4473 = vrot.slane %v4472, 2
    %v4474 = vadd.f32 %v4472, %v4473
    %v4475 = vrot.slane %v4474, 1
    %v4476 = vadd.f32 %v4474, %v4475
    %v4477 = vadd.f32 %v4437, %v4441
    %v4478 = vadd.f32 %v4477, %v4445
    %v4479 = vadd.f32 %v4478, %v4449
    %v4480 = vrot.slane %v4479, 4
    %v4481 = vadd.f32 %v4479, %v4480
    %v4482 = vrot.slane %v4481, 2
    %v4483 = vadd.f32 %v4481, %v4482
    %v4484 = vrot.slane %v4483, 1
    %v4485 = vadd.f32 %v4483, %v4484
    %v4490 = vcombine.low %v4458, %v4467
    %v4491 = vcombine.low %v4476, %v4485
    %v4493 = vunpack.c.l.s4 1966171168
    %v4494 = vunpack.c.0.s8 %v4493
    %v4495 = vlaneseq
    %v4496 = vshrl.u32 %v4495, 7
    %v4497 = vsub.s32 %v4494, %v4496
    %v4498 = vrot.slane %v4490, %v4497
    %v4500 = vunpack.c.l.s4 1966171168
    %v4501 = vunpack.c.0.s8 %v4500
    %v4502 = vlaneseq
    %v4503 = vshrl.u32 %v4502, 7
    %v4504 = vsub.s32 %v4501, %v4503
    %v4505 = vrot.slane %v4491, %v4504
    %v4506 = vcombine.low %v4498, %v4505
    %v4508 = vunpack.c.l.s4 1966171168
    %v4509 = vunpack.c.0.s8 %v4508
    %v4510 = vlaneseq
    %v4511 = vshrl.u32 %v4510, 7
    %v4512 = vsub.s32 %v4509, %v4511
    %v4513 = vrot.slane %v4506, %v4512
    %4515 = vst.msk [vmem:[%s1494] ss:$2 sm:$0xf] %vm1411, %v4513
    %v4516 = vld [vmem:[#allocation3] sm:$0xff]
    %v4517 = vmul.u32 %v307, 16
    %v4518 = vsub.s32 %v161, %v4517
    %v4519 = vsub.s32 %v162, %v4517
    %v4520 = vsub.s32 %v163, %v4517
    %v4521 = vsub.s32 %v164, %v4517
    %v4522 = vsub.s32 %v294, %v4517
    %v4523 = vsub.s32 %v295, %v4517
    %v4524 = vsub.s32 %v296, %v4517
    %v4525 = vsub.s32 %v297, %v4517
    %v4526 = vsub.s32 %v298, %v4517
    %v4527 = vsub.s32 %v299, %v4517
    %v4528 = vsub.s32 %v300, %v4517
    %v4529 = vsub.s32 %v301, %v4517
    %v4530 = vsub.s32 %v302, %v4517
    %v4531 = vsub.s32 %v303, %v4517
    %v4532 = vsub.s32 %v304, %v4517
    %v4533 = vsub.s32 %v305, %v4517
    %v4534 = vsub.s32 %v1497, %v4517
    %v4535 = vsub.s32 %v1498, %v4517
    %v4536 = vsub.s32 %v1499, %v4517
    %v4537 = vsub.s32 %v1500, %v4517
    %v4538 = vsub.s32 %v1501, %v4517
    %v4539 = vsub.s32 %v1502, %v4517
    %v4540 = vsub.s32 %v1503, %v4517
    %v4541 = vsub.s32 %v1504, %v4517
    %v4542 = vsub.s32 %v1505, %v4517
    %v4543 = vsub.s32 %v1506, %v4517
    %v4544 = vsub.s32 %v1507, %v4517
    %v4545 = vsub.s32 %v1508, %v4517
    %v4546 = vsub.s32 %v1509, %v4517
    %v4547 = vsub.s32 %v1510, %v4517
    %v4548 = vsub.s32 %v1511, %v4517
    %v4549 = vsub.s32 %v1512, %v4517
    %v4550 = vsub.s32 %v1513, %v4517
    %v4551 = vsub.s32 %v1514, %v4517
    %v4552 = vsub.s32 %v1515, %v4517
    %v4553 = vsub.s32 %v1516, %v4517
    %v4554 = vsub.s32 %v1517, %v4517
    %v4555 = vsub.s32 %v1518, %v4517
    %v4556 = vsub.s32 %v1519, %v4517
    %v4557 = vsub.s32 %v1520, %v4517
    %v4558 = vsub.s32 %v1521, %v4517
    %v4559 = vsub.s32 %v1522, %v4517
    %v4560 = vsub.s32 %v1523, %v4517
    %v4561 = vsub.s32 %v1524, %v4517
    %v4562 = vsub.s32 %v1525, %v4517
    %v4563 = vsub.s32 %v1526, %v4517
    %v4564 = vsub.s32 %v1527, %v4517
    %v4565 = vsub.s32 %v1528, %v4517
    %v4566 = vsub.s32 %v1529, %v4517
    %v4567 = vsub.s32 %v1530, %v4517
    %v4568 = vsub.s32 %v1531, %v4517
    %v4569 = vsub.s32 %v1532, %v4517
    %v4570 = vsub.s32 %v1533, %v4517
    %v4571 = vsub.s32 %v1534, %v4517
    %v4572 = vsub.s32 %v1535, %v4517
    %v4573 = vsub.s32 %v1536, %v4517
    %v4574 = vsub.s32 %v1537, %v4517
    %v4575 = vsub.s32 %v1538, %v4517
    %v4576 = vsub.s32 %v1539, %v4517
    %v4577 = vsub.s32 %v1540, %v4517
    %v4578 = vsub.s32 %v1541, %v4517
    %v4579 = vsub.s32 %v1542, %v4517
    %v4580 = vsub.s32 %v1543, %v4517
    %v4581 = vsub.s32 %v1544, %v4517
    %vm4582 = vcmp.ge.s32.totalorder %v4518, 0
    %vm4583 = vcmp.ge.s32.totalorder %v4519, 0
    %vm4584 = vcmp.ge.s32.totalorder %v4520, 0
    %vm4585 = vcmp.ge.s32.totalorder %v4521, 0
    %vm4586 = vcmp.ge.s32.totalorder %v4522, 0
    %vm4587 = vcmp.ge.s32.totalorder %v4523, 0
    %vm4588 = vcmp.ge.s32.totalorder %v4524, 0
    %vm4589 = vcmp.ge.s32.totalorder %v4525, 0
    %vm4590 = vcmp.ge.s32.totalorder %v4526, 0
    %vm4591 = vcmp.ge.s32.totalorder %v4527, 0
    %vm4592 = vcmp.ge.s32.totalorder %v4528, 0
    %vm4593 = vcmp.ge.s32.totalorder %v4529, 0
    %vm4594 = vcmp.ge.s32.totalorder %v4530, 0
    %vm4595 = vcmp.ge.s32.totalorder %v4531, 0
    %vm4596 = vcmp.ge.s32.totalorder %v4532, 0
    %vm4597 = vcmp.ge.s32.totalorder %v4533, 0
    %vm4598 = vcmp.ge.s32.totalorder %v4534, 0
    %vm4599 = vcmp.ge.s32.totalorder %v4535, 0
    %vm4600 = vcmp.ge.s32.totalorder %v4536, 0
    %vm4601 = vcmp.ge.s32.totalorder %v4537, 0
    %vm4602 = vcmp.ge.s32.totalorder %v4538, 0
    %vm4603 = vcmp.ge.s32.totalorder %v4539, 0
    %vm4604 = vcmp.ge.s32.totalorder %v4540, 0
    %vm4605 = vcmp.ge.s32.totalorder %v4541, 0
    %vm4606 = vcmp.ge.s32.totalorder %v4542, 0
    %vm4607 = vcmp.ge.s32.totalorder %v4543, 0
    %vm4608 = vcmp.ge.s32.totalorder %v4544, 0
    %vm4609 = vcmp.ge.s32.totalorder %v4545, 0
    %vm4610 = vcmp.ge.s32.totalorder %v4546, 0
    %vm4611 = vcmp.ge.s32.totalorder %v4547, 0
    %vm4612 = vcmp.ge.s32.totalorder %v4548, 0
    %vm4613 = vcmp.ge.s32.totalorder %v4549, 0
    %vm4614 = vcmp.ge.s32.totalorder %v4550, 0
    %vm4615 = vcmp.ge.s32.totalorder %v4551, 0
    %vm4616 = vcmp.ge.s32.totalorder %v4552, 0
    %vm4617 = vcmp.ge.s32.totalorder %v4553, 0
    %vm4618 = vcmp.ge.s32.totalorder %v4554, 0
    %vm4619 = vcmp.ge.s32.totalorder %v4555, 0
    %vm4620 = vcmp.ge.s32.totalorder %v4556, 0
    %vm4621 = vcmp.ge.s32.totalorder %v4557, 0
    %vm4622 = vcmp.ge.s32.totalorder %v4558, 0
    %vm4623 = vcmp.ge.s32.totalorder %v4559, 0
    %vm4624 = vcmp.ge.s32.totalorder %v4560, 0
    %vm4625 = vcmp.ge.s32.totalorder %v4561, 0
    %vm4626 = vcmp.ge.s32.totalorder %v4562, 0
    %vm4627 = vcmp.ge.s32.totalorder %v4563, 0
    %vm4628 = vcmp.ge.s32.totalorder %v4564, 0
    %vm4629 = vcmp.ge.s32.totalorder %v4565, 0
    %vm4630 = vcmp.ge.s32.totalorder %v4566, 0
    %vm4631 = vcmp.ge.s32.totalorder %v4567, 0
    %vm4632 = vcmp.ge.s32.totalorder %v4568, 0
    %vm4633 = vcmp.ge.s32.totalorder %v4569, 0
    %vm4634 = vcmp.ge.s32.totalorder %v4570, 0
    %vm4635 = vcmp.ge.s32.totalorder %v4571, 0
    %vm4636 = vcmp.ge.s32.totalorder %v4572, 0
    %vm4637 = vcmp.ge.s32.totalorder %v4573, 0
    %vm4638 = vcmp.ge.s32.totalorder %v4574, 0
    %vm4639 = vcmp.ge.s32.totalorder %v4575, 0
    %vm4640 = vcmp.ge.s32.totalorder %v4576, 0
    %vm4641 = vcmp.ge.s32.totalorder %v4577, 0
    %vm4642 = vcmp.ge.s32.totalorder %v4578, 0
    %vm4643 = vcmp.ge.s32.totalorder %v4579, 0
    %vm4644 = vcmp.ge.s32.totalorder %v4580, 0
    %vm4645 = vcmp.ge.s32.totalorder %v4581, 0
    %vm4646 = vcmp.lt.s32.totalorder %v4518, 16
    %vm4647 = vcmp.lt.s32.totalorder %v4519, 16
    %vm4648 = vcmp.lt.s32.totalorder %v4520, 16
    %vm4649 = vcmp.lt.s32.totalorder %v4521, 16
    %vm4650 = vcmp.lt.s32.totalorder %v4522, 16
    %vm4651 = vcmp.lt.s32.totalorder %v4523, 16
    %vm4652 = vcmp.lt.s32.totalorder %v4524, 16
    %vm4653 = vcmp.lt.s32.totalorder %v4525, 16
    %vm4654 = vcmp.lt.s32.totalorder %v4526, 16
    %vm4655 = vcmp.lt.s32.totalorder %v4527, 16
    %vm4656 = vcmp.lt.s32.totalorder %v4528, 16
    %vm4657 = vcmp.lt.s32.totalorder %v4529, 16
    %vm4658 = vcmp.lt.s32.totalorder %v4530, 16
    %vm4659 = vcmp.lt.s32.totalorder %v4531, 16
    %vm4660 = vcmp.lt.s32.totalorder %v4532, 16
    %vm4661 = vcmp.lt.s32.totalorder %v4533, 16
    %vm4662 = vcmp.lt.s32.totalorder %v4534, 16
    %vm4663 = vcmp.lt.s32.totalorder %v4535, 16
    %vm4664 = vcmp.lt.s32.totalorder %v4536, 16
    %vm4665 = vcmp.lt.s32.totalorder %v4537, 16
    %vm4666 = vcmp.lt.s32.totalorder %v4538, 16
    %vm4667 = vcmp.lt.s32.totalorder %v4539, 16
    %vm4668 = vcmp.lt.s32.totalorder %v4540, 16
    %vm4669 = vcmp.lt.s32.totalorder %v4541, 16
    %vm4670 = vcmp.lt.s32.totalorder %v4542, 16
    %vm4671 = vcmp.lt.s32.totalorder %v4543, 16
    %vm4672 = vcmp.lt.s32.totalorder %v4544, 16
    %vm4673 = vcmp.lt.s32.totalorder %v4545, 16
    %vm4674 = vcmp.lt.s32.totalorder %v4546, 16
    %vm4675 = vcmp.lt.s32.totalorder %v4547, 16
    %vm4676 = vcmp.lt.s32.totalorder %v4548, 16
    %vm4677 = vcmp.lt.s32.totalorder %v4549, 16
    %vm4678 = vcmp.lt.s32.totalorder %v4550, 16
    %vm4679 = vcmp.lt.s32.totalorder %v4551, 16
    %vm4680 = vcmp.lt.s32.totalorder %v4552, 16
    %vm4681 = vcmp.lt.s32.totalorder %v4553, 16
    %vm4682 = vcmp.lt.s32.totalorder %v4554, 16
    %vm4683 = vcmp.lt.s32.totalorder %v4555, 16
    %vm4684 = vcmp.lt.s32.totalorder %v4556, 16
    %vm4685 = vcmp.lt.s32.totalorder %v4557, 16
    %vm4686 = vcmp.lt.s32.totalorder %v4558, 16
    %vm4687 = vcmp.lt.s32.totalorder %v4559, 16
    %vm4688 = vcmp.lt.s32.totalorder %v4560, 16
    %vm4689 = vcmp.lt.s32.totalorder %v4561, 16
    %vm4690 = vcmp.lt.s32.totalorder %v4562, 16
    %vm4691 = vcmp.lt.s32.totalorder %v4563, 16
    %vm4692 = vcmp.lt.s32.totalorder %v4564, 16
    %vm4693 = vcmp.lt.s32.totalorder %v4565, 16
    %vm4694 = vcmp.lt.s32.totalorder %v4566, 16
    %vm4695 = vcmp.lt.s32.totalorder %v4567, 16
    %vm4696 = vcmp.lt.s32.totalorder %v4568, 16
    %vm4697 = vcmp.lt.s32.totalorder %v4569, 16
    %vm4698 = vcmp.lt.s32.totalorder %v4570, 16
    %vm4699 = vcmp.lt.s32.totalorder %v4571, 16
    %vm4700 = vcmp.lt.s32.totalorder %v4572, 16
    %vm4701 = vcmp.lt.s32.totalorder %v4573, 16
    %vm4702 = vcmp.lt.s32.totalorder %v4574, 16
    %vm4703 = vcmp.lt.s32.totalorder %v4575, 16
    %vm4704 = vcmp.lt.s32.totalorder %v4576, 16
    %vm4705 = vcmp.lt.s32.totalorder %v4577, 16
    %vm4706 = vcmp.lt.s32.totalorder %v4578, 16
    %vm4707 = vcmp.lt.s32.totalorder %v4579, 16
    %vm4708 = vcmp.lt.s32.totalorder %v4580, 16
    %vm4709 = vcmp.lt.s32.totalorder %v4581, 16
    %vm4710 = vmand %vm4582, %vm4646
    %vm4711 = vmand %vm4583, %vm4647
    %vm4712 = vmand %vm4584, %vm4648
    %vm4713 = vmand %vm4585, %vm4649
    %vm4714 = vmand %vm4586, %vm4650
    %vm4715 = vmand %vm4587, %vm4651
    %vm4716 = vmand %vm4588, %vm4652
    %vm4717 = vmand %vm4589, %vm4653
    %vm4718 = vmand %vm4590, %vm4654
    %vm4719 = vmand %vm4591, %vm4655
    %vm4720 = vmand %vm4592, %vm4656
    %vm4721 = vmand %vm4593, %vm4657
    %vm4722 = vmand %vm4594, %vm4658
    %vm4723 = vmand %vm4595, %vm4659
    %vm4724 = vmand %vm4596, %vm4660
    %vm4725 = vmand %vm4597, %vm4661
    %vm4726 = vmand %vm4598, %vm4662
    %vm4727 = vmand %vm4599, %vm4663
    %vm4728 = vmand %vm4600, %vm4664
    %vm4729 = vmand %vm4601, %vm4665
    %vm4730 = vmand %vm4602, %vm4666
    %vm4731 = vmand %vm4603, %vm4667
    %vm4732 = vmand %vm4604, %vm4668
    %vm4733 = vmand %vm4605, %vm4669
    %vm4734 = vmand %vm4606, %vm4670
    %vm4735 = vmand %vm4607, %vm4671
    %vm4736 = vmand %vm4608, %vm4672
    %vm4737 = vmand %vm4609, %vm4673
    %vm4738 = vmand %vm4610, %vm4674
    %vm4739 = vmand %vm4611, %vm4675
    %vm4740 = vmand %vm4612, %vm4676
    %vm4741 = vmand %vm4613, %vm4677
    %vm4742 = vmand %vm4614, %vm4678
    %vm4743 = vmand %vm4615, %vm4679
    %vm4744 = vmand %vm4616, %vm4680
    %vm4745 = vmand %vm4617, %vm4681
    %vm4746 = vmand %vm4618, %vm4682
    %vm4747 = vmand %vm4619, %vm4683
    %vm4748 = vmand %vm4620, %vm4684
    %vm4749 = vmand %vm4621, %vm4685
    %vm4750 = vmand %vm4622, %vm4686
    %vm4751 = vmand %vm4623, %vm4687
    %vm4752 = vmand %vm4624, %vm4688
    %vm4753 = vmand %vm4625, %vm4689
    %vm4754 = vmand %vm4626, %vm4690
    %vm4755 = vmand %vm4627, %vm4691
    %vm4756 = vmand %vm4628, %vm4692
    %vm4757 = vmand %vm4629, %vm4693
    %vm4758 = vmand %vm4630, %vm4694
    %vm4759 = vmand %vm4631, %vm4695
    %vm4760 = vmand %vm4632, %vm4696
    %vm4761 = vmand %vm4633, %vm4697
    %vm4762 = vmand %vm4634, %vm4698
    %vm4763 = vmand %vm4635, %vm4699
    %vm4764 = vmand %vm4636, %vm4700
    %vm4765 = vmand %vm4637, %vm4701
    %vm4766 = vmand %vm4638, %vm4702
    %vm4767 = vmand %vm4639, %vm4703
    %vm4768 = vmand %vm4640, %vm4704
    %vm4769 = vmand %vm4641, %vm4705
    %vm4770 = vmand %vm4642, %vm4706
    %vm4771 = vmand %vm4643, %vm4707
    %vm4772 = vmand %vm4644, %vm4708
    %vm4773 = vmand %vm4645, %vm4709
    %v4774 = vsel %vm4710, 1.0, 0.0
    %v4775 = vsel %vm4711, 1.0, 0.0
    %v4776 = vsel %vm4712, 1.0, 0.0
    %v4777 = vsel %vm4713, 1.0, 0.0
    %v4778 = vsel %vm4714, 1.0, 0.0
    %v4779 = vsel %vm4715, 1.0, 0.0
    %v4780 = vsel %vm4716, 1.0, 0.0
    %v4781 = vsel %vm4717, 1.0, 0.0
    %v4782 = vsel %vm4718, 1.0, 0.0
    %v4783 = vsel %vm4719, 1.0, 0.0
    %v4784 = vsel %vm4720, 1.0, 0.0
    %v4785 = vsel %vm4721, 1.0, 0.0
    %v4786 = vsel %vm4722, 1.0, 0.0
    %v4787 = vsel %vm4723, 1.0, 0.0
    %v4788 = vsel %vm4724, 1.0, 0.0
    %v4789 = vsel %vm4725, 1.0, 0.0
    %v4790 = vsel %vm4726, 1.0, 0.0
    %v4791 = vsel %vm4727, 1.0, 0.0
    %v4792 = vsel %vm4728, 1.0, 0.0
    %v4793 = vsel %vm4729, 1.0, 0.0
    %v4794 = vsel %vm4730, 1.0, 0.0
    %v4795 = vsel %vm4731, 1.0, 0.0
    %v4796 = vsel %vm4732, 1.0, 0.0
    %v4797 = vsel %vm4733, 1.0, 0.0
    %v4798 = vsel %vm4734, 1.0, 0.0
    %v4799 = vsel %vm4735, 1.0, 0.0
    %v4800 = vsel %vm4736, 1.0, 0.0
    %v4801 = vsel %vm4737, 1.0, 0.0
    %v4802 = vsel %vm4738, 1.0, 0.0
    %v4803 = vsel %vm4739, 1.0, 0.0
    %v4804 = vsel %vm4740, 1.0, 0.0
    %v4805 = vsel %vm4741, 1.0, 0.0
    %v4806 = vsel %vm4742, 1.0, 0.0
    %v4807 = vsel %vm4743, 1.0, 0.0
    %v4808 = vsel %vm4744, 1.0, 0.0
    %v4809 = vsel %vm4745, 1.0, 0.0
    %v4810 = vsel %vm4746, 1.0, 0.0
    %v4811 = vsel %vm4747, 1.0, 0.0
    %v4812 = vsel %vm4748, 1.0, 0.0
    %v4813 = vsel %vm4749, 1.0, 0.0
    %v4814 = vsel %vm4750, 1.0, 0.0
    %v4815 = vsel %vm4751, 1.0, 0.0
    %v4816 = vsel %vm4752, 1.0, 0.0
    %v4817 = vsel %vm4753, 1.0, 0.0
    %v4818 = vsel %vm4754, 1.0, 0.0
    %v4819 = vsel %vm4755, 1.0, 0.0
    %v4820 = vsel %vm4756, 1.0, 0.0
    %v4821 = vsel %vm4757, 1.0, 0.0
    %v4822 = vsel %vm4758, 1.0, 0.0
    %v4823 = vsel %vm4759, 1.0, 0.0
    %v4824 = vsel %vm4760, 1.0, 0.0
    %v4825 = vsel %vm4761, 1.0, 0.0
    %v4826 = vsel %vm4762, 1.0, 0.0
    %v4827 = vsel %vm4763, 1.0, 0.0
    %v4828 = vsel %vm4764, 1.0, 0.0
    %v4829 = vsel %vm4765, 1.0, 0.0
    %v4830 = vsel %vm4766, 1.0, 0.0
    %v4831 = vsel %vm4767, 1.0, 0.0
    %v4832 = vsel %vm4768, 1.0, 0.0
    %v4833 = vsel %vm4769, 1.0, 0.0
    %v4834 = vsel %vm4770, 1.0, 0.0
    %v4835 = vsel %vm4771, 1.0, 0.0
    %v4836 = vsel %vm4772, 1.0, 0.0
    %v4837 = vsel %vm4773, 1.0, 0.0
    %v4838 = vmul.u32 %v161, 16
    %v4839 = vmul.u32 %v162, 16
    %v4840 = vmul.u32 %v163, 16
    %v4841 = vmul.u32 %v164, 16
    %v4842 = vsub.s32 %v307, %v4838
    %v4843 = vsub.s32 %v1785, %v4838
    %v4844 = vsub.s32 %v1786, %v4838
    %v4845 = vsub.s32 %v1787, %v4838
    %v4846 = vsub.s32 %v307, %v4839
    %v4847 = vsub.s32 %v1785, %v4839
    %v4848 = vsub.s32 %v1786, %v4839
    %v4849 = vsub.s32 %v1787, %v4839
    %v4850 = vsub.s32 %v307, %v4840
    %v4851 = vsub.s32 %v1785, %v4840
    %v4852 = vsub.s32 %v1786, %v4840
    %v4853 = vsub.s32 %v1787, %v4840
    %v4854 = vsub.s32 %v307, %v4841
    %v4855 = vsub.s32 %v1785, %v4841
    %v4856 = vsub.s32 %v1786, %v4841
    %v4857 = vsub.s32 %v1787, %v4841
    %vm4858 = vcmp.ge.s32.totalorder %v4842, 0
    %vm4859 = vcmp.ge.s32.totalorder %v4843, 0
    %vm4860 = vcmp.ge.s32.totalorder %v4844, 0
    %vm4861 = vcmp.ge.s32.totalorder %v4845, 0
    %vm4862 = vcmp.ge.s32.totalorder %v4846, 0
    %vm4863 = vcmp.ge.s32.totalorder %v4847, 0
    %vm4864 = vcmp.ge.s32.totalorder %v4848, 0
    %vm4865 = vcmp.ge.s32.totalorder %v4849, 0
    %vm4866 = vcmp.ge.s32.totalorder %v4850, 0
    %vm4867 = vcmp.ge.s32.totalorder %v4851, 0
    %vm4868 = vcmp.ge.s32.totalorder %v4852, 0
    %vm4869 = vcmp.ge.s32.totalorder %v4853, 0
    %vm4870 = vcmp.ge.s32.totalorder %v4854, 0
    %vm4871 = vcmp.ge.s32.totalorder %v4855, 0
    %vm4872 = vcmp.ge.s32.totalorder %v4856, 0
    %vm4873 = vcmp.ge.s32.totalorder %v4857, 0
    %vm4874 = vcmp.lt.s32.totalorder %v4842, 16
    %vm4875 = vcmp.lt.s32.totalorder %v4843, 16
    %vm4876 = vcmp.lt.s32.totalorder %v4844, 16
    %vm4877 = vcmp.lt.s32.totalorder %v4845, 16
    %vm4878 = vcmp.lt.s32.totalorder %v4846, 16
    %vm4879 = vcmp.lt.s32.totalorder %v4847, 16
    %vm4880 = vcmp.lt.s32.totalorder %v4848, 16
    %vm4881 = vcmp.lt.s32.totalorder %v4849, 16
    %vm4882 = vcmp.lt.s32.totalorder %v4850, 16
    %vm4883 = vcmp.lt.s32.totalorder %v4851, 16
    %vm4884 = vcmp.lt.s32.totalorder %v4852, 16
    %vm4885 = vcmp.lt.s32.totalorder %v4853, 16
    %vm4886 = vcmp.lt.s32.totalorder %v4854, 16
    %vm4887 = vcmp.lt.s32.totalorder %v4855, 16
    %vm4888 = vcmp.lt.s32.totalorder %v4856, 16
    %vm4889 = vcmp.lt.s32.totalorder %v4857, 16
    %vm4890 = vmand %vm4858, %vm4874
    %vm4891 = vmand %vm4859, %vm4875
    %vm4892 = vmand %vm4860, %vm4876
    %vm4893 = vmand %vm4861, %vm4877
    %vm4894 = vmand %vm4862, %vm4878
    %vm4895 = vmand %vm4863, %vm4879
    %vm4896 = vmand %vm4864, %vm4880
    %vm4897 = vmand %vm4865, %vm4881
    %vm4898 = vmand %vm4866, %vm4882
    %vm4899 = vmand %vm4867, %vm4883
    %vm4900 = vmand %vm4868, %vm4884
    %vm4901 = vmand %vm4869, %vm4885
    %vm4902 = vmand %vm4870, %vm4886
    %vm4903 = vmand %vm4871, %vm4887
    %vm4904 = vmand %vm4872, %vm4888
    %vm4905 = vmand %vm4873, %vm4889
    %v4906 = vsel %vm4890, 1.0, 0.0
    %v4907 = vsel %vm4891, 1.0, 0.0
    %v4908 = vsel %vm4892, 1.0, 0.0
    %v4909 = vsel %vm4893, 1.0, 0.0
    %v4910 = vsel %vm4894, 1.0, 0.0
    %v4911 = vsel %vm4895, 1.0, 0.0
    %v4912 = vsel %vm4896, 1.0, 0.0
    %v4913 = vsel %vm4897, 1.0, 0.0
    %v4914 = vsel %vm4898, 1.0, 0.0
    %v4915 = vsel %vm4899, 1.0, 0.0
    %v4916 = vsel %vm4900, 1.0, 0.0
    %v4917 = vsel %vm4901, 1.0, 0.0
    %v4918 = vsel %vm4902, 1.0, 0.0
    %v4919 = vsel %vm4903, 1.0, 0.0
    %v4920 = vsel %vm4904, 1.0, 0.0
    %v4921 = vsel %vm4905, 1.0, 0.0
    %v4923 = vcombine.high %v4516, %v4516
    %v4925 = vunpack.c.l.s4 1983009808
    %v4926 = vunpack.c.0.s8 %v4925
    %v4927 = vlaneseq
    %v4928 = vshrl.u32 %v4927, 7
    %v4929 = vsub.s32 %v4926, %v4928
    %v4930 = vrot.slane %v4516, %v4929
    %v4932 = vunpack.c.l.s4 1983009808
    %v4933 = vunpack.c.0.s8 %v4932
    %v4934 = vlaneseq
    %v4935 = vshrl.u32 %v4934, 7
    %v4936 = vsub.s32 %v4933, %v4935
    %v4937 = vrot.slane %v4923, %v4936
    %v4938 = vcombine.high %v4930, %v4930
    %v4939 = vcombine.high %v4937, %v4937
    %4944 = vmatprep.subr.mxu0 0.0
    %4945 = vmatpush1.msra.mxu0 %v4774
    %4946 = vmatprep.subr.mxu0 0.0
    %4947 = vmatpush1.msra.mxu0 %v4775
    %4948 = vmatprep.subr.mxu0 0.0
    %4949 = vmatpush1.msra.mxu0 %v4776
    %4950 = vmatprep.subr.mxu0 0.0
    %4951 = vmatpush1.msra.mxu0 %v4777
    %4952 = vmatprep.subr.mxu0 0.0
    %4953 = vmatpush1.msra.mxu0 %v4778
    %4954 = vmatprep.subr.mxu0 0.0
    %4955 = vmatpush1.msra.mxu0 %v4779
    %4956 = vmatprep.subr.mxu0 0.0
    %4957 = vmatpush1.msra.mxu0 %v4780
    %4958 = vmatprep.subr.mxu0 0.0
    %4959 = vmatpush1.msra.mxu0 %v4781
    %4960 = vmatprep.subr.mxu0 0.0
    %4961 = vmatpush1.msra.mxu0 %v4782
    %4962 = vmatprep.subr.mxu0 0.0
    %4963 = vmatpush1.msra.mxu0 %v4783
    %4964 = vmatprep.subr.mxu0 0.0
    %4965 = vmatpush1.msra.mxu0 %v4784
    %4966 = vmatprep.subr.mxu0 0.0
    %4967 = vmatpush1.msra.mxu0 %v4785
    %4968 = vmatprep.subr.mxu0 0.0
    %4969 = vmatpush1.msra.mxu0 %v4786
    %4970 = vmatprep.subr.mxu0 0.0
    %4971 = vmatpush1.msra.mxu0 %v4787
    %4972 = vmatprep.subr.mxu0 0.0
    %4973 = vmatpush1.msra.mxu0 %v4788
    %4974 = vmatprep.subr.mxu0 0.0
    %4975 = vmatpush1.msra.mxu0 %v4789
    %4976 = vmatprep.subr.mxu0 0.0
    %4977 = vmatpush1.msra.mxu0 %v4790
    %4978 = vmatprep.subr.mxu0 0.0
    %4979 = vmatpush1.msra.mxu0 %v4791
    %4980 = vmatprep.subr.mxu0 0.0
    %4981 = vmatpush1.msra.mxu0 %v4792
    %4982 = vmatprep.subr.mxu0 0.0
    %4983 = vmatpush1.msra.mxu0 %v4793
    %4984 = vmatprep.subr.mxu0 0.0
    %4985 = vmatpush1.msra.mxu0 %v4794
    %4986 = vmatprep.subr.mxu0 0.0
    %4987 = vmatpush1.msra.mxu0 %v4795
    %4988 = vmatprep.subr.mxu0 0.0
    %4989 = vmatpush1.msra.mxu0 %v4796
    %4990 = vmatprep.subr.mxu0 0.0
    %4991 = vmatpush1.msra.mxu0 %v4797
    %4992 = vmatprep.subr.mxu0 0.0
    %4993 = vmatpush1.msra.mxu0 %v4798
    %4994 = vmatprep.subr.mxu0 0.0
    %4995 = vmatpush1.msra.mxu0 %v4799
    %4996 = vmatprep.subr.mxu0 0.0
    %4997 = vmatpush1.msra.mxu0 %v4800
    %4998 = vmatprep.subr.mxu0 0.0
    %4999 = vmatpush1.msra.mxu0 %v4801
    %5000 = vmatprep.subr.mxu0 0.0
    %5001 = vmatpush1.msra.mxu0 %v4802
    %5002 = vmatprep.subr.mxu0 0.0
    %5003 = vmatpush1.msra.mxu0 %v4803
    %5004 = vmatprep.subr.mxu0 0.0
    %5005 = vmatpush1.msra.mxu0 %v4804
    %5006 = vmatprep.subr.mxu0 0.0
    %5007 = vmatpush1.msra.mxu0 %v4805
    %5008 = vmatprep.mubr.f32.mxu0 %v4938
    %5009 = vmatmul.mubr.f32.gmra.mrb[0].mxu0 %v4930
    %v5010 = vpop.f32.mrb[0].mxu0
    %v5011 = vadd.f32 0.0, %v5010
    %v5012 = vpop.f32.mrb[0].mxu0
    %5013 = vdwg.mxu0
    %5014 = vmatprep.subr.mxu0 0.0
    %5015 = vmatpush1.msra.mxu0 %v4806
    %5016 = vmatprep.subr.mxu0 0.0
    %5017 = vmatpush1.msra.mxu0 %v4807
    %5018 = vmatprep.subr.mxu0 0.0
    %5019 = vmatpush1.msra.mxu0 %v4808
    %5020 = vmatprep.subr.mxu0 0.0
    %5021 = vmatpush1.msra.mxu0 %v4809
    %5022 = vmatprep.subr.mxu0 0.0
    %5023 = vmatpush1.msra.mxu0 %v4810
    %5024 = vmatprep.subr.mxu0 0.0
    %5025 = vmatpush1.msra.mxu0 %v4811
    %5026 = vmatprep.subr.mxu0 0.0
    %5027 = vmatpush1.msra.mxu0 %v4812
    %5028 = vmatprep.subr.mxu0 0.0
    %5029 = vmatpush1.msra.mxu0 %v4813
    %5030 = vmatprep.subr.mxu0 0.0
    %5031 = vmatpush1.msra.mxu0 %v4814
    %5032 = vmatprep.subr.mxu0 0.0
    %5033 = vmatpush1.msra.mxu0 %v4815
    %5034 = vmatprep.subr.mxu0 0.0
    %5035 = vmatpush1.msra.mxu0 %v4816
    %5036 = vmatprep.subr.mxu0 0.0
    %5037 = vmatpush1.msra.mxu0 %v4817
    %5038 = vmatprep.subr.mxu0 0.0
    %5039 = vmatpush1.msra.mxu0 %v4818
    %5040 = vmatprep.subr.mxu0 0.0
    %5041 = vmatpush1.msra.mxu0 %v4819
    %5042 = vmatprep.subr.mxu0 0.0
    %5043 = vmatpush1.msra.mxu0 %v4820
    %5044 = vmatprep.subr.mxu0 0.0
    %5045 = vmatpush1.msra.mxu0 %v4821
    %5046 = vmatprep.subr.mxu0 0.0
    %5047 = vmatpush1.msra.mxu0 %v4822
    %5048 = vmatprep.subr.mxu0 0.0
    %5049 = vmatpush1.msra.mxu0 %v4823
    %5050 = vmatprep.subr.mxu0 0.0
    %5051 = vmatpush1.msra.mxu0 %v4824
    %5052 = vmatprep.subr.mxu0 0.0
    %5053 = vmatpush1.msra.mxu0 %v4825
    %5054 = vmatprep.subr.mxu0 0.0
    %5055 = vmatpush1.msra.mxu0 %v4826
    %5056 = vmatprep.subr.mxu0 0.0
    %5057 = vmatpush1.msra.mxu0 %v4827
    %5058 = vmatprep.subr.mxu0 0.0
    %5059 = vmatpush1.msra.mxu0 %v4828
    %5060 = vmatprep.subr.mxu0 0.0
    %5061 = vmatpush1.msra.mxu0 %v4829
    %5062 = vmatprep.subr.mxu0 0.0
    %5063 = vmatpush1.msra.mxu0 %v4830
    %5064 = vmatprep.subr.mxu0 0.0
    %5065 = vmatpush1.msra.mxu0 %v4831
    %5066 = vmatprep.subr.mxu0 0.0
    %5067 = vmatpush1.msra.mxu0 %v4832
    %5068 = vmatprep.subr.mxu0 0.0
    %5069 = vmatpush1.msra.mxu0 %v4833
    %5070 = vmatprep.subr.mxu0 0.0
    %5071 = vmatpush1.msra.mxu0 %v4834
    %5072 = vmatprep.subr.mxu0 0.0
    %5073 = vmatpush1.msra.mxu0 %v4835
    %5074 = vmatprep.subr.mxu0 0.0
    %5075 = vmatpush1.msra.mxu0 %v4836
    %5076 = vmatprep.subr.mxu0 0.0
    %5077 = vmatpush1.msra.mxu0 %v4837
    %5078 = vmatprep.mubr.f32.mxu0 %v4939
    %5079 = vmatmul.mubr.f32.gmra.mrb[0].mxu0 %v4937
    %v5080 = vpop.f32.mrb[0].mxu0
    %v5081 = vadd.f32 %v5011, %v5080
    %v5082 = vpop.f32.mrb[0].mxu0
    %5083 = vdwg.mxu0
    %v5085 = vsel %vm483, %v5081, 0
    %5087 = vmatprep.subr.mxu0 %v4907
    %5088 = vmatpush1.msra.mxu0 %v4906
    %5089 = vmatprep.subr.mxu0 %v4911
    %5090 = vmatpush1.msra.mxu0 %v4910
    %5091 = vmatprep.subr.mxu0 %v4915
    %5092 = vmatpush1.msra.mxu0 %v4914
    %5093 = vmatprep.subr.mxu0 %v4919
    %5094 = vmatpush1.msra.mxu0 %v4918
    %5095 = vmatprep.subr.mxu0 0.0
    %5096 = vmatpush1.msra.mxu0 0.0
    %5097 = vmatprep.subr.mxu0 0.0
    %5098 = vmatpush1.msra.mxu0 0.0
    %5099 = vmatprep.subr.mxu0 0.0
    %5100 = vmatpush1.msra.mxu0 0.0
    %5101 = vmatprep.subr.mxu0 0.0
    %5102 = vmatpush1.msra.mxu0 0.0
    %5103 = vmatprep.subr.mxu0 0.0
    %5104 = vmatpush1.msra.mxu0 0.0
    %5105 = vmatprep.subr.mxu0 0.0
    %5106 = vmatpush1.msra.mxu0 0.0
    %5107 = vmatprep.subr.mxu0 0.0
    %5108 = vmatpush1.msra.mxu0 0.0
    %5109 = vmatprep.subr.mxu0 0.0
    %5110 = vmatpush1.msra.mxu0 0.0
    %5111 = vmatprep.subr.mxu0 0.0
    %5112 = vmatpush1.msra.mxu0 0.0
    %5113 = vmatprep.subr.mxu0 0.0
    %5114 = vmatpush1.msra.mxu0 0.0
    %5115 = vmatprep.subr.mxu0 0.0
    %5116 = vmatpush1.msra.mxu0 0.0
    %5117 = vmatprep.subr.mxu0 0.0
    %5118 = vmatpush1.msra.mxu0 0.0
    %5119 = vmatprep.subr.mxu0 0.0
    %5120 = vmatpush1.msra.mxu0 0.0
    %5121 = vmatprep.subr.mxu0 0.0
    %5122 = vmatpush1.msra.mxu0 0.0
    %5123 = vmatprep.subr.mxu0 0.0
    %5124 = vmatpush1.msra.mxu0 0.0
    %5125 = vmatprep.subr.mxu0 0.0
    %5126 = vmatpush1.msra.mxu0 0.0
    %5127 = vmatprep.subr.mxu0 0.0
    %5128 = vmatpush1.msra.mxu0 0.0
    %5129 = vmatprep.subr.mxu0 0.0
    %5130 = vmatpush1.msra.mxu0 0.0
    %5131 = vmatprep.subr.mxu0 0.0
    %5132 = vmatpush1.msra.mxu0 0.0
    %5133 = vmatprep.subr.mxu0 0.0
    %5134 = vmatpush1.msra.mxu0 0.0
    %5135 = vmatprep.subr.mxu0 0.0
    %5136 = vmatpush1.msra.mxu0 0.0
    %5137 = vmatprep.subr.mxu0 0.0
    %5138 = vmatpush1.msra.mxu0 0.0
    %5139 = vmatprep.subr.mxu0 0.0
    %5140 = vmatpush1.msra.mxu0 0.0
    %5141 = vmatprep.subr.mxu0 0.0
    %5142 = vmatpush1.msra.mxu0 0.0
    %5143 = vmatprep.subr.mxu0 0.0
    %5144 = vmatpush1.msra.mxu0 0.0
    %5145 = vmatprep.subr.mxu0 0.0
    %5146 = vmatpush1.msra.mxu0 0.0
    %5147 = vmatprep.subr.mxu0 0.0
    %5148 = vmatpush1.msra.mxu0 0.0
    %5149 = vmatprep.subr.mxu0 0.0
    %5150 = vmatpush1.msra.mxu0 0.0
    %5151 = vmatprep.mubr.f32.mxu0 0.0
    %5152 = vmatmul.mubr.f32.gmra.mrb[0].mxu0 %v5085
    %v5153 = vpop.f32.mrb[0].mxu0
    %v5154 = vadd.f32 0.0, %v5153
    %v5155 = vpop.f32.mrb[0].mxu0
    %v5156 = vadd.f32 0.0, %v5155
    %5157 = vdwg.mxu0
    %5158 = vmatprep.subr.mxu0 %v4909
    %5159 = vmatpush1.msra.mxu0 %v4908
    %5160 = vmatprep.subr.mxu0 %v4913
    %5161 = vmatpush1.msra.mxu0 %v4912
    %5162 = vmatprep.subr.mxu0 %v4917
    %5163 = vmatpush1.msra.mxu0 %v4916
    %5164 = vmatprep.subr.mxu0 %v4921
    %5165 = vmatpush1.msra.mxu0 %v4920
    %5166 = vmatprep.subr.mxu0 0.0
    %5167 = vmatpush1.msra.mxu0 0.0
    %5168 = vmatprep.subr.mxu0 0.0
    %5169 = vmatpush1.msra.mxu0 0.0
    %5170 = vmatprep.subr.mxu0 0.0
    %5171 = vmatpush1.msra.mxu0 0.0
    %5172 = vmatprep.subr.mxu0 0.0
    %5173 = vmatpush1.msra.mxu0 0.0
    %5174 = vmatprep.subr.mxu0 0.0
    %5175 = vmatpush1.msra.mxu0 0.0
    %5176 = vmatprep.subr.mxu0 0.0
    %5177 = vmatpush1.msra.mxu0 0.0
    %5178 = vmatprep.subr.mxu0 0.0
    %5179 = vmatpush1.msra.mxu0 0.0
    %5180 = vmatprep.subr.mxu0 0.0
    %5181 = vmatpush1.msra.mxu0 0.0
    %5182 = vmatprep.subr.mxu0 0.0
    %5183 = vmatpush1.msra.mxu0 0.0
    %5184 = vmatprep.subr.mxu0 0.0
    %5185 = vmatpush1.msra.mxu0 0.0
    %5186 = vmatprep.subr.mxu0 0.0
    %5187 = vmatpush1.msra.mxu0 0.0
    %5188 = vmatprep.subr.mxu0 0.0
    %5189 = vmatpush1.msra.mxu0 0.0
    %5190 = vmatprep.subr.mxu0 0.0
    %5191 = vmatpush1.msra.mxu0 0.0
    %5192 = vmatprep.subr.mxu0 0.0
    %5193 = vmatpush1.msra.mxu0 0.0
    %5194 = vmatprep.subr.mxu0 0.0
    %5195 = vmatpush1.msra.mxu0 0.0
    %5196 = vmatprep.subr.mxu0 0.0
    %5197 = vmatpush1.msra.mxu0 0.0
    %5198 = vmatprep.subr.mxu0 0.0
    %5199 = vmatpush1.msra.mxu0 0.0
    %5200 = vmatprep.subr.mxu0 0.0
    %5201 = vmatpush1.msra.mxu0 0.0
    %5202 = vmatprep.subr.mxu0 0.0
    %5203 = vmatpush1.msra.mxu0 0.0
    %5204 = vmatprep.subr.mxu0 0.0
    %5205 = vmatpush1.msra.mxu0 0.0
    %5206 = vmatprep.subr.mxu0 0.0
    %5207 = vmatpush1.msra.mxu0 0.0
    %5208 = vmatprep.subr.mxu0 0.0
    %5209 = vmatpush1.msra.mxu0 0.0
    %5210 = vmatprep.subr.mxu0 0.0
    %5211 = vmatpush1.msra.mxu0 0.0
    %5212 = vmatprep.subr.mxu0 0.0
    %5213 = vmatpush1.msra.mxu0 0.0
    %5214 = vmatprep.subr.mxu0 0.0
    %5215 = vmatpush1.msra.mxu0 0.0
    %5216 = vmatprep.subr.mxu0 0.0
    %5217 = vmatpush1.msra.mxu0 0.0
    %5218 = vmatprep.subr.mxu0 0.0
    %5219 = vmatpush1.msra.mxu0 0.0
    %5220 = vmatprep.subr.mxu0 0.0
    %5221 = vmatpush1.msra.mxu0 0.0
    %5222 = vmatprep.mubr.f32.mxu0 0.0
    %5223 = vmatmul.mubr.f32.gmra.mrb[0].mxu0 %v5085
    %v5224 = vpop.f32.mrb[0].mxu0
    %v5225 = vadd.f32 0.0, %v5224
    %v5226 = vpop.f32.mrb[0].mxu0
    %v5227 = vadd.f32 0.0, %v5226
    %5228 = vdwg.mxu0
    %v5229 = vmul.f32 %v5154, 0.0026041667
    %v5230 = vmul.f32 %v5156, 0.0026041667
    %v5231 = vmul.f32 %v5225, 0.0026041667
    %v5232 = vmul.f32 %v5227, 0.0026041667
    %v5233 = vmul.f32 %v5229, %v5229
    %v5234 = vmul.f32 %v5230, %v5230
    %v5235 = vmul.f32 %v5231, %v5231
    %v5236 = vmul.f32 %v5232, %v5232
    %v5241 = vrot.slane %v5233, 7
    %v5242 = vrot.slane %v5234, 7
    %v5243 = vrot.slane %v5235, 7
    %v5244 = vrot.slane %v5236, 7
    %v5249 = vsub.f32 %v5229, %v5241
    %v5250 = vsub.f32 %v5230, %v5242
    %v5251 = vsub.f32 %v5231, %v5243
    %v5252 = vsub.f32 %v5232, %v5244
    %v5253 = vmax.f32 %v5249, 0.0
    %v5254 = vmax.f32 %v5250, 0.0
    %v5255 = vmax.f32 %v5251, 0.0
    %v5256 = vmax.f32 %v5252, 0.0
    %v5257 = vadd.f32 %v5253, 1e-05
    %v5258 = vadd.f32 %v5254, 1e-05
    %v5259 = vadd.f32 %v5255, 1e-05
    %v5260 = vadd.f32 %v5256, 1e-05
    %v5261 = vrsqrt.pop %v5257
    %v5262 = vrsqrt.pop %v5258
    %v5263 = vrsqrt.pop %v5259
    %v5264 = vrsqrt.pop %v5260
    %v5269 = vcombine.low %v5261, %v5262
    %v5270 = vcombine.low %v5263, %v5264
    %v5272 = vunpack.c.l.s4 1966171168
    %v5273 = vunpack.c.0.s8 %v5272
    %v5274 = vlaneseq
    %v5275 = vshrl.u32 %v5274, 7
    %v5276 = vsub.s32 %v5273, %v5275
    %v5277 = vrot.slane %v5269, %v5276
    %v5279 = vunpack.c.l.s4 1966171168
    %v5280 = vunpack.c.0.s8 %v5279
    %v5281 = vlaneseq
    %v5282 = vshrl.u32 %v5281, 7
    %v5283 = vsub.s32 %v5280, %v5282
    %v5284 = vrot.slane %v5270, %v5283
    %v5285 = vcombine.high %v5277, %v5284
    %v5287 = vunpack.c.l.s4 1966171168
    %v5288 = vunpack.c.0.s8 %v5287
    %v5289 = vlaneseq
    %v5290 = vshrl.u32 %v5289, 7
    %v5291 = vsub.s32 %v5288, %v5290
    %v5292 = vrot.slane %v5285, %v5291
    %v5294 = vmul.f32 %v4365, %v5292
    %v5295 = vlaneseq
    %v5296 = vshrl.u32 %v5295, 7
    %v5297 = vsub.s32 0, %v5296
    %v5298 = vrot.slane %v5229, %v5297
    %v5299 = vlaneseq
    %v5300 = vshrl.u32 %v5299, 7
    %v5301 = vsub.s32 0, %v5300
    %v5302 = vrot.slane %v5230, %v5301
    %v5303 = vlaneseq
    %v5304 = vshrl.u32 %v5303, 7
    %v5305 = vsub.s32 0, %v5304
    %v5306 = vrot.slane %v5231, %v5305
    %v5307 = vlaneseq
    %v5308 = vshrl.u32 %v5307, 7
    %v5309 = vsub.s32 0, %v5308
    %v5310 = vrot.slane %v5232, %v5309
    %v5311 = vsub.f32 %v4240, %v5298
    %v5312 = vsub.f32 %v4242, %v5302
    %v5313 = vsub.f32 %v4346, %v5306
    %v5314 = vsub.f32 %v4348, %v5310
    %v5315 = vsub.f32 %v4244, %v5298
    %v5316 = vsub.f32 %v4246, %v5302
    %v5317 = vsub.f32 %v4350, %v5306
    %v5318 = vsub.f32 %v4352, %v5310
    %v5319 = vsub.f32 %v4250, %v5298
    %v5320 = vsub.f32 %v4252, %v5302
    %v5321 = vsub.f32 %v4356, %v5306
    %v5322 = vsub.f32 %v4358, %v5310
    %v5323 = vsub.f32 %v4254, %v5298
    %v5324 = vsub.f32 %v4256, %v5302
    %v5325 = vsub.f32 %v4360, %v5306
    %v5326 = vsub.f32 %v4362, %v5310
    %v5328 = vlaneseq
    %v5329 = vshrl.u32 %v5328, 7
    %v5330 = vsub.s32 0, %v5329
    %v5331 = vrot.slane %v5294, %v5330
    %v5332 = vlaneseq
    %v5333 = vshrl.u32 %v5332, 7
    %v5334 = vsub.s32 1, %v5333
    %v5335 = vrot.slane %v5294, %v5334
    %v5336 = vlaneseq
    %v5337 = vshrl.u32 %v5336, 7
    %v5338 = vsub.s32 2, %v5337
    %v5339 = vrot.slane %v5294, %v5338
    %v5340 = vlaneseq
    %v5341 = vshrl.u32 %v5340, 7
    %v5342 = vsub.s32 3, %v5341
    %v5343 = vrot.slane %v5294, %v5342
    %v5348 = vmul.f32 %v5311, %v5331
    %v5349 = vmul.f32 %v5312, %v5335
    %v5350 = vmul.f32 %v5313, %v5339
    %v5351 = vmul.f32 %v5314, %v5343
    %v5352 = vmul.f32 %v5315, %v5331
    %v5353 = vmul.f32 %v5316, %v5335
    %v5354 = vmul.f32 %v5317, %v5339
    %v5355 = vmul.f32 %v5318, %v5343
    %v5356 = vmul.f32 %v5319, %v5331
    %v5357 = vmul.f32 %v5320, %v5335
    %v5358 = vmul.f32 %v5321, %v5339
    %v5359 = vmul.f32 %v5322, %v5343
    %v5360 = vmul.f32 %v5323, %v5331
    %v5361 = vmul.f32 %v5324, %v5335
    %v5362 = vmul.f32 %v5325, %v5339
    %v5363 = vmul.f32 %v5326, %v5343
    %v5365 = vlaneseq
    %v5366 = vshrl.u32 %v5365, 7
    %v5367 = vsub.s32 0, %v5366
    %v5368 = vrot.slane %v4367, %v5367
    %v5369 = vlaneseq
    %v5370 = vshrl.u32 %v5369, 7
    %v5371 = vsub.s32 1, %v5370
    %v5372 = vrot.slane %v4367, %v5371
    %v5373 = vlaneseq
    %v5374 = vshrl.u32 %v5373, 7
    %v5375 = vsub.s32 2, %v5374
    %v5376 = vrot.slane %v4367, %v5375
    %v5377 = vlaneseq
    %v5378 = vshrl.u32 %v5377, 7
    %v5379 = vsub.s32 3, %v5378
    %v5380 = vrot.slane %v4367, %v5379
    %v5385 = vadd.f32 %v5348, %v5368
    %v5386 = vadd.f32 %v5349, %v5372
    %v5387 = vadd.f32 %v5350, %v5376
    %v5388 = vadd.f32 %v5351, %v5380
    %v5389 = vadd.f32 %v5352, %v5368
    %v5390 = vadd.f32 %v5353, %v5372
    %v5391 = vadd.f32 %v5354, %v5376
    %v5392 = vadd.f32 %v5355, %v5380
    %v5393 = vadd.f32 %v5356, %v5368
    %v5394 = vadd.f32 %v5357, %v5372
    %v5395 = vadd.f32 %v5358, %v5376
    %v5396 = vadd.f32 %v5359, %v5380
    %v5397 = vadd.f32 %v5360, %v5368
    %v5398 = vadd.f32 %v5361, %v5372
    %v5399 = vadd.f32 %v5362, %v5376
    %v5400 = vadd.f32 %v5363, %v5380
    %v5401 = vmax.f32 %v5385, 0.0
    %v5402 = vmax.f32 %v5386, 0.0
    %v5403 = vmax.f32 %v5387, 0.0
    %v5404 = vmax.f32 %v5388, 0.0
    %v5405 = vmax.f32 %v5389, 0.0
    %v5406 = vmax.f32 %v5390, 0.0
    %v5407 = vmax.f32 %v5391, 0.0
    %v5408 = vmax.f32 %v5392, 0.0
    %v5409 = vmax.f32 %v5393, 0.0
    %v5410 = vmax.f32 %v5394, 0.0
    %v5411 = vmax.f32 %v5395, 0.0
    %v5412 = vmax.f32 %v5396, 0.0
    %v5413 = vmax.f32 %v5397, 0.0
    %v5414 = vmax.f32 %v5398, 0.0
    %v5415 = vmax.f32 %v5399, 0.0
    %v5416 = vmax.f32 %v5400, 0.0
    %v5417 = vmul.f32 %v5401, %v169
    %v5418 = vmul.f32 %v5402, %v169
    %v5419 = vmul.f32 %v5403, %v169
    %v5420 = vmul.f32 %v5404, %v169
    %v5421 = vmul.f32 %v5405, %v170
    %v5422 = vmul.f32 %v5406, %v170
    %v5423 = vmul.f32 %v5407, %v170
    %v5424 = vmul.f32 %v5408, %v170
    %v5425 = vmul.f32 %v5409, %v171
    %v5426 = vmul.f32 %v5410, %v171
    %v5427 = vmul.f32 %v5411, %v171
    %v5428 = vmul.f32 %v5412, %v171
    %v5429 = vmul.f32 %v5413, %v172
    %v5430 = vmul.f32 %v5414, %v172
    %v5431 = vmul.f32 %v5415, %v172
    %v5432 = vmul.f32 %v5416, %v172
    %v5433 = vld [vmem:[#allocation2 + $0xa00] sm:$0xff]
    %v5434 = vld [vmem:[#allocation2 + $0xa08] sm:$0xff]
    %v5435 = vld [vmem:[#allocation2 + $0xa10] sm:$0xff]
    %v5436 = vld [vmem:[#allocation2 + $0xa18] sm:$0xff]
    %v5437 = vld [vmem:[#allocation2 + $0xa20] sm:$0xff]
    %v5438 = vld [vmem:[#allocation2 + $0xa28] sm:$0xff]
    %v5439 = vld [vmem:[#allocation2 + $0xa30] sm:$0xff]
    %v5440 = vld [vmem:[#allocation2 + $0xa38] sm:$0xff]
    %v5441 = vld [vmem:[#allocation2 + $0xa40] sm:$0xff]
    %v5442 = vld [vmem:[#allocation2 + $0xa48] sm:$0xff]
    %v5443 = vld [vmem:[#allocation2 + $0xa50] sm:$0xff]
    %v5444 = vld [vmem:[#allocation2 + $0xa58] sm:$0xff]
    %v5445 = vld [vmem:[#allocation2 + $0xa60] sm:$0xff]
    %v5446 = vld [vmem:[#allocation2 + $0xa68] sm:$0xff]
    %v5447 = vld [vmem:[#allocation2 + $0xa70] sm:$0xff]
    %v5448 = vld [vmem:[#allocation2 + $0xa78] sm:$0xff]
    %v5449 = vld [vmem:[#allocation2 + $0xa80] sm:$0xff]
    %v5450 = vld [vmem:[#allocation2 + $0xa88] sm:$0xff]
    %v5451 = vld [vmem:[#allocation2 + $0xa90] sm:$0xff]
    %v5452 = vld [vmem:[#allocation2 + $0xa98] sm:$0xff]
    %v5453 = vld [vmem:[#allocation2 + $0xaa0] sm:$0xff]
    %v5454 = vld [vmem:[#allocation2 + $0xaa8] sm:$0xff]
    %v5455 = vld [vmem:[#allocation2 + $0xab0] sm:$0xff]
    %v5456 = vld [vmem:[#allocation2 + $0xab8] sm:$0xff]
    %v5457 = vld [vmem:[#allocation2 + $0xac0] sm:$0xff]
    %v5458 = vld [vmem:[#allocation2 + $0xac8] sm:$0xff]
    %v5459 = vld [vmem:[#allocation2 + $0xad0] sm:$0xff]
    %v5460 = vld [vmem:[#allocation2 + $0xad8] sm:$0xff]
    %v5461 = vld [vmem:[#allocation2 + $0xae0] sm:$0xff]
    %v5462 = vld [vmem:[#allocation2 + $0xae8] sm:$0xff]
    %v5463 = vld [vmem:[#allocation2 + $0xaf0] sm:$0xff]
    %v5464 = vld [vmem:[#allocation2 + $0xaf8] sm:$0xff]
    %v5465 = vld [vmem:[#allocation2 + $0xb00] sm:$0xff]
    %v5466 = vld [vmem:[#allocation2 + $0xb08] sm:$0xff]
    %v5467 = vld [vmem:[#allocation2 + $0xb10] sm:$0xff]
    %v5468 = vld [vmem:[#allocation2 + $0xb18] sm:$0xff]
    %v5469 = vld [vmem:[#allocation2 + $0xb20] sm:$0xff]
    %v5470 = vld [vmem:[#allocation2 + $0xb28] sm:$0xff]
    %v5471 = vld [vmem:[#allocation2 + $0xb30] sm:$0xff]
    %v5472 = vld [vmem:[#allocation2 + $0xb38] sm:$0xff]
    %v5473 = vld [vmem:[#allocation2 + $0xb40] sm:$0xff]
    %v5474 = vld [vmem:[#allocation2 + $0xb48] sm:$0xff]
    %v5475 = vld [vmem:[#allocation2 + $0xb50] sm:$0xff]
    %v5476 = vld [vmem:[#allocation2 + $0xb58] sm:$0xff]
    %v5477 = vld [vmem:[#allocation2 + $0xb60] sm:$0xff]
    %v5478 = vld [vmem:[#allocation2 + $0xb68] sm:$0xff]
    %v5479 = vld [vmem:[#allocation2 + $0xb70] sm:$0xff]
    %v5480 = vld [vmem:[#allocation2 + $0xb78] sm:$0xff]
    %v5481 = vld [vmem:[#allocation2 + $0xb80] sm:$0xff]
    %v5482 = vld [vmem:[#allocation2 + $0xb88] sm:$0xff]
    %v5483 = vld [vmem:[#allocation2 + $0xb90] sm:$0xff]
    %v5484 = vld [vmem:[#allocation2 + $0xb98] sm:$0xff]
    %v5485 = vld [vmem:[#allocation2 + $0xba0] sm:$0xff]
    %v5486 = vld [vmem:[#allocation2 + $0xba8] sm:$0xff]
    %v5487 = vld [vmem:[#allocation2 + $0xbb0] sm:$0xff]
    %v5488 = vld [vmem:[#allocation2 + $0xbb8] sm:$0xff]
    %v5489 = vld [vmem:[#allocation2 + $0xbc0] sm:$0xff]
    %v5490 = vld [vmem:[#allocation2 + $0xbc8] sm:$0xff]
    %v5491 = vld [vmem:[#allocation2 + $0xbd0] sm:$0xff]
    %v5492 = vld [vmem:[#allocation2 + $0xbd8] sm:$0xff]
    %v5493 = vld [vmem:[#allocation2 + $0xbe0] sm:$0xff]
    %v5494 = vld [vmem:[#allocation2 + $0xbe8] sm:$0xff]
    %v5495 = vld [vmem:[#allocation2 + $0xbf0] sm:$0xff]
    %v5496 = vld [vmem:[#allocation2 + $0xbf8] sm:$0xff]
    %v5497 = vld [vmem:[#allocation2 + $0xc00] sm:$0xff]
    %v5498 = vld [vmem:[#allocation2 + $0xc08] sm:$0xff]
    %v5499 = vld [vmem:[#allocation2 + $0xc10] sm:$0xff]
    %v5500 = vld [vmem:[#allocation2 + $0xc18] sm:$0xff]
    %v5501 = vld [vmem:[#allocation2 + $0xc20] sm:$0xff]
    %v5502 = vld [vmem:[#allocation2 + $0xc28] sm:$0xff]
    %v5503 = vld [vmem:[#allocation2 + $0xc30] sm:$0xff]
    %v5504 = vld [vmem:[#allocation2 + $0xc38] sm:$0xff]
    %v5505 = vld [vmem:[#allocation2 + $0xc40] sm:$0xff]
    %v5506 = vld [vmem:[#allocation2 + $0xc48] sm:$0xff]
    %v5507 = vld [vmem:[#allocation2 + $0xc50] sm:$0xff]
    %v5508 = vld [vmem:[#allocation2 + $0xc58] sm:$0xff]
    %v5509 = vld [vmem:[#allocation2 + $0xc60] sm:$0xff]
    %v5510 = vld [vmem:[#allocation2 + $0xc68] sm:$0xff]
    %v5511 = vld [vmem:[#allocation2 + $0xc70] sm:$0xff]
    %v5512 = vld [vmem:[#allocation2 + $0xc78] sm:$0xff]
    %v5513 = vld [vmem:[#allocation2 + $0xc80] sm:$0xff]
    %v5514 = vld [vmem:[#allocation2 + $0xc88] sm:$0xff]
    %v5515 = vld [vmem:[#allocation2 + $0xc90] sm:$0xff]
    %v5516 = vld [vmem:[#allocation2 + $0xc98] sm:$0xff]
    %v5517 = vld [vmem:[#allocation2 + $0xca0] sm:$0xff]
    %v5518 = vld [vmem:[#allocation2 + $0xca8] sm:$0xff]
    %v5519 = vld [vmem:[#allocation2 + $0xcb0] sm:$0xff]
    %v5520 = vld [vmem:[#allocation2 + $0xcb8] sm:$0xff]
    %v5521 = vld [vmem:[#allocation2 + $0xcc0] sm:$0xff]
    %v5522 = vld [vmem:[#allocation2 + $0xcc8] sm:$0xff]
    %v5523 = vld [vmem:[#allocation2 + $0xcd0] sm:$0xff]
    %v5524 = vld [vmem:[#allocation2 + $0xcd8] sm:$0xff]
    %v5525 = vld [vmem:[#allocation2 + $0xce0] sm:$0xff]
    %v5526 = vld [vmem:[#allocation2 + $0xce8] sm:$0xff]
    %v5527 = vld [vmem:[#allocation2 + $0xcf0] sm:$0xff]
    %v5528 = vld [vmem:[#allocation2 + $0xcf8] sm:$0xff]
    %v5529 = vld [vmem:[#allocation2 + $0xd00] sm:$0xff]
    %v5530 = vld [vmem:[#allocation2 + $0xd08] sm:$0xff]
    %v5531 = vld [vmem:[#allocation2 + $0xd10] sm:$0xff]
    %v5532 = vld [vmem:[#allocation2 + $0xd18] sm:$0xff]
    %v5533 = vld [vmem:[#allocation2 + $0xd20] sm:$0xff]
    %v5534 = vld [vmem:[#allocation2 + $0xd28] sm:$0xff]
    %v5535 = vld [vmem:[#allocation2 + $0xd30] sm:$0xff]
    %v5536 = vld [vmem:[#allocation2 + $0xd38] sm:$0xff]
    %v5537 = vld [vmem:[#allocation2 + $0xd40] sm:$0xff]
    %v5538 = vld [vmem:[#allocation2 + $0xd48] sm:$0xff]
    %v5539 = vld [vmem:[#allocation2 + $0xd50] sm:$0xff]
    %v5540 = vld [vmem:[#allocation2 + $0xd58] sm:$0xff]
    %v5541 = vld [vmem:[#allocation2 + $0xd60] sm:$0xff]
    %v5542 = vld [vmem:[#allocation2 + $0xd68] sm:$0xff]
    %v5543 = vld [vmem:[#allocation2 + $0xd70] sm:$0xff]
    %v5544 = vld [vmem:[#allocation2 + $0xd78] sm:$0xff]
    %v5545 = vld [vmem:[#allocation2 + $0xd80] sm:$0xff]
    %v5546 = vld [vmem:[#allocation2 + $0xd88] sm:$0xff]
    %v5547 = vld [vmem:[#allocation2 + $0xd90] sm:$0xff]
    %v5548 = vld [vmem:[#allocation2 + $0xd98] sm:$0xff]
    %v5549 = vld [vmem:[#allocation2 + $0xda0] sm:$0xff]
    %v5550 = vld [vmem:[#allocation2 + $0xda8] sm:$0xff]
    %v5551 = vld [vmem:[#allocation2 + $0xdb0] sm:$0xff]
    %v5552 = vld [vmem:[#allocation2 + $0xdb8] sm:$0xff]
    %v5553 = vld [vmem:[#allocation2 + $0xdc0] sm:$0xff]
    %v5554 = vld [vmem:[#allocation2 + $0xdc8] sm:$0xff]
    %v5555 = vld [vmem:[#allocation2 + $0xdd0] sm:$0xff]
    %v5556 = vld [vmem:[#allocation2 + $0xdd8] sm:$0xff]
    %v5557 = vld [vmem:[#allocation2 + $0xde0] sm:$0xff]
    %v5558 = vld [vmem:[#allocation2 + $0xde8] sm:$0xff]
    %v5559 = vld [vmem:[#allocation2 + $0xdf0] sm:$0xff]
    %v5560 = vld [vmem:[#allocation2 + $0xdf8] sm:$0xff]
    %v5561 = vpack.c.bf16 %v5421, %v5417
    %v5562 = vpack.c.bf16 %v5422, %v5418
    %v5563 = vpack.c.bf16 %v5423, %v5419
    %v5564 = vpack.c.bf16 %v5424, %v5420
    %v5565 = vpack.c.bf16 %v5429, %v5425
    %v5566 = vpack.c.bf16 %v5430, %v5426
    %v5567 = vpack.c.bf16 %v5431, %v5427
    %v5568 = vpack.c.bf16 %v5432, %v5428
    %5569 = vmatprep.subr.bf16.mxu0 %v5434
    %5570 = vmatpush1.bf16.msra.mxu0 %v5433
    %5571 = vmatprep.subr.bf16.mxu0 %v5438
    %5572 = vmatpush1.bf16.msra.mxu0 %v5437
    %5573 = vmatprep.subr.bf16.mxu0 %v5442
    %5574 = vmatpush1.bf16.msra.mxu0 %v5441
    %5575 = vmatprep.subr.bf16.mxu0 %v5446
    %5576 = vmatpush1.bf16.msra.mxu0 %v5445
    %5577 = vmatprep.subr.bf16.mxu0 %v5450
    %5578 = vmatpush1.bf16.msra.mxu0 %v5449
    %5579 = vmatprep.subr.bf16.mxu0 %v5454
    %5580 = vmatpush1.bf16.msra.mxu0 %v5453
    %5581 = vmatprep.subr.bf16.mxu0 %v5458
    %5582 = vmatpush1.bf16.msra.mxu0 %v5457
    %5583 = vmatprep.subr.bf16.mxu0 %v5462
    %5584 = vmatpush1.bf16.msra.mxu0 %v5461
    %5585 = vmatprep.subr.bf16.mxu0 %v5466
    %5586 = vmatpush1.bf16.msra.mxu0 %v5465
    %5587 = vmatprep.subr.bf16.mxu0 %v5470
    %5588 = vmatpush1.bf16.msra.mxu0 %v5469
    %5589 = vmatprep.subr.bf16.mxu0 %v5474
    %5590 = vmatpush1.bf16.msra.mxu0 %v5473
    %5591 = vmatprep.subr.bf16.mxu0 %v5478
    %5592 = vmatpush1.bf16.msra.mxu0 %v5477
    %5593 = vmatprep.subr.bf16.mxu0 %v5482
    %5594 = vmatpush1.bf16.msra.mxu0 %v5481
    %5595 = vmatprep.subr.bf16.mxu0 %v5486
    %5596 = vmatpush1.bf16.msra.mxu0 %v5485
    %5597 = vmatprep.subr.bf16.mxu0 %v5490
    %5598 = vmatpush1.bf16.msra.mxu0 %v5489
    %5599 = vmatprep.subr.bf16.mxu0 %v5494
    %5600 = vmatpush1.bf16.msra.mxu0 %v5493
    %5601 = vmatprep.mubr.bf16.mxu0 %v5562
    %5602 = vmatmul.mubr.bf16.gmra.mrb[0].mxu0 %v5561
    %v5603 = vpop.f32.mrb[0].mxu0
    %v5604 = vadd.f32 0.0, %v5603
    %v5605 = vpop.f32.mrb[0].mxu0
    %v5606 = vadd.f32 0.0, %v5605
    %v5607 = vpop.f32.mrb[0].mxu0
    %v5608 = vadd.f32 0.0, %v5607
    %v5609 = vpop.f32.mrb[0].mxu0
    %v5610 = vadd.f32 0.0, %v5609
    %5611 = vmatprep.mubr.bf16.mxu0 %v5566
    %5612 = vmatmul.mubr.bf16.gmra.mrb[0].mxu0 %v5565
    %v5613 = vpop.f32.mrb[0].mxu0
    %v5614 = vadd.f32 0.0, %v5613
    %v5615 = vpop.f32.mrb[0].mxu0
    %v5616 = vadd.f32 0.0, %v5615
    %v5617 = vpop.f32.mrb[0].mxu0
    %v5618 = vadd.f32 0.0, %v5617
    %v5619 = vpop.f32.mrb[0].mxu0
    %v5620 = vadd.f32 0.0, %v5619
    %5621 = vdwg.mxu0
    %5622 = vmatprep.subr.bf16.mxu0 %v5498
    %5623 = vmatpush1.bf16.msra.mxu0 %v5497
    %5624 = vmatprep.subr.bf16.mxu0 %v5502
    %5625 = vmatpush1.bf16.msra.mxu0 %v5501
    %5626 = vmatprep.subr.bf16.mxu0 %v5506
    %5627 = vmatpush1.bf16.msra.mxu0 %v5505
    %5628 = vmatprep.subr.bf16.mxu0 %v5510
    %5629 = vmatpush1.bf16.msra.mxu0 %v5509
    %5630 = vmatprep.subr.bf16.mxu0 %v5514
    %5631 = vmatpush1.bf16.msra.mxu0 %v5513
    %5632 = vmatprep.subr.bf16.mxu0 %v5518
    %5633 = vmatpush1.bf16.msra.mxu0 %v5517
    %5634 = vmatprep.subr.bf16.mxu0 %v5522
    %5635 = vmatpush1.bf16.msra.mxu0 %v5521
    %5636 = vmatprep.subr.bf16.mxu0 %v5526
    %5637 = vmatpush1.bf16.msra.mxu0 %v5525
    %5638 = vmatprep.subr.bf16.mxu0 %v5530
    %5639 = vmatpush1.bf16.msra.mxu0 %v5529
    %5640 = vmatprep.subr.bf16.mxu0 %v5534
    %5641 = vmatpush1.bf16.msra.mxu0 %v5533
    %5642 = vmatprep.subr.bf16.mxu0 %v5538
    %5643 = vmatpush1.bf16.msra.mxu0 %v5537
    %5644 = vmatprep.subr.bf16.mxu0 %v5542
    %5645 = vmatpush1.bf16.msra.mxu0 %v5541
    %5646 = vmatprep.subr.bf16.mxu0 %v5546
    %5647 = vmatpush1.bf16.msra.mxu0 %v5545
    %5648 = vmatprep.subr.bf16.mxu0 %v5550
    %5649 = vmatpush1.bf16.msra.mxu0 %v5549
    %5650 = vmatprep.subr.bf16.mxu0 %v5554
    %5651 = vmatpush1.bf16.msra.mxu0 %v5553
    %5652 = vmatprep.subr.bf16.mxu0 %v5558
    %5653 = vmatpush1.bf16.msra.mxu0 %v5557
    %5654 = vmatprep.mubr.bf16.mxu0 %v5564
    %5655 = vmatmul.mubr.bf16.gmra.mrb[0].mxu0 %v5563
    %v5656 = vpop.f32.mrb[0].mxu0
    %v5657 = vadd.f32 %v5604, %v5656
    %v5658 = vpop.f32.mrb[0].mxu0
    %v5659 = vadd.f32 %v5606, %v5658
    %v5660 = vpop.f32.mrb[0].mxu0
    %v5661 = vadd.f32 %v5608, %v5660
    %v5662 = vpop.f32.mrb[0].mxu0
    %v5663 = vadd.f32 %v5610, %v5662
    %5664 = vmatprep.mubr.bf16.mxu0 %v5568
    %5665 = vmatmul.mubr.bf16.gmra.mrb[0].mxu0 %v5567
    %v5666 = vpop.f32.mrb[0].mxu0
    %v5667 = vadd.f32 %v5614, %v5666
    %v5668 = vpop.f32.mrb[0].mxu0
    %v5669 = vadd.f32 %v5616, %v5668
    %v5670 = vpop.f32.mrb[0].mxu0
    %v5671 = vadd.f32 %v5618, %v5670
    %v5672 = vpop.f32.mrb[0].mxu0
    %v5673 = vadd.f32 %v5620, %v5672
    %5674 = vdwg.mxu0
    %5675 = vmatprep.subr.bf16.mxu0 %v5436
    %5676 = vmatpush1.bf16.msra.mxu0 %v5435
    %5677 = vmatprep.subr.bf16.mxu0 %v5440
    %5678 = vmatpush1.bf16.msra.mxu0 %v5439
    %5679 = vmatprep.subr.bf16.mxu0 %v5444
    %5680 = vmatpush1.bf16.msra.mxu0 %v5443
    %5681 = vmatprep.subr.bf16.mxu0 %v5448
    %5682 = vmatpush1.bf16.msra.mxu0 %v5447
    %5683 = vmatprep.subr.bf16.mxu0 %v5452
    %5684 = vmatpush1.bf16.msra.mxu0 %v5451
    %5685 = vmatprep.subr.bf16.mxu0 %v5456
    %5686 = vmatpush1.bf16.msra.mxu0 %v5455
    %5687 = vmatprep.subr.bf16.mxu0 %v5460
    %5688 = vmatpush1.bf16.msra.mxu0 %v5459
    %5689 = vmatprep.subr.bf16.mxu0 %v5464
    %5690 = vmatpush1.bf16.msra.mxu0 %v5463
    %5691 = vmatprep.subr.bf16.mxu0 %v5468
    %5692 = vmatpush1.bf16.msra.mxu0 %v5467
    %5693 = vmatprep.subr.bf16.mxu0 %v5472
    %5694 = vmatpush1.bf16.msra.mxu0 %v5471
    %5695 = vmatprep.subr.bf16.mxu0 %v5476
    %5696 = vmatpush1.bf16.msra.mxu0 %v5475
    %5697 = vmatprep.subr.bf16.mxu0 %v5480
    %5698 = vmatpush1.bf16.msra.mxu0 %v5479
    %5699 = vmatprep.subr.bf16.mxu0 %v5484
    %5700 = vmatpush1.bf16.msra.mxu0 %v5483
    %5701 = vmatprep.subr.bf16.mxu0 %v5488
    %5702 = vmatpush1.bf16.msra.mxu0 %v5487
    %5703 = vmatprep.subr.bf16.mxu0 %v5492
    %5704 = vmatpush1.bf16.msra.mxu0 %v5491
    %5705 = vmatprep.subr.bf16.mxu0 %v5496
    %5706 = vmatpush1.bf16.msra.mxu0 %v5495
    %5707 = vmatprep.mubr.bf16.mxu0 %v5562
    %5708 = vmatmul.mubr.bf16.gmra.mrb[0].mxu0 %v5561
    %v5709 = vpop.f32.mrb[0].mxu0
    %v5710 = vadd.f32 0.0, %v5709
    %v5711 = vpop.f32.mrb[0].mxu0
    %v5712 = vadd.f32 0.0, %v5711
    %v5713 = vpop.f32.mrb[0].mxu0
    %v5714 = vadd.f32 0.0, %v5713
    %v5715 = vpop.f32.mrb[0].mxu0
    %v5716 = vadd.f32 0.0, %v5715
    %5717 = vmatprep.mubr.bf16.mxu0 %v5566
    %5718 = vmatmul.mubr.bf16.gmra.mrb[0].mxu0 %v5565
    %v5719 = vpop.f32.mrb[0].mxu0
    %v5720 = vadd.f32 0.0, %v5719
    %v5721 = vpop.f32.mrb[0].mxu0
    %v5722 = vadd.f32 0.0, %v5721
    %v5723 = vpop.f32.mrb[0].mxu0
    %v5724 = vadd.f32 0.0, %v5723
    %v5725 = vpop.f32.mrb[0].mxu0
    %v5726 = vadd.f32 0.0, %v5725
    %5727 = vdwg.mxu0
    %5728 = vmatprep.subr.bf16.mxu0 %v5500
    %5729 = vmatpush1.bf16.msra.mxu0 %v5499
    %5730 = vmatprep.subr.bf16.mxu0 %v5504
    %5731 = vmatpush1.bf16.msra.mxu0 %v5503
    %5732 = vmatprep.subr.bf16.mxu0 %v5508
    %5733 = vmatpush1.bf16.msra.mxu0 %v5507
    %5734 = vmatprep.subr.bf16.mxu0 %v5512
    %5735 = vmatpush1.bf16.msra.mxu0 %v5511
    %5736 = vmatprep.subr.bf16.mxu0 %v5516
    %5737 = vmatpush1.bf16.msra.mxu0 %v5515
    %5738 = vmatprep.subr.bf16.mxu0 %v5520
    %5739 = vmatpush1.bf16.msra.mxu0 %v5519
    %5740 = vmatprep.subr.bf16.mxu0 %v5524
    %5741 = vmatpush1.bf16.msra.mxu0 %v5523
    %5742 = vmatprep.subr.bf16.mxu0 %v5528
    %5743 = vmatpush1.bf16.msra.mxu0 %v5527
    %5744 = vmatprep.subr.bf16.mxu0 %v5532
    %5745 = vmatpush1.bf16.msra.mxu0 %v5531
    %5746 = vmatprep.subr.bf16.mxu0 %v5536
    %5747 = vmatpush1.bf16.msra.mxu0 %v5535
    %5748 = vmatprep.subr.bf16.mxu0 %v5540
    %5749 = vmatpush1.bf16.msra.mxu0 %v5539
    %5750 = vmatprep.subr.bf16.mxu0 %v5544
    %5751 = vmatpush1.bf16.msra.mxu0 %v5543
    %5752 = vmatprep.subr.bf16.mxu0 %v5548
    %5753 = vmatpush1.bf16.msra.mxu0 %v5547
    %5754 = vmatprep.subr.bf16.mxu0 %v5552
    %5755 = vmatpush1.bf16.msra.mxu0 %v5551
    %5756 = vmatprep.subr.bf16.mxu0 %v5556
    %5757 = vmatpush1.bf16.msra.mxu0 %v5555
    %5758 = vmatprep.subr.bf16.mxu0 %v5560
    %5759 = vmatpush1.bf16.msra.mxu0 %v5559
    %5760 = vmatprep.mubr.bf16.mxu0 %v5564
    %5761 = vmatmul.mubr.bf16.gmra.mrb[0].mxu0 %v5563
    %v5762 = vpop.f32.mrb[0].mxu0
    %v5763 = vadd.f32 %v5710, %v5762
    %v5764 = vpop.f32.mrb[0].mxu0
    %v5765 = vadd.f32 %v5712, %v5764
    %v5766 = vpop.f32.mrb[0].mxu0
    %v5767 = vadd.f32 %v5714, %v5766
    %v5768 = vpop.f32.mrb[0].mxu0
    %v5769 = vadd.f32 %v5716, %v5768
    %5770 = vmatprep.mubr.bf16.mxu0 %v5568
    %5771 = vmatmul.mubr.bf16.gmra.mrb[0].mxu0 %v5567
    %v5772 = vpop.f32.mrb[0].mxu0
    %v5773 = vadd.f32 %v5720, %v5772
    %v5774 = vpop.f32.mrb[0].mxu0
    %v5775 = vadd.f32 %v5722, %v5774
    %v5776 = vpop.f32.mrb[0].mxu0
    %v5777 = vadd.f32 %v5724, %v5776
    %v5778 = vpop.f32.mrb[0].mxu0
    %v5779 = vadd.f32 %v5726, %v5778
    %5780 = vdwg.mxu0
    %s5781 = scalar_lea.vmem [#allocation16], 6
    %v5782 = vld [vmem:[%s5781] ss:$8 sm:$0xf]
    %s5783 = scalar_lea.vmem [#allocation16], 7
    %v5784 = vld [vmem:[%s5783] ss:$8 sm:$0xf]
    %v5785 = vadd.f32 %v5657, %v5661
    %v5786 = vadd.f32 %v5785, %v5667
    %v5787 = vadd.f32 %v5786, %v5671
    %v5788 = vrot.slane %v5787, 4
    %v5789 = vadd.f32 %v5787, %v5788
    %v5790 = vrot.slane %v5789, 2
    %v5791 = vadd.f32 %v5789, %v5790
    %v5792 = vrot.slane %v5791, 1
    %v5793 = vadd.f32 %v5791, %v5792
    %v5794 = vadd.f32 %v5659, %v5663
    %v5795 = vadd.f32 %v5794, %v5669
    %v5796 = vadd.f32 %v5795, %v5673
    %v5797 = vrot.slane %v5796, 4
    %v5798 = vadd.f32 %v5796, %v5797
    %v5799 = vrot.slane %v5798, 2
    %v5800 = vadd.f32 %v5798, %v5799
    %v5801 = vrot.slane %v5800, 1
    %v5802 = vadd.f32 %v5800, %v5801
    %v5803 = vadd.f32 %v5763, %v5767
    %v5804 = vadd.f32 %v5803, %v5773
    %v5805 = vadd.f32 %v5804, %v5777
    %v5806 = vrot.slane %v5805, 4
    %v5807 = vadd.f32 %v5805, %v5806
    %v5808 = vrot.slane %v5807, 2
    %v5809 = vadd.f32 %v5807, %v5808
    %v5810 = vrot.slane %v5809, 1
    %v5811 = vadd.f32 %v5809, %v5810
    %v5812 = vadd.f32 %v5765, %v5769
    %v5813 = vadd.f32 %v5812, %v5775
    %v5814 = vadd.f32 %v5813, %v5779
    %v5815 = vrot.slane %v5814, 4
    %v5816 = vadd.f32 %v5814, %v5815
    %v5817 = vrot.slane %v5816, 2
    %v5818 = vadd.f32 %v5816, %v5817
    %v5819 = vrot.slane %v5818, 1
    %v5820 = vadd.f32 %v5818, %v5819
    %v5825 = vcombine.low %v5793, %v5802
    %v5826 = vcombine.low %v5811, %v5820
    %v5828 = vunpack.c.l.s4 1966171168
    %v5829 = vunpack.c.0.s8 %v5828
    %v5830 = vlaneseq
    %v5831 = vshrl.u32 %v5830, 7
    %v5832 = vsub.s32 %v5829, %v5831
    %v5833 = vrot.slane %v5825, %v5832
    %v5835 = vunpack.c.l.s4 1966171168
    %v5836 = vunpack.c.0.s8 %v5835
    %v5837 = vlaneseq
    %v5838 = vshrl.u32 %v5837, 7
    %v5839 = vsub.s32 %v5836, %v5838
    %v5840 = vrot.slane %v5826, %v5839
    %v5841 = vcombine.low %v5833, %v5840
    %v5843 = vunpack.c.l.s4 1966171168
    %v5844 = vunpack.c.0.s8 %v5843
    %v5845 = vlaneseq
    %v5846 = vshrl.u32 %v5845, 7
    %v5847 = vsub.s32 %v5844, %v5846
    %v5848 = vrot.slane %v5841, %v5847
    %5850 = vst.msk [vmem:[#allocation3] ss:$2 sm:$0xf] %vm1411, %v5848
    %v5851 = vmul.f32 %v5657, %v5657
    %v5852 = vmul.f32 %v5659, %v5659
    %v5853 = vmul.f32 %v5763, %v5763
    %v5854 = vmul.f32 %v5765, %v5765
    %v5855 = vmul.f32 %v5661, %v5661
    %v5856 = vmul.f32 %v5663, %v5663
    %v5857 = vmul.f32 %v5767, %v5767
    %v5858 = vmul.f32 %v5769, %v5769
    %v5859 = vmul.f32 %v5667, %v5667
    %v5860 = vmul.f32 %v5669, %v5669
    %v5861 = vmul.f32 %v5773, %v5773
    %v5862 = vmul.f32 %v5775, %v5775
    %v5863 = vmul.f32 %v5671, %v5671
    %v5864 = vmul.f32 %v5673, %v5673
    %v5865 = vmul.f32 %v5777, %v5777
    %v5866 = vmul.f32 %v5779, %v5779
    %v5867 = vadd.f32 %v5851, %v5855
    %v5868 = vadd.f32 %v5867, %v5859
    %v5869 = vadd.f32 %v5868, %v5863
    %v5870 = vrot.slane %v5869, 4
    %v5871 = vadd.f32 %v5869, %v5870
    %v5872 = vrot.slane %v5871, 2
    %v5873 = vadd.f32 %v5871, %v5872
    %v5874 = vrot.slane %v5873, 1
    %v5875 = vadd.f32 %v5873, %v5874
    %v5876 = vadd.f32 %v5852, %v5856
    %v5877 = vadd.f32 %v5876, %v5860
    %v5878 = vadd.f32 %v5877, %v5864
    %v5879 = vrot.slane %v5878, 4
    %v5880 = vadd.f32 %v5878, %v5879
    %v5881 = vrot.slane %v5880, 2
    %v5882 = vadd.f32 %v5880, %v5881
    %v5883 = vrot.slane %v5882, 1
    %v5884 = vadd.f32 %v5882, %v5883
    %v5885 = vadd.f32 %v5853, %v5857
    %v5886 = vadd.f32 %v5885, %v5861
    %v5887 = vadd.f32 %v5886, %v5865
    %v5888 = vrot.slane %v5887, 4
    %v5889 = vadd.f32 %v5887, %v5888
    %v5890 = vrot.slane %v5889, 2
    %v5891 = vadd.f32 %v5889, %v5890
    %v5892 = vrot.slane %v5891, 1
    %v5893 = vadd.f32 %v5891, %v5892
    %v5894 = vadd.f32 %v5854, %v5858
    %v5895 = vadd.f32 %v5894, %v5862
    %v5896 = vadd.f32 %v5895, %v5866
    %v5897 = vrot.slane %v5896, 4
    %v5898 = vadd.f32 %v5896, %v5897
    %v5899 = vrot.slane %v5898, 2
    %v5900 = vadd.f32 %v5898, %v5899
    %v5901 = vrot.slane %v5900, 1
    %v5902 = vadd.f32 %v5900, %v5901
    %v5907 = vcombine.low %v5875, %v5884
    %v5908 = vcombine.low %v5893, %v5902
    %v5910 = vunpack.c.l.s4 1966171168
    %v5911 = vunpack.c.0.s8 %v5910
    %v5912 = vlaneseq
    %v5913 = vshrl.u32 %v5912, 7
    %v5914 = vsub.s32 %v5911, %v5913
    %v5915 = vrot.slane %v5907, %v5914
    %v5917 = vunpack.c.l.s4 1966171168
    %v5918 = vunpack.c.0.s8 %v5917
    %v5919 = vlaneseq
    %v5920 = vshrl.u32 %v5919, 7
    %v5921 = vsub.s32 %v5918, %v5920
    %v5922 = vrot.slane %v5908, %v5921
    %v5923 = vcombine.low %v5915, %v5922
    %v5925 = vunpack.c.l.s4 1966171168
    %v5926 = vunpack.c.0.s8 %v5925
    %v5927 = vlaneseq
    %v5928 = vshrl.u32 %v5927, 7
    %v5929 = vsub.s32 %v5926, %v5928
    %v5930 = vrot.slane %v5923, %v5929
    %5932 = vst.msk [vmem:[%s1494] ss:$2 sm:$0xf] %vm1411, %v5930
    %v5933 = vld [vmem:[#allocation3] sm:$0xff]
    %v5934 = vmul.u32 %v307, 32
    %v5935 = vsub.s32 %v161, %v5934
    %v5936 = vsub.s32 %v162, %v5934
    %v5937 = vsub.s32 %v163, %v5934
    %v5938 = vsub.s32 %v164, %v5934
    %v5939 = vsub.s32 %v294, %v5934
    %v5940 = vsub.s32 %v295, %v5934
    %v5941 = vsub.s32 %v296, %v5934
    %v5942 = vsub.s32 %v297, %v5934
    %v5943 = vsub.s32 %v298, %v5934
    %v5944 = vsub.s32 %v299, %v5934
    %v5945 = vsub.s32 %v300, %v5934
    %v5946 = vsub.s32 %v301, %v5934
    %v5947 = vsub.s32 %v302, %v5934
    %v5948 = vsub.s32 %v303, %v5934
    %v5949 = vsub.s32 %v304, %v5934
    %v5950 = vsub.s32 %v305, %v5934
    %v5951 = vsub.s32 %v1497, %v5934
    %v5952 = vsub.s32 %v1498, %v5934
    %v5953 = vsub.s32 %v1499, %v5934
    %v5954 = vsub.s32 %v1500, %v5934
    %v5955 = vsub.s32 %v1501, %v5934
    %v5956 = vsub.s32 %v1502, %v5934
    %v5957 = vsub.s32 %v1503, %v5934
    %v5958 = vsub.s32 %v1504, %v5934
    %v5959 = vsub.s32 %v1505, %v5934
    %v5960 = vsub.s32 %v1506, %v5934
    %v5961 = vsub.s32 %v1507, %v5934
    %v5962 = vsub.s32 %v1508, %v5934
    %v5963 = vsub.s32 %v1509, %v5934
    %v5964 = vsub.s32 %v1510, %v5934
    %v5965 = vsub.s32 %v1511, %v5934
    %v5966 = vsub.s32 %v1512, %v5934
    %v5967 = vsub.s32 %v1513, %v5934
    %v5968 = vsub.s32 %v1514, %v5934
    %v5969 = vsub.s32 %v1515, %v5934
    %v5970 = vsub.s32 %v1516, %v5934
    %v5971 = vsub.s32 %v1517, %v5934
    %v5972 = vsub.s32 %v1518, %v5934
    %v5973 = vsub.s32 %v1519, %v5934
    %v5974 = vsub.s32 %v1520, %v5934
    %v5975 = vsub.s32 %v1521, %v5934
    %v5976 = vsub.s32 %v1522, %v5934
    %v5977 = vsub.s32 %v1523, %v5934
    %v5978 = vsub.s32 %v1524, %v5934
    %v5979 = vsub.s32 %v1525, %v5934
    %v5980 = vsub.s32 %v1526, %v5934
    %v5981 = vsub.s32 %v1527, %v5934
    %v5982 = vsub.s32 %v1528, %v5934
    %v5983 = vsub.s32 %v1529, %v5934
    %v5984 = vsub.s32 %v1530, %v5934
    %v5985 = vsub.s32 %v1531, %v5934
    %v5986 = vsub.s32 %v1532, %v5934
    %v5987 = vsub.s32 %v1533, %v5934
    %v5988 = vsub.s32 %v1534, %v5934
    %v5989 = vsub.s32 %v1535, %v5934
    %v5990 = vsub.s32 %v1536, %v5934
    %v5991 = vsub.s32 %v1537, %v5934
    %v5992 = vsub.s32 %v1538, %v5934
    %v5993 = vsub.s32 %v1539, %v5934
    %v5994 = vsub.s32 %v1540, %v5934
    %v5995 = vsub.s32 %v1541, %v5934
    %v5996 = vsub.s32 %v1542, %v5934
    %v5997 = vsub.s32 %v1543, %v5934
    %v5998 = vsub.s32 %v1544, %v5934
    %vm5999 = vcmp.ge.s32.totalorder %v5935, 0
    %vm6000 = vcmp.ge.s32.totalorder %v5936, 0
    %vm6001 = vcmp.ge.s32.totalorder %v5937, 0
    %vm6002 = vcmp.ge.s32.totalorder %v5938, 0
    %vm6003 = vcmp.ge.s32.totalorder %v5939, 0
    %vm6004 = vcmp.ge.s32.totalorder %v5940, 0
    %vm6005 = vcmp.ge.s32.totalorder %v5941, 0
    %vm6006 = vcmp.ge.s32.totalorder %v5942, 0
    %vm6007 = vcmp.ge.s32.totalorder %v5943, 0
    %vm6008 = vcmp.ge.s32.totalorder %v5944, 0
    %vm6009 = vcmp.ge.s32.totalorder %v5945, 0
    %vm6010 = vcmp.ge.s32.totalorder %v5946, 0
    %vm6011 = vcmp.ge.s32.totalorder %v5947, 0
    %vm6012 = vcmp.ge.s32.totalorder %v5948, 0
    %vm6013 = vcmp.ge.s32.totalorder %v5949, 0
    %vm6014 = vcmp.ge.s32.totalorder %v5950, 0
    %vm6015 = vcmp.ge.s32.totalorder %v5951, 0
    %vm6016 = vcmp.ge.s32.totalorder %v5952, 0
    %vm6017 = vcmp.ge.s32.totalorder %v5953, 0
    %vm6018 = vcmp.ge.s32.totalorder %v5954, 0
    %vm6019 = vcmp.ge.s32.totalorder %v5955, 0
    %vm6020 = vcmp.ge.s32.totalorder %v5956, 0
    %vm6021 = vcmp.ge.s32.totalorder %v5957, 0
    %vm6022 = vcmp.ge.s32.totalorder %v5958, 0
    %vm6023 = vcmp.ge.s32.totalorder %v5959, 0
    %vm6024 = vcmp.ge.s32.totalorder %v5960, 0
    %vm6025 = vcmp.ge.s32.totalorder %v5961, 0
    %vm6026 = vcmp.ge.s32.totalorder %v5962, 0
    %vm6027 = vcmp.ge.s32.totalorder %v5963, 0
    %vm6028 = vcmp.ge.s32.totalorder %v5964, 0
    %vm6029 = vcmp.ge.s32.totalorder %v5965, 0
    %vm6030 = vcmp.ge.s32.totalorder %v5966, 0
    %vm6031 = vcmp.ge.s32.totalorder %v5967, 0
    %vm6032 = vcmp.ge.s32.totalorder %v5968, 0
    %vm6033 = vcmp.ge.s32.totalorder %v5969, 0
    %vm6034 = vcmp.ge.s32.totalorder %v5970, 0
    %vm6035 = vcmp.ge.s32.totalorder %v5971, 0
    %vm6036 = vcmp.ge.s32.totalorder %v5972, 0
    %vm6037 = vcmp.ge.s32.totalorder %v5973, 0
    %vm6038 = vcmp.ge.s32.totalorder %v5974, 0
    %vm6039 = vcmp.ge.s32.totalorder %v5975, 0
    %vm6040 = vcmp.ge.s32.totalorder %v5976, 0
    %vm6041 = vcmp.ge.s32.totalorder %v5977, 0
    %vm6042 = vcmp.ge.s32.totalorder %v5978, 0
    %vm6043 = vcmp.ge.s32.totalorder %v5979, 0
    %vm6044 = vcmp.ge.s32.totalorder %v5980, 0
    %vm6045 = vcmp.ge.s32.totalorder %v5981, 0
    %vm6046 = vcmp.ge.s32.totalorder %v5982, 0
    %vm6047 = vcmp.ge.s32.totalorder %v5983, 0
    %vm6048 = vcmp.ge.s32.totalorder %v5984, 0
    %vm6049 = vcmp.ge.s32.totalorder %v5985, 0
    %vm6050 = vcmp.ge.s32.totalorder %v5986, 0
    %vm6051 = vcmp.ge.s32.totalorder %v5987, 0
    %vm6052 = vcmp.ge.s32.totalorder %v5988, 0
    %vm6053 = vcmp.ge.s32.totalorder %v5989, 0
    %vm6054 = vcmp.ge.s32.totalorder %v5990, 0
    %vm6055 = vcmp.ge.s32.totalorder %v5991, 0
    %vm6056 = vcmp.ge.s32.totalorder %v5992, 0
    %vm6057 = vcmp.ge.s32.totalorder %v5993, 0
    %vm6058 = vcmp.ge.s32.totalorder %v5994, 0
    %vm6059 = vcmp.ge.s32.totalorder %v5995, 0
    %vm6060 = vcmp.ge.s32.totalorder %v5996, 0
    %vm6061 = vcmp.ge.s32.totalorder %v5997, 0
    %vm6062 = vcmp.ge.s32.totalorder %v5998, 0
    %vm6063 = vcmp.lt.s32.totalorder %v5935, 32
    %vm6064 = vcmp.lt.s32.totalorder %v5936, 32
    %vm6065 = vcmp.lt.s32.totalorder %v5937, 32
    %vm6066 = vcmp.lt.s32.totalorder %v5938, 32
    %vm6067 = vcmp.lt.s32.totalorder %v5939, 32
    %vm6068 = vcmp.lt.s32.totalorder %v5940, 32
    %vm6069 = vcmp.lt.s32.totalorder %v5941, 32
    %vm6070 = vcmp.lt.s32.totalorder %v5942, 32
    %vm6071 = vcmp.lt.s32.totalorder %v5943, 32
    %vm6072 = vcmp.lt.s32.totalorder %v5944, 32
    %vm6073 = vcmp.lt.s32.totalorder %v5945, 32
    %vm6074 = vcmp.lt.s32.totalorder %v5946, 32
    %vm6075 = vcmp.lt.s32.totalorder %v5947, 32
    %vm6076 = vcmp.lt.s32.totalorder %v5948, 32
    %vm6077 = vcmp.lt.s32.totalorder %v5949, 32
    %vm6078 = vcmp.lt.s32.totalorder %v5950, 32
    %vm6079 = vcmp.lt.s32.totalorder %v5951, 32
    %vm6080 = vcmp.lt.s32.totalorder %v5952, 32
    %vm6081 = vcmp.lt.s32.totalorder %v5953, 32
    %vm6082 = vcmp.lt.s32.totalorder %v5954, 32
    %vm6083 = vcmp.lt.s32.totalorder %v5955, 32
    %vm6084 = vcmp.lt.s32.totalorder %v5956, 32
    %vm6085 = vcmp.lt.s32.totalorder %v5957, 32
    %vm6086 = vcmp.lt.s32.totalorder %v5958, 32
    %vm6087 = vcmp.lt.s32.totalorder %v5959, 32
    %vm6088 = vcmp.lt.s32.totalorder %v5960, 32
    %vm6089 = vcmp.lt.s32.totalorder %v5961, 32
    %vm6090 = vcmp.lt.s32.totalorder %v5962, 32
    %vm6091 = vcmp.lt.s32.totalorder %v5963, 32
    %vm6092 = vcmp.lt.s32.totalorder %v5964, 32
    %vm6093 = vcmp.lt.s32.totalorder %v5965, 32
    %vm6094 = vcmp.lt.s32.totalorder %v5966, 32
    %vm6095 = vcmp.lt.s32.totalorder %v5967, 32
    %vm6096 = vcmp.lt.s32.totalorder %v5968, 32
    %vm6097 = vcmp.lt.s32.totalorder %v5969, 32
    %vm6098 = vcmp.lt.s32.totalorder %v5970, 32
    %vm6099 = vcmp.lt.s32.totalorder %v5971, 32
    %vm6100 = vcmp.lt.s32.totalorder %v5972, 32
    %vm6101 = vcmp.lt.s32.totalorder %v5973, 32
    %vm6102 = vcmp.lt.s32.totalorder %v5974, 32
    %vm6103 = vcmp.lt.s32.totalorder %v5975, 32
    %vm6104 = vcmp.lt.s32.totalorder %v5976, 32
    %vm6105 = vcmp.lt.s32.totalorder %v5977, 32
    %vm6106 = vcmp.lt.s32.totalorder %v5978, 32
    %vm6107 = vcmp.lt.s32.totalorder %v5979, 32
    %vm6108 = vcmp.lt.s32.totalorder %v5980, 32
    %vm6109 = vcmp.lt.s32.totalorder %v5981, 32
    %vm6110 = vcmp.lt.s32.totalorder %v5982, 32
    %vm6111 = vcmp.lt.s32.totalorder %v5983, 32
    %vm6112 = vcmp.lt.s32.totalorder %v5984, 32
    %vm6113 = vcmp.lt.s32.totalorder %v5985, 32
    %vm6114 = vcmp.lt.s32.totalorder %v5986, 32
    %vm6115 = vcmp.lt.s32.totalorder %v5987, 32
    %vm6116 = vcmp.lt.s32.totalorder %v5988, 32
    %vm6117 = vcmp.lt.s32.totalorder %v5989, 32
    %vm6118 = vcmp.lt.s32.totalorder %v5990, 32
    %vm6119 = vcmp.lt.s32.totalorder %v5991, 32
    %vm6120 = vcmp.lt.s32.totalorder %v5992, 32
    %vm6121 = vcmp.lt.s32.totalorder %v5993, 32
    %vm6122 = vcmp.lt.s32.totalorder %v5994, 32
    %vm6123 = vcmp.lt.s32.totalorder %v5995, 32
    %vm6124 = vcmp.lt.s32.totalorder %v5996, 32
    %vm6125 = vcmp.lt.s32.totalorder %v5997, 32
    %vm6126 = vcmp.lt.s32.totalorder %v5998, 32
    %vm6127 = vmand %vm5999, %vm6063
    %vm6128 = vmand %vm6000, %vm6064
    %vm6129 = vmand %vm6001, %vm6065
    %vm6130 = vmand %vm6002, %vm6066
    %vm6131 = vmand %vm6003, %vm6067
    %vm6132 = vmand %vm6004, %vm6068
    %vm6133 = vmand %vm6005, %vm6069
    %vm6134 = vmand %vm6006, %vm6070
    %vm6135 = vmand %vm6007, %vm6071
    %vm6136 = vmand %vm6008, %vm6072
    %vm6137 = vmand %vm6009, %vm6073
    %vm6138 = vmand %vm6010, %vm6074
    %vm6139 = vmand %vm6011, %vm6075
    %vm6140 = vmand %vm6012, %vm6076
    %vm6141 = vmand %vm6013, %vm6077
    %vm6142 = vmand %vm6014, %vm6078
    %vm6143 = vmand %vm6015, %vm6079
    %vm6144 = vmand %vm6016, %vm6080
    %vm6145 = vmand %vm6017, %vm6081
    %vm6146 = vmand %vm6018, %vm6082
    %vm6147 = vmand %vm6019, %vm6083
    %vm6148 = vmand %vm6020, %vm6084
    %vm6149 = vmand %vm6021, %vm6085
    %vm6150 = vmand %vm6022, %vm6086
    %vm6151 = vmand %vm6023, %vm6087
    %vm6152 = vmand %vm6024, %vm6088
    %vm6153 = vmand %vm6025, %vm6089
    %vm6154 = vmand %vm6026, %vm6090
    %vm6155 = vmand %vm6027, %vm6091
    %vm6156 = vmand %vm6028, %vm6092
    %vm6157 = vmand %vm6029, %vm6093
    %vm6158 = vmand %vm6030, %vm6094
    %vm6159 = vmand %vm6031, %vm6095
    %vm6160 = vmand %vm6032, %vm6096
    %vm6161 = vmand %vm6033, %vm6097
    %vm6162 = vmand %vm6034, %vm6098
    %vm6163 = vmand %vm6035, %vm6099
    %vm6164 = vmand %vm6036, %vm6100
    %vm6165 = vmand %vm6037, %vm6101
    %vm6166 = vmand %vm6038, %vm6102
    %vm6167 = vmand %vm6039, %vm6103
    %vm6168 = vmand %vm6040, %vm6104
    %vm6169 = vmand %vm6041, %vm6105
    %vm6170 = vmand %vm6042, %vm6106
    %vm6171 = vmand %vm6043, %vm6107
    %vm6172 = vmand %vm6044, %vm6108
    %vm6173 = vmand %vm6045, %vm6109
    %vm6174 = vmand %vm6046, %vm6110
    %vm6175 = vmand %vm6047, %vm6111
    %vm6176 = vmand %vm6048, %vm6112
    %vm6177 = vmand %vm6049, %vm6113
    %vm6178 = vmand %vm6050, %vm6114
    %vm6179 = vmand %vm6051, %vm6115
    %vm6180 = vmand %vm6052, %vm6116
    %vm6181 = vmand %vm6053, %vm6117
    %vm6182 = vmand %vm6054, %vm6118
    %vm6183 = vmand %vm6055, %vm6119
    %vm6184 = vmand %vm6056, %vm6120
    %vm6185 = vmand %vm6057, %vm6121
    %vm6186 = vmand %vm6058, %vm6122
    %vm6187 = vmand %vm6059, %vm6123
    %vm6188 = vmand %vm6060, %vm6124
    %vm6189 = vmand %vm6061, %vm6125
    %vm6190 = vmand %vm6062, %vm6126
    %v6191 = vsel %vm6127, 1.0, 0.0
    %v6192 = vsel %vm6128, 1.0, 0.0
    %v6193 = vsel %vm6129, 1.0, 0.0
    %v6194 = vsel %vm6130, 1.0, 0.0
    %v6195 = vsel %vm6131, 1.0, 0.0
    %v6196 = vsel %vm6132, 1.0, 0.0
    %v6197 = vsel %vm6133, 1.0, 0.0
    %v6198 = vsel %vm6134, 1.0, 0.0
    %v6199 = vsel %vm6135, 1.0, 0.0
    %v6200 = vsel %vm6136, 1.0, 0.0
    %v6201 = vsel %vm6137, 1.0, 0.0
    %v6202 = vsel %vm6138, 1.0, 0.0
    %v6203 = vsel %vm6139, 1.0, 0.0
    %v6204 = vsel %vm6140, 1.0, 0.0
    %v6205 = vsel %vm6141, 1.0, 0.0
    %v6206 = vsel %vm6142, 1.0, 0.0
    %v6207 = vsel %vm6143, 1.0, 0.0
    %v6208 = vsel %vm6144, 1.0, 0.0
    %v6209 = vsel %vm6145, 1.0, 0.0
    %v6210 = vsel %vm6146, 1.0, 0.0
    %v6211 = vsel %vm6147, 1.0, 0.0
    %v6212 = vsel %vm6148, 1.0, 0.0
    %v6213 = vsel %vm6149, 1.0, 0.0
    %v6214 = vsel %vm6150, 1.0, 0.0
    %v6215 = vsel %vm6151, 1.0, 0.0
    %v6216 = vsel %vm6152, 1.0, 0.0
    %v6217 = vsel %vm6153, 1.0, 0.0
    %v6218 = vsel %vm6154, 1.0, 0.0
    %v6219 = vsel %vm6155, 1.0, 0.0
    %v6220 = vsel %vm6156, 1.0, 0.0
    %v6221 = vsel %vm6157, 1.0, 0.0
    %v6222 = vsel %vm6158, 1.0, 0.0
    %v6223 = vsel %vm6159, 1.0, 0.0
    %v6224 = vsel %vm6160, 1.0, 0.0
    %v6225 = vsel %vm6161, 1.0, 0.0
    %v6226 = vsel %vm6162, 1.0, 0.0
    %v6227 = vsel %vm6163, 1.0, 0.0
    %v6228 = vsel %vm6164, 1.0, 0.0
    %v6229 = vsel %vm6165, 1.0, 0.0
    %v6230 = vsel %vm6166, 1.0, 0.0
    %v6231 = vsel %vm6167, 1.0, 0.0
    %v6232 = vsel %vm6168, 1.0, 0.0
    %v6233 = vsel %vm6169, 1.0, 0.0
    %v6234 = vsel %vm6170, 1.0, 0.0
    %v6235 = vsel %vm6171, 1.0, 0.0
    %v6236 = vsel %vm6172, 1.0, 0.0
    %v6237 = vsel %vm6173, 1.0, 0.0
    %v6238 = vsel %vm6174, 1.0, 0.0
    %v6239 = vsel %vm6175, 1.0, 0.0
    %v6240 = vsel %vm6176, 1.0, 0.0
    %v6241 = vsel %vm6177, 1.0, 0.0
    %v6242 = vsel %vm6178, 1.0, 0.0
    %v6243 = vsel %vm6179, 1.0, 0.0
    %v6244 = vsel %vm6180, 1.0, 0.0
    %v6245 = vsel %vm6181, 1.0, 0.0
    %v6246 = vsel %vm6182, 1.0, 0.0
    %v6247 = vsel %vm6183, 1.0, 0.0
    %v6248 = vsel %vm6184, 1.0, 0.0
    %v6249 = vsel %vm6185, 1.0, 0.0
    %v6250 = vsel %vm6186, 1.0, 0.0
    %v6251 = vsel %vm6187, 1.0, 0.0
    %v6252 = vsel %vm6188, 1.0, 0.0
    %v6253 = vsel %vm6189, 1.0, 0.0
    %v6254 = vsel %vm6190, 1.0, 0.0
    %v6255 = vmul.u32 %v161, 32
    %v6256 = vmul.u32 %v162, 32
    %v6257 = vsub.s32 %v307, %v6255
    %v6258 = vsub.s32 %v1785, %v6255
    %v6259 = vsub.s32 %v1786, %v6255
    %v6260 = vsub.s32 %v1787, %v6255
    %v6261 = vsub.s32 %v307, %v6256
    %v6262 = vsub.s32 %v1785, %v6256
    %v6263 = vsub.s32 %v1786, %v6256
    %v6264 = vsub.s32 %v1787, %v6256
    %vm6265 = vcmp.ge.s32.totalorder %v6257, 0
    %vm6266 = vcmp.ge.s32.totalorder %v6258, 0
    %vm6267 = vcmp.ge.s32.totalorder %v6259, 0
    %vm6268 = vcmp.ge.s32.totalorder %v6260, 0
    %vm6269 = vcmp.ge.s32.totalorder %v6261, 0
    %vm6270 = vcmp.ge.s32.totalorder %v6262, 0
    %vm6271 = vcmp.ge.s32.totalorder %v6263, 0
    %vm6272 = vcmp.ge.s32.totalorder %v6264, 0
    %vm6273 = vcmp.lt.s32.totalorder %v6257, 32
    %vm6274 = vcmp.lt.s32.totalorder %v6258, 32
    %vm6275 = vcmp.lt.s32.totalorder %v6259, 32
    %vm6276 = vcmp.lt.s32.totalorder %v6260, 32
    %vm6277 = vcmp.lt.s32.totalorder %v6261, 32
    %vm6278 = vcmp.lt.s32.totalorder %v6262, 32
    %vm6279 = vcmp.lt.s32.totalorder %v6263, 32
    %vm6280 = vcmp.lt.s32.totalorder %v6264, 32
    %vm6281 = vmand %vm6265, %vm6273
    %vm6282 = vmand %vm6266, %vm6274
    %vm6283 = vmand %vm6267, %vm6275
    %vm6284 = vmand %vm6268, %vm6276
    %vm6285 = vmand %vm6269, %vm6277
    %vm6286 = vmand %vm6270, %vm6278
    %vm6287 = vmand %vm6271, %vm6279
    %vm6288 = vmand %vm6272, %vm6280
    %v6289 = vsel %vm6281, 1.0, 0.0
    %v6290 = vsel %vm6282, 1.0, 0.0
    %v6291 = vsel %vm6283, 1.0, 0.0
    %v6292 = vsel %vm6284, 1.0, 0.0
    %v6293 = vsel %vm6285, 1.0, 0.0
    %v6294 = vsel %vm6286, 1.0, 0.0
    %v6295 = vsel %vm6287, 1.0, 0.0
    %v6296 = vsel %vm6288, 1.0, 0.0
    %v6298 = vcombine.high %v5933, %v5933
    %v6300 = vunpack.c.l.s4 1983009808
    %v6301 = vunpack.c.0.s8 %v6300
    %v6302 = vlaneseq
    %v6303 = vshrl.u32 %v6302, 7
    %v6304 = vsub.s32 %v6301, %v6303
    %v6305 = vrot.slane %v5933, %v6304
    %v6307 = vunpack.c.l.s4 1983009808
    %v6308 = vunpack.c.0.s8 %v6307
    %v6309 = vlaneseq
    %v6310 = vshrl.u32 %v6309, 7
    %v6311 = vsub.s32 %v6308, %v6310
    %v6312 = vrot.slane %v6298, %v6311
    %v6313 = vcombine.high %v6305, %v6305
    %v6314 = vcombine.high %v6312, %v6312
    %6319 = vmatprep.subr.mxu0 0.0
    %6320 = vmatpush1.msra.mxu0 %v6191
    %6321 = vmatprep.subr.mxu0 0.0
    %6322 = vmatpush1.msra.mxu0 %v6192
    %6323 = vmatprep.subr.mxu0 0.0
    %6324 = vmatpush1.msra.mxu0 %v6193
    %6325 = vmatprep.subr.mxu0 0.0
    %6326 = vmatpush1.msra.mxu0 %v6194
    %6327 = vmatprep.subr.mxu0 0.0
    %6328 = vmatpush1.msra.mxu0 %v6195
    %6329 = vmatprep.subr.mxu0 0.0
    %6330 = vmatpush1.msra.mxu0 %v6196
    %6331 = vmatprep.subr.mxu0 0.0
    %6332 = vmatpush1.msra.mxu0 %v6197
    %6333 = vmatprep.subr.mxu0 0.0
    %6334 = vmatpush1.msra.mxu0 %v6198
    %6335 = vmatprep.subr.mxu0 0.0
    %6336 = vmatpush1.msra.mxu0 %v6199
    %6337 = vmatprep.subr.mxu0 0.0
    %6338 = vmatpush1.msra.mxu0 %v6200
    %6339 = vmatprep.subr.mxu0 0.0
    %6340 = vmatpush1.msra.mxu0 %v6201
    %6341 = vmatprep.subr.mxu0 0.0
    %6342 = vmatpush1.msra.mxu0 %v6202
    %6343 = vmatprep.subr.mxu0 0.0
    %6344 = vmatpush1.msra.mxu0 %v6203
    %6345 = vmatprep.subr.mxu0 0.0
    %6346 = vmatpush1.msra.mxu0 %v6204
    %6347 = vmatprep.subr.mxu0 0.0
    %6348 = vmatpush1.msra.mxu0 %v6205
    %6349 = vmatprep.subr.mxu0 0.0
    %6350 = vmatpush1.msra.mxu0 %v6206
    %6351 = vmatprep.subr.mxu0 0.0
    %6352 = vmatpush1.msra.mxu0 %v6207
    %6353 = vmatprep.subr.mxu0 0.0
    %6354 = vmatpush1.msra.mxu0 %v6208
    %6355 = vmatprep.subr.mxu0 0.0
    %6356 = vmatpush1.msra.mxu0 %v6209
    %6357 = vmatprep.subr.mxu0 0.0
    %6358 = vmatpush1.msra.mxu0 %v6210
    %6359 = vmatprep.subr.mxu0 0.0
    %6360 = vmatpush1.msra.mxu0 %v6211
    %6361 = vmatprep.subr.mxu0 0.0
    %6362 = vmatpush1.msra.mxu0 %v6212
    %6363 = vmatprep.subr.mxu0 0.0
    %6364 = vmatpush1.msra.mxu0 %v6213
    %6365 = vmatprep.subr.mxu0 0.0
    %6366 = vmatpush1.msra.mxu0 %v6214
    %6367 = vmatprep.subr.mxu0 0.0
    %6368 = vmatpush1.msra.mxu0 %v6215
    %6369 = vmatprep.subr.mxu0 0.0
    %6370 = vmatpush1.msra.mxu0 %v6216
    %6371 = vmatprep.subr.mxu0 0.0
    %6372 = vmatpush1.msra.mxu0 %v6217
    %6373 = vmatprep.subr.mxu0 0.0
    %6374 = vmatpush1.msra.mxu0 %v6218
    %6375 = vmatprep.subr.mxu0 0.0
    %6376 = vmatpush1.msra.mxu0 %v6219
    %6377 = vmatprep.subr.mxu0 0.0
    %6378 = vmatpush1.msra.mxu0 %v6220
    %6379 = vmatprep.subr.mxu0 0.0
    %6380 = vmatpush1.msra.mxu0 %v6221
    %6381 = vmatprep.subr.mxu0 0.0
    %6382 = vmatpush1.msra.mxu0 %v6222
    %6383 = vmatprep.mubr.f32.mxu0 %v6313
    %6384 = vmatmul.mubr.f32.gmra.mrb[0].mxu0 %v6305
    %v6385 = vpop.f32.mrb[0].mxu0
    %v6386 = vadd.f32 0.0, %v6385
    %v6387 = vpop.f32.mrb[0].mxu0
    %6388 = vdwg.mxu0
    %6389 = vmatprep.subr.mxu0 0.0
    %6390 = vmatpush1.msra.mxu0 %v6223
    %6391 = vmatprep.subr.mxu0 0.0
    %6392 = vmatpush1.msra.mxu0 %v6224
    %6393 = vmatprep.subr.mxu0 0.0
    %6394 = vmatpush1.msra.mxu0 %v6225
    %6395 = vmatprep.subr.mxu0 0.0
    %6396 = vmatpush1.msra.mxu0 %v6226
    %6397 = vmatprep.subr.mxu0 0.0
    %6398 = vmatpush1.msra.mxu0 %v6227
    %6399 = vmatprep.subr.mxu0 0.0
    %6400 = vmatpush1.msra.mxu0 %v6228
    %6401 = vmatprep.subr.mxu0 0.0
    %6402 = vmatpush1.msra.mxu0 %v6229
    %6403 = vmatprep.subr.mxu0 0.0
    %6404 = vmatpush1.msra.mxu0 %v6230
    %6405 = vmatprep.subr.mxu0 0.0
    %6406 = vmatpush1.msra.mxu0 %v6231
    %6407 = vmatprep.subr.mxu0 0.0
    %6408 = vmatpush1.msra.mxu0 %v6232
    %6409 = vmatprep.subr.mxu0 0.0
    %6410 = vmatpush1.msra.mxu0 %v6233
    %6411 = vmatprep.subr.mxu0 0.0
    %6412 = vmatpush1.msra.mxu0 %v6234
    %6413 = vmatprep.subr.mxu0 0.0
    %6414 = vmatpush1.msra.mxu0 %v6235
    %6415 = vmatprep.subr.mxu0 0.0
    %6416 = vmatpush1.msra.mxu0 %v6236
    %6417 = vmatprep.subr.mxu0 0.0
    %6418 = vmatpush1.msra.mxu0 %v6237
    %6419 = vmatprep.subr.mxu0 0.0
    %6420 = vmatpush1.msra.mxu0 %v6238
    %6421 = vmatprep.subr.mxu0 0.0
    %6422 = vmatpush1.msra.mxu0 %v6239
    %6423 = vmatprep.subr.mxu0 0.0
    %6424 = vmatpush1.msra.mxu0 %v6240
    %6425 = vmatprep.subr.mxu0 0.0
    %6426 = vmatpush1.msra.mxu0 %v6241
    %6427 = vmatprep.subr.mxu0 0.0
    %6428 = vmatpush1.msra.mxu0 %v6242
    %6429 = vmatprep.subr.mxu0 0.0
    %6430 = vmatpush1.msra.mxu0 %v6243
    %6431 = vmatprep.subr.mxu0 0.0
    %6432 = vmatpush1.msra.mxu0 %v6244
    %6433 = vmatprep.subr.mxu0 0.0
    %6434 = vmatpush1.msra.mxu0 %v6245
    %6435 = vmatprep.subr.mxu0 0.0
    %6436 = vmatpush1.msra.mxu0 %v6246
    %6437 = vmatprep.subr.mxu0 0.0
    %6438 = vmatpush1.msra.mxu0 %v6247
    %6439 = vmatprep.subr.mxu0 0.0
    %6440 = vmatpush1.msra.mxu0 %v6248
    %6441 = vmatprep.subr.mxu0 0.0
    %6442 = vmatpush1.msra.mxu0 %v6249
    %6443 = vmatprep.subr.mxu0 0.0
    %6444 = vmatpush1.msra.mxu0 %v6250
    %6445 = vmatprep.subr.mxu0 0.0
    %6446 = vmatpush1.msra.mxu0 %v6251
    %6447 = vmatprep.subr.mxu0 0.0
    %6448 = vmatpush1.msra.mxu0 %v6252
    %6449 = vmatprep.subr.mxu0 0.0
    %6450 = vmatpush1.msra.mxu0 %v6253
    %6451 = vmatprep.subr.mxu0 0.0
    %6452 = vmatpush1.msra.mxu0 %v6254
    %6453 = vmatprep.mubr.f32.mxu0 %v6314
    %6454 = vmatmul.mubr.f32.gmra.mrb[0].mxu0 %v6312
    %v6455 = vpop.f32.mrb[0].mxu0
    %v6456 = vadd.f32 %v6386, %v6455
    %v6457 = vpop.f32.mrb[0].mxu0
    %6458 = vdwg.mxu0
    %v6460 = vsel %vm907, %v6456, 0
    %6462 = vmatprep.subr.mxu0 %v6290
    %6463 = vmatpush1.msra.mxu0 %v6289
    %6464 = vmatprep.subr.mxu0 %v6294
    %6465 = vmatpush1.msra.mxu0 %v6293
    %6466 = vmatprep.subr.mxu0 0.0
    %6467 = vmatpush1.msra.mxu0 0.0
    %6468 = vmatprep.subr.mxu0 0.0
    %6469 = vmatpush1.msra.mxu0 0.0
    %6470 = vmatprep.subr.mxu0 0.0
    %6471 = vmatpush1.msra.mxu0 0.0
    %6472 = vmatprep.subr.mxu0 0.0
    %6473 = vmatpush1.msra.mxu0 0.0
    %6474 = vmatprep.subr.mxu0 0.0
    %6475 = vmatpush1.msra.mxu0 0.0
    %6476 = vmatprep.subr.mxu0 0.0
    %6477 = vmatpush1.msra.mxu0 0.0
    %6478 = vmatprep.subr.mxu0 0.0
    %6479 = vmatpush1.msra.mxu0 0.0
    %6480 = vmatprep.subr.mxu0 0.0
    %6481 = vmatpush1.msra.mxu0 0.0
    %6482 = vmatprep.subr.mxu0 0.0
    %6483 = vmatpush1.msra.mxu0 0.0
    %6484 = vmatprep.subr.mxu0 0.0
    %6485 = vmatpush1.msra.mxu0 0.0
    %6486 = vmatprep.subr.mxu0 0.0
    %6487 = vmatpush1.msra.mxu0 0.0
    %6488 = vmatprep.subr.mxu0 0.0
    %6489 = vmatpush1.msra.mxu0 0.0
    %6490 = vmatprep.subr.mxu0 0.0
    %6491 = vmatpush1.msra.mxu0 0.0
    %6492 = vmatprep.subr.mxu0 0.0
    %6493 = vmatpush1.msra.mxu0 0.0
    %6494 = vmatprep.subr.mxu0 0.0
    %6495 = vmatpush1.msra.mxu0 0.0
    %6496 = vmatprep.subr.mxu0 0.0
    %6497 = vmatpush1.msra.mxu0 0.0
    %6498 = vmatprep.subr.mxu0 0.0
    %6499 = vmatpush1.msra.mxu0 0.0
    %6500 = vmatprep.subr.mxu0 0.0
    %6501 = vmatpush1.msra.mxu0 0.0
    %6502 = vmatprep.subr.mxu0 0.0
    %6503 = vmatpush1.msra.mxu0 0.0
    %6504 = vmatprep.subr.mxu0 0.0
    %6505 = vmatpush1.msra.mxu0 0.0
    %6506 = vmatprep.subr.mxu0 0.0
    %6507 = vmatpush1.msra.mxu0 0.0
    %6508 = vmatprep.subr.mxu0 0.0
    %6509 = vmatpush1.msra.mxu0 0.0
    %6510 = vmatprep.subr.mxu0 0.0
    %6511 = vmatpush1.msra.mxu0 0.0
    %6512 = vmatprep.subr.mxu0 0.0
    %6513 = vmatpush1.msra.mxu0 0.0
    %6514 = vmatprep.subr.mxu0 0.0
    %6515 = vmatpush1.msra.mxu0 0.0
    %6516 = vmatprep.subr.mxu0 0.0
    %6517 = vmatpush1.msra.mxu0 0.0
    %6518 = vmatprep.subr.mxu0 0.0
    %6519 = vmatpush1.msra.mxu0 0.0
    %6520 = vmatprep.subr.mxu0 0.0
    %6521 = vmatpush1.msra.mxu0 0.0
    %6522 = vmatprep.subr.mxu0 0.0
    %6523 = vmatpush1.msra.mxu0 0.0
    %6524 = vmatprep.subr.mxu0 0.0
    %6525 = vmatpush1.msra.mxu0 0.0
    %6526 = vmatprep.mubr.f32.mxu0 0.0
    %6527 = vmatmul.mubr.f32.gmra.mrb[0].mxu0 %v6460
    %v6528 = vpop.f32.mrb[0].mxu0
    %v6529 = vadd.f32 0.0, %v6528
    %v6530 = vpop.f32.mrb[0].mxu0
    %v6531 = vadd.f32 0.0, %v6530
    %6532 = vdwg.mxu0
    %6533 = vmatprep.subr.mxu0 %v6292
    %6534 = vmatpush1.msra.mxu0 %v6291
    %6535 = vmatprep.subr.mxu0 %v6296
    %6536 = vmatpush1.msra.mxu0 %v6295
    %6537 = vmatprep.subr.mxu0 0.0
    %6538 = vmatpush1.msra.mxu0 0.0
    %6539 = vmatprep.subr.mxu0 0.0
    %6540 = vmatpush1.msra.mxu0 0.0
    %6541 = vmatprep.subr.mxu0 0.0
    %6542 = vmatpush1.msra.mxu0 0.0
    %6543 = vmatprep.subr.mxu0 0.0
    %6544 = vmatpush1.msra.mxu0 0.0
    %6545 = vmatprep.subr.mxu0 0.0
    %6546 = vmatpush1.msra.mxu0 0.0
    %6547 = vmatprep.subr.mxu0 0.0
    %6548 = vmatpush1.msra.mxu0 0.0
    %6549 = vmatprep.subr.mxu0 0.0
    %6550 = vmatpush1.msra.mxu0 0.0
    %6551 = vmatprep.subr.mxu0 0.0
    %6552 = vmatpush1.msra.mxu0 0.0
    %6553 = vmatprep.subr.mxu0 0.0
    %6554 = vmatpush1.msra.mxu0 0.0
    %6555 = vmatprep.subr.mxu0 0.0
    %6556 = vmatpush1.msra.mxu0 0.0
    %6557 = vmatprep.subr.mxu0 0.0
    %6558 = vmatpush1.msra.mxu0 0.0
    %6559 = vmatprep.subr.mxu0 0.0
    %6560 = vmatpush1.msra.mxu0 0.0
    %6561 = vmatprep.subr.mxu0 0.0
    %6562 = vmatpush1.msra.mxu0 0.0
    %6563 = vmatprep.subr.mxu0 0.0
    %6564 = vmatpush1.msra.mxu0 0.0
    %6565 = vmatprep.subr.mxu0 0.0
    %6566 = vmatpush1.msra.mxu0 0.0
    %6567 = vmatprep.subr.mxu0 0.0
    %6568 = vmatpush1.msra.mxu0 0.0
    %6569 = vmatprep.subr.mxu0 0.0
    %6570 = vmatpush1.msra.mxu0 0.0
    %6571 = vmatprep.subr.mxu0 0.0
    %6572 = vmatpush1.msra.mxu0 0.0
    %6573 = vmatprep.subr.mxu0 0.0
    %6574 = vmatpush1.msra.mxu0 0.0
    %6575 = vmatprep.subr.mxu0 0.0
    %6576 = vmatpush1.msra.mxu0 0.0
    %6577 = vmatprep.subr.mxu0 0.0
    %6578 = vmatpush1.msra.mxu0 0.0
    %6579 = vmatprep.subr.mxu0 0.0
    %6580 = vmatpush1.msra.mxu0 0.0
    %6581 = vmatprep.subr.mxu0 0.0
    %6582 = vmatpush1.msra.mxu0 0.0
    %6583 = vmatprep.subr.mxu0 0.0
    %6584 = vmatpush1.msra.mxu0 0.0
    %6585 = vmatprep.subr.mxu0 0.0
    %6586 = vmatpush1.msra.mxu0 0.0
    %6587 = vmatprep.subr.mxu0 0.0
    %6588 = vmatpush1.msra.mxu0 0.0
    %6589 = vmatprep.subr.mxu0 0.0
    %6590 = vmatpush1.msra.mxu0 0.0
    %6591 = vmatprep.subr.mxu0 0.0
    %6592 = vmatpush1.msra.mxu0 0.0
    %6593 = vmatprep.subr.mxu0 0.0
    %6594 = vmatpush1.msra.mxu0 0.0
    %6595 = vmatprep.subr.mxu0 0.0
    %6596 = vmatpush1.msra.mxu0 0.0
    %6597 = vmatprep.mubr.f32.mxu0 0.0
    %6598 = vmatmul.mubr.f32.gmra.mrb[0].mxu0 %v6460
    %v6599 = vpop.f32.mrb[0].mxu0
    %v6600 = vadd.f32 0.0, %v6599
    %v6601 = vpop.f32.mrb[0].mxu0
    %v6602 = vadd.f32 0.0, %v6601
    %6603 = vdwg.mxu0
    %v6604 = vmul.f32 %v6529, 0.0013020834
    %v6605 = vmul.f32 %v6531, 0.0013020834
    %v6606 = vmul.f32 %v6600, 0.0013020834
    %v6607 = vmul.f32 %v6602, 0.0013020834
    %v6608 = vmul.f32 %v6604, %v6604
    %v6609 = vmul.f32 %v6605, %v6605
    %v6610 = vmul.f32 %v6606, %v6606
    %v6611 = vmul.f32 %v6607, %v6607
    %v6616 = vrot.slane %v6608, 7
    %v6617 = vrot.slane %v6609, 7
    %v6618 = vrot.slane %v6610, 7
    %v6619 = vrot.slane %v6611, 7
    %v6624 = vsub.f32 %v6604, %v6616
    %v6625 = vsub.f32 %v6605, %v6617
    %v6626 = vsub.f32 %v6606, %v6618
    %v6627 = vsub.f32 %v6607, %v6619
    %v6628 = vmax.f32 %v6624, 0.0
    %v6629 = vmax.f32 %v6625, 0.0
    %v6630 = vmax.f32 %v6626, 0.0
    %v6631 = vmax.f32 %v6627, 0.0
    %v6632 = vadd.f32 %v6628, 1e-05
    %v6633 = vadd.f32 %v6629, 1e-05
    %v6634 = vadd.f32 %v6630, 1e-05
    %v6635 = vadd.f32 %v6631, 1e-05
    %v6636 = vrsqrt.pop %v6632
    %v6637 = vrsqrt.pop %v6633
    %v6638 = vrsqrt.pop %v6634
    %v6639 = vrsqrt.pop %v6635
    %v6644 = vcombine.low %v6636, %v6637
    %v6645 = vcombine.low %v6638, %v6639
    %v6647 = vunpack.c.l.s4 1966171168
    %v6648 = vunpack.c.0.s8 %v6647
    %v6649 = vlaneseq
    %v6650 = vshrl.u32 %v6649, 7
    %v6651 = vsub.s32 %v6648, %v6650
    %v6652 = vrot.slane %v6644, %v6651
    %v6654 = vunpack.c.l.s4 1966171168
    %v6655 = vunpack.c.0.s8 %v6654
    %v6656 = vlaneseq
    %v6657 = vshrl.u32 %v6656, 7
    %v6658 = vsub.s32 %v6655, %v6657
    %v6659 = vrot.slane %v6645, %v6658
    %v6660 = vcombine.high %v6652, %v6659
    %v6662 = vunpack.c.l.s4 1966171168
    %v6663 = vunpack.c.0.s8 %v6662
    %v6664 = vlaneseq
    %v6665 = vshrl.u32 %v6664, 7
    %v6666 = vsub.s32 %v6663, %v6665
    %v6667 = vrot.slane %v6660, %v6666
    %v6669 = vmul.f32 %v5782, %v6667
    %v6670 = vlaneseq
    %v6671 = vshrl.u32 %v6670, 7
    %v6672 = vsub.s32 0, %v6671
    %v6673 = vrot.slane %v6604, %v6672
    %v6674 = vlaneseq
    %v6675 = vshrl.u32 %v6674, 7
    %v6676 = vsub.s32 0, %v6675
    %v6677 = vrot.slane %v6605, %v6676
    %v6678 = vlaneseq
    %v6679 = vshrl.u32 %v6678, 7
    %v6680 = vsub.s32 0, %v6679
    %v6681 = vrot.slane %v6606, %v6680
    %v6682 = vlaneseq
    %v6683 = vshrl.u32 %v6682, 7
    %v6684 = vsub.s32 0, %v6683
    %v6685 = vrot.slane %v6607, %v6684
    %v6686 = vsub.f32 %v5657, %v6673
    %v6687 = vsub.f32 %v5659, %v6677
    %v6688 = vsub.f32 %v5763, %v6681
    %v6689 = vsub.f32 %v5765, %v6685
    %v6690 = vsub.f32 %v5661, %v6673
    %v6691 = vsub.f32 %v5663, %v6677
    %v6692 = vsub.f32 %v5767, %v6681
    %v6693 = vsub.f32 %v5769, %v6685
    %v6694 = vsub.f32 %v5667, %v6673
    %v6695 = vsub.f32 %v5669, %v6677
    %v6696 = vsub.f32 %v5773, %v6681
    %v6697 = vsub.f32 %v5775, %v6685
    %v6698 = vsub.f32 %v5671, %v6673
    %v6699 = vsub.f32 %v5673, %v6677
    %v6700 = vsub.f32 %v5777, %v6681
    %v6701 = vsub.f32 %v5779, %v6685
    %v6703 = vlaneseq
    %v6704 = vshrl.u32 %v6703, 7
    %v6705 = vsub.s32 0, %v6704
    %v6706 = vrot.slane %v6669, %v6705
    %v6707 = vlaneseq
    %v6708 = vshrl.u32 %v6707, 7
    %v6709 = vsub.s32 1, %v6708
    %v6710 = vrot.slane %v6669, %v6709
    %v6711 = vlaneseq
    %v6712 = vshrl.u32 %v6711, 7
    %v6713 = vsub.s32 2, %v6712
    %v6714 = vrot.slane %v6669, %v6713
    %v6715 = vlaneseq
    %v6716 = vshrl.u32 %v6715, 7
    %v6717 = vsub.s32 3, %v6716
    %v6718 = vrot.slane %v6669, %v6717
    %v6723 = vmul.f32 %v6686, %v6706
    %v6724 = vmul.f32 %v6687, %v6710
    %v6725 = vmul.f32 %v6688, %v6714
    %v6726 = vmul.f32 %v6689, %v6718
    %v6727 = vmul.f32 %v6690, %v6706
    %v6728 = vmul.f32 %v6691, %v6710
    %v6729 = vmul.f32 %v6692, %v6714
    %v6730 = vmul.f32 %v6693, %v6718
    %v6731 = vmul.f32 %v6694, %v6706
    %v6732 = vmul.f32 %v6695, %v6710
    %v6733 = vmul.f32 %v6696, %v6714
    %v6734 = vmul.f32 %v6697, %v6718
    %v6735 = vmul.f32 %v6698, %v6706
    %v6736 = vmul.f32 %v6699, %v6710
    %v6737 = vmul.f32 %v6700, %v6714
    %v6738 = vmul.f32 %v6701, %v6718
    %v6740 = vlaneseq
    %v6741 = vshrl.u32 %v6740, 7
    %v6742 = vsub.s32 0, %v6741
    %v6743 = vrot.slane %v5784, %v6742
    %v6744 = vlaneseq
    %v6745 = vshrl.u32 %v6744, 7
    %v6746 = vsub.s32 1, %v6745
    %v6747 = vrot.slane %v5784, %v6746
    %v6748 = vlaneseq
    %v6749 = vshrl.u32 %v6748, 7
    %v6750 = vsub.s32 2, %v6749
    %v6751 = vrot.slane %v5784, %v6750
    %v6752 = vlaneseq
    %v6753 = vshrl.u32 %v6752, 7
    %v6754 = vsub.s32 3, %v6753
    %v6755 = vrot.slane %v5784, %v6754
    %v6760 = vadd.f32 %v6723, %v6743
    %v6761 = vadd.f32 %v6724, %v6747
    %v6762 = vadd.f32 %v6725, %v6751
    %v6763 = vadd.f32 %v6726, %v6755
    %v6764 = vadd.f32 %v6727, %v6743
    %v6765 = vadd.f32 %v6728, %v6747
    %v6766 = vadd.f32 %v6729, %v6751
    %v6767 = vadd.f32 %v6730, %v6755
    %v6768 = vadd.f32 %v6731, %v6743
    %v6769 = vadd.f32 %v6732, %v6747
    %v6770 = vadd.f32 %v6733, %v6751
    %v6771 = vadd.f32 %v6734, %v6755
    %v6772 = vadd.f32 %v6735, %v6743
    %v6773 = vadd.f32 %v6736, %v6747
    %v6774 = vadd.f32 %v6737, %v6751
    %v6775 = vadd.f32 %v6738, %v6755
    %v6776 = vmax.f32 %v6760, 0.0
    %v6777 = vmax.f32 %v6761, 0.0
    %v6778 = vmax.f32 %v6762, 0.0
    %v6779 = vmax.f32 %v6763, 0.0
    %v6780 = vmax.f32 %v6764, 0.0
    %v6781 = vmax.f32 %v6765, 0.0
    %v6782 = vmax.f32 %v6766, 0.0
    %v6783 = vmax.f32 %v6767, 0.0
    %v6784 = vmax.f32 %v6768, 0.0
    %v6785 = vmax.f32 %v6769, 0.0
    %v6786 = vmax.f32 %v6770, 0.0
    %v6787 = vmax.f32 %v6771, 0.0
    %v6788 = vmax.f32 %v6772, 0.0
    %v6789 = vmax.f32 %v6773, 0.0
    %v6790 = vmax.f32 %v6774, 0.0
    %v6791 = vmax.f32 %v6775, 0.0
    %v6792 = vmul.f32 %v6776, %v169
    %v6793 = vmul.f32 %v6777, %v169
    %v6794 = vmul.f32 %v6778, %v169
    %v6795 = vmul.f32 %v6779, %v169
    %v6796 = vmul.f32 %v6780, %v170
    %v6797 = vmul.f32 %v6781, %v170
    %v6798 = vmul.f32 %v6782, %v170
    %v6799 = vmul.f32 %v6783, %v170
    %v6800 = vmul.f32 %v6784, %v171
    %v6801 = vmul.f32 %v6785, %v171
    %v6802 = vmul.f32 %v6786, %v171
    %v6803 = vmul.f32 %v6787, %v171
    %v6804 = vmul.f32 %v6788, %v172
    %v6805 = vmul.f32 %v6789, %v172
    %v6806 = vmul.f32 %v6790, %v172
    %v6807 = vmul.f32 %v6791, %v172
    %v6808 = vld [vmem:[#allocation16 + $0x20] ss:$0 sm:$0xff]
    %v6809 = vpack.c.bf16 %v6796, %v6792
    %v6810 = vpack.c.bf16 %v6797, %v6793
    %v6811 = vpack.c.bf16 %v6798, %v6794
    %v6812 = vpack.c.bf16 %v6799, %v6795
    %v6813 = vpack.c.bf16 %v6804, %v6800
    %v6814 = vpack.c.bf16 %v6805, %v6801
    %v6815 = vpack.c.bf16 %v6806, %v6802
    %v6816 = vpack.c.bf16 %v6807, %v6803
    %v6817 = vld [vmem:[#allocation14] sm:$0xf]
    %v6818 = vld [vmem:[#allocation14 + $0x4] sm:$0xf]
    %v6819 = vld [vmem:[#allocation14 + $0x8] sm:$0xf]
    %v6820 = vld [vmem:[#allocation14 + $0xc] sm:$0xf]
    %v6821 = vld [vmem:[#allocation14 + $0x10] sm:$0xf]
    %v6822 = vld [vmem:[#allocation14 + $0x14] sm:$0xf]
    %v6823 = vld [vmem:[#allocation14 + $0x18] sm:$0xf]
    %v6824 = vld [vmem:[#allocation14 + $0x1c] sm:$0xf]
    %v6825 = vld [vmem:[#allocation14 + $0x20] sm:$0xf]
    %v6826 = vld [vmem:[#allocation14 + $0x24] sm:$0xf]
    %v6827 = vld [vmem:[#allocation14 + $0x28] sm:$0xf]
    %v6828 = vld [vmem:[#allocation14 + $0x2c] sm:$0xf]
    %v6829 = vld [vmem:[#allocation14 + $0x30] sm:$0xf]
    %v6830 = vld [vmem:[#allocation14 + $0x34] sm:$0xf]
    %v6831 = vld [vmem:[#allocation14 + $0x38] sm:$0xf]
    %v6832 = vld [vmem:[#allocation14 + $0x3c] sm:$0xf]
    %v6833 = vld [vmem:[#allocation14 + $0x40] sm:$0xf]
    %v6834 = vld [vmem:[#allocation14 + $0x44] sm:$0xf]
    %v6835 = vld [vmem:[#allocation14 + $0x48] sm:$0xf]
    %v6836 = vld [vmem:[#allocation14 + $0x4c] sm:$0xf]
    %v6837 = vld [vmem:[#allocation14 + $0x50] sm:$0xf]
    %v6838 = vld [vmem:[#allocation14 + $0x54] sm:$0xf]
    %v6839 = vld [vmem:[#allocation14 + $0x58] sm:$0xf]
    %v6840 = vld [vmem:[#allocation14 + $0x5c] sm:$0xf]
    %v6841 = vld [vmem:[#allocation14 + $0x60] sm:$0xf]
    %v6842 = vld [vmem:[#allocation14 + $0x64] sm:$0xf]
    %v6843 = vld [vmem:[#allocation14 + $0x68] sm:$0xf]
    %v6844 = vld [vmem:[#allocation14 + $0x6c] sm:$0xf]
    %v6845 = vld [vmem:[#allocation14 + $0x70] sm:$0xf]
    %v6846 = vld [vmem:[#allocation14 + $0x74] sm:$0xf]
    %v6847 = vld [vmem:[#allocation14 + $0x78] sm:$0xf]
    %v6848 = vld [vmem:[#allocation14 + $0x7c] sm:$0xf]
    %v6849 = vld [vmem:[#allocation14 + $0x80] sm:$0xf]
    %v6850 = vld [vmem:[#allocation14 + $0x84] sm:$0xf]
    %v6851 = vld [vmem:[#allocation14 + $0x88] sm:$0xf]
    %v6852 = vld [vmem:[#allocation14 + $0x8c] sm:$0xf]
    %v6853 = vld [vmem:[#allocation14 + $0x90] sm:$0xf]
    %v6854 = vld [vmem:[#allocation14 + $0x94] sm:$0xf]
    %v6855 = vld [vmem:[#allocation14 + $0x98] sm:$0xf]
    %v6856 = vld [vmem:[#allocation14 + $0x9c] sm:$0xf]
    %v6857 = vld [vmem:[#allocation14 + $0xa0] sm:$0xf]
    %v6858 = vld [vmem:[#allocation14 + $0xa4] sm:$0xf]
    %v6859 = vld [vmem:[#allocation14 + $0xa8] sm:$0xf]
    %v6860 = vld [vmem:[#allocation14 + $0xac] sm:$0xf]
    %v6861 = vld [vmem:[#allocation14 + $0xb0] sm:$0xf]
    %v6862 = vld [vmem:[#allocation14 + $0xb4] sm:$0xf]
    %v6863 = vld [vmem:[#allocation14 + $0xb8] sm:$0xf]
    %v6864 = vld [vmem:[#allocation14 + $0xbc] sm:$0xf]
    %v6865 = vld [vmem:[#allocation14 + $0xc0] sm:$0xf]
    %v6866 = vld [vmem:[#allocation14 + $0xc4] sm:$0xf]
    %v6867 = vld [vmem:[#allocation14 + $0xc8] sm:$0xf]
    %v6868 = vld [vmem:[#allocation14 + $0xcc] sm:$0xf]
    %v6869 = vld [vmem:[#allocation14 + $0xd0] sm:$0xf]
    %v6870 = vld [vmem:[#allocation14 + $0xd4] sm:$0xf]
    %v6871 = vld [vmem:[#allocation14 + $0xd8] sm:$0xf]
    %v6872 = vld [vmem:[#allocation14 + $0xdc] sm:$0xf]
    %v6873 = vld [vmem:[#allocation14 + $0xe0] sm:$0xf]
    %v6874 = vld [vmem:[#allocation14 + $0xe4] sm:$0xf]
    %v6875 = vld [vmem:[#allocation14 + $0xe8] sm:$0xf]
    %v6876 = vld [vmem:[#allocation14 + $0xec] sm:$0xf]
    %v6877 = vld [vmem:[#allocation14 + $0xf0] sm:$0xf]
    %v6878 = vld [vmem:[#allocation14 + $0xf4] sm:$0xf]
    %v6879 = vld [vmem:[#allocation14 + $0xf8] sm:$0xf]
    %v6880 = vld [vmem:[#allocation14 + $0xfc] sm:$0xf]
    %v6945 = vunpack.c.l.b16 %v6817
    %v6946 = vunpack.c.l.b16 %v6818
    %v6947 = vunpack.c.l.b16 %v6819
    %v6948 = vunpack.c.l.b16 %v6820
    %v6949 = vunpack.c.l.b16 %v6821
    %v6950 = vunpack.c.l.b16 %v6822
    %v6951 = vunpack.c.l.b16 %v6823
    %v6952 = vunpack.c.l.b16 %v6824
    %v6953 = vunpack.c.l.b16 %v6825
    %v6954 = vunpack.c.l.b16 %v6826
    %v6955 = vunpack.c.l.b16 %v6827
    %v6956 = vunpack.c.l.b16 %v6828
    %v6957 = vunpack.c.l.b16 %v6829
    %v6958 = vunpack.c.l.b16 %v6830
    %v6959 = vunpack.c.l.b16 %v6831
    %v6960 = vunpack.c.l.b16 %v6832
    %v6961 = vunpack.c.l.b16 %v6833
    %v6962 = vunpack.c.l.b16 %v6834
    %v6963 = vunpack.c.l.b16 %v6835
    %v6964 = vunpack.c.l.b16 %v6836
    %v6965 = vunpack.c.l.b16 %v6837
    %v6966 = vunpack.c.l.b16 %v6838
    %v6967 = vunpack.c.l.b16 %v6839
    %v6968 = vunpack.c.l.b16 %v6840
    %v6969 = vunpack.c.l.b16 %v6841
    %v6970 = vunpack.c.l.b16 %v6842
    %v6971 = vunpack.c.l.b16 %v6843
    %v6972 = vunpack.c.l.b16 %v6844
    %v6973 = vunpack.c.l.b16 %v6845
    %v6974 = vunpack.c.l.b16 %v6846
    %v6975 = vunpack.c.l.b16 %v6847
    %v6976 = vunpack.c.l.b16 %v6848
    %v6977 = vunpack.c.l.b16 %v6849
    %v6978 = vunpack.c.l.b16 %v6850
    %v6979 = vunpack.c.l.b16 %v6851
    %v6980 = vunpack.c.l.b16 %v6852
    %v6981 = vunpack.c.l.b16 %v6853
    %v6982 = vunpack.c.l.b16 %v6854
    %v6983 = vunpack.c.l.b16 %v6855
    %v6984 = vunpack.c.l.b16 %v6856
    %v6985 = vunpack.c.l.b16 %v6857
    %v6986 = vunpack.c.l.b16 %v6858
    %v6987 = vunpack.c.l.b16 %v6859
    %v6988 = vunpack.c.l.b16 %v6860
    %v6989 = vunpack.c.l.b16 %v6861
    %v6990 = vunpack.c.l.b16 %v6862
    %v6991 = vunpack.c.l.b16 %v6863
    %v6992 = vunpack.c.l.b16 %v6864
    %v6993 = vunpack.c.l.b16 %v6865
    %v6994 = vunpack.c.l.b16 %v6866
    %v6995 = vunpack.c.l.b16 %v6867
    %v6996 = vunpack.c.l.b16 %v6868
    %v6997 = vunpack.c.l.b16 %v6869
    %v6998 = vunpack.c.l.b16 %v6870
    %v6999 = vunpack.c.l.b16 %v6871
    %v7000 = vunpack.c.l.b16 %v6872
    %v7001 = vunpack.c.l.b16 %v6873
    %v7002 = vunpack.c.l.b16 %v6874
    %v7003 = vunpack.c.l.b16 %v6875
    %v7004 = vunpack.c.l.b16 %v6876
    %v7005 = vunpack.c.l.b16 %v6877
    %v7006 = vunpack.c.l.b16 %v6878
    %v7007 = vunpack.c.l.b16 %v6879
    %v7008 = vunpack.c.l.b16 %v6880
    %v7009 = vpack.c.b16 %v6946, %v6945
    %v7010 = vpack.c.b16 %v6948, %v6947
    %v7011 = vpack.c.b16 %v6950, %v6949
    %v7012 = vpack.c.b16 %v6952, %v6951
    %v7013 = vpack.c.b16 %v6954, %v6953
    %v7014 = vpack.c.b16 %v6956, %v6955
    %v7015 = vpack.c.b16 %v6958, %v6957
    %v7016 = vpack.c.b16 %v6960, %v6959
    %v7017 = vpack.c.b16 %v6962, %v6961
    %v7018 = vpack.c.b16 %v6964, %v6963
    %v7019 = vpack.c.b16 %v6966, %v6965
    %v7020 = vpack.c.b16 %v6968, %v6967
    %v7021 = vpack.c.b16 %v6970, %v6969
    %v7022 = vpack.c.b16 %v6972, %v6971
    %v7023 = vpack.c.b16 %v6974, %v6973
    %v7024 = vpack.c.b16 %v6976, %v6975
    %v7025 = vpack.c.b16 %v6978, %v6977
    %v7026 = vpack.c.b16 %v6980, %v6979
    %v7027 = vpack.c.b16 %v6982, %v6981
    %v7028 = vpack.c.b16 %v6984, %v6983
    %v7029 = vpack.c.b16 %v6986, %v6985
    %v7030 = vpack.c.b16 %v6988, %v6987
    %v7031 = vpack.c.b16 %v6990, %v6989
    %v7032 = vpack.c.b16 %v6992, %v6991
    %v7033 = vpack.c.b16 %v6994, %v6993
    %v7034 = vpack.c.b16 %v6996, %v6995
    %v7035 = vpack.c.b16 %v6998, %v6997
    %v7036 = vpack.c.b16 %v7000, %v6999
    %v7037 = vpack.c.b16 %v7002, %v7001
    %v7038 = vpack.c.b16 %v7004, %v7003
    %v7039 = vpack.c.b16 %v7006, %v7005
    %v7040 = vpack.c.b16 %v7008, %v7007
    %7073 = vmatprep.subr.bf16.mxu0 0
    %7074 = vmatpush1.bf16.msra.mxu0 %v7009
    %7075 = vmatprep.subr.bf16.mxu0 0
    %7076 = vmatpush1.bf16.msra.mxu0 %v7010
    %7077 = vmatprep.subr.bf16.mxu0 0
    %7078 = vmatpush1.bf16.msra.mxu0 %v7011
    %7079 = vmatprep.subr.bf16.mxu0 0
    %7080 = vmatpush1.bf16.msra.mxu0 %v7012
    %7081 = vmatprep.subr.bf16.mxu0 0
    %7082 = vmatpush1.bf16.msra.mxu0 %v7013
    %7083 = vmatprep.subr.bf16.mxu0 0
    %7084 = vmatpush1.bf16.msra.mxu0 %v7014
    %7085 = vmatprep.subr.bf16.mxu0 0
    %7086 = vmatpush1.bf16.msra.mxu0 %v7015
    %7087 = vmatprep.subr.bf16.mxu0 0
    %7088 = vmatpush1.bf16.msra.mxu0 %v7016
    %7089 = vmatprep.subr.bf16.mxu0 0
    %7090 = vmatpush1.bf16.msra.mxu0 %v7017
    %7091 = vmatprep.subr.bf16.mxu0 0
    %7092 = vmatpush1.bf16.msra.mxu0 %v7018
    %7093 = vmatprep.subr.bf16.mxu0 0
    %7094 = vmatpush1.bf16.msra.mxu0 %v7019
    %7095 = vmatprep.subr.bf16.mxu0 0
    %7096 = vmatpush1.bf16.msra.mxu0 %v7020
    %7097 = vmatprep.subr.bf16.mxu0 0
    %7098 = vmatpush1.bf16.msra.mxu0 %v7021
    %7099 = vmatprep.subr.bf16.mxu0 0
    %7100 = vmatpush1.bf16.msra.mxu0 %v7022
    %7101 = vmatprep.subr.bf16.mxu0 0
    %7102 = vmatpush1.bf16.msra.mxu0 %v7023
    %7103 = vmatprep.subr.bf16.mxu0 0
    %7104 = vmatpush1.bf16.msra.mxu0 %v7024
    %7105 = vmatprep.mubr.bf16.mxu0 %v6810
    %7106 = vmatmul.mubr.bf16.gmra.mrb[0].mxu0 %v6809
    %v7107 = vpop.f32.mrb[0].mxu0
    %v7108 = vadd.f32 %v6808, %v7107
    %v7109 = vpop.f32.mrb[0].mxu0
    %v7110 = vpop.f32.mrb[0].mxu0
    %v7111 = vadd.f32 %v6808, %v7110
    %v7112 = vpop.f32.mrb[0].mxu0
    %7113 = vmatprep.mubr.bf16.mxu0 %v6814
    %7114 = vmatmul.mubr.bf16.gmra.mrb[0].mxu0 %v6813
    %v7115 = vpop.f32.mrb[0].mxu0
    %v7116 = vadd.f32 %v6808, %v7115
    %v7117 = vpop.f32.mrb[0].mxu0
    %v7118 = vpop.f32.mrb[0].mxu0
    %v7119 = vadd.f32 %v6808, %v7118
    %v7120 = vpop.f32.mrb[0].mxu0
    %7121 = vdwg.mxu0
    %7122 = vmatprep.subr.bf16.mxu0 0
    %7123 = vmatpush1.bf16.msra.mxu0 %v7025
    %7124 = vmatprep.subr.bf16.mxu0 0
    %7125 = vmatpush1.bf16.msra.mxu0 %v7026
    %7126 = vmatprep.subr.bf16.mxu0 0
    %7127 = vmatpush1.bf16.msra.mxu0 %v7027
    %7128 = vmatprep.subr.bf16.mxu0 0
    %7129 = vmatpush1.bf16.msra.mxu0 %v7028
    %7130 = vmatprep.subr.bf16.mxu0 0
    %7131 = vmatpush1.bf16.msra.mxu0 %v7029
    %7132 = vmatprep.subr.bf16.mxu0 0
    %7133 = vmatpush1.bf16.msra.mxu0 %v7030
    %7134 = vmatprep.subr.bf16.mxu0 0
    %7135 = vmatpush1.bf16.msra.mxu0 %v7031
    %7136 = vmatprep.subr.bf16.mxu0 0
    %7137 = vmatpush1.bf16.msra.mxu0 %v7032
    %7138 = vmatprep.subr.bf16.mxu0 0
    %7139 = vmatpush1.bf16.msra.mxu0 %v7033
    %7140 = vmatprep.subr.bf16.mxu0 0
    %7141 = vmatpush1.bf16.msra.mxu0 %v7034
    %7142 = vmatprep.subr.bf16.mxu0 0
    %7143 = vmatpush1.bf16.msra.mxu0 %v7035
    %7144 = vmatprep.subr.bf16.mxu0 0
    %7145 = vmatpush1.bf16.msra.mxu0 %v7036
    %7146 = vmatprep.subr.bf16.mxu0 0
    %7147 = vmatpush1.bf16.msra.mxu0 %v7037
    %7148 = vmatprep.subr.bf16.mxu0 0
    %7149 = vmatpush1.bf16.msra.mxu0 %v7038
    %7150 = vmatprep.subr.bf16.mxu0 0
    %7151 = vmatpush1.bf16.msra.mxu0 %v7039
    %7152 = vmatprep.subr.bf16.mxu0 0
    %7153 = vmatpush1.bf16.msra.mxu0 %v7040
    %7154 = vmatprep.mubr.bf16.mxu0 %v6812
    %7155 = vmatmul.mubr.bf16.gmra.mrb[0].mxu0 %v6811
    %v7156 = vpop.f32.mrb[0].mxu0
    %v7157 = vadd.f32 %v7108, %v7156
    %v7158 = vpop.f32.mrb[0].mxu0
    %v7159 = vpop.f32.mrb[0].mxu0
    %v7160 = vadd.f32 %v7111, %v7159
    %v7161 = vpop.f32.mrb[0].mxu0
    %7162 = vmatprep.mubr.bf16.mxu0 %v6816
    %7163 = vmatmul.mubr.bf16.gmra.mrb[0].mxu0 %v6815
    %v7164 = vpop.f32.mrb[0].mxu0
    %v7165 = vadd.f32 %v7116, %v7164
    %v7166 = vpop.f32.mrb[0].mxu0
    %v7167 = vpop.f32.mrb[0].mxu0
    %v7168 = vadd.f32 %v7119, %v7167
    %v7169 = vpop.f32.mrb[0].mxu0
    %7170 = vdwg.mxu0
    %v7171 = vtanh.pop %v7157
    %v7172 = vtanh.pop %v7160
    %v7173 = vtanh.pop %v7165
    %v7174 = vtanh.pop %v7168
    %7175 = vst [vmem:[#allocation18] sm:$0xff] %v7171
    %7176 = vst [vmem:[#allocation18 + $0x8] sm:$0xff] %v7172
    %7177 = vst [vmem:[#allocation18 + $0x10] sm:$0xff] %v7173
    %7178 = vst [vmem:[#allocation18 + $0x18] sm:$0xff] %v7174
    // Predicated region
    $region58: #{tpu_custom_call.1} parent=1 // pred_check
      _
    $region59: #{tpu_custom_call.1} parent=1 // pred_check_branch
      %7180 = sbr.rel (0) target = $region61
    $region60: #{tpu_custom_call.1} parent=1 // pred_region
      %s7182 = ssub.s32 512, 512
      %7183 = vsyncadd [#allocation7], %s7182
      %s7184 = sshll.u32 [#allocation17], 4
      %s7185 = int_to_ptr.vmem [resolvable:$true] %s7184
      %7190 = dma.vmem_to_hbm [thread:$0]  %s7185, 512, %s8, [#allocation7], 128, 128, 8
    $region61: #{tpu_custom_call.1} parent=1 // pred_fallthru
      _
    // Predicated region
    $region62: #{tpu_custom_call.1} parent=1 // pred_check
      _
    $region63: #{tpu_custom_call.1} parent=1 // pred_check_branch
      %7192 = sbr.rel (0) target = $region65
    $region64: #{tpu_custom_call.1} parent=1 // pred_region
      %s7194 = ssub.s32 512, 512
      %7195 = vsyncadd [#allocation19], %s7194
      %s7196 = sshll.u32 [#allocation18], 4
      %s7197 = int_to_ptr.vmem [resolvable:$true] %s7196
      %7202 = dma.vmem_to_hbm [thread:$0]  %s7197, 512, %s9, [#allocation19], 128, 128, 8
    $region65: #{tpu_custom_call.1} parent=1 // pred_fallthru
      _
    // Predicated region
    $region66: #{tpu_custom_call.1} parent=1 // pred_check
      _
    $region67: #{tpu_custom_call.1} parent=1 // pred_check_branch
      %7204 = sbr.rel (0) target = $region69
    $region68: #{tpu_custom_call.1} parent=1 // pred_region
      %7205 = dma.done [#allocation7], 512
    $region69: #{tpu_custom_call.1} parent=1 // pred_fallthru
      _
    // Predicated region
    $region70: #{tpu_custom_call.1} parent=1 // pred_check
      _
    $region71: #{tpu_custom_call.1} parent=1 // pred_check_branch
      %7207 = sbr.rel (0) target = $region73
    $region72: #{tpu_custom_call.1} parent=1 // pred_region
      %7208 = dma.done [#allocation19], 512
    $region73: #{tpu_custom_call.1} parent=1 // pred_fallthru
      _
    %7209 = vsyncpa [#allocation6], 1
    %7210 = vsyncpa [#allocation9], 1
    %7211 = vsyncpa [#allocation12], 1
    %7212 = vsyncpa [#allocation15], 1
    %7213 = vsyncpa [#allocation7], 1
    %7214 = vsyncpa [#allocation19], 1
  %7215 = vsyncmov [#allocation4]
  %s7216 = vpop.sfrf %7215
  %p7217 = scmp.eq.s32.totalorder %s7216, 0
  %p7218 = pneg %p7217
  %7220 = shalt.err (%p7218)

</llo_original>
